<compile_context>
chip_gen: v7x
topology: tpu7x:2x2x1
jax: 0.10.0
libtpu: 0.0.40
codegen_flags: <defaults>
</compile_context>

<pallas_src>
import functools
import math

import jax
import jax.numpy as jnp
from jax.experimental import pallas as pl
from jax.experimental.pallas import tpu as pltpu


KERNEL_SIZE = 31  # conformer depthwise kernel size (same padding 15/15)


# ----------------------------- fused layer kernel ----------------------------

def _pcmer_layer_kernel(
    x_ref, ln1g_ref, ln1b_ref, wqkv_ref, bqkv_ref, proj_ref, wo_ref, bo_ref,
    ln2g_ref, ln2b_ref, w1a_ref, b1a_ref, w1g_ref, b1g_ref, dww_ref, dwb_ref,
    w2_ref, b2_ref, o_ref, *, H, Dh, M_real):
    f32 = jnp.float32
    bf16 = jnp.bfloat16

    x = x_ref[0].astype(f32)                      # (N, D)
    N = x.shape[0]
    inner = H * Dh
    Mp = proj_ref.shape[0]                        # padded feature count

    def layer_norm(v, g_ref, b_ref):
        mu = jnp.mean(v, axis=-1, keepdims=True)
        var = jnp.mean((v - mu) ** 2, axis=-1, keepdims=True)
        vhat = (v - mu) * jax.lax.rsqrt(var + 1e-5)
        return vhat * g_ref[...].astype(f32) + b_ref[...].astype(f32)

    # ------------------------- attention branch -------------------------
    xn = layer_norm(x, ln1g_ref, ln1b_ref)
    qkv = jnp.dot(xn.astype(bf16), wqkv_ref[...],
                  preferred_element_type=f32) + bqkv_ref[...]      # (N, 3*inner)

    proj = proj_ref[...]                                           # (Mp, Dh) bf16
    col = jax.lax.broadcasted_iota(jnp.int32, (1, Mp), 1)
    feat_mask = col < M_real                                       # real features

    dn = float(Dh) ** -0.25                # data_normalizer
    ratio = float(M_real) ** -0.5
    feat_eps = 1e-4
    c_last = (((1,), (1,)), ((), ()))
    c_first = (((0,), (0,)), ((), ()))

    attn = jnp.zeros_like(x)                                       # (N, D)
    for h in range(H):                      # static head loop, all in VMEM
        q_h = qkv[:, h * Dh:(h + 1) * Dh]
        k_h = qkv[:, inner + h * Dh:inner + (h + 1) * Dh]
        v_h = qkv[:, 2 * inner + h * Dh:2 * inner + (h + 1) * Dh]

        # performer softmax-kernel feature maps
        q_dash = jax.lax.dot_general((q_h * dn).astype(bf16), proj, c_last,
                                     preferred_element_type=f32)   # (N, Mp)
        k_dash = jax.lax.dot_general((k_h * dn).astype(bf16), proj, c_last,
                                     preferred_element_type=f32)   # (N, Mp)
        q_diag = jnp.sum(q_h * q_h, axis=-1, keepdims=True) * (0.5 * dn * dn)
        k_diag = jnp.sum(k_h * k_h, axis=-1, keepdims=True) * (0.5 * dn * dn)

        q_max = jnp.max(jnp.where(feat_mask, q_dash, -jnp.inf),
                        axis=-1, keepdims=True)
        q_feat = jnp.where(
            feat_mask, ratio * (jnp.exp(q_dash - q_diag - q_max) + feat_eps), 0.0)
        # NOTE: matches the FCPE reference exactly (eps inside the exponent for keys).
        k_feat = jnp.where(
            feat_mask, ratio * jnp.exp(k_dash - k_diag + feat_eps), 0.0)

        # non-causal linear attention
        context = jax.lax.dot_general(k_feat.astype(bf16), v_h.astype(bf16),
                                      c_first, preferred_element_type=f32)  # (Mp, Dh)
        k_sum = jnp.sum(k_feat, axis=0, keepdims=True)             # (1, Mp)
        denom = jnp.sum(q_feat * k_sum, axis=-1, keepdims=True)    # (N, 1)
        d_inv = pl.reciprocal(denom + 1e-8, approx=True)
        out_h = jnp.dot(q_feat.astype(bf16), context.astype(bf16),
                        preferred_element_type=f32) * d_inv        # (N, Dh)

        # output projection accumulated per head (== concat(heads) @ Wo)
        attn = attn + jnp.dot(out_h.astype(bf16),
                              wo_ref[h * Dh:(h + 1) * Dh, :],
                              preferred_element_type=f32)

    phone1 = x + attn + bo_ref[...].astype(f32)                    # residual

    # ------------------------ conformer conv branch ----------------------
    xn2 = layer_norm(phone1, ln2g_ref, ln2b_ref).astype(bf16)
    a = jnp.dot(xn2, w1a_ref[...], preferred_element_type=f32) + b1a_ref[...]
    g = jnp.dot(xn2, w1g_ref[...], preferred_element_type=f32) + b1g_ref[...]
    u = a * jax.nn.sigmoid(g)                                      # GLU, (N, C)

    K = dww_ref.shape[0]
    pad = K // 2
    dw = dww_ref[...].astype(f32)                                  # (K, C)
    row = jax.lax.broadcasted_iota(jnp.int32, (N, 1), 0)
    acc = jnp.zeros_like(u)
    # depthwise conv, same padding (15/15) done via circular roll + validity mask
    for kk in range(K):                                            # static taps
        s = kk - pad
        if s <= -N or s >= N:
            continue                       # this tap only reads zero padding
        shift = (-s) % N
        shifted = pltpu.roll(u, shift=shift, axis=0) if shift else u
        valid = jnp.logical_and(row + s >= 0, row + s < N)
        acc = acc + jnp.where(valid, shifted, 0.0) * dw[kk:kk + 1, :]
    y = acc + dwb_ref[...].astype(f32)
    y = y * jax.nn.sigmoid(y)                                      # Swish
    conv = jnp.dot(y.astype(bf16), w2_ref[...],
                   preferred_element_type=f32) + b2_ref[...]

    o_ref[0] = (phone1 + conv).astype(o_ref.dtype)


# ------------------------------ layer wrapper ---------------------------------

def encoder_layer(phone, lp, *, H, Dh, M_real):
    B, N, D = phone.shape
    inner = H * Dh
    C = lp["w1a"].shape[1]
    K = lp["dw_w"].shape[0]
    Mp = lp["proj"].shape[0]

    def w_spec(shape):
        return pl.BlockSpec(shape, lambda b: (0, 0))

    kernel = functools.partial(_pcmer_layer_kernel, H=H, Dh=Dh, M_real=M_real)
    return pl.pallas_call(
        kernel,
        out_shape=jax.ShapeDtypeStruct((B, N, D), phone.dtype),
        grid=(B,),
        in_specs=[
            pl.BlockSpec((1, N, D), lambda b: (b, 0, 0)),     # phone
            w_spec((1, D)), w_spec((1, D)),                   # ln1 gamma/beta
            w_spec((D, 3 * inner)), w_spec((1, 3 * inner)),   # fused qkv
            w_spec((Mp, Dh)),                                 # performer proj
            w_spec((inner, D)), w_spec((1, D)),               # out proj
            w_spec((1, D)), w_spec((1, D)),                   # ln2 gamma/beta
            w_spec((D, C)), w_spec((1, C)),                   # pw conv1 value
            w_spec((D, C)), w_spec((1, C)),                   # pw conv1 gate
            w_spec((K, C)), w_spec((1, C)),                   # depthwise taps
            w_spec((C, D)), w_spec((1, D)),                   # pw conv2
        ],
        out_specs=pl.BlockSpec((1, N, D), lambda b: (b, 0, 0)),
        compiler_params=pltpu.CompilerParams(
            dimension_semantics=("parallel",)),
    )(phone, lp["ln1_g"], lp["ln1_b"], lp["wqkv"], lp["bqkv"], lp["proj"],
      lp["wo"], lp["bo"], lp["ln2_g"], lp["ln2_b"], lp["w1a"], lp["b1a"],
      lp["w1g"], lp["b1g"], lp["dw_w"], lp["dw_b"], lp["w2"], lp["b2"])


def pcmer_forward(phone, params, *, H, Dh, M_real):
    for lp in params:
        phone = encoder_layer(phone, lp, H=H, Dh=Dh, M_real=M_real)
    return phone


# ----------------------------- parameter init ---------------------------------

def init_params(key, num_layers, D, H, Dh, M_real, M_pad):
    inner = H * Dh      # attention inner dim
    C = 2 * D           # conformer inner dim (expansion_factor=2)
    scale = 0.02
    params = []
    for layer in range(num_layers):
        ks = jax.random.split(jax.random.fold_in(key, layer), 16)
        wq = scale * jax.random.normal(ks[0], (D, inner), jnp.float32)
        wk = scale * jax.random.normal(ks[1], (D, inner), jnp.float32)
        wv = scale * jax.random.normal(ks[2], (D, inner), jnp.float32)
        bq = scale * jax.random.normal(ks[3], (inner,), jnp.float32)
        bk = scale * jax.random.normal(ks[4], (inner,), jnp.float32)
        bv = scale * jax.random.normal(ks[5], (inner,), jnp.float32)
        # performer random-feature buffer, zero-padded to lane-aligned M_pad
        proj = jax.random.normal(ks[6], (M_real, Dh), jnp.float32)
        proj = jnp.pad(proj, ((0, M_pad - M_real), (0, 0)))
        lp = {
            "ln1_g": jnp.ones((1, D), jnp.float32),
            "ln1_b": jnp.zeros((1, D), jnp.float32),
            # fused q/k/v projection (D, 3*inner); bf16 for the MXU
            "wqkv": jnp.concatenate([wq, wk, wv], axis=1).astype(jnp.bfloat16),
            "bqkv": jnp.concatenate([bq, bk, bv]).reshape(1, 3 * inner),
            "proj": proj.astype(jnp.bfloat16),
            "wo": (scale * jax.random.normal(ks[7], (inner, D), jnp.float32)
                   ).astype(jnp.bfloat16),
            "bo": (scale * jax.random.normal(ks[8], (D,), jnp.float32)
                   ).reshape(1, D),
            "ln2_g": jnp.ones((1, D), jnp.float32),
            "ln2_b": jnp.zeros((1, D), jnp.float32),
            # pointwise conv1 (dim -> 2*inner_dim) split into value/gate halves
            "w1a": (scale * jax.random.normal(ks[9], (D, C), jnp.float32)
                    ).astype(jnp.bfloat16),
            "b1a": (scale * jax.random.normal(ks[10], (C,), jnp.float32)
                    ).reshape(1, C),
            "w1g": (scale * jax.random.normal(ks[11], (D, C), jnp.float32)
                    ).astype(jnp.bfloat16),
            "b1g": (scale * jax.random.normal(ks[12], (C,), jnp.float32)
                    ).reshape(1, C),
            # depthwise conv taps (K, C) and bias (kept f32: VPU work)
            "dw_w": scale * jax.random.normal(ks[13], (KERNEL_SIZE, C), jnp.float32),
            "dw_b": (scale * jax.random.normal(ks[14], (C,), jnp.float32)
                     ).reshape(1, C),
            # pointwise conv2 (inner_dim -> dim)
            "w2": (scale * jax.random.normal(ks[15], (C, D), jnp.float32)
                   ).astype(jnp.bfloat16),
            "b2": jnp.zeros((1, D), jnp.float32),
        }
        params.append(lp)
    return params


# --------------------------------- main ----------------------------------------

if __name__ == "__main__":
    # PCmer(num_layers=2, num_heads=2, dim_model=32, ...); SelfAttention uses
    # dim_head=64 (module default) so nb_features = int(64 * ln(64)) = 266,
    # zero-padded (and masked in-kernel) to the lane-aligned 384.
    B, N, D = 2, 8, 32
    num_layers, H, Dh = 2, 2, 64
    M_real = int(Dh * math.log(Dh))                 # 266
    M_pad = ((M_real + 127) // 128) * 128           # 384

    key = jax.random.PRNGKey(0)
    params = init_params(key, num_layers, D, H, Dh, M_real, M_pad)
    phone = jax.random.normal(jax.random.fold_in(key, 999), (B, N, D), jnp.float32)

    fwd = jax.jit(lambda p, prm: pcmer_forward(p, prm, H=H, Dh=Dh, M_real=M_real))
    out = jax.block_until_ready(fwd(phone, params))
    assert out.shape == (B, N, D) and out.dtype == jnp.float32
    assert bool(jnp.all(jnp.isfinite(out)))
    print("KERNEL_OK")
</pallas_src>

<mosaic_0001>
module attributes {stable_mosaic.version = 11 : i64} {
  func.func @_pcmer_layer_kernel(%arg0: i32, %arg1: memref<1x8x32xf32, #tpu.memory_space<vmem>>, %arg2: memref<1x32xf32, #tpu.memory_space<vmem>>, %arg3: memref<1x32xf32, #tpu.memory_space<vmem>>, %arg4: memref<32x384xbf16, #tpu.memory_space<vmem>>, %arg5: memref<1x384xf32, #tpu.memory_space<vmem>>, %arg6: memref<384x64xbf16, #tpu.memory_space<vmem>>, %arg7: memref<128x32xbf16, #tpu.memory_space<vmem>>, %arg8: memref<1x32xf32, #tpu.memory_space<vmem>>, %arg9: memref<1x32xf32, #tpu.memory_space<vmem>>, %arg10: memref<1x32xf32, #tpu.memory_space<vmem>>, %arg11: memref<32x64xbf16, #tpu.memory_space<vmem>>, %arg12: memref<1x64xf32, #tpu.memory_space<vmem>>, %arg13: memref<32x64xbf16, #tpu.memory_space<vmem>>, %arg14: memref<1x64xf32, #tpu.memory_space<vmem>>, %arg15: memref<31x64xf32, #tpu.memory_space<vmem>>, %arg16: memref<1x64xf32, #tpu.memory_space<vmem>>, %arg17: memref<64x32xbf16, #tpu.memory_space<vmem>>, %arg18: memref<1x32xf32, #tpu.memory_space<vmem>>, %arg19: memref<1x8x32xf32, #tpu.memory_space<vmem>>) attributes {dimension_semantics = [#tpu.dimension_semantics<parallel>], iteration_bounds = array<i64: 2>, scalar_prefetch = 0 : i64, scratch_operands = 0 : i64, tpu.core_type = #tpu.core_type<tc>, window_params = [{transform_indices = @transform_0, window_bounds = array<i64: 1, 8, 32>}, {pipeline_mode = #tpu.pipeline_mode<synchronous>, transform_indices = @transform_1, window_bounds = array<i64: 1, 32>}, {pipeline_mode = #tpu.pipeline_mode<synchronous>, transform_indices = @transform_2, window_bounds = array<i64: 1, 32>}, {pipeline_mode = #tpu.pipeline_mode<synchronous>, transform_indices = @transform_3, window_bounds = array<i64: 32, 384>}, {pipeline_mode = #tpu.pipeline_mode<synchronous>, transform_indices = @transform_4, window_bounds = array<i64: 1, 384>}, {pipeline_mode = #tpu.pipeline_mode<synchronous>, transform_indices = @transform_5, window_bounds = array<i64: 384, 64>}, {pipeline_mode = #tpu.pipeline_mode<synchronous>, transform_indices = @transform_6, window_bounds = array<i64: 128, 32>}, {pipeline_mode = #tpu.pipeline_mode<synchronous>, transform_indices = @transform_7, window_bounds = array<i64: 1, 32>}, {pipeline_mode = #tpu.pipeline_mode<synchronous>, transform_indices = @transform_8, window_bounds = array<i64: 1, 32>}, {pipeline_mode = #tpu.pipeline_mode<synchronous>, transform_indices = @transform_9, window_bounds = array<i64: 1, 32>}, {pipeline_mode = #tpu.pipeline_mode<synchronous>, transform_indices = @transform_10, window_bounds = array<i64: 32, 64>}, {pipeline_mode = #tpu.pipeline_mode<synchronous>, transform_indices = @transform_11, window_bounds = array<i64: 1, 64>}, {pipeline_mode = #tpu.pipeline_mode<synchronous>, transform_indices = @transform_12, window_bounds = array<i64: 32, 64>}, {pipeline_mode = #tpu.pipeline_mode<synchronous>, transform_indices = @transform_13, window_bounds = array<i64: 1, 64>}, {pipeline_mode = #tpu.pipeline_mode<synchronous>, transform_indices = @transform_14, window_bounds = array<i64: 31, 64>}, {pipeline_mode = #tpu.pipeline_mode<synchronous>, transform_indices = @transform_15, window_bounds = array<i64: 1, 64>}, {pipeline_mode = #tpu.pipeline_mode<synchronous>, transform_indices = @transform_16, window_bounds = array<i64: 64, 32>}, {pipeline_mode = #tpu.pipeline_mode<synchronous>, transform_indices = @transform_17, window_bounds = array<i64: 1, 32>}, {transform_indices = @transform_18, window_bounds = array<i64: 1, 8, 32>}]} {
    %c0 = arith.constant 0 : index
    %c0_0 = arith.constant 0 : index
    %c0_1 = arith.constant 0 : index
    %0 = vector.load %arg1[%c0, %c0_0, %c0_1] : memref<1x8x32xf32, #tpu.memory_space<vmem>>, vector<1x8x32xf32>
    %1 = vector.shape_cast %0 : vector<1x8x32xf32> to vector<8x32xf32>
    %cst = arith.constant dense<0.000000e+00> : vector<8xf32>
    %2 = vector.multi_reduction <add>, %1, %cst [1] : vector<8x32xf32> to vector<8xf32>
    %3 = vector.shape_cast %2 : vector<8xf32> to vector<8x1xf32>
    %cst_2 = arith.constant 3.200000e+01 : f32
    %4 = vector.broadcast %cst_2 : f32 to vector<8x1xf32>
    %5 = arith.divf %3, %4 : vector<8x1xf32>
    %6 = vector.broadcast %5 : vector<8x1xf32> to vector<8x32xf32>
    %7 = arith.subf %1, %6 : vector<8x32xf32>
    %8 = arith.mulf %7, %7 : vector<8x32xf32>
    %cst_3 = arith.constant dense<0.000000e+00> : vector<8xf32>
    %9 = vector.multi_reduction <add>, %8, %cst_3 [1] : vector<8x32xf32> to vector<8xf32>
    %10 = vector.shape_cast %9 : vector<8xf32> to vector<8x1xf32>
    %cst_4 = arith.constant 3.200000e+01 : f32
    %11 = vector.broadcast %cst_4 : f32 to vector<8x1xf32>
    %12 = arith.divf %10, %11 : vector<8x1xf32>
    %13 = vector.broadcast %5 : vector<8x1xf32> to vector<8x32xf32>
    %14 = arith.subf %1, %13 : vector<8x32xf32>
    %cst_5 = arith.constant 9.99999974E-6 : f32
    %15 = vector.broadcast %cst_5 : f32 to vector<8x1xf32>
    %16 = arith.addf %12, %15 : vector<8x1xf32>
    %17 = math.rsqrt %16 : vector<8x1xf32>
    %18 = vector.broadcast %17 : vector<8x1xf32> to vector<8x32xf32>
    %19 = arith.mulf %14, %18 : vector<8x32xf32>
    %c0_6 = arith.constant 0 : index
    %c0_7 = arith.constant 0 : index
    %20 = vector.load %arg2[%c0_6, %c0_7] : memref<1x32xf32, #tpu.memory_space<vmem>>, vector<1x32xf32>
    %21 = vector.broadcast %20 : vector<1x32xf32> to vector<8x32xf32>
    %22 = arith.mulf %19, %21 : vector<8x32xf32>
    %c0_8 = arith.constant 0 : index
    %c0_9 = arith.constant 0 : index
    %23 = vector.load %arg3[%c0_8, %c0_9] : memref<1x32xf32, #tpu.memory_space<vmem>>, vector<1x32xf32>
    %24 = vector.broadcast %23 : vector<1x32xf32> to vector<8x32xf32>
    %25 = arith.addf %22, %24 : vector<8x32xf32>
    %26 = arith.truncf %25 : vector<8x32xf32> to vector<8x32xbf16>
    %c0_10 = arith.constant 0 : index
    %c0_11 = arith.constant 0 : index
    %27 = vector.load %arg4[%c0_10, %c0_11] : memref<32x384xbf16, #tpu.memory_space<vmem>>, vector<32x384xbf16>
    %cst_12 = arith.constant dense<0.000000e+00> : vector<8x384xf32>
    %28 = tpu.matmul %26, %27, %cst_12 {dimension_numbers = #tpu.dot_dimension_numbers<[1], [0], [0], [1], [0, 0, 1, 1], [], []>} : vector<8x32xbf16>, vector<32x384xbf16>, vector<8x384xf32> -> vector<8x384xf32>
    %c0_13 = arith.constant 0 : index
    %c0_14 = arith.constant 0 : index
    %29 = vector.load %arg5[%c0_13, %c0_14] : memref<1x384xf32, #tpu.memory_space<vmem>>, vector<1x384xf32>
    %30 = vector.broadcast %29 : vector<1x384xf32> to vector<8x384xf32>
    %31 = arith.addf %28, %30 : vector<8x384xf32>
    %c0_15 = arith.constant 0 : index
    %c0_16 = arith.constant 0 : index
    %32 = vector.load %arg6[%c0_15, %c0_16] : memref<384x64xbf16, #tpu.memory_space<vmem>>, vector<384x64xbf16>
    %33 = tpu.iota {dimensions = array<i32: 1>} : vector<1x384xi32>
    %c266_i32 = arith.constant 266 : i32
    %34 = vector.broadcast %c266_i32 : i32 to vector<1x384xi32>
    %35 = arith.cmpi slt, %33, %34 : vector<1x384xi32>
    %cst_17 = arith.constant 0.000000e+00 : f32
    %36 = vector.broadcast %cst_17 : f32 to vector<8x32xf32>
    %37 = vector.extract_strided_slice %31 {offsets = [0, 0], sizes = [8, 64], strides = [1, 1]} : vector<8x384xf32> to vector<8x64xf32>
    %38 = vector.extract_strided_slice %31 {offsets = [0, 128], sizes = [8, 64], strides = [1, 1]} : vector<8x384xf32> to vector<8x64xf32>
    %39 = vector.extract_strided_slice %31 {offsets = [0, 256], sizes = [8, 64], strides = [1, 1]} : vector<8x384xf32> to vector<8x64xf32>
    %cst_18 = arith.constant 0.353553385 : f32
    %40 = vector.broadcast %cst_18 : f32 to vector<8x64xf32>
    %41 = arith.mulf %37, %40 : vector<8x64xf32>
    %42 = arith.truncf %41 : vector<8x64xf32> to vector<8x64xbf16>
    %cst_19 = arith.constant dense<0.000000e+00> : vector<8x384xf32>
    %43 = tpu.matmul %42, %32, %cst_19 {dimension_numbers = #tpu.dot_dimension_numbers<[1], [1], [0], [0], [0, 0, 1, 0], [], []>} : vector<8x64xbf16>, vector<384x64xbf16>, vector<8x384xf32> -> vector<8x384xf32>
    %cst_20 = arith.constant 0.353553385 : f32
    %44 = vector.broadcast %cst_20 : f32 to vector<8x64xf32>
    %45 = arith.mulf %38, %44 : vector<8x64xf32>
    %46 = arith.truncf %45 : vector<8x64xf32> to vector<8x64xbf16>
    %cst_21 = arith.constant dense<0.000000e+00> : vector<8x384xf32>
    %47 = tpu.matmul %46, %32, %cst_21 {dimension_numbers = #tpu.dot_dimension_numbers<[1], [1], [0], [0], [0, 0, 1, 0], [], []>} : vector<8x64xbf16>, vector<384x64xbf16>, vector<8x384xf32> -> vector<8x384xf32>
    %48 = arith.mulf %37, %37 : vector<8x64xf32>
    %cst_22 = arith.constant dense<0.000000e+00> : vector<8xf32>
    %49 = vector.multi_reduction <add>, %48, %cst_22 [1] : vector<8x64xf32> to vector<8xf32>
    %50 = vector.shape_cast %49 : vector<8xf32> to vector<8x1xf32>
    %cst_23 = arith.constant 6.250000e-02 : f32
    %51 = vector.broadcast %cst_23 : f32 to vector<8x1xf32>
    %52 = arith.mulf %50, %51 : vector<8x1xf32>
    %53 = arith.mulf %38, %38 : vector<8x64xf32>
    %cst_24 = arith.constant dense<0.000000e+00> : vector<8xf32>
    %54 = vector.multi_reduction <add>, %53, %cst_24 [1] : vector<8x64xf32> to vector<8xf32>
    %55 = vector.shape_cast %54 : vector<8xf32> to vector<8x1xf32>
    %cst_25 = arith.constant 6.250000e-02 : f32
    %56 = vector.broadcast %cst_25 : f32 to vector<8x1xf32>
    %57 = arith.mulf %55, %56 : vector<8x1xf32>
    %cst_26 = arith.constant 0xFF800000 : f32
    %58 = vector.shape_cast %35 : vector<1x384xi1> to vector<1x384xi1>
    %59 = vector.broadcast %58 : vector<1x384xi1> to vector<8x384xi1>
    %60 = vector.broadcast %cst_26 : f32 to vector<8x384xf32>
    %61 = arith.select %59, %43, %60 : vector<8x384xi1>, vector<8x384xf32>
    %cst_27 = arith.constant dense<0xFF800000> : vector<8xf32>
    %62 = vector.multi_reduction <maximumf>, %61, %cst_27 [1] : vector<8x384xf32> to vector<8xf32>
    %63 = vector.shape_cast %62 : vector<8xf32> to vector<8x1xf32>
    %64 = vector.broadcast %52 : vector<8x1xf32> to vector<8x384xf32>
    %65 = arith.subf %43, %64 : vector<8x384xf32>
    %66 = vector.broadcast %63 : vector<8x1xf32> to vector<8x384xf32>
    %67 = arith.subf %65, %66 : vector<8x384xf32>
    %68 = math.exp %67 : vector<8x384xf32>
    %cst_28 = arith.constant 9.99999974E-5 : f32
    %69 = vector.broadcast %cst_28 : f32 to vector<8x384xf32>
    %70 = arith.addf %68, %69 : vector<8x384xf32>
    %cst_29 = arith.constant 0.0613139346 : f32
    %71 = vector.broadcast %cst_29 : f32 to vector<8x384xf32>
    %72 = arith.mulf %71, %70 : vector<8x384xf32>
    %cst_30 = arith.constant 0.000000e+00 : f32
    %73 = vector.shape_cast %35 : vector<1x384xi1> to vector<1x384xi1>
    %74 = vector.broadcast %73 : vector<1x384xi1> to vector<8x384xi1>
    %75 = vector.broadcast %cst_30 : f32 to vector<8x384xf32>
    %76 = arith.select %74, %72, %75 : vector<8x384xi1>, vector<8x384xf32>
    %77 = vector.broadcast %57 : vector<8x1xf32> to vector<8x384xf32>
    %78 = arith.subf %47, %77 : vector<8x384xf32>
    %cst_31 = arith.constant 9.99999974E-5 : f32
    %79 = vector.broadcast %cst_31 : f32 to vector<8x384xf32>
    %80 = arith.addf %78, %79 : vector<8x384xf32>
    %81 = math.exp %80 : vector<8x384xf32>
    %cst_32 = arith.constant 0.0613139346 : f32
    %82 = vector.broadcast %cst_32 : f32 to vector<8x384xf32>
    %83 = arith.mulf %82, %81 : vector<8x384xf32>
    %cst_33 = arith.constant 0.000000e+00 : f32
    %84 = vector.shape_cast %35 : vector<1x384xi1> to vector<1x384xi1>
    %85 = vector.broadcast %84 : vector<1x384xi1> to vector<8x384xi1>
    %86 = vector.broadcast %cst_33 : f32 to vector<8x384xf32>
    %87 = arith.select %85, %83, %86 : vector<8x384xi1>, vector<8x384xf32>
    %88 = arith.truncf %87 : vector<8x384xf32> to vector<8x384xbf16>
    %89 = arith.truncf %39 : vector<8x64xf32> to vector<8x64xbf16>
    %cst_34 = arith.constant dense<0.000000e+00> : vector<384x64xf32>
    %90 = tpu.matmul %88, %89, %cst_34 {dimension_numbers = #tpu.dot_dimension_numbers<[0], [0], [1], [1], [0, 1, 1, 1], [], []>} : vector<8x384xbf16>, vector<8x64xbf16>, vector<384x64xf32> -> vector<384x64xf32>
    %cst_35 = arith.constant dense<0.000000e+00> : vector<384xf32>
    %91 = vector.multi_reduction <add>, %87, %cst_35 [0] : vector<8x384xf32> to vector<384xf32>
    %92 = vector.shape_cast %91 : vector<384xf32> to vector<1x384xf32>
    %93 = vector.broadcast %92 : vector<1x384xf32> to vector<8x384xf32>
    %94 = arith.mulf %76, %93 : vector<8x384xf32>
    %cst_36 = arith.constant dense<0.000000e+00> : vector<8xf32>
    %95 = vector.multi_reduction <add>, %94, %cst_36 [1] : vector<8x384xf32> to vector<8xf32>
    %96 = vector.shape_cast %95 : vector<8xf32> to vector<8x1xf32>
    %cst_37 = arith.constant 9.99999993E-9 : f32
    %97 = vector.broadcast %cst_37 : f32 to vector<8x1xf32>
    %98 = arith.addf %96, %97 : vector<8x1xf32>
    %99 = tpu.reciprocal %98 {approx = true} : vector<8x1xf32> -> vector<8x1xf32>
    %100 = arith.truncf %76 : vector<8x384xf32> to vector<8x384xbf16>
    %101 = arith.truncf %90 : vector<384x64xf32> to vector<384x64xbf16>
    %cst_38 = arith.constant dense<0.000000e+00> : vector<8x64xf32>
    %102 = tpu.matmul %100, %101, %cst_38 {dimension_numbers = #tpu.dot_dimension_numbers<[1], [0], [0], [1], [0, 0, 1, 1], [], []>} : vector<8x384xbf16>, vector<384x64xbf16>, vector<8x64xf32> -> vector<8x64xf32>
    %103 = vector.broadcast %99 : vector<8x1xf32> to vector<8x64xf32>
    %104 = arith.mulf %102, %103 : vector<8x64xf32>
    %105 = arith.truncf %104 : vector<8x64xf32> to vector<8x64xbf16>
    %c0_39 = arith.constant 0 : index
    %c0_40 = arith.constant 0 : index
    %106 = vector.load %arg7[%c0_39, %c0_40] : memref<128x32xbf16, #tpu.memory_space<vmem>>, vector<64x32xbf16>
    %cst_41 = arith.constant dense<0.000000e+00> : vector<8x32xf32>
    %107 = tpu.matmul %105, %106, %cst_41 {dimension_numbers = #tpu.dot_dimension_numbers<[1], [0], [0], [1], [0, 0, 1, 1], [], []>} : vector<8x64xbf16>, vector<64x32xbf16>, vector<8x32xf32> -> vector<8x32xf32>
    %108 = arith.addf %36, %107 : vector<8x32xf32>
    %109 = vector.extract_strided_slice %31 {offsets = [0, 64], sizes = [8, 64], strides = [1, 1]} : vector<8x384xf32> to vector<8x64xf32>
    %110 = vector.extract_strided_slice %31 {offsets = [0, 192], sizes = [8, 64], strides = [1, 1]} : vector<8x384xf32> to vector<8x64xf32>
    %111 = vector.extract_strided_slice %31 {offsets = [0, 320], sizes = [8, 64], strides = [1, 1]} : vector<8x384xf32> to vector<8x64xf32>
    %cst_42 = arith.constant 0.353553385 : f32
    %112 = vector.broadcast %cst_42 : f32 to vector<8x64xf32>
    %113 = arith.mulf %109, %112 : vector<8x64xf32>
    %114 = arith.truncf %113 : vector<8x64xf32> to vector<8x64xbf16>
    %cst_43 = arith.constant dense<0.000000e+00> : vector<8x384xf32>
    %115 = tpu.matmul %114, %32, %cst_43 {dimension_numbers = #tpu.dot_dimension_numbers<[1], [1], [0], [0], [0, 0, 1, 0], [], []>} : vector<8x64xbf16>, vector<384x64xbf16>, vector<8x384xf32> -> vector<8x384xf32>
    %cst_44 = arith.constant 0.353553385 : f32
    %116 = vector.broadcast %cst_44 : f32 to vector<8x64xf32>
    %117 = arith.mulf %110, %116 : vector<8x64xf32>
    %118 = arith.truncf %117 : vector<8x64xf32> to vector<8x64xbf16>
    %cst_45 = arith.constant dense<0.000000e+00> : vector<8x384xf32>
    %119 = tpu.matmul %118, %32, %cst_45 {dimension_numbers = #tpu.dot_dimension_numbers<[1], [1], [0], [0], [0, 0, 1, 0], [], []>} : vector<8x64xbf16>, vector<384x64xbf16>, vector<8x384xf32> -> vector<8x384xf32>
    %120 = arith.mulf %109, %109 : vector<8x64xf32>
    %cst_46 = arith.constant dense<0.000000e+00> : vector<8xf32>
    %121 = vector.multi_reduction <add>, %120, %cst_46 [1] : vector<8x64xf32> to vector<8xf32>
    %122 = vector.shape_cast %121 : vector<8xf32> to vector<8x1xf32>
    %cst_47 = arith.constant 6.250000e-02 : f32
    %123 = vector.broadcast %cst_47 : f32 to vector<8x1xf32>
    %124 = arith.mulf %122, %123 : vector<8x1xf32>
    %125 = arith.mulf %110, %110 : vector<8x64xf32>
    %cst_48 = arith.constant dense<0.000000e+00> : vector<8xf32>
    %126 = vector.multi_reduction <add>, %125, %cst_48 [1] : vector<8x64xf32> to vector<8xf32>
    %127 = vector.shape_cast %126 : vector<8xf32> to vector<8x1xf32>
    %cst_49 = arith.constant 6.250000e-02 : f32
    %128 = vector.broadcast %cst_49 : f32 to vector<8x1xf32>
    %129 = arith.mulf %127, %128 : vector<8x1xf32>
    %cst_50 = arith.constant 0xFF800000 : f32
    %130 = vector.shape_cast %35 : vector<1x384xi1> to vector<1x384xi1>
    %131 = vector.broadcast %130 : vector<1x384xi1> to vector<8x384xi1>
    %132 = vector.broadcast %cst_50 : f32 to vector<8x384xf32>
    %133 = arith.select %131, %115, %132 : vector<8x384xi1>, vector<8x384xf32>
    %cst_51 = arith.constant dense<0xFF800000> : vector<8xf32>
    %134 = vector.multi_reduction <maximumf>, %133, %cst_51 [1] : vector<8x384xf32> to vector<8xf32>
    %135 = vector.shape_cast %134 : vector<8xf32> to vector<8x1xf32>
    %136 = vector.broadcast %124 : vector<8x1xf32> to vector<8x384xf32>
    %137 = arith.subf %115, %136 : vector<8x384xf32>
    %138 = vector.broadcast %135 : vector<8x1xf32> to vector<8x384xf32>
    %139 = arith.subf %137, %138 : vector<8x384xf32>
    %140 = math.exp %139 : vector<8x384xf32>
    %cst_52 = arith.constant 9.99999974E-5 : f32
    %141 = vector.broadcast %cst_52 : f32 to vector<8x384xf32>
    %142 = arith.addf %140, %141 : vector<8x384xf32>
    %cst_53 = arith.constant 0.0613139346 : f32
    %143 = vector.broadcast %cst_53 : f32 to vector<8x384xf32>
    %144 = arith.mulf %143, %142 : vector<8x384xf32>
    %cst_54 = arith.constant 0.000000e+00 : f32
    %145 = vector.shape_cast %35 : vector<1x384xi1> to vector<1x384xi1>
    %146 = vector.broadcast %145 : vector<1x384xi1> to vector<8x384xi1>
    %147 = vector.broadcast %cst_54 : f32 to vector<8x384xf32>
    %148 = arith.select %146, %144, %147 : vector<8x384xi1>, vector<8x384xf32>
    %149 = vector.broadcast %129 : vector<8x1xf32> to vector<8x384xf32>
    %150 = arith.subf %119, %149 : vector<8x384xf32>
    %cst_55 = arith.constant 9.99999974E-5 : f32
    %151 = vector.broadcast %cst_55 : f32 to vector<8x384xf32>
    %152 = arith.addf %150, %151 : vector<8x384xf32>
    %153 = math.exp %152 : vector<8x384xf32>
    %cst_56 = arith.constant 0.0613139346 : f32
    %154 = vector.broadcast %cst_56 : f32 to vector<8x384xf32>
    %155 = arith.mulf %154, %153 : vector<8x384xf32>
    %cst_57 = arith.constant 0.000000e+00 : f32
    %156 = vector.shape_cast %35 : vector<1x384xi1> to vector<1x384xi1>
    %157 = vector.broadcast %156 : vector<1x384xi1> to vector<8x384xi1>
    %158 = vector.broadcast %cst_57 : f32 to vector<8x384xf32>
    %159 = arith.select %157, %155, %158 : vector<8x384xi1>, vector<8x384xf32>
    %160 = arith.truncf %159 : vector<8x384xf32> to vector<8x384xbf16>
    %161 = arith.truncf %111 : vector<8x64xf32> to vector<8x64xbf16>
    %cst_58 = arith.constant dense<0.000000e+00> : vector<384x64xf32>
    %162 = tpu.matmul %160, %161, %cst_58 {dimension_numbers = #tpu.dot_dimension_numbers<[0], [0], [1], [1], [0, 1, 1, 1], [], []>} : vector<8x384xbf16>, vector<8x64xbf16>, vector<384x64xf32> -> vector<384x64xf32>
    %cst_59 = arith.constant dense<0.000000e+00> : vector<384xf32>
    %163 = vector.multi_reduction <add>, %159, %cst_59 [0] : vector<8x384xf32> to vector<384xf32>
    %164 = vector.shape_cast %163 : vector<384xf32> to vector<1x384xf32>
    %165 = vector.broadcast %164 : vector<1x384xf32> to vector<8x384xf32>
    %166 = arith.mulf %148, %165 : vector<8x384xf32>
    %cst_60 = arith.constant dense<0.000000e+00> : vector<8xf32>
    %167 = vector.multi_reduction <add>, %166, %cst_60 [1] : vector<8x384xf32> to vector<8xf32>
    %168 = vector.shape_cast %167 : vector<8xf32> to vector<8x1xf32>
    %cst_61 = arith.constant 9.99999993E-9 : f32
    %169 = vector.broadcast %cst_61 : f32 to vector<8x1xf32>
    %170 = arith.addf %168, %169 : vector<8x1xf32>
    %171 = tpu.reciprocal %170 {approx = true} : vector<8x1xf32> -> vector<8x1xf32>
    %172 = arith.truncf %148 : vector<8x384xf32> to vector<8x384xbf16>
    %173 = arith.truncf %162 : vector<384x64xf32> to vector<384x64xbf16>
    %cst_62 = arith.constant dense<0.000000e+00> : vector<8x64xf32>
    %174 = tpu.matmul %172, %173, %cst_62 {dimension_numbers = #tpu.dot_dimension_numbers<[1], [0], [0], [1], [0, 0, 1, 1], [], []>} : vector<8x384xbf16>, vector<384x64xbf16>, vector<8x64xf32> -> vector<8x64xf32>
    %175 = vector.broadcast %171 : vector<8x1xf32> to vector<8x64xf32>
    %176 = arith.mulf %174, %175 : vector<8x64xf32>
    %177 = arith.truncf %176 : vector<8x64xf32> to vector<8x64xbf16>
    %c64 = arith.constant 64 : index
    %c0_63 = arith.constant 0 : index
    %178 = vector.load %arg7[%c64, %c0_63] : memref<128x32xbf16, #tpu.memory_space<vmem>>, vector<64x32xbf16>
    %cst_64 = arith.constant dense<0.000000e+00> : vector<8x32xf32>
    %179 = tpu.matmul %177, %178, %cst_64 {dimension_numbers = #tpu.dot_dimension_numbers<[1], [0], [0], [1], [0, 0, 1, 1], [], []>} : vector<8x64xbf16>, vector<64x32xbf16>, vector<8x32xf32> -> vector<8x32xf32>
    %180 = arith.addf %108, %179 : vector<8x32xf32>
    %181 = arith.addf %1, %180 : vector<8x32xf32>
    %c0_65 = arith.constant 0 : index
    %c0_66 = arith.constant 0 : index
    %182 = vector.load %arg8[%c0_65, %c0_66] : memref<1x32xf32, #tpu.memory_space<vmem>>, vector<1x32xf32>
    %183 = vector.broadcast %182 : vector<1x32xf32> to vector<8x32xf32>
    %184 = arith.addf %181, %183 : vector<8x32xf32>
    %cst_67 = arith.constant dense<0.000000e+00> : vector<8xf32>
    %185 = vector.multi_reduction <add>, %184, %cst_67 [1] : vector<8x32xf32> to vector<8xf32>
    %186 = vector.shape_cast %185 : vector<8xf32> to vector<8x1xf32>
    %cst_68 = arith.constant 3.200000e+01 : f32
    %187 = vector.broadcast %cst_68 : f32 to vector<8x1xf32>
    %188 = arith.divf %186, %187 : vector<8x1xf32>
    %189 = vector.broadcast %188 : vector<8x1xf32> to vector<8x32xf32>
    %190 = arith.subf %184, %189 : vector<8x32xf32>
    %191 = arith.mulf %190, %190 : vector<8x32xf32>
    %cst_69 = arith.constant dense<0.000000e+00> : vector<8xf32>
    %192 = vector.multi_reduction <add>, %191, %cst_69 [1] : vector<8x32xf32> to vector<8xf32>
    %193 = vector.shape_cast %192 : vector<8xf32> to vector<8x1xf32>
    %cst_70 = arith.constant 3.200000e+01 : f32
    %194 = vector.broadcast %cst_70 : f32 to vector<8x1xf32>
    %195 = arith.divf %193, %194 : vector<8x1xf32>
    %196 = vector.broadcast %188 : vector<8x1xf32> to vector<8x32xf32>
    %197 = arith.subf %184, %196 : vector<8x32xf32>
    %cst_71 = arith.constant 9.99999974E-6 : f32
    %198 = vector.broadcast %cst_71 : f32 to vector<8x1xf32>
    %199 = arith.addf %195, %198 : vector<8x1xf32>
    %200 = math.rsqrt %199 : vector<8x1xf32>
    %201 = vector.broadcast %200 : vector<8x1xf32> to vector<8x32xf32>
    %202 = arith.mulf %197, %201 : vector<8x32xf32>
    %c0_72 = arith.constant 0 : index
    %c0_73 = arith.constant 0 : index
    %203 = vector.load %arg9[%c0_72, %c0_73] : memref<1x32xf32, #tpu.memory_space<vmem>>, vector<1x32xf32>
    %204 = vector.broadcast %203 : vector<1x32xf32> to vector<8x32xf32>
    %205 = arith.mulf %202, %204 : vector<8x32xf32>
    %c0_74 = arith.constant 0 : index
    %c0_75 = arith.constant 0 : index
    %206 = vector.load %arg10[%c0_74, %c0_75] : memref<1x32xf32, #tpu.memory_space<vmem>>, vector<1x32xf32>
    %207 = vector.broadcast %206 : vector<1x32xf32> to vector<8x32xf32>
    %208 = arith.addf %205, %207 : vector<8x32xf32>
    %209 = arith.truncf %208 : vector<8x32xf32> to vector<8x32xbf16>
    %c0_76 = arith.constant 0 : index
    %c0_77 = arith.constant 0 : index
    %210 = vector.load %arg11[%c0_76, %c0_77] : memref<32x64xbf16, #tpu.memory_space<vmem>>, vector<32x64xbf16>
    %cst_78 = arith.constant dense<0.000000e+00> : vector<8x64xf32>
    %211 = tpu.matmul %209, %210, %cst_78 {dimension_numbers = #tpu.dot_dimension_numbers<[1], [0], [0], [1], [0, 0, 1, 1], [], []>} : vector<8x32xbf16>, vector<32x64xbf16>, vector<8x64xf32> -> vector<8x64xf32>
    %c0_79 = arith.constant 0 : index
    %c0_80 = arith.constant 0 : index
    %212 = vector.load %arg12[%c0_79, %c0_80] : memref<1x64xf32, #tpu.memory_space<vmem>>, vector<1x64xf32>
    %213 = vector.broadcast %212 : vector<1x64xf32> to vector<8x64xf32>
    %214 = arith.addf %211, %213 : vector<8x64xf32>
    %c0_81 = arith.constant 0 : index
    %c0_82 = arith.constant 0 : index
    %215 = vector.load %arg13[%c0_81, %c0_82] : memref<32x64xbf16, #tpu.memory_space<vmem>>, vector<32x64xbf16>
    %cst_83 = arith.constant dense<0.000000e+00> : vector<8x64xf32>
    %216 = tpu.matmul %209, %215, %cst_83 {dimension_numbers = #tpu.dot_dimension_numbers<[1], [0], [0], [1], [0, 0, 1, 1], [], []>} : vector<8x32xbf16>, vector<32x64xbf16>, vector<8x64xf32> -> vector<8x64xf32>
    %c0_84 = arith.constant 0 : index
    %c0_85 = arith.constant 0 : index
    %217 = vector.load %arg14[%c0_84, %c0_85] : memref<1x64xf32, #tpu.memory_space<vmem>>, vector<1x64xf32>
    %218 = vector.broadcast %217 : vector<1x64xf32> to vector<8x64xf32>
    %219 = arith.addf %216, %218 : vector<8x64xf32>
    %220 = arith.negf %219 : vector<8x64xf32>
    %221 = math.exp %220 : vector<8x64xf32>
    %cst_86 = arith.constant 1.000000e+00 : f32
    %222 = vector.broadcast %cst_86 : f32 to vector<8x64xf32>
    %223 = arith.addf %222, %221 : vector<8x64xf32>
    %224 = arith.divf %222, %223 : vector<8x64xf32>
    %225 = arith.mulf %214, %224 : vector<8x64xf32>
    %c0_87 = arith.constant 0 : index
    %c0_88 = arith.constant 0 : index
    %226 = vector.load %arg15[%c0_87, %c0_88] : memref<31x64xf32, #tpu.memory_space<vmem>>, vector<31x64xf32>
    %227 = tpu.iota {dimensions = array<i32: 0>} : vector<8x1xi32>
    %cst_89 = arith.constant 0.000000e+00 : f32
    %228 = vector.broadcast %cst_89 : f32 to vector<8x64xf32>
    %c7_i32 = arith.constant 7 : i32
    %229 = tpu.dynamic_rotate %225 by %c7_i32 dim 0 : vector<8x64xf32>, i32 -> vector<8x64xf32>
    %c-7_i32 = arith.constant -7 : i32
    %230 = vector.broadcast %c-7_i32 : i32 to vector<8x1xi32>
    %231 = arith.addi %227, %230 : vector<8x1xi32>
    %c0_i32 = arith.constant 0 : i32
    %232 = vector.broadcast %c0_i32 : i32 to vector<8x1xi32>
    %233 = arith.cmpi sge, %231, %232 : vector<8x1xi32>
    %c-7_i32_90 = arith.constant -7 : i32
    %234 = vector.broadcast %c-7_i32_90 : i32 to vector<8x1xi32>
    %235 = arith.addi %227, %234 : vector<8x1xi32>
    %c8_i32 = arith.constant 8 : i32
    %236 = vector.broadcast %c8_i32 : i32 to vector<8x1xi32>
    %237 = arith.cmpi slt, %235, %236 : vector<8x1xi32>
    %238 = arith.andi %233, %237 : vector<8x1xi1>
    %cst_91 = arith.constant 0.000000e+00 : f32
    %239 = vector.shape_cast %238 : vector<8x1xi1> to vector<8x1xi1>
    %240 = vector.broadcast %239 : vector<8x1xi1> to vector<8x64xi1>
    %241 = vector.broadcast %cst_91 : f32 to vector<8x64xf32>
    %242 = arith.select %240, %229, %241 : vector<8x64xi1>, vector<8x64xf32>
    %243 = vector.extract_strided_slice %226 {offsets = [8, 0], sizes = [1, 64], strides = [1, 1]} : vector<31x64xf32> to vector<1x64xf32>
    %244 = vector.broadcast %243 : vector<1x64xf32> to vector<8x64xf32>
    %245 = arith.mulf %242, %244 : vector<8x64xf32>
    %246 = arith.addf %228, %245 : vector<8x64xf32>
    %c6_i32 = arith.constant 6 : i32
    %247 = tpu.dynamic_rotate %225 by %c6_i32 dim 0 : vector<8x64xf32>, i32 -> vector<8x64xf32>
    %c-6_i32 = arith.constant -6 : i32
    %248 = vector.broadcast %c-6_i32 : i32 to vector<8x1xi32>
    %249 = arith.addi %227, %248 : vector<8x1xi32>
    %c0_i32_92 = arith.constant 0 : i32
    %250 = vector.broadcast %c0_i32_92 : i32 to vector<8x1xi32>
    %251 = arith.cmpi sge, %249, %250 : vector<8x1xi32>
    %c-6_i32_93 = arith.constant -6 : i32
    %252 = vector.broadcast %c-6_i32_93 : i32 to vector<8x1xi32>
    %253 = arith.addi %227, %252 : vector<8x1xi32>
    %c8_i32_94 = arith.constant 8 : i32
    %254 = vector.broadcast %c8_i32_94 : i32 to vector<8x1xi32>
    %255 = arith.cmpi slt, %253, %254 : vector<8x1xi32>
    %256 = arith.andi %251, %255 : vector<8x1xi1>
    %cst_95 = arith.constant 0.000000e+00 : f32
    %257 = vector.shape_cast %256 : vector<8x1xi1> to vector<8x1xi1>
    %258 = vector.broadcast %257 : vector<8x1xi1> to vector<8x64xi1>
    %259 = vector.broadcast %cst_95 : f32 to vector<8x64xf32>
    %260 = arith.select %258, %247, %259 : vector<8x64xi1>, vector<8x64xf32>
    %261 = vector.extract_strided_slice %226 {offsets = [9, 0], sizes = [1, 64], strides = [1, 1]} : vector<31x64xf32> to vector<1x64xf32>
    %262 = vector.broadcast %261 : vector<1x64xf32> to vector<8x64xf32>
    %263 = arith.mulf %260, %262 : vector<8x64xf32>
    %264 = arith.addf %246, %263 : vector<8x64xf32>
    %c5_i32 = arith.constant 5 : i32
    %265 = tpu.dynamic_rotate %225 by %c5_i32 dim 0 : vector<8x64xf32>, i32 -> vector<8x64xf32>
    %c-5_i32 = arith.constant -5 : i32
    %266 = vector.broadcast %c-5_i32 : i32 to vector<8x1xi32>
    %267 = arith.addi %227, %266 : vector<8x1xi32>
    %c0_i32_96 = arith.constant 0 : i32
    %268 = vector.broadcast %c0_i32_96 : i32 to vector<8x1xi32>
    %269 = arith.cmpi sge, %267, %268 : vector<8x1xi32>
    %c-5_i32_97 = arith.constant -5 : i32
    %270 = vector.broadcast %c-5_i32_97 : i32 to vector<8x1xi32>
    %271 = arith.addi %227, %270 : vector<8x1xi32>
    %c8_i32_98 = arith.constant 8 : i32
    %272 = vector.broadcast %c8_i32_98 : i32 to vector<8x1xi32>
    %273 = arith.cmpi slt, %271, %272 : vector<8x1xi32>
    %274 = arith.andi %269, %273 : vector<8x1xi1>
    %cst_99 = arith.constant 0.000000e+00 : f32
    %275 = vector.shape_cast %274 : vector<8x1xi1> to vector<8x1xi1>
    %276 = vector.broadcast %275 : vector<8x1xi1> to vector<8x64xi1>
    %277 = vector.broadcast %cst_99 : f32 to vector<8x64xf32>
    %278 = arith.select %276, %265, %277 : vector<8x64xi1>, vector<8x64xf32>
    %279 = vector.extract_strided_slice %226 {offsets = [10, 0], sizes = [1, 64], strides = [1, 1]} : vector<31x64xf32> to vector<1x64xf32>
    %280 = vector.broadcast %279 : vector<1x64xf32> to vector<8x64xf32>
    %281 = arith.mulf %278, %280 : vector<8x64xf32>
    %282 = arith.addf %264, %281 : vector<8x64xf32>
    %c4_i32 = arith.constant 4 : i32
    %283 = tpu.dynamic_rotate %225 by %c4_i32 dim 0 : vector<8x64xf32>, i32 -> vector<8x64xf32>
    %c-4_i32 = arith.constant -4 : i32
    %284 = vector.broadcast %c-4_i32 : i32 to vector<8x1xi32>
    %285 = arith.addi %227, %284 : vector<8x1xi32>
    %c0_i32_100 = arith.constant 0 : i32
    %286 = vector.broadcast %c0_i32_100 : i32 to vector<8x1xi32>
    %287 = arith.cmpi sge, %285, %286 : vector<8x1xi32>
    %c-4_i32_101 = arith.constant -4 : i32
    %288 = vector.broadcast %c-4_i32_101 : i32 to vector<8x1xi32>
    %289 = arith.addi %227, %288 : vector<8x1xi32>
    %c8_i32_102 = arith.constant 8 : i32
    %290 = vector.broadcast %c8_i32_102 : i32 to vector<8x1xi32>
    %291 = arith.cmpi slt, %289, %290 : vector<8x1xi32>
    %292 = arith.andi %287, %291 : vector<8x1xi1>
    %cst_103 = arith.constant 0.000000e+00 : f32
    %293 = vector.shape_cast %292 : vector<8x1xi1> to vector<8x1xi1>
    %294 = vector.broadcast %293 : vector<8x1xi1> to vector<8x64xi1>
    %295 = vector.broadcast %cst_103 : f32 to vector<8x64xf32>
    %296 = arith.select %294, %283, %295 : vector<8x64xi1>, vector<8x64xf32>
    %297 = vector.extract_strided_slice %226 {offsets = [11, 0], sizes = [1, 64], strides = [1, 1]} : vector<31x64xf32> to vector<1x64xf32>
    %298 = vector.broadcast %297 : vector<1x64xf32> to vector<8x64xf32>
    %299 = arith.mulf %296, %298 : vector<8x64xf32>
    %300 = arith.addf %282, %299 : vector<8x64xf32>
    %c3_i32 = arith.constant 3 : i32
    %301 = tpu.dynamic_rotate %225 by %c3_i32 dim 0 : vector<8x64xf32>, i32 -> vector<8x64xf32>
    %c-3_i32 = arith.constant -3 : i32
    %302 = vector.broadcast %c-3_i32 : i32 to vector<8x1xi32>
    %303 = arith.addi %227, %302 : vector<8x1xi32>
    %c0_i32_104 = arith.constant 0 : i32
    %304 = vector.broadcast %c0_i32_104 : i32 to vector<8x1xi32>
    %305 = arith.cmpi sge, %303, %304 : vector<8x1xi32>
    %c-3_i32_105 = arith.constant -3 : i32
    %306 = vector.broadcast %c-3_i32_105 : i32 to vector<8x1xi32>
    %307 = arith.addi %227, %306 : vector<8x1xi32>
    %c8_i32_106 = arith.constant 8 : i32
    %308 = vector.broadcast %c8_i32_106 : i32 to vector<8x1xi32>
    %309 = arith.cmpi slt, %307, %308 : vector<8x1xi32>
    %310 = arith.andi %305, %309 : vector<8x1xi1>
    %cst_107 = arith.constant 0.000000e+00 : f32
    %311 = vector.shape_cast %310 : vector<8x1xi1> to vector<8x1xi1>
    %312 = vector.broadcast %311 : vector<8x1xi1> to vector<8x64xi1>
    %313 = vector.broadcast %cst_107 : f32 to vector<8x64xf32>
    %314 = arith.select %312, %301, %313 : vector<8x64xi1>, vector<8x64xf32>
    %315 = vector.extract_strided_slice %226 {offsets = [12, 0], sizes = [1, 64], strides = [1, 1]} : vector<31x64xf32> to vector<1x64xf32>
    %316 = vector.broadcast %315 : vector<1x64xf32> to vector<8x64xf32>
    %317 = arith.mulf %314, %316 : vector<8x64xf32>
    %318 = arith.addf %300, %317 : vector<8x64xf32>
    %c2_i32 = arith.constant 2 : i32
    %319 = tpu.dynamic_rotate %225 by %c2_i32 dim 0 : vector<8x64xf32>, i32 -> vector<8x64xf32>
    %c-2_i32 = arith.constant -2 : i32
    %320 = vector.broadcast %c-2_i32 : i32 to vector<8x1xi32>
    %321 = arith.addi %227, %320 : vector<8x1xi32>
    %c0_i32_108 = arith.constant 0 : i32
    %322 = vector.broadcast %c0_i32_108 : i32 to vector<8x1xi32>
    %323 = arith.cmpi sge, %321, %322 : vector<8x1xi32>
    %c-2_i32_109 = arith.constant -2 : i32
    %324 = vector.broadcast %c-2_i32_109 : i32 to vector<8x1xi32>
    %325 = arith.addi %227, %324 : vector<8x1xi32>
    %c8_i32_110 = arith.constant 8 : i32
    %326 = vector.broadcast %c8_i32_110 : i32 to vector<8x1xi32>
    %327 = arith.cmpi slt, %325, %326 : vector<8x1xi32>
    %328 = arith.andi %323, %327 : vector<8x1xi1>
    %cst_111 = arith.constant 0.000000e+00 : f32
    %329 = vector.shape_cast %328 : vector<8x1xi1> to vector<8x1xi1>
    %330 = vector.broadcast %329 : vector<8x1xi1> to vector<8x64xi1>
    %331 = vector.broadcast %cst_111 : f32 to vector<8x64xf32>
    %332 = arith.select %330, %319, %331 : vector<8x64xi1>, vector<8x64xf32>
    %333 = vector.extract_strided_slice %226 {offsets = [13, 0], sizes = [1, 64], strides = [1, 1]} : vector<31x64xf32> to vector<1x64xf32>
    %334 = vector.broadcast %333 : vector<1x64xf32> to vector<8x64xf32>
    %335 = arith.mulf %332, %334 : vector<8x64xf32>
    %336 = arith.addf %318, %335 : vector<8x64xf32>
    %c1_i32 = arith.constant 1 : i32
    %337 = tpu.dynamic_rotate %225 by %c1_i32 dim 0 : vector<8x64xf32>, i32 -> vector<8x64xf32>
    %c-1_i32 = arith.constant -1 : i32
    %338 = vector.broadcast %c-1_i32 : i32 to vector<8x1xi32>
    %339 = arith.addi %227, %338 : vector<8x1xi32>
    %c0_i32_112 = arith.constant 0 : i32
    %340 = vector.broadcast %c0_i32_112 : i32 to vector<8x1xi32>
    %341 = arith.cmpi sge, %339, %340 : vector<8x1xi32>
    %c-1_i32_113 = arith.constant -1 : i32
    %342 = vector.broadcast %c-1_i32_113 : i32 to vector<8x1xi32>
    %343 = arith.addi %227, %342 : vector<8x1xi32>
    %c8_i32_114 = arith.constant 8 : i32
    %344 = vector.broadcast %c8_i32_114 : i32 to vector<8x1xi32>
    %345 = arith.cmpi slt, %343, %344 : vector<8x1xi32>
    %346 = arith.andi %341, %345 : vector<8x1xi1>
    %cst_115 = arith.constant 0.000000e+00 : f32
    %347 = vector.shape_cast %346 : vector<8x1xi1> to vector<8x1xi1>
    %348 = vector.broadcast %347 : vector<8x1xi1> to vector<8x64xi1>
    %349 = vector.broadcast %cst_115 : f32 to vector<8x64xf32>
    %350 = arith.select %348, %337, %349 : vector<8x64xi1>, vector<8x64xf32>
    %351 = vector.extract_strided_slice %226 {offsets = [14, 0], sizes = [1, 64], strides = [1, 1]} : vector<31x64xf32> to vector<1x64xf32>
    %352 = vector.broadcast %351 : vector<1x64xf32> to vector<8x64xf32>
    %353 = arith.mulf %350, %352 : vector<8x64xf32>
    %354 = arith.addf %336, %353 : vector<8x64xf32>
    %c0_i32_116 = arith.constant 0 : i32
    %355 = vector.broadcast %c0_i32_116 : i32 to vector<8x1xi32>
    %356 = arith.addi %227, %355 : vector<8x1xi32>
    %c0_i32_117 = arith.constant 0 : i32
    %357 = vector.broadcast %c0_i32_117 : i32 to vector<8x1xi32>
    %358 = arith.cmpi sge, %356, %357 : vector<8x1xi32>
    %c0_i32_118 = arith.constant 0 : i32
    %359 = vector.broadcast %c0_i32_118 : i32 to vector<8x1xi32>
    %360 = arith.addi %227, %359 : vector<8x1xi32>
    %c8_i32_119 = arith.constant 8 : i32
    %361 = vector.broadcast %c8_i32_119 : i32 to vector<8x1xi32>
    %362 = arith.cmpi slt, %360, %361 : vector<8x1xi32>
    %363 = arith.andi %358, %362 : vector<8x1xi1>
    %cst_120 = arith.constant 0.000000e+00 : f32
    %364 = vector.shape_cast %363 : vector<8x1xi1> to vector<8x1xi1>
    %365 = vector.broadcast %364 : vector<8x1xi1> to vector<8x64xi1>
    %366 = vector.broadcast %cst_120 : f32 to vector<8x64xf32>
    %367 = arith.select %365, %225, %366 : vector<8x64xi1>, vector<8x64xf32>
    %368 = vector.extract_strided_slice %226 {offsets = [15, 0], sizes = [1, 64], strides = [1, 1]} : vector<31x64xf32> to vector<1x64xf32>
    %369 = vector.broadcast %368 : vector<1x64xf32> to vector<8x64xf32>
    %370 = arith.mulf %367, %369 : vector<8x64xf32>
    %371 = arith.addf %354, %370 : vector<8x64xf32>
    %c7_i32_121 = arith.constant 7 : i32
    %372 = tpu.dynamic_rotate %225 by %c7_i32_121 dim 0 : vector<8x64xf32>, i32 -> vector<8x64xf32>
    %c1_i32_122 = arith.constant 1 : i32
    %373 = vector.broadcast %c1_i32_122 : i32 to vector<8x1xi32>
    %374 = arith.addi %227, %373 : vector<8x1xi32>
    %c0_i32_123 = arith.constant 0 : i32
    %375 = vector.broadcast %c0_i32_123 : i32 to vector<8x1xi32>
    %376 = arith.cmpi sge, %374, %375 : vector<8x1xi32>
    %c1_i32_124 = arith.constant 1 : i32
    %377 = vector.broadcast %c1_i32_124 : i32 to vector<8x1xi32>
    %378 = arith.addi %227, %377 : vector<8x1xi32>
    %c8_i32_125 = arith.constant 8 : i32
    %379 = vector.broadcast %c8_i32_125 : i32 to vector<8x1xi32>
    %380 = arith.cmpi slt, %378, %379 : vector<8x1xi32>
    %381 = arith.andi %376, %380 : vector<8x1xi1>
    %cst_126 = arith.constant 0.000000e+00 : f32
    %382 = vector.shape_cast %381 : vector<8x1xi1> to vector<8x1xi1>
    %383 = vector.broadcast %382 : vector<8x1xi1> to vector<8x64xi1>
    %384 = vector.broadcast %cst_126 : f32 to vector<8x64xf32>
    %385 = arith.select %383, %372, %384 : vector<8x64xi1>, vector<8x64xf32>
    %386 = vector.extract_strided_slice %226 {offsets = [16, 0], sizes = [1, 64], strides = [1, 1]} : vector<31x64xf32> to vector<1x64xf32>
    %387 = vector.broadcast %386 : vector<1x64xf32> to vector<8x64xf32>
    %388 = arith.mulf %385, %387 : vector<8x64xf32>
    %389 = arith.addf %371, %388 : vector<8x64xf32>
    %c6_i32_127 = arith.constant 6 : i32
    %390 = tpu.dynamic_rotate %225 by %c6_i32_127 dim 0 : vector<8x64xf32>, i32 -> vector<8x64xf32>
    %c2_i32_128 = arith.constant 2 : i32
    %391 = vector.broadcast %c2_i32_128 : i32 to vector<8x1xi32>
    %392 = arith.addi %227, %391 : vector<8x1xi32>
    %c0_i32_129 = arith.constant 0 : i32
    %393 = vector.broadcast %c0_i32_129 : i32 to vector<8x1xi32>
    %394 = arith.cmpi sge, %392, %393 : vector<8x1xi32>
    %c2_i32_130 = arith.constant 2 : i32
    %395 = vector.broadcast %c2_i32_130 : i32 to vector<8x1xi32>
    %396 = arith.addi %227, %395 : vector<8x1xi32>
    %c8_i32_131 = arith.constant 8 : i32
    %397 = vector.broadcast %c8_i32_131 : i32 to vector<8x1xi32>
    %398 = arith.cmpi slt, %396, %397 : vector<8x1xi32>
    %399 = arith.andi %394, %398 : vector<8x1xi1>
    %cst_132 = arith.constant 0.000000e+00 : f32
    %400 = vector.shape_cast %399 : vector<8x1xi1> to vector<8x1xi1>
    %401 = vector.broadcast %400 : vector<8x1xi1> to vector<8x64xi1>
    %402 = vector.broadcast %cst_132 : f32 to vector<8x64xf32>
    %403 = arith.select %401, %390, %402 : vector<8x64xi1>, vector<8x64xf32>
    %404 = vector.extract_strided_slice %226 {offsets = [17, 0], sizes = [1, 64], strides = [1, 1]} : vector<31x64xf32> to vector<1x64xf32>
    %405 = vector.broadcast %404 : vector<1x64xf32> to vector<8x64xf32>
    %406 = arith.mulf %403, %405 : vector<8x64xf32>
    %407 = arith.addf %389, %406 : vector<8x64xf32>
    %c5_i32_133 = arith.constant 5 : i32
    %408 = tpu.dynamic_rotate %225 by %c5_i32_133 dim 0 : vector<8x64xf32>, i32 -> vector<8x64xf32>
    %c3_i32_134 = arith.constant 3 : i32
    %409 = vector.broadcast %c3_i32_134 : i32 to vector<8x1xi32>
    %410 = arith.addi %227, %409 : vector<8x1xi32>
    %c0_i32_135 = arith.constant 0 : i32
    %411 = vector.broadcast %c0_i32_135 : i32 to vector<8x1xi32>
    %412 = arith.cmpi sge, %410, %411 : vector<8x1xi32>
    %c3_i32_136 = arith.constant 3 : i32
    %413 = vector.broadcast %c3_i32_136 : i32 to vector<8x1xi32>
    %414 = arith.addi %227, %413 : vector<8x1xi32>
    %c8_i32_137 = arith.constant 8 : i32
    %415 = vector.broadcast %c8_i32_137 : i32 to vector<8x1xi32>
    %416 = arith.cmpi slt, %414, %415 : vector<8x1xi32>
    %417 = arith.andi %412, %416 : vector<8x1xi1>
    %cst_138 = arith.constant 0.000000e+00 : f32
    %418 = vector.shape_cast %417 : vector<8x1xi1> to vector<8x1xi1>
    %419 = vector.broadcast %418 : vector<8x1xi1> to vector<8x64xi1>
    %420 = vector.broadcast %cst_138 : f32 to vector<8x64xf32>
    %421 = arith.select %419, %408, %420 : vector<8x64xi1>, vector<8x64xf32>
    %422 = vector.extract_strided_slice %226 {offsets = [18, 0], sizes = [1, 64], strides = [1, 1]} : vector<31x64xf32> to vector<1x64xf32>
    %423 = vector.broadcast %422 : vector<1x64xf32> to vector<8x64xf32>
    %424 = arith.mulf %421, %423 : vector<8x64xf32>
    %425 = arith.addf %407, %424 : vector<8x64xf32>
    %c4_i32_139 = arith.constant 4 : i32
    %426 = tpu.dynamic_rotate %225 by %c4_i32_139 dim 0 : vector<8x64xf32>, i32 -> vector<8x64xf32>
    %c4_i32_140 = arith.constant 4 : i32
    %427 = vector.broadcast %c4_i32_140 : i32 to vector<8x1xi32>
    %428 = arith.addi %227, %427 : vector<8x1xi32>
    %c0_i32_141 = arith.constant 0 : i32
    %429 = vector.broadcast %c0_i32_141 : i32 to vector<8x1xi32>
    %430 = arith.cmpi sge, %428, %429 : vector<8x1xi32>
    %c4_i32_142 = arith.constant 4 : i32
    %431 = vector.broadcast %c4_i32_142 : i32 to vector<8x1xi32>
    %432 = arith.addi %227, %431 : vector<8x1xi32>
    %c8_i32_143 = arith.constant 8 : i32
    %433 = vector.broadcast %c8_i32_143 : i32 to vector<8x1xi32>
    %434 = arith.cmpi slt, %432, %433 : vector<8x1xi32>
    %435 = arith.andi %430, %434 : vector<8x1xi1>
    %cst_144 = arith.constant 0.000000e+00 : f32
    %436 = vector.shape_cast %435 : vector<8x1xi1> to vector<8x1xi1>
    %437 = vector.broadcast %436 : vector<8x1xi1> to vector<8x64xi1>
    %438 = vector.broadcast %cst_144 : f32 to vector<8x64xf32>
    %439 = arith.select %437, %426, %438 : vector<8x64xi1>, vector<8x64xf32>
    %440 = vector.extract_strided_slice %226 {offsets = [19, 0], sizes = [1, 64], strides = [1, 1]} : vector<31x64xf32> to vector<1x64xf32>
    %441 = vector.broadcast %440 : vector<1x64xf32> to vector<8x64xf32>
    %442 = arith.mulf %439, %441 : vector<8x64xf32>
    %443 = arith.addf %425, %442 : vector<8x64xf32>
    %c3_i32_145 = arith.constant 3 : i32
    %444 = tpu.dynamic_rotate %225 by %c3_i32_145 dim 0 : vector<8x64xf32>, i32 -> vector<8x64xf32>
    %c5_i32_146 = arith.constant 5 : i32
    %445 = vector.broadcast %c5_i32_146 : i32 to vector<8x1xi32>
    %446 = arith.addi %227, %445 : vector<8x1xi32>
    %c0_i32_147 = arith.constant 0 : i32
    %447 = vector.broadcast %c0_i32_147 : i32 to vector<8x1xi32>
    %448 = arith.cmpi sge, %446, %447 : vector<8x1xi32>
    %c5_i32_148 = arith.constant 5 : i32
    %449 = vector.broadcast %c5_i32_148 : i32 to vector<8x1xi32>
    %450 = arith.addi %227, %449 : vector<8x1xi32>
    %c8_i32_149 = arith.constant 8 : i32
    %451 = vector.broadcast %c8_i32_149 : i32 to vector<8x1xi32>
    %452 = arith.cmpi slt, %450, %451 : vector<8x1xi32>
    %453 = arith.andi %448, %452 : vector<8x1xi1>
    %cst_150 = arith.constant 0.000000e+00 : f32
    %454 = vector.shape_cast %453 : vector<8x1xi1> to vector<8x1xi1>
    %455 = vector.broadcast %454 : vector<8x1xi1> to vector<8x64xi1>
    %456 = vector.broadcast %cst_150 : f32 to vector<8x64xf32>
    %457 = arith.select %455, %444, %456 : vector<8x64xi1>, vector<8x64xf32>
    %458 = vector.extract_strided_slice %226 {offsets = [20, 0], sizes = [1, 64], strides = [1, 1]} : vector<31x64xf32> to vector<1x64xf32>
    %459 = vector.broadcast %458 : vector<1x64xf32> to vector<8x64xf32>
    %460 = arith.mulf %457, %459 : vector<8x64xf32>
    %461 = arith.addf %443, %460 : vector<8x64xf32>
    %c2_i32_151 = arith.constant 2 : i32
    %462 = tpu.dynamic_rotate %225 by %c2_i32_151 dim 0 : vector<8x64xf32>, i32 -> vector<8x64xf32>
    %c6_i32_152 = arith.constant 6 : i32
    %463 = vector.broadcast %c6_i32_152 : i32 to vector<8x1xi32>
    %464 = arith.addi %227, %463 : vector<8x1xi32>
    %c0_i32_153 = arith.constant 0 : i32
    %465 = vector.broadcast %c0_i32_153 : i32 to vector<8x1xi32>
    %466 = arith.cmpi sge, %464, %465 : vector<8x1xi32>
    %c6_i32_154 = arith.constant 6 : i32
    %467 = vector.broadcast %c6_i32_154 : i32 to vector<8x1xi32>
    %468 = arith.addi %227, %467 : vector<8x1xi32>
    %c8_i32_155 = arith.constant 8 : i32
    %469 = vector.broadcast %c8_i32_155 : i32 to vector<8x1xi32>
    %470 = arith.cmpi slt, %468, %469 : vector<8x1xi32>
    %471 = arith.andi %466, %470 : vector<8x1xi1>
    %cst_156 = arith.constant 0.000000e+00 : f32
    %472 = vector.shape_cast %471 : vector<8x1xi1> to vector<8x1xi1>
    %473 = vector.broadcast %472 : vector<8x1xi1> to vector<8x64xi1>
    %474 = vector.broadcast %cst_156 : f32 to vector<8x64xf32>
    %475 = arith.select %473, %462, %474 : vector<8x64xi1>, vector<8x64xf32>
    %476 = vector.extract_strided_slice %226 {offsets = [21, 0], sizes = [1, 64], strides = [1, 1]} : vector<31x64xf32> to vector<1x64xf32>
    %477 = vector.broadcast %476 : vector<1x64xf32> to vector<8x64xf32>
    %478 = arith.mulf %475, %477 : vector<8x64xf32>
    %479 = arith.addf %461, %478 : vector<8x64xf32>
    %c1_i32_157 = arith.constant 1 : i32
    %480 = tpu.dynamic_rotate %225 by %c1_i32_157 dim 0 : vector<8x64xf32>, i32 -> vector<8x64xf32>
    %c7_i32_158 = arith.constant 7 : i32
    %481 = vector.broadcast %c7_i32_158 : i32 to vector<8x1xi32>
    %482 = arith.addi %227, %481 : vector<8x1xi32>
    %c0_i32_159 = arith.constant 0 : i32
    %483 = vector.broadcast %c0_i32_159 : i32 to vector<8x1xi32>
    %484 = arith.cmpi sge, %482, %483 : vector<8x1xi32>
    %c7_i32_160 = arith.constant 7 : i32
    %485 = vector.broadcast %c7_i32_160 : i32 to vector<8x1xi32>
    %486 = arith.addi %227, %485 : vector<8x1xi32>
    %c8_i32_161 = arith.constant 8 : i32
    %487 = vector.broadcast %c8_i32_161 : i32 to vector<8x1xi32>
    %488 = arith.cmpi slt, %486, %487 : vector<8x1xi32>
    %489 = arith.andi %484, %488 : vector<8x1xi1>
    %cst_162 = arith.constant 0.000000e+00 : f32
    %490 = vector.shape_cast %489 : vector<8x1xi1> to vector<8x1xi1>
    %491 = vector.broadcast %490 : vector<8x1xi1> to vector<8x64xi1>
    %492 = vector.broadcast %cst_162 : f32 to vector<8x64xf32>
    %493 = arith.select %491, %480, %492 : vector<8x64xi1>, vector<8x64xf32>
    %494 = vector.extract_strided_slice %226 {offsets = [22, 0], sizes = [1, 64], strides = [1, 1]} : vector<31x64xf32> to vector<1x64xf32>
    %495 = vector.broadcast %494 : vector<1x64xf32> to vector<8x64xf32>
    %496 = arith.mulf %493, %495 : vector<8x64xf32>
    %497 = arith.addf %479, %496 : vector<8x64xf32>
    %c0_163 = arith.constant 0 : index
    %c0_164 = arith.constant 0 : index
    %498 = vector.load %arg16[%c0_163, %c0_164] : memref<1x64xf32, #tpu.memory_space<vmem>>, vector<1x64xf32>
    %499 = vector.broadcast %498 : vector<1x64xf32> to vector<8x64xf32>
    %500 = arith.addf %497, %499 : vector<8x64xf32>
    %501 = arith.negf %500 : vector<8x64xf32>
    %502 = math.exp %501 : vector<8x64xf32>
    %cst_165 = arith.constant 1.000000e+00 : f32
    %503 = vector.broadcast %cst_165 : f32 to vector<8x64xf32>
    %504 = arith.addf %503, %502 : vector<8x64xf32>
    %505 = arith.divf %503, %504 : vector<8x64xf32>
    %506 = arith.mulf %500, %505 : vector<8x64xf32>
    %507 = arith.truncf %506 : vector<8x64xf32> to vector<8x64xbf16>
    %c0_166 = arith.constant 0 : index
    %c0_167 = arith.constant 0 : index
    %508 = vector.load %arg17[%c0_166, %c0_167] : memref<64x32xbf16, #tpu.memory_space<vmem>>, vector<64x32xbf16>
    %cst_168 = arith.constant dense<0.000000e+00> : vector<8x32xf32>
    %509 = tpu.matmul %507, %508, %cst_168 {dimension_numbers = #tpu.dot_dimension_numbers<[1], [0], [0], [1], [0, 0, 1, 1], [], []>} : vector<8x64xbf16>, vector<64x32xbf16>, vector<8x32xf32> -> vector<8x32xf32>
    %c0_169 = arith.constant 0 : index
    %c0_170 = arith.constant 0 : index
    %510 = vector.load %arg18[%c0_169, %c0_170] : memref<1x32xf32, #tpu.memory_space<vmem>>, vector<1x32xf32>
    %511 = vector.broadcast %510 : vector<1x32xf32> to vector<8x32xf32>
    %512 = arith.addf %509, %511 : vector<8x32xf32>
    %513 = arith.addf %184, %512 : vector<8x32xf32>
    %c0_171 = arith.constant 0 : index
    %c0_172 = arith.constant 0 : index
    %c0_173 = arith.constant 0 : index
    %514 = vector.load %arg19[%c0_171, %c0_172, %c0_173] : memref<1x8x32xf32, #tpu.memory_space<vmem>>, vector<1x8x32xf32>
    %515 = vector.shape_cast %514 : vector<1x8x32xf32> to vector<8x32xf32>
    %516 = vector.shape_cast %513 : vector<8x32xf32> to vector<1x8x32xf32>
    tpu.vector_store %arg19[%c0_171, %c0_172, %c0_173], %516 {strides = array<i32>} : memref<1x8x32xf32, #tpu.memory_space<vmem>>, vector<1x8x32xf32>,
    return
  }
  func.func @transform_0(%arg0: i32) -> (i32, i32, i32) {
    %c0_i32 = arith.constant 0 : i32
    %c0_i32_0 = arith.constant 0 : i32
    %c0_i32_1 = arith.constant 0 : i32
    return %arg0, %c0_i32, %c0_i32_0 : i32, i32, i32
  }
  func.func @transform_1(%arg0: i32) -> (i32, i32) {
    %c0_i32 = arith.constant 0 : i32
    %c0_i32_0 = arith.constant 0 : i32
    %c0_i32_1 = arith.constant 0 : i32
    return %c0_i32, %c0_i32_0 : i32, i32
  }
  func.func @transform_2(%arg0: i32) -> (i32, i32) {
    %c0_i32 = arith.constant 0 : i32
    %c0_i32_0 = arith.constant 0 : i32
    %c0_i32_1 = arith.constant 0 : i32
    return %c0_i32, %c0_i32_0 : i32, i32
  }
  func.func @transform_3(%arg0: i32) -> (i32, i32) {
    %c0_i32 = arith.constant 0 : i32
    %c0_i32_0 = arith.constant 0 : i32
    %c0_i32_1 = arith.constant 0 : i32
    return %c0_i32, %c0_i32_0 : i32, i32
  }
  func.func @transform_4(%arg0: i32) -> (i32, i32) {
    %c0_i32 = arith.constant 0 : i32
    %c0_i32_0 = arith.constant 0 : i32
    %c0_i32_1 = arith.constant 0 : i32
    return %c0_i32, %c0_i32_0 : i32, i32
  }
  func.func @transform_5(%arg0: i32) -> (i32, i32) {
    %c0_i32 = arith.constant 0 : i32
    %c0_i32_0 = arith.constant 0 : i32
    %c0_i32_1 = arith.constant 0 : i32
    return %c0_i32, %c0_i32_0 : i32, i32
  }
  func.func @transform_6(%arg0: i32) -> (i32, i32) {
    %c0_i32 = arith.constant 0 : i32
    %c0_i32_0 = arith.constant 0 : i32
    %c0_i32_1 = arith.constant 0 : i32
    return %c0_i32, %c0_i32_0 : i32, i32
  }
  func.func @transform_7(%arg0: i32) -> (i32, i32) {
    %c0_i32 = arith.constant 0 : i32
    %c0_i32_0 = arith.constant 0 : i32
    %c0_i32_1 = arith.constant 0 : i32
    return %c0_i32, %c0_i32_0 : i32, i32
  }
  func.func @transform_8(%arg0: i32) -> (i32, i32) {
    %c0_i32 = arith.constant 0 : i32
    %c0_i32_0 = arith.constant 0 : i32
    %c0_i32_1 = arith.constant 0 : i32
    return %c0_i32, %c0_i32_0 : i32, i32
  }
  func.func @transform_9(%arg0: i32) -> (i32, i32) {
    %c0_i32 = arith.constant 0 : i32
    %c0_i32_0 = arith.constant 0 : i32
    %c0_i32_1 = arith.constant 0 : i32
    return %c0_i32, %c0_i32_0 : i32, i32
  }
  func.func @transform_10(%arg0: i32) -> (i32, i32) {
    %c0_i32 = arith.constant 0 : i32
    %c0_i32_0 = arith.constant 0 : i32
    %c0_i32_1 = arith.constant 0 : i32
    return %c0_i32, %c0_i32_0 : i32, i32
  }
  func.func @transform_11(%arg0: i32) -> (i32, i32) {
    %c0_i32 = arith.constant 0 : i32
    %c0_i32_0 = arith.constant 0 : i32
    %c0_i32_1 = arith.constant 0 : i32
    return %c0_i32, %c0_i32_0 : i32, i32
  }
  func.func @transform_12(%arg0: i32) -> (i32, i32) {
    %c0_i32 = arith.constant 0 : i32
    %c0_i32_0 = arith.constant 0 : i32
    %c0_i32_1 = arith.constant 0 : i32
    return %c0_i32, %c0_i32_0 : i32, i32
  }
  func.func @transform_13(%arg0: i32) -> (i32, i32) {
    %c0_i32 = arith.constant 0 : i32
    %c0_i32_0 = arith.constant 0 : i32
    %c0_i32_1 = arith.constant 0 : i32
    return %c0_i32, %c0_i32_0 : i32, i32
  }
  func.func @transform_14(%arg0: i32) -> (i32, i32) {
    %c0_i32 = arith.constant 0 : i32
    %c0_i32_0 = arith.constant 0 : i32
    %c0_i32_1 = arith.constant 0 : i32
    return %c0_i32, %c0_i32_0 : i32, i32
  }
  func.func @transform_15(%arg0: i32) -> (i32, i32) {
    %c0_i32 = arith.constant 0 : i32
    %c0_i32_0 = arith.constant 0 : i32
    %c0_i32_1 = arith.constant 0 : i32
    return %c0_i32, %c0_i32_0 : i32, i32
  }
  func.func @transform_16(%arg0: i32) -> (i32, i32) {
    %c0_i32 = arith.constant 0 : i32
    %c0_i32_0 = arith.constant 0 : i32
    %c0_i32_1 = arith.constant 0 : i32
    return %c0_i32, %c0_i32_0 : i32, i32
  }
  func.func @transform_17(%arg0: i32) -> (i32, i32) {
    %c0_i32 = arith.constant 0 : i32
    %c0_i32_0 = arith.constant 0 : i32
    %c0_i32_1 = arith.constant 0 : i32
    return %c0_i32, %c0_i32_0 : i32, i32
  }
  func.func @transform_18(%arg0: i32) -> (i32, i32, i32) {
    %c0_i32 = arith.constant 0 : i32
    %c0_i32_0 = arith.constant 0 : i32
    %c0_i32_1 = arith.constant 0 : i32
    return %arg0, %c0_i32, %c0_i32_0 : i32, i32, i32
  }
}

module attributes {stable_mosaic.version = 11 : i64} {
  func.func @_pcmer_layer_kernel(%arg0: i32, %arg1: memref<1x8x32xf32, #tpu.memory_space<vmem>>, %arg2: memref<1x32xf32, #tpu.memory_space<vmem>>, %arg3: memref<1x32xf32, #tpu.memory_space<vmem>>, %arg4: memref<32x384xbf16, #tpu.memory_space<vmem>>, %arg5: memref<1x384xf32, #tpu.memory_space<vmem>>, %arg6: memref<384x64xbf16, #tpu.memory_space<vmem>>, %arg7: memref<128x32xbf16, #tpu.memory_space<vmem>>, %arg8: memref<1x32xf32, #tpu.memory_space<vmem>>, %arg9: memref<1x32xf32, #tpu.memory_space<vmem>>, %arg10: memref<1x32xf32, #tpu.memory_space<vmem>>, %arg11: memref<32x64xbf16, #tpu.memory_space<vmem>>, %arg12: memref<1x64xf32, #tpu.memory_space<vmem>>, %arg13: memref<32x64xbf16, #tpu.memory_space<vmem>>, %arg14: memref<1x64xf32, #tpu.memory_space<vmem>>, %arg15: memref<31x64xf32, #tpu.memory_space<vmem>>, %arg16: memref<1x64xf32, #tpu.memory_space<vmem>>, %arg17: memref<64x32xbf16, #tpu.memory_space<vmem>>, %arg18: memref<1x32xf32, #tpu.memory_space<vmem>>, %arg19: memref<1x8x32xf32, #tpu.memory_space<vmem>>) attributes {dimension_semantics = [#tpu.dimension_semantics<parallel>], iteration_bounds = array<i64: 2>, scalar_prefetch = 0 : i64, scratch_operands = 0 : i64, tpu.core_type = #tpu.core_type<tc>, window_params = [{transform_indices = @transform_0, window_bounds = array<i64: 1, 8, 32>}, {pipeline_mode = #tpu.pipeline_mode<synchronous>, transform_indices = @transform_1, window_bounds = array<i64: 1, 32>}, {pipeline_mode = #tpu.pipeline_mode<synchronous>, transform_indices = @transform_2, window_bounds = array<i64: 1, 32>}, {pipeline_mode = #tpu.pipeline_mode<synchronous>, transform_indices = @transform_3, window_bounds = array<i64: 32, 384>}, {pipeline_mode = #tpu.pipeline_mode<synchronous>, transform_indices = @transform_4, window_bounds = array<i64: 1, 384>}, {pipeline_mode = #tpu.pipeline_mode<synchronous>, transform_indices = @transform_5, window_bounds = array<i64: 384, 64>}, {pipeline_mode = #tpu.pipeline_mode<synchronous>, transform_indices = @transform_6, window_bounds = array<i64: 128, 32>}, {pipeline_mode = #tpu.pipeline_mode<synchronous>, transform_indices = @transform_7, window_bounds = array<i64: 1, 32>}, {pipeline_mode = #tpu.pipeline_mode<synchronous>, transform_indices = @transform_8, window_bounds = array<i64: 1, 32>}, {pipeline_mode = #tpu.pipeline_mode<synchronous>, transform_indices = @transform_9, window_bounds = array<i64: 1, 32>}, {pipeline_mode = #tpu.pipeline_mode<synchronous>, transform_indices = @transform_10, window_bounds = array<i64: 32, 64>}, {pipeline_mode = #tpu.pipeline_mode<synchronous>, transform_indices = @transform_11, window_bounds = array<i64: 1, 64>}, {pipeline_mode = #tpu.pipeline_mode<synchronous>, transform_indices = @transform_12, window_bounds = array<i64: 32, 64>}, {pipeline_mode = #tpu.pipeline_mode<synchronous>, transform_indices = @transform_13, window_bounds = array<i64: 1, 64>}, {pipeline_mode = #tpu.pipeline_mode<synchronous>, transform_indices = @transform_14, window_bounds = array<i64: 31, 64>}, {pipeline_mode = #tpu.pipeline_mode<synchronous>, transform_indices = @transform_15, window_bounds = array<i64: 1, 64>}, {pipeline_mode = #tpu.pipeline_mode<synchronous>, transform_indices = @transform_16, window_bounds = array<i64: 64, 32>}, {pipeline_mode = #tpu.pipeline_mode<synchronous>, transform_indices = @transform_17, window_bounds = array<i64: 1, 32>}, {transform_indices = @transform_18, window_bounds = array<i64: 1, 8, 32>}]} {
    %c0 = arith.constant 0 : index
    %c0_0 = arith.constant 0 : index
    %c0_1 = arith.constant 0 : index
    %0 = vector.load %arg1[%c0, %c0_0, %c0_1] : memref<1x8x32xf32, #tpu.memory_space<vmem>>, vector<1x8x32xf32>
    %1 = vector.shape_cast %0 : vector<1x8x32xf32> to vector<8x32xf32>
    %cst = arith.constant dense<0.000000e+00> : vector<8xf32>
    %2 = vector.multi_reduction <add>, %1, %cst [1] : vector<8x32xf32> to vector<8xf32>
    %3 = vector.shape_cast %2 : vector<8xf32> to vector<8x1xf32>
    %cst_2 = arith.constant 3.200000e+01 : f32
    %4 = vector.broadcast %cst_2 : f32 to vector<8x1xf32>
    %5 = arith.divf %3, %4 : vector<8x1xf32>
    %6 = vector.broadcast %5 : vector<8x1xf32> to vector<8x32xf32>
    %7 = arith.subf %1, %6 : vector<8x32xf32>
    %8 = arith.mulf %7, %7 : vector<8x32xf32>
    %cst_3 = arith.constant dense<0.000000e+00> : vector<8xf32>
    %9 = vector.multi_reduction <add>, %8, %cst_3 [1] : vector<8x32xf32> to vector<8xf32>
    %10 = vector.shape_cast %9 : vector<8xf32> to vector<8x1xf32>
    %cst_4 = arith.constant 3.200000e+01 : f32
    %11 = vector.broadcast %cst_4 : f32 to vector<8x1xf32>
    %12 = arith.divf %10, %11 : vector<8x1xf32>
    %13 = vector.broadcast %5 : vector<8x1xf32> to vector<8x32xf32>
    %14 = arith.subf %1, %13 : vector<8x32xf32>
    %cst_5 = arith.constant 9.99999974E-6 : f32
    %15 = vector.broadcast %cst_5 : f32 to vector<8x1xf32>
    %16 = arith.addf %12, %15 : vector<8x1xf32>
    %17 = math.rsqrt %16 : vector<8x1xf32>
    %18 = vector.broadcast %17 : vector<8x1xf32> to vector<8x32xf32>
    %19 = arith.mulf %14, %18 : vector<8x32xf32>
    %c0_6 = arith.constant 0 : index
    %c0_7 = arith.constant 0 : index
    %20 = vector.load %arg2[%c0_6, %c0_7] : memref<1x32xf32, #tpu.memory_space<vmem>>, vector<1x32xf32>
    %21 = vector.broadcast %20 : vector<1x32xf32> to vector<8x32xf32>
    %22 = arith.mulf %19, %21 : vector<8x32xf32>
    %c0_8 = arith.constant 0 : index
    %c0_9 = arith.constant 0 : index
    %23 = vector.load %arg3[%c0_8, %c0_9] : memref<1x32xf32, #tpu.memory_space<vmem>>, vector<1x32xf32>
    %24 = vector.broadcast %23 : vector<1x32xf32> to vector<8x32xf32>
    %25 = arith.addf %22, %24 : vector<8x32xf32>
    %26 = arith.truncf %25 : vector<8x32xf32> to vector<8x32xbf16>
    %c0_10 = arith.constant 0 : index
    %c0_11 = arith.constant 0 : index
    %27 = vector.load %arg4[%c0_10, %c0_11] : memref<32x384xbf16, #tpu.memory_space<vmem>>, vector<32x384xbf16>
    %cst_12 = arith.constant dense<0.000000e+00> : vector<8x384xf32>
    %28 = tpu.matmul %26, %27, %cst_12 {dimension_numbers = #tpu.dot_dimension_numbers<[1], [0], [0], [1], [0, 0, 1, 1], [], []>} : vector<8x32xbf16>, vector<32x384xbf16>, vector<8x384xf32> -> vector<8x384xf32>
    %c0_13 = arith.constant 0 : index
    %c0_14 = arith.constant 0 : index
    %29 = vector.load %arg5[%c0_13, %c0_14] : memref<1x384xf32, #tpu.memory_space<vmem>>, vector<1x384xf32>
    %30 = vector.broadcast %29 : vector<1x384xf32> to vector<8x384xf32>
    %31 = arith.addf %28, %30 : vector<8x384xf32>
    %c0_15 = arith.constant 0 : index
    %c0_16 = arith.constant 0 : index
    %32 = vector.load %arg6[%c0_15, %c0_16] : memref<384x64xbf16, #tpu.memory_space<vmem>>, vector<384x64xbf16>
    %33 = tpu.iota {dimensions = array<i32: 1>} : vector<1x384xi32>
    %c266_i32 = arith.constant 266 : i32
    %34 = vector.broadcast %c266_i32 : i32 to vector<1x384xi32>
    %35 = arith.cmpi slt, %33, %34 : vector<1x384xi32>
    %cst_17 = arith.constant 0.000000e+00 : f32
    %36 = vector.broadcast %cst_17 : f32 to vector<8x32xf32>
    %37 = vector.extract_strided_slice %31 {offsets = [0, 0], sizes = [8, 64], strides = [1, 1]} : vector<8x384xf32> to vector<8x64xf32>
    %38 = vector.extract_strided_slice %31 {offsets = [0, 128], sizes = [8, 64], strides = [1, 1]} : vector<8x384xf32> to vector<8x64xf32>
    %39 = vector.extract_strided_slice %31 {offsets = [0, 256], sizes = [8, 64], strides = [1, 1]} : vector<8x384xf32> to vector<8x64xf32>
    %cst_18 = arith.constant 0.353553385 : f32
    %40 = vector.broadcast %cst_18 : f32 to vector<8x64xf32>
    %41 = arith.mulf %37, %40 : vector<8x64xf32>
    %42 = arith.truncf %41 : vector<8x64xf32> to vector<8x64xbf16>
    %cst_19 = arith.constant dense<0.000000e+00> : vector<8x384xf32>
    %43 = tpu.matmul %42, %32, %cst_19 {dimension_numbers = #tpu.dot_dimension_numbers<[1], [1], [0], [0], [0, 0, 1, 0], [], []>} : vector<8x64xbf16>, vector<384x64xbf16>, vector<8x384xf32> -> vector<8x384xf32>
    %cst_20 = arith.constant 0.353553385 : f32
    %44 = vector.broadcast %cst_20 : f32 to vector<8x64xf32>
    %45 = arith.mulf %38, %44 : vector<8x64xf32>
    %46 = arith.truncf %45 : vector<8x64xf32> to vector<8x64xbf16>
    %cst_21 = arith.constant dense<0.000000e+00> : vector<8x384xf32>
    %47 = tpu.matmul %46, %32, %cst_21 {dimension_numbers = #tpu.dot_dimension_numbers<[1], [1], [0], [0], [0, 0, 1, 0], [], []>} : vector<8x64xbf16>, vector<384x64xbf16>, vector<8x384xf32> -> vector<8x384xf32>
    %48 = arith.mulf %37, %37 : vector<8x64xf32>
    %cst_22 = arith.constant dense<0.000000e+00> : vector<8xf32>
    %49 = vector.multi_reduction <add>, %48, %cst_22 [1] : vector<8x64xf32> to vector<8xf32>
    %50 = vector.shape_cast %49 : vector<8xf32> to vector<8x1xf32>
    %cst_23 = arith.constant 6.250000e-02 : f32
    %51 = vector.broadcast %cst_23 : f32 to vector<8x1xf32>
    %52 = arith.mulf %50, %51 : vector<8x1xf32>
    %53 = arith.mulf %38, %38 : vector<8x64xf32>
    %cst_24 = arith.constant dense<0.000000e+00> : vector<8xf32>
    %54 = vector.multi_reduction <add>, %53, %cst_24 [1] : vector<8x64xf32> to vector<8xf32>
    %55 = vector.shape_cast %54 : vector<8xf32> to vector<8x1xf32>
    %cst_25 = arith.constant 6.250000e-02 : f32
    %56 = vector.broadcast %cst_25 : f32 to vector<8x1xf32>
    %57 = arith.mulf %55, %56 : vector<8x1xf32>
    %cst_26 = arith.constant 0xFF800000 : f32
    %58 = vector.shape_cast %35 : vector<1x384xi1> to vector<1x384xi1>
    %59 = vector.broadcast %58 : vector<1x384xi1> to vector<8x384xi1>
    %60 = vector.broadcast %cst_26 : f32 to vector<8x384xf32>
    %61 = arith.select %59, %43, %60 : vector<8x384xi1>, vector<8x384xf32>
    %cst_27 = arith.constant dense<0xFF800000> : vector<8xf32>
    %62 = vector.multi_reduction <maximumf>, %61, %cst_27 [1] : vector<8x384xf32> to vector<8xf32>
    %63 = vector.shape_cast %62 : vector<8xf32> to vector<8x1xf32>
    %64 = vector.broadcast %52 : vector<8x1xf32> to vector<8x384xf32>
    %65 = arith.subf %43, %64 : vector<8x384xf32>
    %66 = vector.broadcast %63 : vector<8x1xf32> to vector<8x384xf32>
    %67 = arith.subf %65, %66 : vector<8x384xf32>
    %68 = math.exp %67 : vector<8x384xf32>
    %cst_28 = arith.constant 9.99999974E-5 : f32
    %69 = vector.broadcast %cst_28 : f32 to vector<8x384xf32>
    %70 = arith.addf %68, %69 : vector<8x384xf32>
    %cst_29 = arith.constant 0.0613139346 : f32
    %71 = vector.broadcast %cst_29 : f32 to vector<8x384xf32>
    %72 = arith.mulf %71, %70 : vector<8x384xf32>
    %cst_30 = arith.constant 0.000000e+00 : f32
    %73 = vector.shape_cast %35 : vector<1x384xi1> to vector<1x384xi1>
    %74 = vector.broadcast %73 : vector<1x384xi1> to vector<8x384xi1>
    %75 = vector.broadcast %cst_30 : f32 to vector<8x384xf32>
    %76 = arith.select %74, %72, %75 : vector<8x384xi1>, vector<8x384xf32>
    %77 = vector.broadcast %57 : vector<8x1xf32> to vector<8x384xf32>
    %78 = arith.subf %47, %77 : vector<8x384xf32>
    %cst_31 = arith.constant 9.99999974E-5 : f32
    %79 = vector.broadcast %cst_31 : f32 to vector<8x384xf32>
    %80 = arith.addf %78, %79 : vector<8x384xf32>
    %81 = math.exp %80 : vector<8x384xf32>
    %cst_32 = arith.constant 0.0613139346 : f32
    %82 = vector.broadcast %cst_32 : f32 to vector<8x384xf32>
    %83 = arith.mulf %82, %81 : vector<8x384xf32>
    %cst_33 = arith.constant 0.000000e+00 : f32
    %84 = vector.shape_cast %35 : vector<1x384xi1> to vector<1x384xi1>
    %85 = vector.broadcast %84 : vector<1x384xi1> to vector<8x384xi1>
    %86 = vector.broadcast %cst_33 : f32 to vector<8x384xf32>
    %87 = arith.select %85, %83, %86 : vector<8x384xi1>, vector<8x384xf32>
    %88 = arith.truncf %87 : vector<8x384xf32> to vector<8x384xbf16>
    %89 = arith.truncf %39 : vector<8x64xf32> to vector<8x64xbf16>
    %cst_34 = arith.constant dense<0.000000e+00> : vector<384x64xf32>
    %90 = tpu.matmul %88, %89, %cst_34 {dimension_numbers = #tpu.dot_dimension_numbers<[0], [0], [1], [1], [0, 1, 1, 1], [], []>} : vector<8x384xbf16>, vector<8x64xbf16>, vector<384x64xf32> -> vector<384x64xf32>
    %cst_35 = arith.constant dense<0.000000e+00> : vector<384xf32>
    %91 = vector.multi_reduction <add>, %87, %cst_35 [0] : vector<8x384xf32> to vector<384xf32>
    %92 = vector.shape_cast %91 : vector<384xf32> to vector<1x384xf32>
    %93 = vector.broadcast %92 : vector<1x384xf32> to vector<8x384xf32>
    %94 = arith.mulf %76, %93 : vector<8x384xf32>
    %cst_36 = arith.constant dense<0.000000e+00> : vector<8xf32>
    %95 = vector.multi_reduction <add>, %94, %cst_36 [1] : vector<8x384xf32> to vector<8xf32>
    %96 = vector.shape_cast %95 : vector<8xf32> to vector<8x1xf32>
    %cst_37 = arith.constant 9.99999993E-9 : f32
    %97 = vector.broadcast %cst_37 : f32 to vector<8x1xf32>
    %98 = arith.addf %96, %97 : vector<8x1xf32>
    %99 = tpu.reciprocal %98 {approx = true} : vector<8x1xf32> -> vector<8x1xf32>
    %100 = arith.truncf %76 : vector<8x384xf32> to vector<8x384xbf16>
    %101 = arith.truncf %90 : vector<384x64xf32> to vector<384x64xbf16>
    %cst_38 = arith.constant dense<0.000000e+00> : vector<8x64xf32>
    %102 = tpu.matmul %100, %101, %cst_38 {dimension_numbers = #tpu.dot_dimension_numbers<[1], [0], [0], [1], [0, 0, 1, 1], [], []>} : vector<8x384xbf16>, vector<384x64xbf16>, vector<8x64xf32> -> vector<8x64xf32>
    %103 = vector.broadcast %99 : vector<8x1xf32> to vector<8x64xf32>
    %104 = arith.mulf %102, %103 : vector<8x64xf32>
    %105 = arith.truncf %104 : vector<8x64xf32> to vector<8x64xbf16>
    %c0_39 = arith.constant 0 : index
    %c0_40 = arith.constant 0 : index
    %106 = vector.load %arg7[%c0_39, %c0_40] : memref<128x32xbf16, #tpu.memory_space<vmem>>, vector<64x32xbf16>
    %cst_41 = arith.constant dense<0.000000e+00> : vector<8x32xf32>
    %107 = tpu.matmul %105, %106, %cst_41 {dimension_numbers = #tpu.dot_dimension_numbers<[1], [0], [0], [1], [0, 0, 1, 1], [], []>} : vector<8x64xbf16>, vector<64x32xbf16>, vector<8x32xf32> -> vector<8x32xf32>
    %108 = arith.addf %36, %107 : vector<8x32xf32>
    %109 = vector.extract_strided_slice %31 {offsets = [0, 64], sizes = [8, 64], strides = [1, 1]} : vector<8x384xf32> to vector<8x64xf32>
    %110 = vector.extract_strided_slice %31 {offsets = [0, 192], sizes = [8, 64], strides = [1, 1]} : vector<8x384xf32> to vector<8x64xf32>
    %111 = vector.extract_strided_slice %31 {offsets = [0, 320], sizes = [8, 64], strides = [1, 1]} : vector<8x384xf32> to vector<8x64xf32>
    %cst_42 = arith.constant 0.353553385 : f32
    %112 = vector.broadcast %cst_42 : f32 to vector<8x64xf32>
    %113 = arith.mulf %109, %112 : vector<8x64xf32>
    %114 = arith.truncf %113 : vector<8x64xf32> to vector<8x64xbf16>
    %cst_43 = arith.constant dense<0.000000e+00> : vector<8x384xf32>
    %115 = tpu.matmul %114, %32, %cst_43 {dimension_numbers = #tpu.dot_dimension_numbers<[1], [1], [0], [0], [0, 0, 1, 0], [], []>} : vector<8x64xbf16>, vector<384x64xbf16>, vector<8x384xf32> -> vector<8x384xf32>
    %cst_44 = arith.constant 0.353553385 : f32
    %116 = vector.broadcast %cst_44 : f32 to vector<8x64xf32>
    %117 = arith.mulf %110, %116 : vector<8x64xf32>
    %118 = arith.truncf %117 : vector<8x64xf32> to vector<8x64xbf16>
    %cst_45 = arith.constant dense<0.000000e+00> : vector<8x384xf32>
    %119 = tpu.matmul %118, %32, %cst_45 {dimension_numbers = #tpu.dot_dimension_numbers<[1], [1], [0], [0], [0, 0, 1, 0], [], []>} : vector<8x64xbf16>, vector<384x64xbf16>, vector<8x384xf32> -> vector<8x384xf32>
    %120 = arith.mulf %109, %109 : vector<8x64xf32>
    %cst_46 = arith.constant dense<0.000000e+00> : vector<8xf32>
    %121 = vector.multi_reduction <add>, %120, %cst_46 [1] : vector<8x64xf32> to vector<8xf32>
    %122 = vector.shape_cast %121 : vector<8xf32> to vector<8x1xf32>
    %cst_47 = arith.constant 6.250000e-02 : f32
    %123 = vector.broadcast %cst_47 : f32 to vector<8x1xf32>
    %124 = arith.mulf %122, %123 : vector<8x1xf32>
    %125 = arith.mulf %110, %110 : vector<8x64xf32>
    %cst_48 = arith.constant dense<0.000000e+00> : vector<8xf32>
    %126 = vector.multi_reduction <add>, %125, %cst_48 [1] : vector<8x64xf32> to vector<8xf32>
    %127 = vector.shape_cast %126 : vector<8xf32> to vector<8x1xf32>
    %cst_49 = arith.constant 6.250000e-02 : f32
    %128 = vector.broadcast %cst_49 : f32 to vector<8x1xf32>
    %129 = arith.mulf %127, %128 : vector<8x1xf32>
    %cst_50 = arith.constant 0xFF800000 : f32
    %130 = vector.shape_cast %35 : vector<1x384xi1> to vector<1x384xi1>
    %131 = vector.broadcast %130 : vector<1x384xi1> to vector<8x384xi1>
    %132 = vector.broadcast %cst_50 : f32 to vector<8x384xf32>
    %133 = arith.select %131, %115, %132 : vector<8x384xi1>, vector<8x384xf32>
    %cst_51 = arith.constant dense<0xFF800000> : vector<8xf32>
    %134 = vector.multi_reduction <maximumf>, %133, %cst_51 [1] : vector<8x384xf32> to vector<8xf32>
    %135 = vector.shape_cast %134 : vector<8xf32> to vector<8x1xf32>
    %136 = vector.broadcast %124 : vector<8x1xf32> to vector<8x384xf32>
    %137 = arith.subf %115, %136 : vector<8x384xf32>
    %138 = vector.broadcast %135 : vector<8x1xf32> to vector<8x384xf32>
    %139 = arith.subf %137, %138 : vector<8x384xf32>
    %140 = math.exp %139 : vector<8x384xf32>
    %cst_52 = arith.constant 9.99999974E-5 : f32
    %141 = vector.broadcast %cst_52 : f32 to vector<8x384xf32>
    %142 = arith.addf %140, %141 : vector<8x384xf32>
    %cst_53 = arith.constant 0.0613139346 : f32
    %143 = vector.broadcast %cst_53 : f32 to vector<8x384xf32>
    %144 = arith.mulf %143, %142 : vector<8x384xf32>
    %cst_54 = arith.constant 0.000000e+00 : f32
    %145 = vector.shape_cast %35 : vector<1x384xi1> to vector<1x384xi1>
    %146 = vector.broadcast %145 : vector<1x384xi1> to vector<8x384xi1>
    %147 = vector.broadcast %cst_54 : f32 to vector<8x384xf32>
    %148 = arith.select %146, %144, %147 : vector<8x384xi1>, vector<8x384xf32>
    %149 = vector.broadcast %129 : vector<8x1xf32> to vector<8x384xf32>
    %150 = arith.subf %119, %149 : vector<8x384xf32>
    %cst_55 = arith.constant 9.99999974E-5 : f32
    %151 = vector.broadcast %cst_55 : f32 to vector<8x384xf32>
    %152 = arith.addf %150, %151 : vector<8x384xf32>
    %153 = math.exp %152 : vector<8x384xf32>
    %cst_56 = arith.constant 0.0613139346 : f32
    %154 = vector.broadcast %cst_56 : f32 to vector<8x384xf32>
    %155 = arith.mulf %154, %153 : vector<8x384xf32>
    %cst_57 = arith.constant 0.000000e+00 : f32
    %156 = vector.shape_cast %35 : vector<1x384xi1> to vector<1x384xi1>
    %157 = vector.broadcast %156 : vector<1x384xi1> to vector<8x384xi1>
    %158 = vector.broadcast %cst_57 : f32 to vector<8x384xf32>
    %159 = arith.select %157, %155, %158 : vector<8x384xi1>, vector<8x384xf32>
    %160 = arith.truncf %159 : vector<8x384xf32> to vector<8x384xbf16>
    %161 = arith.truncf %111 : vector<8x64xf32> to vector<8x64xbf16>
    %cst_58 = arith.constant dense<0.000000e+00> : vector<384x64xf32>
    %162 = tpu.matmul %160, %161, %cst_58 {dimension_numbers = #tpu.dot_dimension_numbers<[0], [0], [1], [1], [0, 1, 1, 1], [], []>} : vector<8x384xbf16>, vector<8x64xbf16>, vector<384x64xf32> -> vector<384x64xf32>
    %cst_59 = arith.constant dense<0.000000e+00> : vector<384xf32>
    %163 = vector.multi_reduction <add>, %159, %cst_59 [0] : vector<8x384xf32> to vector<384xf32>
    %164 = vector.shape_cast %163 : vector<384xf32> to vector<1x384xf32>
    %165 = vector.broadcast %164 : vector<1x384xf32> to vector<8x384xf32>
    %166 = arith.mulf %148, %165 : vector<8x384xf32>
    %cst_60 = arith.constant dense<0.000000e+00> : vector<8xf32>
    %167 = vector.multi_reduction <add>, %166, %cst_60 [1] : vector<8x384xf32> to vector<8xf32>
    %168 = vector.shape_cast %167 : vector<8xf32> to vector<8x1xf32>
    %cst_61 = arith.constant 9.99999993E-9 : f32
    %169 = vector.broadcast %cst_61 : f32 to vector<8x1xf32>
    %170 = arith.addf %168, %169 : vector<8x1xf32>
    %171 = tpu.reciprocal %170 {approx = true} : vector<8x1xf32> -> vector<8x1xf32>
    %172 = arith.truncf %148 : vector<8x384xf32> to vector<8x384xbf16>
    %173 = arith.truncf %162 : vector<384x64xf32> to vector<384x64xbf16>
    %cst_62 = arith.constant dense<0.000000e+00> : vector<8x64xf32>
    %174 = tpu.matmul %172, %173, %cst_62 {dimension_numbers = #tpu.dot_dimension_numbers<[1], [0], [0], [1], [0, 0, 1, 1], [], []>} : vector<8x384xbf16>, vector<384x64xbf16>, vector<8x64xf32> -> vector<8x64xf32>
    %175 = vector.broadcast %171 : vector<8x1xf32> to vector<8x64xf32>
    %176 = arith.mulf %174, %175 : vector<8x64xf32>
    %177 = arith.truncf %176 : vector<8x64xf32> to vector<8x64xbf16>
    %c64 = arith.constant 64 : index
    %c0_63 = arith.constant 0 : index
    %178 = vector.load %arg7[%c64, %c0_63] : memref<128x32xbf16, #tpu.memory_space<vmem>>, vector<64x32xbf16>
    %cst_64 = arith.constant dense<0.000000e+00> : vector<8x32xf32>
    %179 = tpu.matmul %177, %178, %cst_64 {dimension_numbers = #tpu.dot_dimension_numbers<[1], [0], [0], [1], [0, 0, 1, 1], [], []>} : vector<8x64xbf16>, vector<64x32xbf16>, vector<8x32xf32> -> vector<8x32xf32>
    %180 = arith.addf %108, %179 : vector<8x32xf32>
    %181 = arith.addf %1, %180 : vector<8x32xf32>
    %c0_65 = arith.constant 0 : index
    %c0_66 = arith.constant 0 : index
    %182 = vector.load %arg8[%c0_65, %c0_66] : memref<1x32xf32, #tpu.memory_space<vmem>>, vector<1x32xf32>
    %183 = vector.broadcast %182 : vector<1x32xf32> to vector<8x32xf32>
    %184 = arith.addf %181, %183 : vector<8x32xf32>
    %cst_67 = arith.constant dense<0.000000e+00> : vector<8xf32>
    %185 = vector.multi_reduction <add>, %184, %cst_67 [1] : vector<8x32xf32> to vector<8xf32>
    %186 = vector.shape_cast %185 : vector<8xf32> to vector<8x1xf32>
    %cst_68 = arith.constant 3.200000e+01 : f32
    %187 = vector.broadcast %cst_68 : f32 to vector<8x1xf32>
    %188 = arith.divf %186, %187 : vector<8x1xf32>
    %189 = vector.broadcast %188 : vector<8x1xf32> to vector<8x32xf32>
    %190 = arith.subf %184, %189 : vector<8x32xf32>
    %191 = arith.mulf %190, %190 : vector<8x32xf32>
    %cst_69 = arith.constant dense<0.000000e+00> : vector<8xf32>
    %192 = vector.multi_reduction <add>, %191, %cst_69 [1] : vector<8x32xf32> to vector<8xf32>
    %193 = vector.shape_cast %192 : vector<8xf32> to vector<8x1xf32>
    %cst_70 = arith.constant 3.200000e+01 : f32
    %194 = vector.broadcast %cst_70 : f32 to vector<8x1xf32>
    %195 = arith.divf %193, %194 : vector<8x1xf32>
    %196 = vector.broadcast %188 : vector<8x1xf32> to vector<8x32xf32>
    %197 = arith.subf %184, %196 : vector<8x32xf32>
    %cst_71 = arith.constant 9.99999974E-6 : f32
    %198 = vector.broadcast %cst_71 : f32 to vector<8x1xf32>
    %199 = arith.addf %195, %198 : vector<8x1xf32>
    %200 = math.rsqrt %199 : vector<8x1xf32>
    %201 = vector.broadcast %200 : vector<8x1xf32> to vector<8x32xf32>
    %202 = arith.mulf %197, %201 : vector<8x32xf32>
    %c0_72 = arith.constant 0 : index
    %c0_73 = arith.constant 0 : index
    %203 = vector.load %arg9[%c0_72, %c0_73] : memref<1x32xf32, #tpu.memory_space<vmem>>, vector<1x32xf32>
    %204 = vector.broadcast %203 : vector<1x32xf32> to vector<8x32xf32>
    %205 = arith.mulf %202, %204 : vector<8x32xf32>
    %c0_74 = arith.constant 0 : index
    %c0_75 = arith.constant 0 : index
    %206 = vector.load %arg10[%c0_74, %c0_75] : memref<1x32xf32, #tpu.memory_space<vmem>>, vector<1x32xf32>
    %207 = vector.broadcast %206 : vector<1x32xf32> to vector<8x32xf32>
    %208 = arith.addf %205, %207 : vector<8x32xf32>
    %209 = arith.truncf %208 : vector<8x32xf32> to vector<8x32xbf16>
    %c0_76 = arith.constant 0 : index
    %c0_77 = arith.constant 0 : index
    %210 = vector.load %arg11[%c0_76, %c0_77] : memref<32x64xbf16, #tpu.memory_space<vmem>>, vector<32x64xbf16>
    %cst_78 = arith.constant dense<0.000000e+00> : vector<8x64xf32>
    %211 = tpu.matmul %209, %210, %cst_78 {dimension_numbers = #tpu.dot_dimension_numbers<[1], [0], [0], [1], [0, 0, 1, 1], [], []>} : vector<8x32xbf16>, vector<32x64xbf16>, vector<8x64xf32> -> vector<8x64xf32>
    %c0_79 = arith.constant 0 : index
    %c0_80 = arith.constant 0 : index
    %212 = vector.load %arg12[%c0_79, %c0_80] : memref<1x64xf32, #tpu.memory_space<vmem>>, vector<1x64xf32>
    %213 = vector.broadcast %212 : vector<1x64xf32> to vector<8x64xf32>
    %214 = arith.addf %211, %213 : vector<8x64xf32>
    %c0_81 = arith.constant 0 : index
    %c0_82 = arith.constant 0 : index
    %215 = vector.load %arg13[%c0_81, %c0_82] : memref<32x64xbf16, #tpu.memory_space<vmem>>, vector<32x64xbf16>
    %cst_83 = arith.constant dense<0.000000e+00> : vector<8x64xf32>
    %216 = tpu.matmul %209, %215, %cst_83 {dimension_numbers = #tpu.dot_dimension_numbers<[1], [0], [0], [1], [0, 0, 1, 1], [], []>} : vector<8x32xbf16>, vector<32x64xbf16>, vector<8x64xf32> -> vector<8x64xf32>
    %c0_84 = arith.constant 0 : index
    %c0_85 = arith.constant 0 : index
    %217 = vector.load %arg14[%c0_84, %c0_85] : memref<1x64xf32, #tpu.memory_space<vmem>>, vector<1x64xf32>
    %218 = vector.broadcast %217 : vector<1x64xf32> to vector<8x64xf32>
    %219 = arith.addf %216, %218 : vector<8x64xf32>
    %220 = arith.negf %219 : vector<8x64xf32>
    %221 = math.exp %220 : vector<8x64xf32>
    %cst_86 = arith.constant 1.000000e+00 : f32
    %222 = vector.broadcast %cst_86 : f32 to vector<8x64xf32>
    %223 = arith.addf %222, %221 : vector<8x64xf32>
    %224 = arith.divf %222, %223 : vector<8x64xf32>
    %225 = arith.mulf %214, %224 : vector<8x64xf32>
    %c0_87 = arith.constant 0 : index
    %c0_88 = arith.constant 0 : index
    %226 = vector.load %arg15[%c0_87, %c0_88] : memref<31x64xf32, #tpu.memory_space<vmem>>, vector<31x64xf32>
    %227 = tpu.iota {dimensions = array<i32: 0>} : vector<8x1xi32>
    %cst_89 = arith.constant 0.000000e+00 : f32
    %228 = vector.broadcast %cst_89 : f32 to vector<8x64xf32>
    %c7_i32 = arith.constant 7 : i32
    %229 = tpu.dynamic_rotate %225 by %c7_i32 dim 0 : vector<8x64xf32>, i32 -> vector<8x64xf32>
    %c-7_i32 = arith.constant -7 : i32
    %230 = vector.broadcast %c-7_i32 : i32 to vector<8x1xi32>
    %231 = arith.addi %227, %230 : vector<8x1xi32>
    %c0_i32 = arith.constant 0 : i32
    %232 = vector.broadcast %c0_i32 : i32 to vector<8x1xi32>
    %233 = arith.cmpi sge, %231, %232 : vector<8x1xi32>
    %c-7_i32_90 = arith.constant -7 : i32
    %234 = vector.broadcast %c-7_i32_90 : i32 to vector<8x1xi32>
    %235 = arith.addi %227, %234 : vector<8x1xi32>
    %c8_i32 = arith.constant 8 : i32
    %236 = vector.broadcast %c8_i32 : i32 to vector<8x1xi32>
    %237 = arith.cmpi slt, %235, %236 : vector<8x1xi32>
    %238 = arith.andi %233, %237 : vector<8x1xi1>
    %cst_91 = arith.constant 0.000000e+00 : f32
    %239 = vector.shape_cast %238 : vector<8x1xi1> to vector<8x1xi1>
    %240 = vector.broadcast %239 : vector<8x1xi1> to vector<8x64xi1>
    %241 = vector.broadcast %cst_91 : f32 to vector<8x64xf32>
    %242 = arith.select %240, %229, %241 : vector<8x64xi1>, vector<8x64xf32>
    %243 = vector.extract_strided_slice %226 {offsets = [8, 0], sizes = [1, 64], strides = [1, 1]} : vector<31x64xf32> to vector<1x64xf32>
    %244 = vector.broadcast %243 : vector<1x64xf32> to vector<8x64xf32>
    %245 = arith.mulf %242, %244 : vector<8x64xf32>
    %246 = arith.addf %228, %245 : vector<8x64xf32>
    %c6_i32 = arith.constant 6 : i32
    %247 = tpu.dynamic_rotate %225 by %c6_i32 dim 0 : vector<8x64xf32>, i32 -> vector<8x64xf32>
    %c-6_i32 = arith.constant -6 : i32
    %248 = vector.broadcast %c-6_i32 : i32 to vector<8x1xi32>
    %249 = arith.addi %227, %248 : vector<8x1xi32>
    %c0_i32_92 = arith.constant 0 : i32
    %250 = vector.broadcast %c0_i32_92 : i32 to vector<8x1xi32>
    %251 = arith.cmpi sge, %249, %250 : vector<8x1xi32>
    %c-6_i32_93 = arith.constant -6 : i32
    %252 = vector.broadcast %c-6_i32_93 : i32 to vector<8x1xi32>
    %253 = arith.addi %227, %252 : vector<8x1xi32>
    %c8_i32_94 = arith.constant 8 : i32
    %254 = vector.broadcast %c8_i32_94 : i32 to vector<8x1xi32>
    %255 = arith.cmpi slt, %253, %254 : vector<8x1xi32>
    %256 = arith.andi %251, %255 : vector<8x1xi1>
    %cst_95 = arith.constant 0.000000e+00 : f32
    %257 = vector.shape_cast %256 : vector<8x1xi1> to vector<8x1xi1>
    %258 = vector.broadcast %257 : vector<8x1xi1> to vector<8x64xi1>
    %259 = vector.broadcast %cst_95 : f32 to vector<8x64xf32>
    %260 = arith.select %258, %247, %259 : vector<8x64xi1>, vector<8x64xf32>
    %261 = vector.extract_strided_slice %226 {offsets = [9, 0], sizes = [1, 64], strides = [1, 1]} : vector<31x64xf32> to vector<1x64xf32>
    %262 = vector.broadcast %261 : vector<1x64xf32> to vector<8x64xf32>
    %263 = arith.mulf %260, %262 : vector<8x64xf32>
    %264 = arith.addf %246, %263 : vector<8x64xf32>
    %c5_i32 = arith.constant 5 : i32
    %265 = tpu.dynamic_rotate %225 by %c5_i32 dim 0 : vector<8x64xf32>, i32 -> vector<8x64xf32>
    %c-5_i32 = arith.constant -5 : i32
    %266 = vector.broadcast %c-5_i32 : i32 to vector<8x1xi32>
    %267 = arith.addi %227, %266 : vector<8x1xi32>
    %c0_i32_96 = arith.constant 0 : i32
    %268 = vector.broadcast %c0_i32_96 : i32 to vector<8x1xi32>
    %269 = arith.cmpi sge, %267, %268 : vector<8x1xi32>
    %c-5_i32_97 = arith.constant -5 : i32
    %270 = vector.broadcast %c-5_i32_97 : i32 to vector<8x1xi32>
    %271 = arith.addi %227, %270 : vector<8x1xi32>
    %c8_i32_98 = arith.constant 8 : i32
    %272 = vector.broadcast %c8_i32_98 : i32 to vector<8x1xi32>
    %273 = arith.cmpi slt, %271, %272 : vector<8x1xi32>
    %274 = arith.andi %269, %273 : vector<8x1xi1>
    %cst_99 = arith.constant 0.000000e+00 : f32
    %275 = vector.shape_cast %274 : vector<8x1xi1> to vector<8x1xi1>
    %276 = vector.broadcast %275 : vector<8x1xi1> to vector<8x64xi1>
    %277 = vector.broadcast %cst_99 : f32 to vector<8x64xf32>
    %278 = arith.select %276, %265, %277 : vector<8x64xi1>, vector<8x64xf32>
    %279 = vector.extract_strided_slice %226 {offsets = [10, 0], sizes = [1, 64], strides = [1, 1]} : vector<31x64xf32> to vector<1x64xf32>
    %280 = vector.broadcast %279 : vector<1x64xf32> to vector<8x64xf32>
    %281 = arith.mulf %278, %280 : vector<8x64xf32>
    %282 = arith.addf %264, %281 : vector<8x64xf32>
    %c4_i32 = arith.constant 4 : i32
    %283 = tpu.dynamic_rotate %225 by %c4_i32 dim 0 : vector<8x64xf32>, i32 -> vector<8x64xf32>
    %c-4_i32 = arith.constant -4 : i32
    %284 = vector.broadcast %c-4_i32 : i32 to vector<8x1xi32>
    %285 = arith.addi %227, %284 : vector<8x1xi32>
    %c0_i32_100 = arith.constant 0 : i32
    %286 = vector.broadcast %c0_i32_100 : i32 to vector<8x1xi32>
    %287 = arith.cmpi sge, %285, %286 : vector<8x1xi32>
    %c-4_i32_101 = arith.constant -4 : i32
    %288 = vector.broadcast %c-4_i32_101 : i32 to vector<8x1xi32>
    %289 = arith.addi %227, %288 : vector<8x1xi32>
    %c8_i32_102 = arith.constant 8 : i32
    %290 = vector.broadcast %c8_i32_102 : i32 to vector<8x1xi32>
    %291 = arith.cmpi slt, %289, %290 : vector<8x1xi32>
    %292 = arith.andi %287, %291 : vector<8x1xi1>
    %cst_103 = arith.constant 0.000000e+00 : f32
    %293 = vector.shape_cast %292 : vector<8x1xi1> to vector<8x1xi1>
    %294 = vector.broadcast %293 : vector<8x1xi1> to vector<8x64xi1>
    %295 = vector.broadcast %cst_103 : f32 to vector<8x64xf32>
    %296 = arith.select %294, %283, %295 : vector<8x64xi1>, vector<8x64xf32>
    %297 = vector.extract_strided_slice %226 {offsets = [11, 0], sizes = [1, 64], strides = [1, 1]} : vector<31x64xf32> to vector<1x64xf32>
    %298 = vector.broadcast %297 : vector<1x64xf32> to vector<8x64xf32>
    %299 = arith.mulf %296, %298 : vector<8x64xf32>
    %300 = arith.addf %282, %299 : vector<8x64xf32>
    %c3_i32 = arith.constant 3 : i32
    %301 = tpu.dynamic_rotate %225 by %c3_i32 dim 0 : vector<8x64xf32>, i32 -> vector<8x64xf32>
    %c-3_i32 = arith.constant -3 : i32
    %302 = vector.broadcast %c-3_i32 : i32 to vector<8x1xi32>
    %303 = arith.addi %227, %302 : vector<8x1xi32>
    %c0_i32_104 = arith.constant 0 : i32
    %304 = vector.broadcast %c0_i32_104 : i32 to vector<8x1xi32>
    %305 = arith.cmpi sge, %303, %304 : vector<8x1xi32>
    %c-3_i32_105 = arith.constant -3 : i32
    %306 = vector.broadcast %c-3_i32_105 : i32 to vector<8x1xi32>
    %307 = arith.addi %227, %306 : vector<8x1xi32>
    %c8_i32_106 = arith.constant 8 : i32
    %308 = vector.broadcast %c8_i32_106 : i32 to vector<8x1xi32>
    %309 = arith.cmpi slt, %307, %308 : vector<8x1xi32>
    %310 = arith.andi %305, %309 : vector<8x1xi1>
    %cst_107 = arith.constant 0.000000e+00 : f32
    %311 = vector.shape_cast %310 : vector<8x1xi1> to vector<8x1xi1>
    %312 = vector.broadcast %311 : vector<8x1xi1> to vector<8x64xi1>
    %313 = vector.broadcast %cst_107 : f32 to vector<8x64xf32>
    %314 = arith.select %312, %301, %313 : vector<8x64xi1>, vector<8x64xf32>
    %315 = vector.extract_strided_slice %226 {offsets = [12, 0], sizes = [1, 64], strides = [1, 1]} : vector<31x64xf32> to vector<1x64xf32>
    %316 = vector.broadcast %315 : vector<1x64xf32> to vector<8x64xf32>
    %317 = arith.mulf %314, %316 : vector<8x64xf32>
    %318 = arith.addf %300, %317 : vector<8x64xf32>
    %c2_i32 = arith.constant 2 : i32
    %319 = tpu.dynamic_rotate %225 by %c2_i32 dim 0 : vector<8x64xf32>, i32 -> vector<8x64xf32>
    %c-2_i32 = arith.constant -2 : i32
    %320 = vector.broadcast %c-2_i32 : i32 to vector<8x1xi32>
    %321 = arith.addi %227, %320 : vector<8x1xi32>
    %c0_i32_108 = arith.constant 0 : i32
    %322 = vector.broadcast %c0_i32_108 : i32 to vector<8x1xi32>
    %323 = arith.cmpi sge, %321, %322 : vector<8x1xi32>
    %c-2_i32_109 = arith.constant -2 : i32
    %324 = vector.broadcast %c-2_i32_109 : i32 to vector<8x1xi32>
    %325 = arith.addi %227, %324 : vector<8x1xi32>
    %c8_i32_110 = arith.constant 8 : i32
    %326 = vector.broadcast %c8_i32_110 : i32 to vector<8x1xi32>
    %327 = arith.cmpi slt, %325, %326 : vector<8x1xi32>
    %328 = arith.andi %323, %327 : vector<8x1xi1>
    %cst_111 = arith.constant 0.000000e+00 : f32
    %329 = vector.shape_cast %328 : vector<8x1xi1> to vector<8x1xi1>
    %330 = vector.broadcast %329 : vector<8x1xi1> to vector<8x64xi1>
    %331 = vector.broadcast %cst_111 : f32 to vector<8x64xf32>
    %332 = arith.select %330, %319, %331 : vector<8x64xi1>, vector<8x64xf32>
    %333 = vector.extract_strided_slice %226 {offsets = [13, 0], sizes = [1, 64], strides = [1, 1]} : vector<31x64xf32> to vector<1x64xf32>
    %334 = vector.broadcast %333 : vector<1x64xf32> to vector<8x64xf32>
    %335 = arith.mulf %332, %334 : vector<8x64xf32>
    %336 = arith.addf %318, %335 : vector<8x64xf32>
    %c1_i32 = arith.constant 1 : i32
    %337 = tpu.dynamic_rotate %225 by %c1_i32 dim 0 : vector<8x64xf32>, i32 -> vector<8x64xf32>
    %c-1_i32 = arith.constant -1 : i32
    %338 = vector.broadcast %c-1_i32 : i32 to vector<8x1xi32>
    %339 = arith.addi %227, %338 : vector<8x1xi32>
    %c0_i32_112 = arith.constant 0 : i32
    %340 = vector.broadcast %c0_i32_112 : i32 to vector<8x1xi32>
    %341 = arith.cmpi sge, %339, %340 : vector<8x1xi32>
    %c-1_i32_113 = arith.constant -1 : i32
    %342 = vector.broadcast %c-1_i32_113 : i32 to vector<8x1xi32>
    %343 = arith.addi %227, %342 : vector<8x1xi32>
    %c8_i32_114 = arith.constant 8 : i32
    %344 = vector.broadcast %c8_i32_114 : i32 to vector<8x1xi32>
    %345 = arith.cmpi slt, %343, %344 : vector<8x1xi32>
    %346 = arith.andi %341, %345 : vector<8x1xi1>
    %cst_115 = arith.constant 0.000000e+00 : f32
    %347 = vector.shape_cast %346 : vector<8x1xi1> to vector<8x1xi1>
    %348 = vector.broadcast %347 : vector<8x1xi1> to vector<8x64xi1>
    %349 = vector.broadcast %cst_115 : f32 to vector<8x64xf32>
    %350 = arith.select %348, %337, %349 : vector<8x64xi1>, vector<8x64xf32>
    %351 = vector.extract_strided_slice %226 {offsets = [14, 0], sizes = [1, 64], strides = [1, 1]} : vector<31x64xf32> to vector<1x64xf32>
    %352 = vector.broadcast %351 : vector<1x64xf32> to vector<8x64xf32>
    %353 = arith.mulf %350, %352 : vector<8x64xf32>
    %354 = arith.addf %336, %353 : vector<8x64xf32>
    %c0_i32_116 = arith.constant 0 : i32
    %355 = vector.broadcast %c0_i32_116 : i32 to vector<8x1xi32>
    %356 = arith.addi %227, %355 : vector<8x1xi32>
    %c0_i32_117 = arith.constant 0 : i32
    %357 = vector.broadcast %c0_i32_117 : i32 to vector<8x1xi32>
    %358 = arith.cmpi sge, %356, %357 : vector<8x1xi32>
    %c0_i32_118 = arith.constant 0 : i32
    %359 = vector.broadcast %c0_i32_118 : i32 to vector<8x1xi32>
    %360 = arith.addi %227, %359 : vector<8x1xi32>
    %c8_i32_119 = arith.constant 8 : i32
    %361 = vector.broadcast %c8_i32_119 : i32 to vector<8x1xi32>
    %362 = arith.cmpi slt, %360, %361 : vector<8x1xi32>
    %363 = arith.andi %358, %362 : vector<8x1xi1>
    %cst_120 = arith.constant 0.000000e+00 : f32
    %364 = vector.shape_cast %363 : vector<8x1xi1> to vector<8x1xi1>
    %365 = vector.broadcast %364 : vector<8x1xi1> to vector<8x64xi1>
    %366 = vector.broadcast %cst_120 : f32 to vector<8x64xf32>
    %367 = arith.select %365, %225, %366 : vector<8x64xi1>, vector<8x64xf32>
    %368 = vector.extract_strided_slice %226 {offsets = [15, 0], sizes = [1, 64], strides = [1, 1]} : vector<31x64xf32> to vector<1x64xf32>
    %369 = vector.broadcast %368 : vector<1x64xf32> to vector<8x64xf32>
    %370 = arith.mulf %367, %369 : vector<8x64xf32>
    %371 = arith.addf %354, %370 : vector<8x64xf32>
    %c7_i32_121 = arith.constant 7 : i32
    %372 = tpu.dynamic_rotate %225 by %c7_i32_121 dim 0 : vector<8x64xf32>, i32 -> vector<8x64xf32>
    %c1_i32_122 = arith.constant 1 : i32
    %373 = vector.broadcast %c1_i32_122 : i32 to vector<8x1xi32>
    %374 = arith.addi %227, %373 : vector<8x1xi32>
    %c0_i32_123 = arith.constant 0 : i32
    %375 = vector.broadcast %c0_i32_123 : i32 to vector<8x1xi32>
    %376 = arith.cmpi sge, %374, %375 : vector<8x1xi32>
    %c1_i32_124 = arith.constant 1 : i32
    %377 = vector.broadcast %c1_i32_124 : i32 to vector<8x1xi32>
    %378 = arith.addi %227, %377 : vector<8x1xi32>
    %c8_i32_125 = arith.constant 8 : i32
    %379 = vector.broadcast %c8_i32_125 : i32 to vector<8x1xi32>
    %380 = arith.cmpi slt, %378, %379 : vector<8x1xi32>
    %381 = arith.andi %376, %380 : vector<8x1xi1>
    %cst_126 = arith.constant 0.000000e+00 : f32
    %382 = vector.shape_cast %381 : vector<8x1xi1> to vector<8x1xi1>
    %383 = vector.broadcast %382 : vector<8x1xi1> to vector<8x64xi1>
    %384 = vector.broadcast %cst_126 : f32 to vector<8x64xf32>
    %385 = arith.select %383, %372, %384 : vector<8x64xi1>, vector<8x64xf32>
    %386 = vector.extract_strided_slice %226 {offsets = [16, 0], sizes = [1, 64], strides = [1, 1]} : vector<31x64xf32> to vector<1x64xf32>
    %387 = vector.broadcast %386 : vector<1x64xf32> to vector<8x64xf32>
    %388 = arith.mulf %385, %387 : vector<8x64xf32>
    %389 = arith.addf %371, %388 : vector<8x64xf32>
    %c6_i32_127 = arith.constant 6 : i32
    %390 = tpu.dynamic_rotate %225 by %c6_i32_127 dim 0 : vector<8x64xf32>, i32 -> vector<8x64xf32>
    %c2_i32_128 = arith.constant 2 : i32
    %391 = vector.broadcast %c2_i32_128 : i32 to vector<8x1xi32>
    %392 = arith.addi %227, %391 : vector<8x1xi32>
    %c0_i32_129 = arith.constant 0 : i32
    %393 = vector.broadcast %c0_i32_129 : i32 to vector<8x1xi32>
    %394 = arith.cmpi sge, %392, %393 : vector<8x1xi32>
    %c2_i32_130 = arith.constant 2 : i32
    %395 = vector.broadcast %c2_i32_130 : i32 to vector<8x1xi32>
    %396 = arith.addi %227, %395 : vector<8x1xi32>
    %c8_i32_131 = arith.constant 8 : i32
    %397 = vector.broadcast %c8_i32_131 : i32 to vector<8x1xi32>
    %398 = arith.cmpi slt, %396, %397 : vector<8x1xi32>
    %399 = arith.andi %394, %398 : vector<8x1xi1>
    %cst_132 = arith.constant 0.000000e+00 : f32
    %400 = vector.shape_cast %399 : vector<8x1xi1> to vector<8x1xi1>
    %401 = vector.broadcast %400 : vector<8x1xi1> to vector<8x64xi1>
    %402 = vector.broadcast %cst_132 : f32 to vector<8x64xf32>
    %403 = arith.select %401, %390, %402 : vector<8x64xi1>, vector<8x64xf32>
    %404 = vector.extract_strided_slice %226 {offsets = [17, 0], sizes = [1, 64], strides = [1, 1]} : vector<31x64xf32> to vector<1x64xf32>
    %405 = vector.broadcast %404 : vector<1x64xf32> to vector<8x64xf32>
    %406 = arith.mulf %403, %405 : vector<8x64xf32>
    %407 = arith.addf %389, %406 : vector<8x64xf32>
    %c5_i32_133 = arith.constant 5 : i32
    %408 = tpu.dynamic_rotate %225 by %c5_i32_133 dim 0 : vector<8x64xf32>, i32 -> vector<8x64xf32>
    %c3_i32_134 = arith.constant 3 : i32
    %409 = vector.broadcast %c3_i32_134 : i32 to vector<8x1xi32>
    %410 = arith.addi %227, %409 : vector<8x1xi32>
    %c0_i32_135 = arith.constant 0 : i32
    %411 = vector.broadcast %c0_i32_135 : i32 to vector<8x1xi32>
    %412 = arith.cmpi sge, %410, %411 : vector<8x1xi32>
    %c3_i32_136 = arith.constant 3 : i32
    %413 = vector.broadcast %c3_i32_136 : i32 to vector<8x1xi32>
    %414 = arith.addi %227, %413 : vector<8x1xi32>
    %c8_i32_137 = arith.constant 8 : i32
    %415 = vector.broadcast %c8_i32_137 : i32 to vector<8x1xi32>
    %416 = arith.cmpi slt, %414, %415 : vector<8x1xi32>
    %417 = arith.andi %412, %416 : vector<8x1xi1>
    %cst_138 = arith.constant 0.000000e+00 : f32
    %418 = vector.shape_cast %417 : vector<8x1xi1> to vector<8x1xi1>
    %419 = vector.broadcast %418 : vector<8x1xi1> to vector<8x64xi1>
    %420 = vector.broadcast %cst_138 : f32 to vector<8x64xf32>
    %421 = arith.select %419, %408, %420 : vector<8x64xi1>, vector<8x64xf32>
    %422 = vector.extract_strided_slice %226 {offsets = [18, 0], sizes = [1, 64], strides = [1, 1]} : vector<31x64xf32> to vector<1x64xf32>
    %423 = vector.broadcast %422 : vector<1x64xf32> to vector<8x64xf32>
    %424 = arith.mulf %421, %423 : vector<8x64xf32>
    %425 = arith.addf %407, %424 : vector<8x64xf32>
    %c4_i32_139 = arith.constant 4 : i32
    %426 = tpu.dynamic_rotate %225 by %c4_i32_139 dim 0 : vector<8x64xf32>, i32 -> vector<8x64xf32>
    %c4_i32_140 = arith.constant 4 : i32
    %427 = vector.broadcast %c4_i32_140 : i32 to vector<8x1xi32>
    %428 = arith.addi %227, %427 : vector<8x1xi32>
    %c0_i32_141 = arith.constant 0 : i32
    %429 = vector.broadcast %c0_i32_141 : i32 to vector<8x1xi32>
    %430 = arith.cmpi sge, %428, %429 : vector<8x1xi32>
    %c4_i32_142 = arith.constant 4 : i32
    %431 = vector.broadcast %c4_i32_142 : i32 to vector<8x1xi32>
    %432 = arith.addi %227, %431 : vector<8x1xi32>
    %c8_i32_143 = arith.constant 8 : i32
    %433 = vector.broadcast %c8_i32_143 : i32 to vector<8x1xi32>
    %434 = arith.cmpi slt, %432, %433 : vector<8x1xi32>
    %435 = arith.andi %430, %434 : vector<8x1xi1>
    %cst_144 = arith.constant 0.000000e+00 : f32
    %436 = vector.shape_cast %435 : vector<8x1xi1> to vector<8x1xi1>
    %437 = vector.broadcast %436 : vector<8x1xi1> to vector<8x64xi1>
    %438 = vector.broadcast %cst_144 : f32 to vector<8x64xf32>
    %439 = arith.select %437, %426, %438 : vector<8x64xi1>, vector<8x64xf32>
    %440 = vector.extract_strided_slice %226 {offsets = [19, 0], sizes = [1, 64], strides = [1, 1]} : vector<31x64xf32> to vector<1x64xf32>
    %441 = vector.broadcast %440 : vector<1x64xf32> to vector<8x64xf32>
    %442 = arith.mulf %439, %441 : vector<8x64xf32>
    %443 = arith.addf %425, %442 : vector<8x64xf32>
    %c3_i32_145 = arith.constant 3 : i32
    %444 = tpu.dynamic_rotate %225 by %c3_i32_145 dim 0 : vector<8x64xf32>, i32 -> vector<8x64xf32>
    %c5_i32_146 = arith.constant 5 : i32
    %445 = vector.broadcast %c5_i32_146 : i32 to vector<8x1xi32>
    %446 = arith.addi %227, %445 : vector<8x1xi32>
    %c0_i32_147 = arith.constant 0 : i32
    %447 = vector.broadcast %c0_i32_147 : i32 to vector<8x1xi32>
    %448 = arith.cmpi sge, %446, %447 : vector<8x1xi32>
    %c5_i32_148 = arith.constant 5 : i32
    %449 = vector.broadcast %c5_i32_148 : i32 to vector<8x1xi32>
    %450 = arith.addi %227, %449 : vector<8x1xi32>
    %c8_i32_149 = arith.constant 8 : i32
    %451 = vector.broadcast %c8_i32_149 : i32 to vector<8x1xi32>
    %452 = arith.cmpi slt, %450, %451 : vector<8x1xi32>
    %453 = arith.andi %448, %452 : vector<8x1xi1>
    %cst_150 = arith.constant 0.000000e+00 : f32
    %454 = vector.shape_cast %453 : vector<8x1xi1> to vector<8x1xi1>
    %455 = vector.broadcast %454 : vector<8x1xi1> to vector<8x64xi1>
    %456 = vector.broadcast %cst_150 : f32 to vector<8x64xf32>
    %457 = arith.select %455, %444, %456 : vector<8x64xi1>, vector<8x64xf32>
    %458 = vector.extract_strided_slice %226 {offsets = [20, 0], sizes = [1, 64], strides = [1, 1]} : vector<31x64xf32> to vector<1x64xf32>
    %459 = vector.broadcast %458 : vector<1x64xf32> to vector<8x64xf32>
    %460 = arith.mulf %457, %459 : vector<8x64xf32>
    %461 = arith.addf %443, %460 : vector<8x64xf32>
    %c2_i32_151 = arith.constant 2 : i32
    %462 = tpu.dynamic_rotate %225 by %c2_i32_151 dim 0 : vector<8x64xf32>, i32 -> vector<8x64xf32>
    %c6_i32_152 = arith.constant 6 : i32
    %463 = vector.broadcast %c6_i32_152 : i32 to vector<8x1xi32>
    %464 = arith.addi %227, %463 : vector<8x1xi32>
    %c0_i32_153 = arith.constant 0 : i32
    %465 = vector.broadcast %c0_i32_153 : i32 to vector<8x1xi32>
    %466 = arith.cmpi sge, %464, %465 : vector<8x1xi32>
    %c6_i32_154 = arith.constant 6 : i32
    %467 = vector.broadcast %c6_i32_154 : i32 to vector<8x1xi32>
    %468 = arith.addi %227, %467 : vector<8x1xi32>
    %c8_i32_155 = arith.constant 8 : i32
    %469 = vector.broadcast %c8_i32_155 : i32 to vector<8x1xi32>
    %470 = arith.cmpi slt, %468, %469 : vector<8x1xi32>
    %471 = arith.andi %466, %470 : vector<8x1xi1>
    %cst_156 = arith.constant 0.000000e+00 : f32
    %472 = vector.shape_cast %471 : vector<8x1xi1> to vector<8x1xi1>
    %473 = vector.broadcast %472 : vector<8x1xi1> to vector<8x64xi1>
    %474 = vector.broadcast %cst_156 : f32 to vector<8x64xf32>
    %475 = arith.select %473, %462, %474 : vector<8x64xi1>, vector<8x64xf32>
    %476 = vector.extract_strided_slice %226 {offsets = [21, 0], sizes = [1, 64], strides = [1, 1]} : vector<31x64xf32> to vector<1x64xf32>
    %477 = vector.broadcast %476 : vector<1x64xf32> to vector<8x64xf32>
    %478 = arith.mulf %475, %477 : vector<8x64xf32>
    %479 = arith.addf %461, %478 : vector<8x64xf32>
    %c1_i32_157 = arith.constant 1 : i32
    %480 = tpu.dynamic_rotate %225 by %c1_i32_157 dim 0 : vector<8x64xf32>, i32 -> vector<8x64xf32>
    %c7_i32_158 = arith.constant 7 : i32
    %481 = vector.broadcast %c7_i32_158 : i32 to vector<8x1xi32>
    %482 = arith.addi %227, %481 : vector<8x1xi32>
    %c0_i32_159 = arith.constant 0 : i32
    %483 = vector.broadcast %c0_i32_159 : i32 to vector<8x1xi32>
    %484 = arith.cmpi sge, %482, %483 : vector<8x1xi32>
    %c7_i32_160 = arith.constant 7 : i32
    %485 = vector.broadcast %c7_i32_160 : i32 to vector<8x1xi32>
    %486 = arith.addi %227, %485 : vector<8x1xi32>
    %c8_i32_161 = arith.constant 8 : i32
    %487 = vector.broadcast %c8_i32_161 : i32 to vector<8x1xi32>
    %488 = arith.cmpi slt, %486, %487 : vector<8x1xi32>
    %489 = arith.andi %484, %488 : vector<8x1xi1>
    %cst_162 = arith.constant 0.000000e+00 : f32
    %490 = vector.shape_cast %489 : vector<8x1xi1> to vector<8x1xi1>
    %491 = vector.broadcast %490 : vector<8x1xi1> to vector<8x64xi1>
    %492 = vector.broadcast %cst_162 : f32 to vector<8x64xf32>
    %493 = arith.select %491, %480, %492 : vector<8x64xi1>, vector<8x64xf32>
    %494 = vector.extract_strided_slice %226 {offsets = [22, 0], sizes = [1, 64], strides = [1, 1]} : vector<31x64xf32> to vector<1x64xf32>
    %495 = vector.broadcast %494 : vector<1x64xf32> to vector<8x64xf32>
    %496 = arith.mulf %493, %495 : vector<8x64xf32>
    %497 = arith.addf %479, %496 : vector<8x64xf32>
    %c0_163 = arith.constant 0 : index
    %c0_164 = arith.constant 0 : index
    %498 = vector.load %arg16[%c0_163, %c0_164] : memref<1x64xf32, #tpu.memory_space<vmem>>, vector<1x64xf32>
    %499 = vector.broadcast %498 : vector<1x64xf32> to vector<8x64xf32>
    %500 = arith.addf %497, %499 : vector<8x64xf32>
    %501 = arith.negf %500 : vector<8x64xf32>
    %502 = math.exp %501 : vector<8x64xf32>
    %cst_165 = arith.constant 1.000000e+00 : f32
    %503 = vector.broadcast %cst_165 : f32 to vector<8x64xf32>
    %504 = arith.addf %503, %502 : vector<8x64xf32>
    %505 = arith.divf %503, %504 : vector<8x64xf32>
    %506 = arith.mulf %500, %505 : vector<8x64xf32>
    %507 = arith.truncf %506 : vector<8x64xf32> to vector<8x64xbf16>
    %c0_166 = arith.constant 0 : index
    %c0_167 = arith.constant 0 : index
    %508 = vector.load %arg17[%c0_166, %c0_167] : memref<64x32xbf16, #tpu.memory_space<vmem>>, vector<64x32xbf16>
    %cst_168 = arith.constant dense<0.000000e+00> : vector<8x32xf32>
    %509 = tpu.matmul %507, %508, %cst_168 {dimension_numbers = #tpu.dot_dimension_numbers<[1], [0], [0], [1], [0, 0, 1, 1], [], []>} : vector<8x64xbf16>, vector<64x32xbf16>, vector<8x32xf32> -> vector<8x32xf32>
    %c0_169 = arith.constant 0 : index
    %c0_170 = arith.constant 0 : index
    %510 = vector.load %arg18[%c0_169, %c0_170] : memref<1x32xf32, #tpu.memory_space<vmem>>, vector<1x32xf32>
    %511 = vector.broadcast %510 : vector<1x32xf32> to vector<8x32xf32>
    %512 = arith.addf %509, %511 : vector<8x32xf32>
    %513 = arith.addf %184, %512 : vector<8x32xf32>
    %c0_171 = arith.constant 0 : index
    %c0_172 = arith.constant 0 : index
    %c0_173 = arith.constant 0 : index
    %514 = vector.load %arg19[%c0_171, %c0_172, %c0_173] : memref<1x8x32xf32, #tpu.memory_space<vmem>>, vector<1x8x32xf32>
    %515 = vector.shape_cast %514 : vector<1x8x32xf32> to vector<8x32xf32>
    %516 = vector.shape_cast %513 : vector<8x32xf32> to vector<1x8x32xf32>
    tpu.vector_store %arg19[%c0_171, %c0_172, %c0_173], %516 {strides = array<i32>} : memref<1x8x32xf32, #tpu.memory_space<vmem>>, vector<1x8x32xf32>,
    return
  }
  func.func @transform_0(%arg0: i32) -> (i32, i32, i32) {
    %c0_i32 = arith.constant 0 : i32
    %c0_i32_0 = arith.constant 0 : i32
    %c0_i32_1 = arith.constant 0 : i32
    return %arg0, %c0_i32, %c0_i32_0 : i32, i32, i32
  }
  func.func @transform_1(%arg0: i32) -> (i32, i32) {
    %c0_i32 = arith.constant 0 : i32
    %c0_i32_0 = arith.constant 0 : i32
    %c0_i32_1 = arith.constant 0 : i32
    return %c0_i32, %c0_i32_0 : i32, i32
  }
  func.func @transform_2(%arg0: i32) -> (i32, i32) {
    %c0_i32 = arith.constant 0 : i32
    %c0_i32_0 = arith.constant 0 : i32
    %c0_i32_1 = arith.constant 0 : i32
    return %c0_i32, %c0_i32_0 : i32, i32
  }
  func.func @transform_3(%arg0: i32) -> (i32, i32) {
    %c0_i32 = arith.constant 0 : i32
    %c0_i32_0 = arith.constant 0 : i32
    %c0_i32_1 = arith.constant 0 : i32
    return %c0_i32, %c0_i32_0 : i32, i32
  }
  func.func @transform_4(%arg0: i32) -> (i32, i32) {
    %c0_i32 = arith.constant 0 : i32
    %c0_i32_0 = arith.constant 0 : i32
    %c0_i32_1 = arith.constant 0 : i32
    return %c0_i32, %c0_i32_0 : i32, i32
  }
  func.func @transform_5(%arg0: i32) -> (i32, i32) {
    %c0_i32 = arith.constant 0 : i32
    %c0_i32_0 = arith.constant 0 : i32
    %c0_i32_1 = arith.constant 0 : i32
    return %c0_i32, %c0_i32_0 : i32, i32
  }
  func.func @transform_6(%arg0: i32) -> (i32, i32) {
    %c0_i32 = arith.constant 0 : i32
    %c0_i32_0 = arith.constant 0 : i32
    %c0_i32_1 = arith.constant 0 : i32
    return %c0_i32, %c0_i32_0 : i32, i32
  }
  func.func @transform_7(%arg0: i32) -> (i32, i32) {
    %c0_i32 = arith.constant 0 : i32
    %c0_i32_0 = arith.constant 0 : i32
    %c0_i32_1 = arith.constant 0 : i32
    return %c0_i32, %c0_i32_0 : i32, i32
  }
  func.func @transform_8(%arg0: i32) -> (i32, i32) {
    %c0_i32 = arith.constant 0 : i32
    %c0_i32_0 = arith.constant 0 : i32
    %c0_i32_1 = arith.constant 0 : i32
    return %c0_i32, %c0_i32_0 : i32, i32
  }
  func.func @transform_9(%arg0: i32) -> (i32, i32) {
    %c0_i32 = arith.constant 0 : i32
    %c0_i32_0 = arith.constant 0 : i32
    %c0_i32_1 = arith.constant 0 : i32
    return %c0_i32, %c0_i32_0 : i32, i32
  }
  func.func @transform_10(%arg0: i32) -> (i32, i32) {
    %c0_i32 = arith.constant 0 : i32
    %c0_i32_0 = arith.constant 0 : i32
    %c0_i32_1 = arith.constant 0 : i32
    return %c0_i32, %c0_i32_0 : i32, i32
  }
  func.func @transform_11(%arg0: i32) -> (i32, i32) {
    %c0_i32 = arith.constant 0 : i32
    %c0_i32_0 = arith.constant 0 : i32
    %c0_i32_1 = arith.constant 0 : i32
    return %c0_i32, %c0_i32_0 : i32, i32
  }
  func.func @transform_12(%arg0: i32) -> (i32, i32) {
    %c0_i32 = arith.constant 0 : i32
    %c0_i32_0 = arith.constant 0 : i32
    %c0_i32_1 = arith.constant 0 : i32
    return %c0_i32, %c0_i32_0 : i32, i32
  }
  func.func @transform_13(%arg0: i32) -> (i32, i32) {
    %c0_i32 = arith.constant 0 : i32
    %c0_i32_0 = arith.constant 0 : i32
    %c0_i32_1 = arith.constant 0 : i32
    return %c0_i32, %c0_i32_0 : i32, i32
  }
  func.func @transform_14(%arg0: i32) -> (i32, i32) {
    %c0_i32 = arith.constant 0 : i32
    %c0_i32_0 = arith.constant 0 : i32
    %c0_i32_1 = arith.constant 0 : i32
    return %c0_i32, %c0_i32_0 : i32, i32
  }
  func.func @transform_15(%arg0: i32) -> (i32, i32) {
    %c0_i32 = arith.constant 0 : i32
    %c0_i32_0 = arith.constant 0 : i32
    %c0_i32_1 = arith.constant 0 : i32
    return %c0_i32, %c0_i32_0 : i32, i32
  }
  func.func @transform_16(%arg0: i32) -> (i32, i32) {
    %c0_i32 = arith.constant 0 : i32
    %c0_i32_0 = arith.constant 0 : i32
    %c0_i32_1 = arith.constant 0 : i32
    return %c0_i32, %c0_i32_0 : i32, i32
  }
  func.func @transform_17(%arg0: i32) -> (i32, i32) {
    %c0_i32 = arith.constant 0 : i32
    %c0_i32_0 = arith.constant 0 : i32
    %c0_i32_1 = arith.constant 0 : i32
    return %c0_i32, %c0_i32_0 : i32, i32
  }
  func.func @transform_18(%arg0: i32) -> (i32, i32, i32) {
    %c0_i32 = arith.constant 0 : i32
    %c0_i32_0 = arith.constant 0 : i32
    %c0_i32_1 = arith.constant 0 : i32
    return %arg0, %c0_i32, %c0_i32_0 : i32, i32, i32
  }
}

</mosaic_0001>

<llo_original>
// kernel: _lambda_.2
$region0: #{_lambda_.2}
  #allocation0 [shape = 'u32[]', space=smem, size = 0x4, offset = 0x4, fixed_abs, tag = 'smem constant byte address 0x4 - core index']
  #allocation1 [shape = 'u32[144,128]{1,0:T(1,128)}', space=vmem, size = 0x12000, scoped, tag = 'internal scratch']
  %s0 = inlined_call_operand.vmem [shape: f32[2,8,32], index: 0, kind: input, shape index: {}]
  %s1 = inlined_call_operand.vmem [shape: f32[1,32], index: 1, kind: input, shape index: {}]
  %s2 = inlined_call_operand.vmem [shape: f32[1,32], index: 2, kind: input, shape index: {}]
  %s3 = inlined_call_operand.vmem [shape: bf16[32,384], index: 3, kind: input, shape index: {}]
  %s4 = inlined_call_operand.vmem [shape: f32[1,384], index: 4, kind: input, shape index: {}]
  %s5 = inlined_call_operand.vmem [shape: bf16[384,64], index: 5, kind: input, shape index: {}]
  %s6 = inlined_call_operand.vmem [shape: bf16[128,32], index: 6, kind: input, shape index: {}]
  %s7 = inlined_call_operand.vmem [shape: f32[1,32], index: 7, kind: input, shape index: {}]
  %s8 = inlined_call_operand.vmem [shape: f32[1,32], index: 8, kind: input, shape index: {}]
  %s9 = inlined_call_operand.vmem [shape: f32[1,32], index: 9, kind: input, shape index: {}]
  %s10 = inlined_call_operand.vmem [shape: bf16[32,64], index: 10, kind: input, shape index: {}]
  %s11 = inlined_call_operand.vmem [shape: f32[1,64], index: 11, kind: input, shape index: {}]
  %s12 = inlined_call_operand.vmem [shape: bf16[32,64], index: 12, kind: input, shape index: {}]
  %s13 = inlined_call_operand.vmem [shape: f32[1,64], index: 13, kind: input, shape index: {}]
  %s14 = inlined_call_operand.vmem [shape: f32[31,64], index: 14, kind: input, shape index: {}]
  %s15 = inlined_call_operand.vmem [shape: f32[1,64], index: 15, kind: input, shape index: {}]
  %s16 = inlined_call_operand.vmem [shape: bf16[64,32], index: 16, kind: input, shape index: {}]
  %s17 = inlined_call_operand.vmem [shape: f32[1,32], index: 17, kind: input, shape index: {}]
  %s18 = inlined_call_operand.vmem [shape: f32[2,8,32], index: 18, kind: output, shape index: {}]
  %s19 = sld [smem:[#allocation0]]
  $region105: #{_lambda_.2} parent=0
    _
  %s21 = ssub.s32 1, %s19
  %s22 = scalar_select 0, %s21, %s19
  loop: start=0, step=1, limit=4
  $region2: #{_lambda_.2} parent=0 // loop_pre_header
    _
  $region3: #{_lambda_.2} parent=0 // loop_header
    %s24 = sphi 0, %s28
    %p25 = scmp.ge.s32.totalorder %s24, 4
    %s34 = sphi 0, %s36
    %s37 = sphi 0, %s34
    %s38 = sphi 0, %s37
    %s54 = sphi 0, %s38
    %s58 = sphi 0, %s58
    %s60 = sphi 0, %s58
    %s61 = sphi 0, %s60
    %s75 = sphi 0, %s61
    %s79 = sphi 0, %s79
    %s81 = sphi 0, %s79
    %s82 = sphi 0, %s81
    %s96 = sphi 0, %s82
    %s100 = sphi 0, %s100
    %s102 = sphi 0, %s100
    %s103 = sphi 0, %s102
    %s117 = sphi 0, %s103
    %s121 = sphi 0, %s121
    %s123 = sphi 0, %s121
    %s124 = sphi 0, %s123
    %s138 = sphi 0, %s124
    %s142 = sphi 0, %s142
    %s144 = sphi 0, %s142
    %s145 = sphi 0, %s144
    %s159 = sphi 0, %s145
    %s163 = sphi 0, %s163
    %s165 = sphi 0, %s163
    %s166 = sphi 0, %s165
    %s180 = sphi 0, %s166
    %s184 = sphi 0, %s184
    %s186 = sphi 0, %s184
    %s187 = sphi 0, %s186
    %s201 = sphi 0, %s187
    %s205 = sphi 0, %s205
    %s207 = sphi 0, %s205
    %s208 = sphi 0, %s207
    %s222 = sphi 0, %s208
    %s226 = sphi 0, %s226
    %s228 = sphi 0, %s226
    %s229 = sphi 0, %s228
    %s243 = sphi 0, %s229
    %s247 = sphi 0, %s247
    %s249 = sphi 0, %s247
    %s250 = sphi 0, %s249
    %s264 = sphi 0, %s250
    %s268 = sphi 0, %s268
    %s270 = sphi 0, %s268
    %s271 = sphi 0, %s270
    %s285 = sphi 0, %s271
    %s289 = sphi 0, %s289
    %s291 = sphi 0, %s289
    %s292 = sphi 0, %s291
    %s306 = sphi 0, %s292
    %s310 = sphi 0, %s310
    %s312 = sphi 0, %s310
    %s313 = sphi 0, %s312
    %s327 = sphi 0, %s313
    %s331 = sphi 0, %s331
    %s333 = sphi 0, %s331
    %s334 = sphi 0, %s333
    %s348 = sphi 0, %s334
    %s352 = sphi 0, %s352
    %s354 = sphi 0, %s352
    %s355 = sphi 0, %s354
    %s369 = sphi 0, %s355
    %s373 = sphi 0, %s373
    %s375 = sphi 0, %s373
    %s376 = sphi 0, %s375
    %s390 = sphi 0, %s376
    %s394 = sphi 0, %s394
    %s396 = sphi 0, %s394
    %s397 = sphi 0, %s396
    %s411 = sphi 0, %s397
    %s417 = sphi 0, %s419
    %s420 = sphi 0, %s417
    %s421 = sphi 0, %s420
    %s437 = sphi 0, %s421
  $region4: #{_lambda_.2} parent=0 // loop_header_branch
    %27 = sbr.rel (%p25) target = $region8
  $region5: #{_lambda_.2} parent=0 // loop_body
    %s29 = ssub.s32 %s24, 1
    %s30 = ssub.s32 %s24, 2
    %s31 = sadd.s32 %s24, 1
    %s32 = ssub.s32 %s24, %s31
    %p33 = scmp.eq.s32.totalorder %s32, 0
    %s35 = sadd.s32 %s34, 1
    %s36 = scalar_select %p33, %s34, %s35
    %p39 = pneg %p33
    %p40 = scmp.eq.s32.totalorder %s24, 1
    %p41 = por %p39, %p40
    %p42 = scmp.ne.s32.totalorder %s34, %s37
    %p43 = scmp.eq.s32.totalorder %s24, 0
    %p44 = por %p42, %p43
    %p45 = scmp.ne.s32.totalorder %s34, %s37
    %p46 = scmp.eq.s32.totalorder %s29, 1
    %p47 = por %p45, %p46
    %p48 = scmp.ne.s32.totalorder %s37, %s38
    %p49 = scmp.eq.s32.totalorder %s29, 0
    %p50 = por %p48, %p49
    %p51 = scmp.ne.s32.totalorder %s37, %s38
    %p52 = scmp.eq.s32.totalorder %s30, 1
    %p53 = por %p51, %p52
    %p55 = scmp.ne.s32.totalorder %s38, %s54
    %p56 = scmp.eq.s32.totalorder %s30, 0
    %p57 = por %p55, %p56
    %s59 = sadd.s32 %s58, 1
    %p62 = scmp.eq.s32.totalorder %s24, 1
    %p63 = scmp.ne.s32.totalorder %s58, %s60
    %p64 = scmp.eq.s32.totalorder %s24, 0
    %p65 = por %p63, %p64
    %p66 = scmp.ne.s32.totalorder %s58, %s60
    %p67 = scmp.eq.s32.totalorder %s29, 1
    %p68 = por %p66, %p67
    %p69 = scmp.ne.s32.totalorder %s60, %s61
    %p70 = scmp.eq.s32.totalorder %s29, 0
    %p71 = por %p69, %p70
    %p72 = scmp.ne.s32.totalorder %s60, %s61
    %p73 = scmp.eq.s32.totalorder %s30, 1
    %p74 = por %p72, %p73
    %p76 = scmp.ne.s32.totalorder %s61, %s75
    %p77 = scmp.eq.s32.totalorder %s30, 0
    %p78 = por %p76, %p77
    %s80 = sadd.s32 %s79, 1
    %p83 = scmp.eq.s32.totalorder %s24, 1
    %p84 = scmp.ne.s32.totalorder %s79, %s81
    %p85 = scmp.eq.s32.totalorder %s24, 0
    %p86 = por %p84, %p85
    %p87 = scmp.ne.s32.totalorder %s79, %s81
    %p88 = scmp.eq.s32.totalorder %s29, 1
    %p89 = por %p87, %p88
    %p90 = scmp.ne.s32.totalorder %s81, %s82
    %p91 = scmp.eq.s32.totalorder %s29, 0
    %p92 = por %p90, %p91
    %p93 = scmp.ne.s32.totalorder %s81, %s82
    %p94 = scmp.eq.s32.totalorder %s30, 1
    %p95 = por %p93, %p94
    %p97 = scmp.ne.s32.totalorder %s82, %s96
    %p98 = scmp.eq.s32.totalorder %s30, 0
    %p99 = por %p97, %p98
    %s101 = sadd.s32 %s100, 1
    %p104 = scmp.eq.s32.totalorder %s24, 1
    %p105 = scmp.ne.s32.totalorder %s100, %s102
    %p106 = scmp.eq.s32.totalorder %s24, 0
    %p107 = por %p105, %p106
    %p108 = scmp.ne.s32.totalorder %s100, %s102
    %p109 = scmp.eq.s32.totalorder %s29, 1
    %p110 = por %p108, %p109
    %p111 = scmp.ne.s32.totalorder %s102, %s103
    %p112 = scmp.eq.s32.totalorder %s29, 0
    %p113 = por %p111, %p112
    %p114 = scmp.ne.s32.totalorder %s102, %s103
    %p115 = scmp.eq.s32.totalorder %s30, 1
    %p116 = por %p114, %p115
    %p118 = scmp.ne.s32.totalorder %s103, %s117
    %p119 = scmp.eq.s32.totalorder %s30, 0
    %p120 = por %p118, %p119
    %s122 = sadd.s32 %s121, 1
    %p125 = scmp.eq.s32.totalorder %s24, 1
    %p126 = scmp.ne.s32.totalorder %s121, %s123
    %p127 = scmp.eq.s32.totalorder %s24, 0
    %p128 = por %p126, %p127
    %p129 = scmp.ne.s32.totalorder %s121, %s123
    %p130 = scmp.eq.s32.totalorder %s29, 1
    %p131 = por %p129, %p130
    %p132 = scmp.ne.s32.totalorder %s123, %s124
    %p133 = scmp.eq.s32.totalorder %s29, 0
    %p134 = por %p132, %p133
    %p135 = scmp.ne.s32.totalorder %s123, %s124
    %p136 = scmp.eq.s32.totalorder %s30, 1
    %p137 = por %p135, %p136
    %p139 = scmp.ne.s32.totalorder %s124, %s138
    %p140 = scmp.eq.s32.totalorder %s30, 0
    %p141 = por %p139, %p140
    %s143 = sadd.s32 %s142, 1
    %p146 = scmp.eq.s32.totalorder %s24, 1
    %p147 = scmp.ne.s32.totalorder %s142, %s144
    %p148 = scmp.eq.s32.totalorder %s24, 0
    %p149 = por %p147, %p148
    %p150 = scmp.ne.s32.totalorder %s142, %s144
    %p151 = scmp.eq.s32.totalorder %s29, 1
    %p152 = por %p150, %p151
    %p153 = scmp.ne.s32.totalorder %s144, %s145
    %p154 = scmp.eq.s32.totalorder %s29, 0
    %p155 = por %p153, %p154
    %p156 = scmp.ne.s32.totalorder %s144, %s145
    %p157 = scmp.eq.s32.totalorder %s30, 1
    %p158 = por %p156, %p157
    %p160 = scmp.ne.s32.totalorder %s145, %s159
    %p161 = scmp.eq.s32.totalorder %s30, 0
    %p162 = por %p160, %p161
    %s164 = sadd.s32 %s163, 1
    %p167 = scmp.eq.s32.totalorder %s24, 1
    %p168 = scmp.ne.s32.totalorder %s163, %s165
    %p169 = scmp.eq.s32.totalorder %s24, 0
    %p170 = por %p168, %p169
    %p171 = scmp.ne.s32.totalorder %s163, %s165
    %p172 = scmp.eq.s32.totalorder %s29, 1
    %p173 = por %p171, %p172
    %p174 = scmp.ne.s32.totalorder %s165, %s166
    %p175 = scmp.eq.s32.totalorder %s29, 0
    %p176 = por %p174, %p175
    %p177 = scmp.ne.s32.totalorder %s165, %s166
    %p178 = scmp.eq.s32.totalorder %s30, 1
    %p179 = por %p177, %p178
    %p181 = scmp.ne.s32.totalorder %s166, %s180
    %p182 = scmp.eq.s32.totalorder %s30, 0
    %p183 = por %p181, %p182
    %s185 = sadd.s32 %s184, 1
    %p188 = scmp.eq.s32.totalorder %s24, 1
    %p189 = scmp.ne.s32.totalorder %s184, %s186
    %p190 = scmp.eq.s32.totalorder %s24, 0
    %p191 = por %p189, %p190
    %p192 = scmp.ne.s32.totalorder %s184, %s186
    %p193 = scmp.eq.s32.totalorder %s29, 1
    %p194 = por %p192, %p193
    %p195 = scmp.ne.s32.totalorder %s186, %s187
    %p196 = scmp.eq.s32.totalorder %s29, 0
    %p197 = por %p195, %p196
    %p198 = scmp.ne.s32.totalorder %s186, %s187
    %p199 = scmp.eq.s32.totalorder %s30, 1
    %p200 = por %p198, %p199
    %p202 = scmp.ne.s32.totalorder %s187, %s201
    %p203 = scmp.eq.s32.totalorder %s30, 0
    %p204 = por %p202, %p203
    %s206 = sadd.s32 %s205, 1
    %p209 = scmp.eq.s32.totalorder %s24, 1
    %p210 = scmp.ne.s32.totalorder %s205, %s207
    %p211 = scmp.eq.s32.totalorder %s24, 0
    %p212 = por %p210, %p211
    %p213 = scmp.ne.s32.totalorder %s205, %s207
    %p214 = scmp.eq.s32.totalorder %s29, 1
    %p215 = por %p213, %p214
    %p216 = scmp.ne.s32.totalorder %s207, %s208
    %p217 = scmp.eq.s32.totalorder %s29, 0
    %p218 = por %p216, %p217
    %p219 = scmp.ne.s32.totalorder %s207, %s208
    %p220 = scmp.eq.s32.totalorder %s30, 1
    %p221 = por %p219, %p220
    %p223 = scmp.ne.s32.totalorder %s208, %s222
    %p224 = scmp.eq.s32.totalorder %s30, 0
    %p225 = por %p223, %p224
    %s227 = sadd.s32 %s226, 1
    %p230 = scmp.eq.s32.totalorder %s24, 1
    %p231 = scmp.ne.s32.totalorder %s226, %s228
    %p232 = scmp.eq.s32.totalorder %s24, 0
    %p233 = por %p231, %p232
    %p234 = scmp.ne.s32.totalorder %s226, %s228
    %p235 = scmp.eq.s32.totalorder %s29, 1
    %p236 = por %p234, %p235
    %p237 = scmp.ne.s32.totalorder %s228, %s229
    %p238 = scmp.eq.s32.totalorder %s29, 0
    %p239 = por %p237, %p238
    %p240 = scmp.ne.s32.totalorder %s228, %s229
    %p241 = scmp.eq.s32.totalorder %s30, 1
    %p242 = por %p240, %p241
    %p244 = scmp.ne.s32.totalorder %s229, %s243
    %p245 = scmp.eq.s32.totalorder %s30, 0
    %p246 = por %p244, %p245
    %s248 = sadd.s32 %s247, 1
    %p251 = scmp.eq.s32.totalorder %s24, 1
    %p252 = scmp.ne.s32.totalorder %s247, %s249
    %p253 = scmp.eq.s32.totalorder %s24, 0
    %p254 = por %p252, %p253
    %p255 = scmp.ne.s32.totalorder %s247, %s249
    %p256 = scmp.eq.s32.totalorder %s29, 1
    %p257 = por %p255, %p256
    %p258 = scmp.ne.s32.totalorder %s249, %s250
    %p259 = scmp.eq.s32.totalorder %s29, 0
    %p260 = por %p258, %p259
    %p261 = scmp.ne.s32.totalorder %s249, %s250
    %p262 = scmp.eq.s32.totalorder %s30, 1
    %p263 = por %p261, %p262
    %p265 = scmp.ne.s32.totalorder %s250, %s264
    %p266 = scmp.eq.s32.totalorder %s30, 0
    %p267 = por %p265, %p266
    %s269 = sadd.s32 %s268, 1
    %p272 = scmp.eq.s32.totalorder %s24, 1
    %p273 = scmp.ne.s32.totalorder %s268, %s270
    %p274 = scmp.eq.s32.totalorder %s24, 0
    %p275 = por %p273, %p274
    %p276 = scmp.ne.s32.totalorder %s268, %s270
    %p277 = scmp.eq.s32.totalorder %s29, 1
    %p278 = por %p276, %p277
    %p279 = scmp.ne.s32.totalorder %s270, %s271
    %p280 = scmp.eq.s32.totalorder %s29, 0
    %p281 = por %p279, %p280
    %p282 = scmp.ne.s32.totalorder %s270, %s271
    %p283 = scmp.eq.s32.totalorder %s30, 1
    %p284 = por %p282, %p283
    %p286 = scmp.ne.s32.totalorder %s271, %s285
    %p287 = scmp.eq.s32.totalorder %s30, 0
    %p288 = por %p286, %p287
    %s290 = sadd.s32 %s289, 1
    %p293 = scmp.eq.s32.totalorder %s24, 1
    %p294 = scmp.ne.s32.totalorder %s289, %s291
    %p295 = scmp.eq.s32.totalorder %s24, 0
    %p296 = por %p294, %p295
    %p297 = scmp.ne.s32.totalorder %s289, %s291
    %p298 = scmp.eq.s32.totalorder %s29, 1
    %p299 = por %p297, %p298
    %p300 = scmp.ne.s32.totalorder %s291, %s292
    %p301 = scmp.eq.s32.totalorder %s29, 0
    %p302 = por %p300, %p301
    %p303 = scmp.ne.s32.totalorder %s291, %s292
    %p304 = scmp.eq.s32.totalorder %s30, 1
    %p305 = por %p303, %p304
    %p307 = scmp.ne.s32.totalorder %s292, %s306
    %p308 = scmp.eq.s32.totalorder %s30, 0
    %p309 = por %p307, %p308
    %s311 = sadd.s32 %s310, 1
    %p314 = scmp.eq.s32.totalorder %s24, 1
    %p315 = scmp.ne.s32.totalorder %s310, %s312
    %p316 = scmp.eq.s32.totalorder %s24, 0
    %p317 = por %p315, %p316
    %p318 = scmp.ne.s32.totalorder %s310, %s312
    %p319 = scmp.eq.s32.totalorder %s29, 1
    %p320 = por %p318, %p319
    %p321 = scmp.ne.s32.totalorder %s312, %s313
    %p322 = scmp.eq.s32.totalorder %s29, 0
    %p323 = por %p321, %p322
    %p324 = scmp.ne.s32.totalorder %s312, %s313
    %p325 = scmp.eq.s32.totalorder %s30, 1
    %p326 = por %p324, %p325
    %p328 = scmp.ne.s32.totalorder %s313, %s327
    %p329 = scmp.eq.s32.totalorder %s30, 0
    %p330 = por %p328, %p329
    %s332 = sadd.s32 %s331, 1
    %p335 = scmp.eq.s32.totalorder %s24, 1
    %p336 = scmp.ne.s32.totalorder %s331, %s333
    %p337 = scmp.eq.s32.totalorder %s24, 0
    %p338 = por %p336, %p337
    %p339 = scmp.ne.s32.totalorder %s331, %s333
    %p340 = scmp.eq.s32.totalorder %s29, 1
    %p341 = por %p339, %p340
    %p342 = scmp.ne.s32.totalorder %s333, %s334
    %p343 = scmp.eq.s32.totalorder %s29, 0
    %p344 = por %p342, %p343
    %p345 = scmp.ne.s32.totalorder %s333, %s334
    %p346 = scmp.eq.s32.totalorder %s30, 1
    %p347 = por %p345, %p346
    %p349 = scmp.ne.s32.totalorder %s334, %s348
    %p350 = scmp.eq.s32.totalorder %s30, 0
    %p351 = por %p349, %p350
    %s353 = sadd.s32 %s352, 1
    %p356 = scmp.eq.s32.totalorder %s24, 1
    %p357 = scmp.ne.s32.totalorder %s352, %s354
    %p358 = scmp.eq.s32.totalorder %s24, 0
    %p359 = por %p357, %p358
    %p360 = scmp.ne.s32.totalorder %s352, %s354
    %p361 = scmp.eq.s32.totalorder %s29, 1
    %p362 = por %p360, %p361
    %p363 = scmp.ne.s32.totalorder %s354, %s355
    %p364 = scmp.eq.s32.totalorder %s29, 0
    %p365 = por %p363, %p364
    %p366 = scmp.ne.s32.totalorder %s354, %s355
    %p367 = scmp.eq.s32.totalorder %s30, 1
    %p368 = por %p366, %p367
    %p370 = scmp.ne.s32.totalorder %s355, %s369
    %p371 = scmp.eq.s32.totalorder %s30, 0
    %p372 = por %p370, %p371
    %s374 = sadd.s32 %s373, 1
    %p377 = scmp.eq.s32.totalorder %s24, 1
    %p378 = scmp.ne.s32.totalorder %s373, %s375
    %p379 = scmp.eq.s32.totalorder %s24, 0
    %p380 = por %p378, %p379
    %p381 = scmp.ne.s32.totalorder %s373, %s375
    %p382 = scmp.eq.s32.totalorder %s29, 1
    %p383 = por %p381, %p382
    %p384 = scmp.ne.s32.totalorder %s375, %s376
    %p385 = scmp.eq.s32.totalorder %s29, 0
    %p386 = por %p384, %p385
    %p387 = scmp.ne.s32.totalorder %s375, %s376
    %p388 = scmp.eq.s32.totalorder %s30, 1
    %p389 = por %p387, %p388
    %p391 = scmp.ne.s32.totalorder %s376, %s390
    %p392 = scmp.eq.s32.totalorder %s30, 0
    %p393 = por %p391, %p392
    %s395 = sadd.s32 %s394, 1
    %p398 = scmp.eq.s32.totalorder %s24, 1
    %p399 = scmp.ne.s32.totalorder %s394, %s396
    %p400 = scmp.eq.s32.totalorder %s24, 0
    %p401 = por %p399, %p400
    %p402 = scmp.ne.s32.totalorder %s394, %s396
    %p403 = scmp.eq.s32.totalorder %s29, 1
    %p404 = por %p402, %p403
    %p405 = scmp.ne.s32.totalorder %s396, %s397
    %p406 = scmp.eq.s32.totalorder %s29, 0
    %p407 = por %p405, %p406
    %p408 = scmp.ne.s32.totalorder %s396, %s397
    %p409 = scmp.eq.s32.totalorder %s30, 1
    %p410 = por %p408, %p409
    %p412 = scmp.ne.s32.totalorder %s397, %s411
    %p413 = scmp.eq.s32.totalorder %s30, 0
    %p414 = por %p412, %p413
    %s415 = ssub.s32 %s24, %s31
    %p416 = scmp.eq.s32.totalorder %s415, 0
    %s418 = sadd.s32 %s417, 1
    %s419 = scalar_select %p416, %s417, %s418
    %p422 = pneg %p416
    %p423 = scmp.eq.s32.totalorder %s24, 1
    %p424 = por %p422, %p423
    %p425 = scmp.ne.s32.totalorder %s417, %s420
    %p426 = scmp.eq.s32.totalorder %s24, 0
    %p427 = por %p425, %p426
    %p428 = scmp.ne.s32.totalorder %s417, %s420
    %p429 = scmp.eq.s32.totalorder %s29, 1
    %p430 = por %p428, %p429
    %p431 = scmp.ne.s32.totalorder %s420, %s421
    %p432 = scmp.eq.s32.totalorder %s29, 0
    %p433 = por %p431, %p432
    %p434 = scmp.ne.s32.totalorder %s420, %s421
    %p435 = scmp.eq.s32.totalorder %s30, 1
    %p436 = por %p434, %p435
    %p438 = scmp.ne.s32.totalorder %s421, %s437
    %p439 = scmp.eq.s32.totalorder %s30, 0
    %p440 = por %p438, %p439
    %p441 = scmp.le.s32.totalorder 1, %s24
    %p442 = scmp.lt.s32.totalorder %s24, 3
    %p443 = pnand %p441, %p442
    %p444 = pneg %p443
    // Predicated region
    $region9: #{_lambda_.2} parent=5 // pred_check
      _
    $region10: #{_lambda_.2} parent=5 // pred_check_branch
      %446 = sbr.rel (%p443) target = $region12
    $region11: #{_lambda_.2} parent=5 // pred_region
      %s447 = ssub.s32 %s24, 1
      // Predicated region
      $region13: #{_lambda_.2} parent=11 // pred_check
        %p448 = pneg %p71
      $region14: #{_lambda_.2} parent=11 // pred_check_branch
        %450 = sbr.rel (%p448) target = $region16
      $region15: #{_lambda_.2} parent=11 // pred_region
        _
      $region16: #{_lambda_.2} parent=11 // pred_fallthru
        _
      // Predicated region
      $region17: #{_lambda_.2} parent=11 // pred_check
        %p451 = pneg %p92
      $region18: #{_lambda_.2} parent=11 // pred_check_branch
        %453 = sbr.rel (%p451) target = $region20
      $region19: #{_lambda_.2} parent=11 // pred_region
        _
      $region20: #{_lambda_.2} parent=11 // pred_fallthru
        _
      // Predicated region
      $region21: #{_lambda_.2} parent=11 // pred_check
        %p454 = pneg %p113
      $region22: #{_lambda_.2} parent=11 // pred_check_branch
        %456 = sbr.rel (%p454) target = $region24
      $region23: #{_lambda_.2} parent=11 // pred_region
        _
      $region24: #{_lambda_.2} parent=11 // pred_fallthru
        _
      // Predicated region
      $region25: #{_lambda_.2} parent=11 // pred_check
        %p457 = pneg %p134
      $region26: #{_lambda_.2} parent=11 // pred_check_branch
        %459 = sbr.rel (%p457) target = $region28
      $region27: #{_lambda_.2} parent=11 // pred_region
        _
      $region28: #{_lambda_.2} parent=11 // pred_fallthru
        _
      // Predicated region
      $region29: #{_lambda_.2} parent=11 // pred_check
        %p460 = pneg %p155
      $region30: #{_lambda_.2} parent=11 // pred_check_branch
        %462 = sbr.rel (%p460) target = $region32
      $region31: #{_lambda_.2} parent=11 // pred_region
        _
      $region32: #{_lambda_.2} parent=11 // pred_fallthru
        _
      // Predicated region
      $region33: #{_lambda_.2} parent=11 // pred_check
        %p463 = pneg %p176
      $region34: #{_lambda_.2} parent=11 // pred_check_branch
        %465 = sbr.rel (%p463) target = $region36
      $region35: #{_lambda_.2} parent=11 // pred_region
        _
      $region36: #{_lambda_.2} parent=11 // pred_fallthru
        _
      // Predicated region
      $region37: #{_lambda_.2} parent=11 // pred_check
        %p466 = pneg %p197
      $region38: #{_lambda_.2} parent=11 // pred_check_branch
        %468 = sbr.rel (%p466) target = $region40
      $region39: #{_lambda_.2} parent=11 // pred_region
        _
      $region40: #{_lambda_.2} parent=11 // pred_fallthru
        _
      // Predicated region
      $region41: #{_lambda_.2} parent=11 // pred_check
        %p469 = pneg %p218
      $region42: #{_lambda_.2} parent=11 // pred_check_branch
        %471 = sbr.rel (%p469) target = $region44
      $region43: #{_lambda_.2} parent=11 // pred_region
        _
      $region44: #{_lambda_.2} parent=11 // pred_fallthru
        _
      // Predicated region
      $region45: #{_lambda_.2} parent=11 // pred_check
        %p472 = pneg %p239
      $region46: #{_lambda_.2} parent=11 // pred_check_branch
        %474 = sbr.rel (%p472) target = $region48
      $region47: #{_lambda_.2} parent=11 // pred_region
        _
      $region48: #{_lambda_.2} parent=11 // pred_fallthru
        _
      // Predicated region
      $region49: #{_lambda_.2} parent=11 // pred_check
        %p475 = pneg %p260
      $region50: #{_lambda_.2} parent=11 // pred_check_branch
        %477 = sbr.rel (%p475) target = $region52
      $region51: #{_lambda_.2} parent=11 // pred_region
        _
      $region52: #{_lambda_.2} parent=11 // pred_fallthru
        _
      // Predicated region
      $region53: #{_lambda_.2} parent=11 // pred_check
        %p478 = pneg %p281
      $region54: #{_lambda_.2} parent=11 // pred_check_branch
        %480 = sbr.rel (%p478) target = $region56
      $region55: #{_lambda_.2} parent=11 // pred_region
        _
      $region56: #{_lambda_.2} parent=11 // pred_fallthru
        _
      // Predicated region
      $region57: #{_lambda_.2} parent=11 // pred_check
        %p481 = pneg %p302
      $region58: #{_lambda_.2} parent=11 // pred_check_branch
        %483 = sbr.rel (%p481) target = $region60
      $region59: #{_lambda_.2} parent=11 // pred_region
        _
      $region60: #{_lambda_.2} parent=11 // pred_fallthru
        _
      // Predicated region
      $region61: #{_lambda_.2} parent=11 // pred_check
        %p484 = pneg %p323
      $region62: #{_lambda_.2} parent=11 // pred_check_branch
        %486 = sbr.rel (%p484) target = $region64
      $region63: #{_lambda_.2} parent=11 // pred_region
        _
      $region64: #{_lambda_.2} parent=11 // pred_fallthru
        _
      // Predicated region
      $region65: #{_lambda_.2} parent=11 // pred_check
        %p487 = pneg %p344
      $region66: #{_lambda_.2} parent=11 // pred_check_branch
        %489 = sbr.rel (%p487) target = $region68
      $region67: #{_lambda_.2} parent=11 // pred_region
        _
      $region68: #{_lambda_.2} parent=11 // pred_fallthru
        _
      // Predicated region
      $region69: #{_lambda_.2} parent=11 // pred_check
        %p490 = pneg %p365
      $region70: #{_lambda_.2} parent=11 // pred_check_branch
        %492 = sbr.rel (%p490) target = $region72
      $region71: #{_lambda_.2} parent=11 // pred_region
        _
      $region72: #{_lambda_.2} parent=11 // pred_fallthru
        _
      // Predicated region
      $region73: #{_lambda_.2} parent=11 // pred_check
        %p493 = pneg %p386
      $region74: #{_lambda_.2} parent=11 // pred_check_branch
        %495 = sbr.rel (%p493) target = $region76
      $region75: #{_lambda_.2} parent=11 // pred_region
        _
      $region76: #{_lambda_.2} parent=11 // pred_fallthru
        _
      // Predicated region
      $region77: #{_lambda_.2} parent=11 // pred_check
        %p496 = pneg %p407
      $region78: #{_lambda_.2} parent=11 // pred_check_branch
        %498 = sbr.rel (%p496) target = $region80
      $region79: #{_lambda_.2} parent=11 // pred_region
        _
      $region80: #{_lambda_.2} parent=11 // pred_fallthru
        _
    $region12: #{_lambda_.2} parent=5 // pred_fallthru
      _
    %p499 = scmp.lt.s32.totalorder %s24, 2
    // Predicated region
    $region81: #{_lambda_.2} parent=5 // pred_check
      %p500 = pneg %p499
    $region82: #{_lambda_.2} parent=5 // pred_check_branch
      %502 = sbr.rel (%p500) target = $region84
    $region83: #{_lambda_.2} parent=5 // pred_region
      // Predicated region
      $region85: #{_lambda_.2} parent=83 // pred_check
        %p503 = pneg %p44
      $region86: #{_lambda_.2} parent=83 // pred_check_branch
        %505 = sbr.rel (%p503) target = $region88
      $region87: #{_lambda_.2} parent=83 // pred_region
        %p506 = scmp.lt.s32.totalorder %s24, 1
        %s507 = scalar_select %p506, %s24, 1
        %s508 = smul.addr %s507, 8
        %s509 = scalar_lea.vmem %s0, %s508
      $region88: #{_lambda_.2} parent=83 // pred_fallthru
        _
    $region84: #{_lambda_.2} parent=5 // pred_fallthru
      _
    %p510 = scmp.le.s32.totalorder 1, %s24
    %p511 = scmp.lt.s32.totalorder %s24, 3
    %p512 = pnand %p510, %p511
    %p513 = pneg %p512
    // Predicated region
    $region89: #{_lambda_.2} parent=5 // pred_check
      _
    $region90: #{_lambda_.2} parent=5 // pred_check_branch
      %515 = sbr.rel (%p512) target = $region92
    $region91: #{_lambda_.2} parent=5 // pred_region
      %s516 = ssub.s32 %s24, 1
      %p517 = scmp.lt.s32.totalorder %s29, 1
      %s518 = scalar_select %p517, %s29, 1
      %s519 = smul.addr %s518, 8
      %s520 = scalar_lea.vmem %s0, %s519
      %p521 = pneg %p50
      %p522 = pneg %p47
      %p523 = pneg %p71
      %p524 = pneg %p68
      %p525 = pneg %p92
      %p526 = pneg %p89
      %p527 = pneg %p113
      %p528 = pneg %p110
      %p529 = pneg %p134
      %p530 = pneg %p131
      %p531 = pneg %p155
      %p532 = pneg %p152
      %p533 = pneg %p176
      %p534 = pneg %p173
      %p535 = pneg %p197
      %p536 = pneg %p194
      %p537 = pneg %p218
      %p538 = pneg %p215
      %p539 = pneg %p239
      %p540 = pneg %p236
      %p541 = pneg %p260
      %p542 = pneg %p257
      %p543 = pneg %p281
      %p544 = pneg %p278
      %p545 = pneg %p302
      %p546 = pneg %p299
      %p547 = pneg %p323
      %p548 = pneg %p320
      %p549 = pneg %p344
      %p550 = pneg %p341
      %p551 = pneg %p365
      %p552 = pneg %p362
      %p553 = pneg %p386
      %p554 = pneg %p383
      %p555 = pneg %p407
      %p556 = pneg %p404
      %p557 = pneg %p433
      %p558 = pneg %p430
      %p559 = scmp.lt.s32.totalorder %s29, 1
      %s560 = scalar_select %p559, %s29, 1
      %s561 = smul.addr %s560, 8
      %s562 = scalar_lea.vmem %s18, %s561
      %p563 = scmp.lt.s32.totalorder %s29, 1
      %s564 = scalar_select %p563, %s29, 1
      %s565 = smul.addr %s564, 8
      %s566 = scalar_lea.vmem %s0, %s565
      %p567 = scmp.lt.s32.totalorder %s29, 1
      %s568 = scalar_select %p567, %s29, 1
      %s569 = smul.addr %s568, 8
      %s570 = scalar_lea.vmem %s18, %s569
      %v572 = vld [vmem:[%s566] sm:$0xff]
      %vm573 = vcmask 261120
      %v574 = vsel %vm573, %v572, 0.0
      %575 = vadd.xlane.f32.xlu0 %v574
      %v576 = vpop.xlane.xlu0 %575
      %v577 = vrcp.pop 32.0
      %v578 = vmul.f32 %v576, %v577
      %v579 = vsub.f32 %v572, %v578
      %v580 = vmul.f32 %v579, %v579
      %v581 = vsel %vm573, %v580, 0.0
      %582 = vadd.xlane.f32.xlu0 %v581
      %v583 = vpop.xlane.xlu0 %582
      %v584 = vmul.f32 %v583, %v577
      %v585 = vadd.f32 %v584, 1e-05
      %v586 = vrsqrt.pop %v585
      %v587 = vmul.f32 %v579, %v586
      %v588 = vld [vmem:[%s1] sm:$0x1]
      %v590 = vlaneseq
      %v591 = vshrl.u32 %v590, 7
      %v592 = vsub.s32 0, %v591
      %v593 = vrot.slane %v588, %v592
      %v595 = vmul.f32 %v587, %v593
      %v596 = vld [vmem:[%s2] sm:$0x1]
      %v598 = vlaneseq
      %v599 = vshrl.u32 %v598, 7
      %v600 = vsub.s32 0, %v599
      %v601 = vrot.slane %v596, %v600
      %v603 = vadd.f32 %v595, %v601
      %v604 = vpack.c.bf16 %v603, %v603
      %v605 = vld [vmem:[%s3] sm:$0xff]
      %v606 = vld [vmem:[%s3 + $0x8] sm:$0xf]
      %v607 = vld [vmem:[%s3 + $0xc] sm:$0xff]
      %v608 = vld [vmem:[%s3 + $0x14] sm:$0xf]
      %v609 = vld [vmem:[%s3 + $0x18] sm:$0xff]
      %v610 = vld [vmem:[%s3 + $0x20] sm:$0xf]
      %v611 = vld [vmem:[%s3 + $0x24] sm:$0xff]
      %v612 = vld [vmem:[%s3 + $0x2c] sm:$0xf]
      %v613 = vld [vmem:[%s4] sm:$0x7]
      %v615 = vlaneseq
      %v616 = vshrl.u32 %v615, 7
      %v617 = vsub.s32 0, %v616
      %v618 = vrot.slane %v613, %v617
      %v619 = vlaneseq
      %v620 = vshrl.u32 %v619, 7
      %v621 = vsub.s32 1, %v620
      %v622 = vrot.slane %v613, %v621
      %v623 = vlaneseq
      %v624 = vshrl.u32 %v623, 7
      %v625 = vsub.s32 2, %v624
      %v626 = vrot.slane %v613, %v625
      %v638 = vunpack.c.l.b16 %v605
      %v639 = vunpack.c.h.b16 %v605
      %v640 = vunpack.c.l.b16 %v606
      %v641 = vunpack.c.l.b16 %v607
      %v642 = vunpack.c.h.b16 %v607
      %v643 = vunpack.c.l.b16 %v608
      %v644 = vunpack.c.l.b16 %v609
      %v645 = vunpack.c.h.b16 %v609
      %v646 = vunpack.c.l.b16 %v610
      %v647 = vunpack.c.l.b16 %v611
      %v648 = vunpack.c.h.b16 %v611
      %v649 = vunpack.c.l.b16 %v612
      %v650 = vpack.c.b16 %v641, %v638
      %v651 = vpack.c.b16 %v642, %v639
      %v652 = vpack.c.b16 %v643, %v640
      %v653 = vpack.c.b16 %v647, %v644
      %v654 = vpack.c.b16 %v648, %v645
      %v655 = vpack.c.b16 %v649, %v646
      %v663 = vsel %vm573, %v604, 0
      %665 = vmatprep.subr.bf16.mxu0 %v651
      %666 = vmatpush1.bf16.msra.mxu0 %v650
      %667 = vmatprep.subr.bf16.mxu0 %v654
      %668 = vmatpush1.bf16.msra.mxu0 %v653
      %669 = vmatprep.subr.bf16.mxu0 0
      %670 = vmatpush1.bf16.msra.mxu0 0
      %671 = vmatprep.subr.bf16.mxu0 0
      %672 = vmatpush1.bf16.msra.mxu0 0
      %673 = vmatprep.subr.bf16.mxu0 0
      %674 = vmatpush1.bf16.msra.mxu0 0
      %675 = vmatprep.subr.bf16.mxu0 0
      %676 = vmatpush1.bf16.msra.mxu0 0
      %677 = vmatprep.subr.bf16.mxu0 0
      %678 = vmatpush1.bf16.msra.mxu0 0
      %679 = vmatprep.subr.bf16.mxu0 0
      %680 = vmatpush1.bf16.msra.mxu0 0
      %681 = vmatprep.subr.bf16.mxu0 0
      %682 = vmatpush1.bf16.msra.mxu0 0
      %683 = vmatprep.subr.bf16.mxu0 0
      %684 = vmatpush1.bf16.msra.mxu0 0
      %685 = vmatprep.subr.bf16.mxu0 0
      %686 = vmatpush1.bf16.msra.mxu0 0
      %687 = vmatprep.subr.bf16.mxu0 0
      %688 = vmatpush1.bf16.msra.mxu0 0
      %689 = vmatprep.subr.bf16.mxu0 0
      %690 = vmatpush1.bf16.msra.mxu0 0
      %691 = vmatprep.subr.bf16.mxu0 0
      %692 = vmatpush1.bf16.msra.mxu0 0
      %693 = vmatprep.subr.bf16.mxu0 0
      %694 = vmatpush1.bf16.msra.mxu0 0
      %695 = vmatprep.subr.bf16.mxu0 0
      %696 = vmatpush1.bf16.msra.mxu0 0
      %697 = vmatprep.mubr.bf16.mxu0 0
      %698 = vmatmul.mubr.bf16.gmra.mrb[0].mxu0 %v663
      %v699 = vpop.f32.mrb[0].mxu0
      %v700 = vadd.f32 %v618, %v699
      %v701 = vpop.f32.mrb[0].mxu0
      %v702 = vadd.f32 %v622, %v701
      %v703 = vpop.f32.mrb[0].mxu0
      %v704 = vpop.f32.mrb[0].mxu0
      %705 = vdwg.mxu0
      %706 = vmatprep.subr.bf16.mxu0 0
      %707 = vmatpush1.bf16.msra.mxu0 %v652
      %708 = vmatprep.subr.bf16.mxu0 0
      %709 = vmatpush1.bf16.msra.mxu0 %v655
      %710 = vmatprep.subr.bf16.mxu0 0
      %711 = vmatpush1.bf16.msra.mxu0 0
      %712 = vmatprep.subr.bf16.mxu0 0
      %713 = vmatpush1.bf16.msra.mxu0 0
      %714 = vmatprep.subr.bf16.mxu0 0
      %715 = vmatpush1.bf16.msra.mxu0 0
      %716 = vmatprep.subr.bf16.mxu0 0
      %717 = vmatpush1.bf16.msra.mxu0 0
      %718 = vmatprep.subr.bf16.mxu0 0
      %719 = vmatpush1.bf16.msra.mxu0 0
      %720 = vmatprep.subr.bf16.mxu0 0
      %721 = vmatpush1.bf16.msra.mxu0 0
      %722 = vmatprep.subr.bf16.mxu0 0
      %723 = vmatpush1.bf16.msra.mxu0 0
      %724 = vmatprep.subr.bf16.mxu0 0
      %725 = vmatpush1.bf16.msra.mxu0 0
      %726 = vmatprep.subr.bf16.mxu0 0
      %727 = vmatpush1.bf16.msra.mxu0 0
      %728 = vmatprep.subr.bf16.mxu0 0
      %729 = vmatpush1.bf16.msra.mxu0 0
      %730 = vmatprep.subr.bf16.mxu0 0
      %731 = vmatpush1.bf16.msra.mxu0 0
      %732 = vmatprep.subr.bf16.mxu0 0
      %733 = vmatpush1.bf16.msra.mxu0 0
      %734 = vmatprep.subr.bf16.mxu0 0
      %735 = vmatpush1.bf16.msra.mxu0 0
      %736 = vmatprep.subr.bf16.mxu0 0
      %737 = vmatpush1.bf16.msra.mxu0 0
      %738 = vmatprep.mubr.bf16.mxu0 0
      %739 = vmatmul.mubr.bf16.gmra.mrb[0].mxu0 %v663
      %v740 = vpop.f32.mrb[0].mxu0
      %v741 = vadd.f32 %v626, %v740
      %v742 = vpop.f32.mrb[0].mxu0
      %v743 = vpop.f32.mrb[0].mxu0
      %v744 = vpop.f32.mrb[0].mxu0
      %745 = vdwg.mxu0
      %v746 = vld [vmem:[%s5] sm:$0xf]
      %v747 = vld [vmem:[%s5 + $0x4] sm:$0xf]
      %v748 = vld [vmem:[%s5 + $0x8] sm:$0xf]
      %v749 = vld [vmem:[%s5 + $0xc] sm:$0xf]
      %v750 = vld [vmem:[%s5 + $0x10] sm:$0xf]
      %v751 = vld [vmem:[%s5 + $0x14] sm:$0xf]
      %v752 = vld [vmem:[%s5 + $0x18] sm:$0xf]
      %v753 = vld [vmem:[%s5 + $0x1c] sm:$0xf]
      %v754 = vld [vmem:[%s5 + $0x20] sm:$0xf]
      %v755 = vld [vmem:[%s5 + $0x24] sm:$0xf]
      %v756 = vld [vmem:[%s5 + $0x28] sm:$0xf]
      %v757 = vld [vmem:[%s5 + $0x2c] sm:$0xf]
      %v758 = vld [vmem:[%s5 + $0x30] sm:$0xf]
      %v759 = vld [vmem:[%s5 + $0x34] sm:$0xf]
      %v760 = vld [vmem:[%s5 + $0x38] sm:$0xf]
      %v761 = vld [vmem:[%s5 + $0x3c] sm:$0xf]
      %v762 = vld [vmem:[%s5 + $0x40] sm:$0xf]
      %v763 = vld [vmem:[%s5 + $0x44] sm:$0xf]
      %v764 = vld [vmem:[%s5 + $0x48] sm:$0xf]
      %v765 = vld [vmem:[%s5 + $0x4c] sm:$0xf]
      %v766 = vld [vmem:[%s5 + $0x50] sm:$0xf]
      %v767 = vld [vmem:[%s5 + $0x54] sm:$0xf]
      %v768 = vld [vmem:[%s5 + $0x58] sm:$0xf]
      %v769 = vld [vmem:[%s5 + $0x5c] sm:$0xf]
      %v770 = vld [vmem:[%s5 + $0x60] sm:$0xf]
      %v771 = vld [vmem:[%s5 + $0x64] sm:$0xf]
      %v772 = vld [vmem:[%s5 + $0x68] sm:$0xf]
      %v773 = vld [vmem:[%s5 + $0x6c] sm:$0xf]
      %v774 = vld [vmem:[%s5 + $0x70] sm:$0xf]
      %v775 = vld [vmem:[%s5 + $0x74] sm:$0xf]
      %v776 = vld [vmem:[%s5 + $0x78] sm:$0xf]
      %v777 = vld [vmem:[%s5 + $0x7c] sm:$0xf]
      %v778 = vld [vmem:[%s5 + $0x80] sm:$0xf]
      %v779 = vld [vmem:[%s5 + $0x84] sm:$0xf]
      %v780 = vld [vmem:[%s5 + $0x88] sm:$0xf]
      %v781 = vld [vmem:[%s5 + $0x8c] sm:$0xf]
      %v782 = vld [vmem:[%s5 + $0x90] sm:$0xf]
      %v783 = vld [vmem:[%s5 + $0x94] sm:$0xf]
      %v784 = vld [vmem:[%s5 + $0x98] sm:$0xf]
      %v785 = vld [vmem:[%s5 + $0x9c] sm:$0xf]
      %v786 = vld [vmem:[%s5 + $0xa0] sm:$0xf]
      %v787 = vld [vmem:[%s5 + $0xa4] sm:$0xf]
      %v788 = vld [vmem:[%s5 + $0xa8] sm:$0xf]
      %v789 = vld [vmem:[%s5 + $0xac] sm:$0xf]
      %v790 = vld [vmem:[%s5 + $0xb0] sm:$0xf]
      %v791 = vld [vmem:[%s5 + $0xb4] sm:$0xf]
      %v792 = vld [vmem:[%s5 + $0xb8] sm:$0xf]
      %v793 = vld [vmem:[%s5 + $0xbc] sm:$0xf]
      %v794 = vlaneseq
      %v795 = vand.u32 %v794, 127
      %v796 = vadd.s32 %v795, 128
      %v797 = vadd.s32 %v795, 256
      %vm798 = vcmp.lt.s32.totalorder %v795, 266
      %vm799 = vcmp.lt.s32.totalorder %v796, 266
      %vm800 = vcmp.lt.s32.totalorder %v797, 266
      %v801 = vmul.f32 %v700, 0.35355338
      %v802 = vpack.c.bf16 %v801, %v801
      %v851 = vunpack.c.l.b16 %v746
      %v852 = vunpack.c.l.b16 %v747
      %v853 = vunpack.c.l.b16 %v748
      %v854 = vunpack.c.l.b16 %v749
      %v855 = vunpack.c.l.b16 %v750
      %v856 = vunpack.c.l.b16 %v751
      %v857 = vunpack.c.l.b16 %v752
      %v858 = vunpack.c.l.b16 %v753
      %v859 = vunpack.c.l.b16 %v754
      %v860 = vunpack.c.l.b16 %v755
      %v861 = vunpack.c.l.b16 %v756
      %v862 = vunpack.c.l.b16 %v757
      %v863 = vunpack.c.l.b16 %v758
      %v864 = vunpack.c.l.b16 %v759
      %v865 = vunpack.c.l.b16 %v760
      %v866 = vunpack.c.l.b16 %v761
      %v867 = vunpack.c.l.b16 %v762
      %v868 = vunpack.c.l.b16 %v763
      %v869 = vunpack.c.l.b16 %v764
      %v870 = vunpack.c.l.b16 %v765
      %v871 = vunpack.c.l.b16 %v766
      %v872 = vunpack.c.l.b16 %v767
      %v873 = vunpack.c.l.b16 %v768
      %v874 = vunpack.c.l.b16 %v769
      %v875 = vunpack.c.l.b16 %v770
      %v876 = vunpack.c.l.b16 %v771
      %v877 = vunpack.c.l.b16 %v772
      %v878 = vunpack.c.l.b16 %v773
      %v879 = vunpack.c.l.b16 %v774
      %v880 = vunpack.c.l.b16 %v775
      %v881 = vunpack.c.l.b16 %v776
      %v882 = vunpack.c.l.b16 %v777
      %v883 = vunpack.c.l.b16 %v778
      %v884 = vunpack.c.l.b16 %v779
      %v885 = vunpack.c.l.b16 %v780
      %v886 = vunpack.c.l.b16 %v781
      %v887 = vunpack.c.l.b16 %v782
      %v888 = vunpack.c.l.b16 %v783
      %v889 = vunpack.c.l.b16 %v784
      %v890 = vunpack.c.l.b16 %v785
      %v891 = vunpack.c.l.b16 %v786
      %v892 = vunpack.c.l.b16 %v787
      %v893 = vunpack.c.l.b16 %v788
      %v894 = vunpack.c.l.b16 %v789
      %v895 = vunpack.c.l.b16 %v790
      %v896 = vunpack.c.l.b16 %v791
      %v897 = vunpack.c.l.b16 %v792
      %v898 = vunpack.c.l.b16 %v793
      %v899 = vpack.c.b16 %v852, %v851
      %v900 = vpack.c.b16 %v854, %v853
      %v901 = vpack.c.b16 %v856, %v855
      %v902 = vpack.c.b16 %v858, %v857
      %v903 = vpack.c.b16 %v860, %v859
      %v904 = vpack.c.b16 %v862, %v861
      %v905 = vpack.c.b16 %v864, %v863
      %v906 = vpack.c.b16 %v866, %v865
      %v907 = vpack.c.b16 %v868, %v867
      %v908 = vpack.c.b16 %v870, %v869
      %v909 = vpack.c.b16 %v872, %v871
      %v910 = vpack.c.b16 %v874, %v873
      %v911 = vpack.c.b16 %v876, %v875
      %v912 = vpack.c.b16 %v878, %v877
      %v913 = vpack.c.b16 %v880, %v879
      %v914 = vpack.c.b16 %v882, %v881
      %v915 = vpack.c.b16 %v884, %v883
      %v916 = vpack.c.b16 %v886, %v885
      %v917 = vpack.c.b16 %v888, %v887
      %v918 = vpack.c.b16 %v890, %v889
      %v919 = vpack.c.b16 %v892, %v891
      %v920 = vpack.c.b16 %v894, %v893
      %v921 = vpack.c.b16 %v896, %v895
      %v922 = vpack.c.b16 %v898, %v897
      %vm923 = vcmask 523264
      %v925 = vsel %vm923, %v802, 0
      %v928 = vsel %vm923, %v899, 0
      %v931 = vsel %vm923, %v900, 0
      %v934 = vsel %vm923, %v901, 0
      %v937 = vsel %vm923, %v902, 0
      %v940 = vsel %vm923, %v903, 0
      %v943 = vsel %vm923, %v904, 0
      %v946 = vsel %vm923, %v905, 0
      %v949 = vsel %vm923, %v906, 0
      %v952 = vsel %vm923, %v907, 0
      %v955 = vsel %vm923, %v908, 0
      %v958 = vsel %vm923, %v909, 0
      %v961 = vsel %vm923, %v910, 0
      %v964 = vsel %vm923, %v911, 0
      %v967 = vsel %vm923, %v912, 0
      %v970 = vsel %vm923, %v913, 0
      %v973 = vsel %vm923, %v914, 0
      %v976 = vsel %vm923, %v915, 0
      %v979 = vsel %vm923, %v916, 0
      %v982 = vsel %vm923, %v917, 0
      %v985 = vsel %vm923, %v918, 0
      %v988 = vsel %vm923, %v919, 0
      %v991 = vsel %vm923, %v920, 0
      %v994 = vsel %vm923, %v921, 0
      %v997 = vsel %vm923, %v922, 0
      %999 = vmatprep.subr.bf16.mxu0 0
      %1000 = vmatpush1.bf16.xpose.msra.mxu0 %v928
      %1001 = vmatprep.subr.bf16.mxu0 0
      %1002 = vmatpush1.bf16.xpose.msra.mxu0 %v931
      %1003 = vmatprep.subr.bf16.mxu0 0
      %1004 = vmatpush1.bf16.xpose.msra.mxu0 %v934
      %1005 = vmatprep.subr.bf16.mxu0 0
      %1006 = vmatpush1.bf16.xpose.msra.mxu0 %v937
      %1007 = vmatprep.subr.bf16.mxu0 0
      %1008 = vmatpush1.bf16.xpose.msra.mxu0 %v940
      %1009 = vmatprep.subr.bf16.mxu0 0
      %1010 = vmatpush1.bf16.xpose.msra.mxu0 %v943
      %1011 = vmatprep.subr.bf16.mxu0 0
      %1012 = vmatpush1.bf16.xpose.msra.mxu0 %v946
      %1013 = vmatprep.subr.bf16.mxu0 0
      %1014 = vmatpush1.bf16.xpose.msra.mxu0 %v949
      %1015 = vmatprep.subr.bf16.mxu0 0
      %1016 = vmatpush1.bf16.xpose.msra.mxu0 %v952
      %1017 = vmatprep.subr.bf16.mxu0 0
      %1018 = vmatpush1.bf16.xpose.msra.mxu0 %v955
      %1019 = vmatprep.subr.bf16.mxu0 0
      %1020 = vmatpush1.bf16.xpose.msra.mxu0 %v958
      %1021 = vmatprep.subr.bf16.mxu0 0
      %1022 = vmatpush1.bf16.xpose.msra.mxu0 %v961
      %1023 = vmatprep.subr.bf16.mxu0 0
      %1024 = vmatpush1.bf16.xpose.msra.mxu0 %v964
      %1025 = vmatprep.subr.bf16.mxu0 0
      %1026 = vmatpush1.bf16.xpose.msra.mxu0 %v967
      %1027 = vmatprep.subr.bf16.mxu0 0
      %1028 = vmatpush1.bf16.xpose.msra.mxu0 %v970
      %1029 = vmatprep.subr.bf16.mxu0 0
      %1030 = vmatpush1.bf16.xpose.msra.mxu0 %v973
      %1031 = vmatprep.mubr.bf16.mxu0 0
      %1032 = vmatmul.mubr.bf16.gmra.mrb[0].mxu0 %v925
      %v1033 = vpop.f32.mrb[0].mxu0
      %v1034 = vadd.f32 0.0, %v1033
      %v1035 = vpop.f32.mrb[0].mxu0
      %v1036 = vadd.f32 0.0, %v1035
      %v1037 = vpop.f32.mrb[0].mxu0
      %v1038 = vpop.f32.mrb[0].mxu0
      %1039 = vdwg.mxu0
      %1040 = vmatprep.subr.bf16.mxu0 0
      %1041 = vmatpush1.bf16.xpose.msra.mxu0 %v976
      %1042 = vmatprep.subr.bf16.mxu0 0
      %1043 = vmatpush1.bf16.xpose.msra.mxu0 %v979
      %1044 = vmatprep.subr.bf16.mxu0 0
      %1045 = vmatpush1.bf16.xpose.msra.mxu0 %v982
      %1046 = vmatprep.subr.bf16.mxu0 0
      %1047 = vmatpush1.bf16.xpose.msra.mxu0 %v985
      %1048 = vmatprep.subr.bf16.mxu0 0
      %1049 = vmatpush1.bf16.xpose.msra.mxu0 %v988
      %1050 = vmatprep.subr.bf16.mxu0 0
      %1051 = vmatpush1.bf16.xpose.msra.mxu0 %v991
      %1052 = vmatprep.subr.bf16.mxu0 0
      %1053 = vmatpush1.bf16.xpose.msra.mxu0 %v994
      %1054 = vmatprep.subr.bf16.mxu0 0
      %1055 = vmatpush1.bf16.xpose.msra.mxu0 %v997
      %1056 = vmatprep.subr.bf16.mxu0 0
      %1057 = vmatpush1.bf16.xpose.msra.mxu0 0
      %1058 = vmatprep.subr.bf16.mxu0 0
      %1059 = vmatpush1.bf16.xpose.msra.mxu0 0
      %1060 = vmatprep.subr.bf16.mxu0 0
      %1061 = vmatpush1.bf16.xpose.msra.mxu0 0
      %1062 = vmatprep.subr.bf16.mxu0 0
      %1063 = vmatpush1.bf16.xpose.msra.mxu0 0
      %1064 = vmatprep.subr.bf16.mxu0 0
      %1065 = vmatpush1.bf16.xpose.msra.mxu0 0
      %1066 = vmatprep.subr.bf16.mxu0 0
      %1067 = vmatpush1.bf16.xpose.msra.mxu0 0
      %1068 = vmatprep.subr.bf16.mxu0 0
      %1069 = vmatpush1.bf16.xpose.msra.mxu0 0
      %1070 = vmatprep.subr.bf16.mxu0 0
      %1071 = vmatpush1.bf16.xpose.msra.mxu0 0
      %1072 = vmatprep.mubr.bf16.mxu0 0
      %1073 = vmatmul.mubr.bf16.gmra.mrb[0].mxu0 %v925
      %v1074 = vpop.f32.mrb[0].mxu0
      %v1075 = vadd.f32 0.0, %v1074
      %v1076 = vpop.f32.mrb[0].mxu0
      %v1077 = vpop.f32.mrb[0].mxu0
      %v1078 = vpop.f32.mrb[0].mxu0
      %1079 = vdwg.mxu0
      %v1080 = vmul.f32 %v702, 0.35355338
      %v1081 = vpack.c.bf16 %v1080, %v1080
      %v1083 = vsel %vm923, %v1081, 0
      %1085 = vmatprep.subr.bf16.mxu0 0
      %1086 = vmatpush1.bf16.xpose.msra.mxu0 %v928
      %1087 = vmatprep.subr.bf16.mxu0 0
      %1088 = vmatpush1.bf16.xpose.msra.mxu0 %v931
      %1089 = vmatprep.subr.bf16.mxu0 0
      %1090 = vmatpush1.bf16.xpose.msra.mxu0 %v934
      %1091 = vmatprep.subr.bf16.mxu0 0
      %1092 = vmatpush1.bf16.xpose.msra.mxu0 %v937
      %1093 = vmatprep.subr.bf16.mxu0 0
      %1094 = vmatpush1.bf16.xpose.msra.mxu0 %v940
      %1095 = vmatprep.subr.bf16.mxu0 0
      %1096 = vmatpush1.bf16.xpose.msra.mxu0 %v943
      %1097 = vmatprep.subr.bf16.mxu0 0
      %1098 = vmatpush1.bf16.xpose.msra.mxu0 %v946
      %1099 = vmatprep.subr.bf16.mxu0 0
      %1100 = vmatpush1.bf16.xpose.msra.mxu0 %v949
      %1101 = vmatprep.subr.bf16.mxu0 0
      %1102 = vmatpush1.bf16.xpose.msra.mxu0 %v952
      %1103 = vmatprep.subr.bf16.mxu0 0
      %1104 = vmatpush1.bf16.xpose.msra.mxu0 %v955
      %1105 = vmatprep.subr.bf16.mxu0 0
      %1106 = vmatpush1.bf16.xpose.msra.mxu0 %v958
      %1107 = vmatprep.subr.bf16.mxu0 0
      %1108 = vmatpush1.bf16.xpose.msra.mxu0 %v961
      %1109 = vmatprep.subr.bf16.mxu0 0
      %1110 = vmatpush1.bf16.xpose.msra.mxu0 %v964
      %1111 = vmatprep.subr.bf16.mxu0 0
      %1112 = vmatpush1.bf16.xpose.msra.mxu0 %v967
      %1113 = vmatprep.subr.bf16.mxu0 0
      %1114 = vmatpush1.bf16.xpose.msra.mxu0 %v970
      %1115 = vmatprep.subr.bf16.mxu0 0
      %1116 = vmatpush1.bf16.xpose.msra.mxu0 %v973
      %1117 = vmatprep.mubr.bf16.mxu0 0
      %1118 = vmatmul.mubr.bf16.gmra.mrb[0].mxu0 %v1083
      %v1119 = vpop.f32.mrb[0].mxu0
      %v1120 = vadd.f32 0.0, %v1119
      %v1121 = vpop.f32.mrb[0].mxu0
      %v1122 = vadd.f32 0.0, %v1121
      %v1123 = vpop.f32.mrb[0].mxu0
      %v1124 = vpop.f32.mrb[0].mxu0
      %1125 = vdwg.mxu0
      %1126 = vmatprep.subr.bf16.mxu0 0
      %1127 = vmatpush1.bf16.xpose.msra.mxu0 %v976
      %1128 = vmatprep.subr.bf16.mxu0 0
      %1129 = vmatpush1.bf16.xpose.msra.mxu0 %v979
      %1130 = vmatprep.subr.bf16.mxu0 0
      %1131 = vmatpush1.bf16.xpose.msra.mxu0 %v982
      %1132 = vmatprep.subr.bf16.mxu0 0
      %1133 = vmatpush1.bf16.xpose.msra.mxu0 %v985
      %1134 = vmatprep.subr.bf16.mxu0 0
      %1135 = vmatpush1.bf16.xpose.msra.mxu0 %v988
      %1136 = vmatprep.subr.bf16.mxu0 0
      %1137 = vmatpush1.bf16.xpose.msra.mxu0 %v991
      %1138 = vmatprep.subr.bf16.mxu0 0
      %1139 = vmatpush1.bf16.xpose.msra.mxu0 %v994
      %1140 = vmatprep.subr.bf16.mxu0 0
      %1141 = vmatpush1.bf16.xpose.msra.mxu0 %v997
      %1142 = vmatprep.subr.bf16.mxu0 0
      %1143 = vmatpush1.bf16.xpose.msra.mxu0 0
      %1144 = vmatprep.subr.bf16.mxu0 0
      %1145 = vmatpush1.bf16.xpose.msra.mxu0 0
      %1146 = vmatprep.subr.bf16.mxu0 0
      %1147 = vmatpush1.bf16.xpose.msra.mxu0 0
      %1148 = vmatprep.subr.bf16.mxu0 0
      %1149 = vmatpush1.bf16.xpose.msra.mxu0 0
      %1150 = vmatprep.subr.bf16.mxu0 0
      %1151 = vmatpush1.bf16.xpose.msra.mxu0 0
      %1152 = vmatprep.subr.bf16.mxu0 0
      %1153 = vmatpush1.bf16.xpose.msra.mxu0 0
      %1154 = vmatprep.subr.bf16.mxu0 0
      %1155 = vmatpush1.bf16.xpose.msra.mxu0 0
      %1156 = vmatprep.subr.bf16.mxu0 0
      %1157 = vmatpush1.bf16.xpose.msra.mxu0 0
      %1158 = vmatprep.mubr.bf16.mxu0 0
      %1159 = vmatmul.mubr.bf16.gmra.mrb[0].mxu0 %v1083
      %v1160 = vpop.f32.mrb[0].mxu0
      %v1161 = vadd.f32 0.0, %v1160
      %v1162 = vpop.f32.mrb[0].mxu0
      %v1163 = vpop.f32.mrb[0].mxu0
      %v1164 = vpop.f32.mrb[0].mxu0
      %1165 = vdwg.mxu0
      %v1166 = vmul.f32 %v700, %v700
      %v1167 = vsel %vm923, %v1166, 0.0
      %1168 = vadd.xlane.f32.xlu0 %v1167
      %v1169 = vpop.xlane.xlu0 %1168
      %v1170 = vmul.f32 %v1169, 0.0625
      %v1171 = vmul.f32 %v702, %v702
      %v1172 = vsel %vm923, %v1171, 0.0
      %1173 = vadd.xlane.f32.xlu0 %v1172
      %v1174 = vpop.xlane.xlu0 %1173
      %v1175 = vmul.f32 %v1174, 0.0625
      %v1176 = vsel %vm798, 1, 0
      %v1177 = vsel %vm799, 1, 0
      %v1178 = vsel %vm800, 1, 0
      %vm1179 = vcmp.eq.s32.totalorder %v1176, 1
      %vm1180 = vcmp.eq.s32.totalorder %v1177, 1
      %vm1181 = vcmp.eq.s32.totalorder %v1178, 1
      %v1182 = vsel %vm1179, %v1034, -inf
      %v1183 = vsel %vm1180, %v1036, -inf
      %v1184 = vsel %vm1181, %v1075, -inf
      %v1185 = vmax.f32 %v1182, %v1183
      %v1186 = vmax.f32 %v1185, %v1184
      %1187 = vmax.xlane.f32.xlu0 %v1186
      %v1188 = vpop.xlane.xlu0 %1187
      %v1189 = vsub.f32 %v1034, %v1170
      %v1190 = vsub.f32 %v1036, %v1170
      %v1191 = vsub.f32 %v1075, %v1170
      %v1192 = vsub.f32 %v1189, %v1188
      %v1193 = vsub.f32 %v1190, %v1188
      %v1194 = vsub.f32 %v1191, %v1188
      %v1195 = vmul.f32 %v1192, 1.442695
      %v1196 = vpow.pop %v1195
      %v1197 = vmul.f32 %v1193, 1.442695
      %v1198 = vpow.pop %v1197
      %v1199 = vmul.f32 %v1194, 1.442695
      %v1200 = vpow.pop %v1199
      %v1201 = vadd.f32 %v1196, 0.0001
      %v1202 = vadd.f32 %v1198, 0.0001
      %v1203 = vadd.f32 %v1200, 0.0001
      %v1204 = vmul.f32 %v1201, 0.061313935
      %v1205 = vmul.f32 %v1202, 0.061313935
      %v1206 = vmul.f32 %v1203, 0.061313935
      %v1207 = vsel %vm1179, %v1204, 0.0
      %v1208 = vsel %vm1180, %v1205, 0.0
      %v1209 = vsel %vm1181, %v1206, 0.0
      %v1210 = vsub.f32 %v1120, %v1175
      %v1211 = vsub.f32 %v1122, %v1175
      %v1212 = vsub.f32 %v1161, %v1175
      %v1213 = vadd.f32 %v1210, 0.0001
      %v1214 = vadd.f32 %v1211, 0.0001
      %v1215 = vadd.f32 %v1212, 0.0001
      %v1216 = vmul.f32 %v1213, 1.442695
      %v1217 = vpow.pop %v1216
      %v1218 = vmul.f32 %v1214, 1.442695
      %v1219 = vpow.pop %v1218
      %v1220 = vmul.f32 %v1215, 1.442695
      %v1221 = vpow.pop %v1220
      %v1222 = vmul.f32 %v1217, 0.061313935
      %v1223 = vmul.f32 %v1219, 0.061313935
      %v1224 = vmul.f32 %v1221, 0.061313935
      %v1225 = vsel %vm1179, %v1222, 0.0
      %v1226 = vsel %vm1180, %v1223, 0.0
      %v1227 = vsel %vm1181, %v1224, 0.0
      %v1228 = vpack.c.bf16 %v1225, %v1225
      %v1229 = vpack.c.bf16 %v1226, %v1226
      %v1230 = vpack.c.bf16 %v1227, %v1227
      %v1231 = vpack.c.bf16 %v741, %v741
      %1232 = vxpose.xlu0.c.b16.start [1/8] %v1228, 128
      %1233 = vxpose.xlu0.c.b16.cont [2/8] 0, 128
      %1234 = vxpose.xlu0.c.b16.cont [3/8] 0, 128
      %1235 = vxpose.xlu0.c.b16.cont [4/8] 0, 128
      %1236 = vxpose.xlu0.c.b16.cont [5/8] 0, 128
      %1237 = vxpose.xlu0.c.b16.cont [6/8] 0, 128
      %1238 = vxpose.xlu0.c.b16.cont [7/8] 0, 128
      %1239 = vxpose.xlu0.c.b16.end [8/8] 0, 128
      %v1240 = vpop.trf.xlu0
      %v1241 = vpop.trf.xlu0
      %v1242 = vpop.trf.xlu0
      %v1243 = vpop.trf.xlu0
      %v1244 = vpop.trf.xlu0
      %v1245 = vpop.trf.xlu0
      %v1246 = vpop.trf.xlu0
      %v1247 = vpop.trf.xlu0
      %1248 = vxpose.xlu0.c.b16.start [1/8] %v1229, 128
      %1249 = vxpose.xlu0.c.b16.cont [2/8] 0, 128
      %1250 = vxpose.xlu0.c.b16.cont [3/8] 0, 128
      %1251 = vxpose.xlu0.c.b16.cont [4/8] 0, 128
      %1252 = vxpose.xlu0.c.b16.cont [5/8] 0, 128
      %1253 = vxpose.xlu0.c.b16.cont [6/8] 0, 128
      %1254 = vxpose.xlu0.c.b16.cont [7/8] 0, 128
      %1255 = vxpose.xlu0.c.b16.end [8/8] 0, 128
      %v1256 = vpop.trf.xlu0
      %v1257 = vpop.trf.xlu0
      %v1258 = vpop.trf.xlu0
      %v1259 = vpop.trf.xlu0
      %v1260 = vpop.trf.xlu0
      %v1261 = vpop.trf.xlu0
      %v1262 = vpop.trf.xlu0
      %v1263 = vpop.trf.xlu0
      %1264 = vxpose.xlu0.c.b16.start [1/8] %v1230, 128
      %1265 = vxpose.xlu0.c.b16.cont [2/8] 0, 128
      %1266 = vxpose.xlu0.c.b16.cont [3/8] 0, 128
      %1267 = vxpose.xlu0.c.b16.cont [4/8] 0, 128
      %1268 = vxpose.xlu0.c.b16.cont [5/8] 0, 128
      %1269 = vxpose.xlu0.c.b16.cont [6/8] 0, 128
      %1270 = vxpose.xlu0.c.b16.cont [7/8] 0, 128
      %1271 = vxpose.xlu0.c.b16.end [8/8] 0, 128
      %v1272 = vpop.trf.xlu0
      %v1273 = vpop.trf.xlu0
      %v1274 = vpop.trf.xlu0
      %v1275 = vpop.trf.xlu0
      %v1276 = vpop.trf.xlu0
      %v1277 = vpop.trf.xlu0
      %v1278 = vpop.trf.xlu0
      %v1279 = vpop.trf.xlu0
      %vm1280 = vcmask 64512
      %v1282 = vsel %vm1280, %v1240, 0
      %v1285 = vsel %vm1280, %v1241, 0
      %v1288 = vsel %vm1280, %v1242, 0
      %v1291 = vsel %vm1280, %v1243, 0
      %v1294 = vsel %vm1280, %v1244, 0
      %v1297 = vsel %vm1280, %v1245, 0
      %v1300 = vsel %vm1280, %v1246, 0
      %v1303 = vsel %vm1280, %v1247, 0
      %v1306 = vsel %vm1280, %v1256, 0
      %v1309 = vsel %vm1280, %v1257, 0
      %v1312 = vsel %vm1280, %v1258, 0
      %v1315 = vsel %vm1280, %v1259, 0
      %v1318 = vsel %vm1280, %v1260, 0
      %v1321 = vsel %vm1280, %v1261, 0
      %v1324 = vsel %vm1280, %v1262, 0
      %v1327 = vsel %vm1280, %v1263, 0
      %v1330 = vsel %vm1280, %v1272, 0
      %v1333 = vsel %vm1280, %v1273, 0
      %v1336 = vsel %vm1280, %v1274, 0
      %v1339 = vsel %vm1280, %v1275, 0
      %v1342 = vsel %vm1280, %v1276, 0
      %v1345 = vsel %vm1280, %v1277, 0
      %v1348 = vsel %vm1280, %v1278, 0
      %v1351 = vsel %vm1280, %v1279, 0
      %vm1353 = vcmask 1043456
      %v1355 = vsel %vm1353, %v1231, 0
      %1357 = vmatprep.subr.bf16.mxu0 0
      %1358 = vmatpush1.bf16.msra.mxu0 %v1355
      %1359 = vmatprep.subr.bf16.mxu0 0
      %1360 = vmatpush1.bf16.msra.mxu0 0
      %1361 = vmatprep.subr.bf16.mxu0 0
      %1362 = vmatpush1.bf16.msra.mxu0 0
      %1363 = vmatprep.subr.bf16.mxu0 0
      %1364 = vmatpush1.bf16.msra.mxu0 0
      %1365 = vmatprep.subr.bf16.mxu0 0
      %1366 = vmatpush1.bf16.msra.mxu0 0
      %1367 = vmatprep.subr.bf16.mxu0 0
      %1368 = vmatpush1.bf16.msra.mxu0 0
      %1369 = vmatprep.subr.bf16.mxu0 0
      %1370 = vmatpush1.bf16.msra.mxu0 0
      %1371 = vmatprep.subr.bf16.mxu0 0
      %1372 = vmatpush1.bf16.msra.mxu0 0
      %1373 = vmatprep.subr.bf16.mxu0 0
      %1374 = vmatpush1.bf16.msra.mxu0 0
      %1375 = vmatprep.subr.bf16.mxu0 0
      %1376 = vmatpush1.bf16.msra.mxu0 0
      %1377 = vmatprep.subr.bf16.mxu0 0
      %1378 = vmatpush1.bf16.msra.mxu0 0
      %1379 = vmatprep.subr.bf16.mxu0 0
      %1380 = vmatpush1.bf16.msra.mxu0 0
      %1381 = vmatprep.subr.bf16.mxu0 0
      %1382 = vmatpush1.bf16.msra.mxu0 0
      %1383 = vmatprep.subr.bf16.mxu0 0
      %1384 = vmatpush1.bf16.msra.mxu0 0
      %1385 = vmatprep.subr.bf16.mxu0 0
      %1386 = vmatpush1.bf16.msra.mxu0 0
      %1387 = vmatprep.subr.bf16.mxu0 0
      %1388 = vmatpush1.bf16.msra.mxu0 0
      %1389 = vmatprep.mubr.bf16.mxu0 0
      %1390 = vmatmul.mubr.bf16.gmra.mrb[0].mxu0 %v1282
      %v1391 = vpop.f32.mrb[0].mxu0
      %v1392 = vadd.f32 0.0, %v1391
      %v1393 = vpop.f32.mrb[0].mxu0
      %v1394 = vpop.f32.mrb[0].mxu0
      %v1395 = vadd.f32 0.0, %v1394
      %v1396 = vpop.f32.mrb[0].mxu0
      %1397 = vmatprep.mubr.bf16.mxu0 0
      %1398 = vmatmul.mubr.bf16.gmra.mrb[0].mxu0 %v1285
      %v1399 = vpop.f32.mrb[0].mxu0
      %v1400 = vadd.f32 0.0, %v1399
      %v1401 = vpop.f32.mrb[0].mxu0
      %v1402 = vpop.f32.mrb[0].mxu0
      %v1403 = vadd.f32 0.0, %v1402
      %v1404 = vpop.f32.mrb[0].mxu0
      %1405 = vmatprep.mubr.bf16.mxu0 0
      %1406 = vmatmul.mubr.bf16.gmra.mrb[0].mxu0 %v1288
      %v1407 = vpop.f32.mrb[0].mxu0
      %v1408 = vadd.f32 0.0, %v1407
      %v1409 = vpop.f32.mrb[0].mxu0
      %v1410 = vpop.f32.mrb[0].mxu0
      %v1411 = vadd.f32 0.0, %v1410
      %v1412 = vpop.f32.mrb[0].mxu0
      %1413 = vmatprep.mubr.bf16.mxu0 0
      %1414 = vmatmul.mubr.bf16.gmra.mrb[0].mxu0 %v1291
      %v1415 = vpop.f32.mrb[0].mxu0
      %v1416 = vadd.f32 0.0, %v1415
      %v1417 = vpop.f32.mrb[0].mxu0
      %v1418 = vpop.f32.mrb[0].mxu0
      %v1419 = vadd.f32 0.0, %v1418
      %v1420 = vpop.f32.mrb[0].mxu0
      %1421 = vmatprep.mubr.bf16.mxu0 0
      %1422 = vmatmul.mubr.bf16.gmra.mrb[0].mxu0 %v1294
      %v1423 = vpop.f32.mrb[0].mxu0
      %v1424 = vadd.f32 0.0, %v1423
      %v1425 = vpop.f32.mrb[0].mxu0
      %v1426 = vpop.f32.mrb[0].mxu0
      %v1427 = vadd.f32 0.0, %v1426
      %v1428 = vpop.f32.mrb[0].mxu0
      %1429 = vmatprep.mubr.bf16.mxu0 0
      %1430 = vmatmul.mubr.bf16.gmra.mrb[0].mxu0 %v1297
      %v1431 = vpop.f32.mrb[0].mxu0
      %v1432 = vadd.f32 0.0, %v1431
      %v1433 = vpop.f32.mrb[0].mxu0
      %v1434 = vpop.f32.mrb[0].mxu0
      %v1435 = vadd.f32 0.0, %v1434
      %v1436 = vpop.f32.mrb[0].mxu0
      %1437 = vmatprep.mubr.bf16.mxu0 0
      %1438 = vmatmul.mubr.bf16.gmra.mrb[0].mxu0 %v1300
      %v1439 = vpop.f32.mrb[0].mxu0
      %v1440 = vadd.f32 0.0, %v1439
      %v1441 = vpop.f32.mrb[0].mxu0
      %v1442 = vpop.f32.mrb[0].mxu0
      %v1443 = vadd.f32 0.0, %v1442
      %v1444 = vpop.f32.mrb[0].mxu0
      %1445 = vmatprep.mubr.bf16.mxu0 0
      %1446 = vmatmul.mubr.bf16.gmra.mrb[0].mxu0 %v1303
      %v1447 = vpop.f32.mrb[0].mxu0
      %v1448 = vadd.f32 0.0, %v1447
      %v1449 = vpop.f32.mrb[0].mxu0
      %v1450 = vpop.f32.mrb[0].mxu0
      %v1451 = vadd.f32 0.0, %v1450
      %v1452 = vpop.f32.mrb[0].mxu0
      %1453 = vmatprep.mubr.bf16.mxu0 0
      %1454 = vmatmul.mubr.bf16.gmra.mrb[0].mxu0 %v1306
      %v1455 = vpop.f32.mrb[0].mxu0
      %v1456 = vadd.f32 0.0, %v1455
      %v1457 = vpop.f32.mrb[0].mxu0
      %v1458 = vpop.f32.mrb[0].mxu0
      %v1459 = vadd.f32 0.0, %v1458
      %v1460 = vpop.f32.mrb[0].mxu0
      %1461 = vmatprep.mubr.bf16.mxu0 0
      %1462 = vmatmul.mubr.bf16.gmra.mrb[0].mxu0 %v1309
      %v1463 = vpop.f32.mrb[0].mxu0
      %v1464 = vadd.f32 0.0, %v1463
      %v1465 = vpop.f32.mrb[0].mxu0
      %v1466 = vpop.f32.mrb[0].mxu0
      %v1467 = vadd.f32 0.0, %v1466
      %v1468 = vpop.f32.mrb[0].mxu0
      %1469 = vmatprep.mubr.bf16.mxu0 0
      %1470 = vmatmul.mubr.bf16.gmra.mrb[0].mxu0 %v1312
      %v1471 = vpop.f32.mrb[0].mxu0
      %v1472 = vadd.f32 0.0, %v1471
      %v1473 = vpop.f32.mrb[0].mxu0
      %v1474 = vpop.f32.mrb[0].mxu0
      %v1475 = vadd.f32 0.0, %v1474
      %v1476 = vpop.f32.mrb[0].mxu0
      %1477 = vmatprep.mubr.bf16.mxu0 0
      %1478 = vmatmul.mubr.bf16.gmra.mrb[0].mxu0 %v1315
      %v1479 = vpop.f32.mrb[0].mxu0
      %v1480 = vadd.f32 0.0, %v1479
      %v1481 = vpop.f32.mrb[0].mxu0
      %v1482 = vpop.f32.mrb[0].mxu0
      %v1483 = vadd.f32 0.0, %v1482
      %v1484 = vpop.f32.mrb[0].mxu0
      %1485 = vmatprep.mubr.bf16.mxu0 0
      %1486 = vmatmul.mubr.bf16.gmra.mrb[0].mxu0 %v1318
      %v1487 = vpop.f32.mrb[0].mxu0
      %v1488 = vadd.f32 0.0, %v1487
      %v1489 = vpop.f32.mrb[0].mxu0
      %v1490 = vpop.f32.mrb[0].mxu0
      %v1491 = vadd.f32 0.0, %v1490
      %v1492 = vpop.f32.mrb[0].mxu0
      %1493 = vmatprep.mubr.bf16.mxu0 0
      %1494 = vmatmul.mubr.bf16.gmra.mrb[0].mxu0 %v1321
      %v1495 = vpop.f32.mrb[0].mxu0
      %v1496 = vadd.f32 0.0, %v1495
      %v1497 = vpop.f32.mrb[0].mxu0
      %v1498 = vpop.f32.mrb[0].mxu0
      %v1499 = vadd.f32 0.0, %v1498
      %v1500 = vpop.f32.mrb[0].mxu0
      %1501 = vmatprep.mubr.bf16.mxu0 0
      %1502 = vmatmul.mubr.bf16.gmra.mrb[0].mxu0 %v1324
      %v1503 = vpop.f32.mrb[0].mxu0
      %v1504 = vadd.f32 0.0, %v1503
      %v1505 = vpop.f32.mrb[0].mxu0
      %v1506 = vpop.f32.mrb[0].mxu0
      %v1507 = vadd.f32 0.0, %v1506
      %v1508 = vpop.f32.mrb[0].mxu0
      %1509 = vmatprep.mubr.bf16.mxu0 0
      %1510 = vmatmul.mubr.bf16.gmra.mrb[0].mxu0 %v1327
      %v1511 = vpop.f32.mrb[0].mxu0
      %v1512 = vadd.f32 0.0, %v1511
      %v1513 = vpop.f32.mrb[0].mxu0
      %v1514 = vpop.f32.mrb[0].mxu0
      %v1515 = vadd.f32 0.0, %v1514
      %v1516 = vpop.f32.mrb[0].mxu0
      %1517 = vmatprep.mubr.bf16.mxu0 0
      %1518 = vmatmul.mubr.bf16.gmra.mrb[0].mxu0 %v1330
      %v1519 = vpop.f32.mrb[0].mxu0
      %v1520 = vadd.f32 0.0, %v1519
      %v1521 = vpop.f32.mrb[0].mxu0
      %v1522 = vpop.f32.mrb[0].mxu0
      %v1523 = vadd.f32 0.0, %v1522
      %v1524 = vpop.f32.mrb[0].mxu0
      %1525 = vmatprep.mubr.bf16.mxu0 0
      %1526 = vmatmul.mubr.bf16.gmra.mrb[0].mxu0 %v1333
      %v1527 = vpop.f32.mrb[0].mxu0
      %v1528 = vadd.f32 0.0, %v1527
      %v1529 = vpop.f32.mrb[0].mxu0
      %v1530 = vpop.f32.mrb[0].mxu0
      %v1531 = vadd.f32 0.0, %v1530
      %v1532 = vpop.f32.mrb[0].mxu0
      %1533 = vmatprep.mubr.bf16.mxu0 0
      %1534 = vmatmul.mubr.bf16.gmra.mrb[0].mxu0 %v1336
      %v1535 = vpop.f32.mrb[0].mxu0
      %v1536 = vadd.f32 0.0, %v1535
      %v1537 = vpop.f32.mrb[0].mxu0
      %v1538 = vpop.f32.mrb[0].mxu0
      %v1539 = vadd.f32 0.0, %v1538
      %v1540 = vpop.f32.mrb[0].mxu0
      %1541 = vmatprep.mubr.bf16.mxu0 0
      %1542 = vmatmul.mubr.bf16.gmra.mrb[0].mxu0 %v1339
      %v1543 = vpop.f32.mrb[0].mxu0
      %v1544 = vadd.f32 0.0, %v1543
      %v1545 = vpop.f32.mrb[0].mxu0
      %v1546 = vpop.f32.mrb[0].mxu0
      %v1547 = vadd.f32 0.0, %v1546
      %v1548 = vpop.f32.mrb[0].mxu0
      %1549 = vmatprep.mubr.bf16.mxu0 0
      %1550 = vmatmul.mubr.bf16.gmra.mrb[0].mxu0 %v1342
      %v1551 = vpop.f32.mrb[0].mxu0
      %v1552 = vadd.f32 0.0, %v1551
      %v1553 = vpop.f32.mrb[0].mxu0
      %v1554 = vpop.f32.mrb[0].mxu0
      %v1555 = vadd.f32 0.0, %v1554
      %v1556 = vpop.f32.mrb[0].mxu0
      %1557 = vmatprep.mubr.bf16.mxu0 0
      %1558 = vmatmul.mubr.bf16.gmra.mrb[0].mxu0 %v1345
      %v1559 = vpop.f32.mrb[0].mxu0
      %v1560 = vadd.f32 0.0, %v1559
      %v1561 = vpop.f32.mrb[0].mxu0
      %v1562 = vpop.f32.mrb[0].mxu0
      %v1563 = vadd.f32 0.0, %v1562
      %v1564 = vpop.f32.mrb[0].mxu0
      %1565 = vmatprep.mubr.bf16.mxu0 0
      %1566 = vmatmul.mubr.bf16.gmra.mrb[0].mxu0 %v1348
      %v1567 = vpop.f32.mrb[0].mxu0
      %v1568 = vadd.f32 0.0, %v1567
      %v1569 = vpop.f32.mrb[0].mxu0
      %v1570 = vpop.f32.mrb[0].mxu0
      %v1571 = vadd.f32 0.0, %v1570
      %v1572 = vpop.f32.mrb[0].mxu0
      %1573 = vmatprep.mubr.bf16.mxu0 0
      %1574 = vmatmul.mubr.bf16.gmra.mrb[0].mxu0 %v1351
      %v1575 = vpop.f32.mrb[0].mxu0
      %v1576 = vadd.f32 0.0, %v1575
      %v1577 = vpop.f32.mrb[0].mxu0
      %v1578 = vpop.f32.mrb[0].mxu0
      %v1579 = vadd.f32 0.0, %v1578
      %v1580 = vpop.f32.mrb[0].mxu0
      %1581 = vdwg.mxu0
      %v1582 = vrot.slane %v1225, 4
      %v1583 = vadd.f32 %v1225, %v1582
      %v1584 = vrot.slane %v1583, 2
      %v1585 = vadd.f32 %v1583, %v1584
      %v1586 = vrot.slane %v1585, 1
      %v1587 = vadd.f32 %v1585, %v1586
      %v1588 = vrot.slane %v1226, 4
      %v1589 = vadd.f32 %v1226, %v1588
      %v1590 = vrot.slane %v1589, 2
      %v1591 = vadd.f32 %v1589, %v1590
      %v1592 = vrot.slane %v1591, 1
      %v1593 = vadd.f32 %v1591, %v1592
      %v1594 = vrot.slane %v1227, 4
      %v1595 = vadd.f32 %v1227, %v1594
      %v1596 = vrot.slane %v1595, 2
      %v1597 = vadd.f32 %v1595, %v1596
      %v1598 = vrot.slane %v1597, 1
      %v1599 = vadd.f32 %v1597, %v1598
      %v1600 = vmul.f32 %v1207, %v1587
      %v1601 = vmul.f32 %v1208, %v1593
      %v1602 = vmul.f32 %v1209, %v1599
      %v1603 = vadd.f32 %v1600, %v1601
      %v1604 = vadd.f32 %v1603, %v1602
      %1605 = vadd.xlane.f32.xlu0 %v1604
      %v1606 = vpop.xlane.xlu0 %1605
      %v1607 = vadd.f32 %v1606, 1e-08
      %v1608 = vrcp.pop %v1607
      %v1609 = vpack.c.bf16 %v1207, %v1207
      %v1610 = vpack.c.bf16 %v1208, %v1208
      %v1611 = vpack.c.bf16 %v1209, %v1209
      %v1612 = vpack.c.bf16 %v1395, %v1392
      %v1613 = vpack.c.bf16 %v1403, %v1400
      %v1614 = vpack.c.bf16 %v1411, %v1408
      %v1615 = vpack.c.bf16 %v1419, %v1416
      %v1616 = vpack.c.bf16 %v1427, %v1424
      %v1617 = vpack.c.bf16 %v1435, %v1432
      %v1618 = vpack.c.bf16 %v1443, %v1440
      %v1619 = vpack.c.bf16 %v1451, %v1448
      %v1620 = vpack.c.bf16 %v1459, %v1456
      %v1621 = vpack.c.bf16 %v1467, %v1464
      %v1622 = vpack.c.bf16 %v1475, %v1472
      %v1623 = vpack.c.bf16 %v1483, %v1480
      %v1624 = vpack.c.bf16 %v1491, %v1488
      %v1625 = vpack.c.bf16 %v1499, %v1496
      %v1626 = vpack.c.bf16 %v1507, %v1504
      %v1627 = vpack.c.bf16 %v1515, %v1512
      %v1628 = vpack.c.bf16 %v1523, %v1520
      %v1629 = vpack.c.bf16 %v1531, %v1528
      %v1630 = vpack.c.bf16 %v1539, %v1536
      %v1631 = vpack.c.bf16 %v1547, %v1544
      %v1632 = vpack.c.bf16 %v1555, %v1552
      %v1633 = vpack.c.bf16 %v1563, %v1560
      %v1634 = vpack.c.bf16 %v1571, %v1568
      %v1635 = vpack.c.bf16 %v1579, %v1576
      %1636 = vmatprep.subr.bf16.mxu0 0
      %1637 = vmatpush1.bf16.msra.mxu0 %v1612
      %1638 = vmatprep.subr.bf16.mxu0 0
      %1639 = vmatpush1.bf16.msra.mxu0 %v1613
      %1640 = vmatprep.subr.bf16.mxu0 0
      %1641 = vmatpush1.bf16.msra.mxu0 %v1614
      %1642 = vmatprep.subr.bf16.mxu0 0
      %1643 = vmatpush1.bf16.msra.mxu0 %v1615
      %1644 = vmatprep.subr.bf16.mxu0 0
      %1645 = vmatpush1.bf16.msra.mxu0 %v1616
      %1646 = vmatprep.subr.bf16.mxu0 0
      %1647 = vmatpush1.bf16.msra.mxu0 %v1617
      %1648 = vmatprep.subr.bf16.mxu0 0
      %1649 = vmatpush1.bf16.msra.mxu0 %v1618
      %1650 = vmatprep.subr.bf16.mxu0 0
      %1651 = vmatpush1.bf16.msra.mxu0 %v1619
      %1652 = vmatprep.subr.bf16.mxu0 0
      %1653 = vmatpush1.bf16.msra.mxu0 %v1620
      %1654 = vmatprep.subr.bf16.mxu0 0
      %1655 = vmatpush1.bf16.msra.mxu0 %v1621
      %1656 = vmatprep.subr.bf16.mxu0 0
      %1657 = vmatpush1.bf16.msra.mxu0 %v1622
      %1658 = vmatprep.subr.bf16.mxu0 0
      %1659 = vmatpush1.bf16.msra.mxu0 %v1623
      %1660 = vmatprep.subr.bf16.mxu0 0
      %1661 = vmatpush1.bf16.msra.mxu0 %v1624
      %1662 = vmatprep.subr.bf16.mxu0 0
      %1663 = vmatpush1.bf16.msra.mxu0 %v1625
      %1664 = vmatprep.subr.bf16.mxu0 0
      %1665 = vmatpush1.bf16.msra.mxu0 %v1626
      %1666 = vmatprep.subr.bf16.mxu0 0
      %1667 = vmatpush1.bf16.msra.mxu0 %v1627
      %1668 = vmatprep.mubr.bf16.mxu0 %v1610
      %1669 = vmatmul.mubr.bf16.gmra.mrb[0].mxu0 %v1609
      %v1670 = vpop.f32.mrb[0].mxu0
      %v1671 = vadd.f32 0.0, %v1670
      %v1672 = vpop.f32.mrb[0].mxu0
      %v1673 = vpop.f32.mrb[0].mxu0
      %v1674 = vpop.f32.mrb[0].mxu0
      %1675 = vdwg.mxu0
      %1676 = vmatprep.subr.bf16.mxu0 0
      %1677 = vmatpush1.bf16.msra.mxu0 %v1628
      %1678 = vmatprep.subr.bf16.mxu0 0
      %1679 = vmatpush1.bf16.msra.mxu0 %v1629
      %1680 = vmatprep.subr.bf16.mxu0 0
      %1681 = vmatpush1.bf16.msra.mxu0 %v1630
      %1682 = vmatprep.subr.bf16.mxu0 0
      %1683 = vmatpush1.bf16.msra.mxu0 %v1631
      %1684 = vmatprep.subr.bf16.mxu0 0
      %1685 = vmatpush1.bf16.msra.mxu0 %v1632
      %1686 = vmatprep.subr.bf16.mxu0 0
      %1687 = vmatpush1.bf16.msra.mxu0 %v1633
      %1688 = vmatprep.subr.bf16.mxu0 0
      %1689 = vmatpush1.bf16.msra.mxu0 %v1634
      %1690 = vmatprep.subr.bf16.mxu0 0
      %1691 = vmatpush1.bf16.msra.mxu0 %v1635
      %1692 = vmatprep.subr.bf16.mxu0 0
      %1693 = vmatpush1.bf16.msra.mxu0 0
      %1694 = vmatprep.subr.bf16.mxu0 0
      %1695 = vmatpush1.bf16.msra.mxu0 0
      %1696 = vmatprep.subr.bf16.mxu0 0
      %1697 = vmatpush1.bf16.msra.mxu0 0
      %1698 = vmatprep.subr.bf16.mxu0 0
      %1699 = vmatpush1.bf16.msra.mxu0 0
      %1700 = vmatprep.subr.bf16.mxu0 0
      %1701 = vmatpush1.bf16.msra.mxu0 0
      %1702 = vmatprep.subr.bf16.mxu0 0
      %1703 = vmatpush1.bf16.msra.mxu0 0
      %1704 = vmatprep.subr.bf16.mxu0 0
      %1705 = vmatpush1.bf16.msra.mxu0 0
      %1706 = vmatprep.subr.bf16.mxu0 0
      %1707 = vmatpush1.bf16.msra.mxu0 0
      %1708 = vmatprep.mubr.bf16.mxu0 0
      %1709 = vmatmul.mubr.bf16.gmra.mrb[0].mxu0 %v1611
      %v1710 = vpop.f32.mrb[0].mxu0
      %v1711 = vadd.f32 %v1671, %v1710
      %v1712 = vpop.f32.mrb[0].mxu0
      %v1713 = vpop.f32.mrb[0].mxu0
      %v1714 = vpop.f32.mrb[0].mxu0
      %1715 = vdwg.mxu0
      %v1716 = vmul.f32 %v1711, %v1608
      %v1717 = vpack.c.bf16 %v1716, %v1716
      %v1718 = vld [vmem:[%s6] sm:$0xf]
      %v1719 = vld [vmem:[%s6 + $0x4] sm:$0xf]
      %v1720 = vld [vmem:[%s6 + $0x8] sm:$0xf]
      %v1721 = vld [vmem:[%s6 + $0xc] sm:$0xf]
      %v1722 = vld [vmem:[%s6 + $0x10] sm:$0xf]
      %v1723 = vld [vmem:[%s6 + $0x14] sm:$0xf]
      %v1724 = vld [vmem:[%s6 + $0x18] sm:$0xf]
      %v1725 = vld [vmem:[%s6 + $0x1c] sm:$0xf]
      %1727 = vrot.lane.b32.xlu0 %v802, 64
      %v1728 = vpop.permute.xlu0 %1727
      %v1730 = vsel %vm923, %v1728, 0
      %1732 = vmatprep.subr.bf16.mxu0 0
      %1733 = vmatpush1.bf16.xpose.msra.mxu0 %v928
      %1734 = vmatprep.subr.bf16.mxu0 0
      %1735 = vmatpush1.bf16.xpose.msra.mxu0 %v931
      %1736 = vmatprep.subr.bf16.mxu0 0
      %1737 = vmatpush1.bf16.xpose.msra.mxu0 %v934
      %1738 = vmatprep.subr.bf16.mxu0 0
      %1739 = vmatpush1.bf16.xpose.msra.mxu0 %v937
      %1740 = vmatprep.subr.bf16.mxu0 0
      %1741 = vmatpush1.bf16.xpose.msra.mxu0 %v940
      %1742 = vmatprep.subr.bf16.mxu0 0
      %1743 = vmatpush1.bf16.xpose.msra.mxu0 %v943
      %1744 = vmatprep.subr.bf16.mxu0 0
      %1745 = vmatpush1.bf16.xpose.msra.mxu0 %v946
      %1746 = vmatprep.subr.bf16.mxu0 0
      %1747 = vmatpush1.bf16.xpose.msra.mxu0 %v949
      %1748 = vmatprep.subr.bf16.mxu0 0
      %1749 = vmatpush1.bf16.xpose.msra.mxu0 %v952
      %1750 = vmatprep.subr.bf16.mxu0 0
      %1751 = vmatpush1.bf16.xpose.msra.mxu0 %v955
      %1752 = vmatprep.subr.bf16.mxu0 0
      %1753 = vmatpush1.bf16.xpose.msra.mxu0 %v958
      %1754 = vmatprep.subr.bf16.mxu0 0
      %1755 = vmatpush1.bf16.xpose.msra.mxu0 %v961
      %1756 = vmatprep.subr.bf16.mxu0 0
      %1757 = vmatpush1.bf16.xpose.msra.mxu0 %v964
      %1758 = vmatprep.subr.bf16.mxu0 0
      %1759 = vmatpush1.bf16.xpose.msra.mxu0 %v967
      %1760 = vmatprep.subr.bf16.mxu0 0
      %1761 = vmatpush1.bf16.xpose.msra.mxu0 %v970
      %1762 = vmatprep.subr.bf16.mxu0 0
      %1763 = vmatpush1.bf16.xpose.msra.mxu0 %v973
      %1764 = vmatprep.mubr.bf16.mxu0 0
      %1765 = vmatmul.mubr.bf16.gmra.mrb[0].mxu0 %v1730
      %v1766 = vpop.f32.mrb[0].mxu0
      %v1767 = vadd.f32 0.0, %v1766
      %v1768 = vpop.f32.mrb[0].mxu0
      %v1769 = vadd.f32 0.0, %v1768
      %v1770 = vpop.f32.mrb[0].mxu0
      %v1771 = vpop.f32.mrb[0].mxu0
      %1772 = vdwg.mxu0
      %1773 = vmatprep.subr.bf16.mxu0 0
      %1774 = vmatpush1.bf16.xpose.msra.mxu0 %v976
      %1775 = vmatprep.subr.bf16.mxu0 0
      %1776 = vmatpush1.bf16.xpose.msra.mxu0 %v979
      %1777 = vmatprep.subr.bf16.mxu0 0
      %1778 = vmatpush1.bf16.xpose.msra.mxu0 %v982
      %1779 = vmatprep.subr.bf16.mxu0 0
      %1780 = vmatpush1.bf16.xpose.msra.mxu0 %v985
      %1781 = vmatprep.subr.bf16.mxu0 0
      %1782 = vmatpush1.bf16.xpose.msra.mxu0 %v988
      %1783 = vmatprep.subr.bf16.mxu0 0
      %1784 = vmatpush1.bf16.xpose.msra.mxu0 %v991
      %1785 = vmatprep.subr.bf16.mxu0 0
      %1786 = vmatpush1.bf16.xpose.msra.mxu0 %v994
      %1787 = vmatprep.subr.bf16.mxu0 0
      %1788 = vmatpush1.bf16.xpose.msra.mxu0 %v997
      %1789 = vmatprep.subr.bf16.mxu0 0
      %1790 = vmatpush1.bf16.xpose.msra.mxu0 0
      %1791 = vmatprep.subr.bf16.mxu0 0
      %1792 = vmatpush1.bf16.xpose.msra.mxu0 0
      %1793 = vmatprep.subr.bf16.mxu0 0
      %1794 = vmatpush1.bf16.xpose.msra.mxu0 0
      %1795 = vmatprep.subr.bf16.mxu0 0
      %1796 = vmatpush1.bf16.xpose.msra.mxu0 0
      %1797 = vmatprep.subr.bf16.mxu0 0
      %1798 = vmatpush1.bf16.xpose.msra.mxu0 0
      %1799 = vmatprep.subr.bf16.mxu0 0
      %1800 = vmatpush1.bf16.xpose.msra.mxu0 0
      %1801 = vmatprep.subr.bf16.mxu0 0
      %1802 = vmatpush1.bf16.xpose.msra.mxu0 0
      %1803 = vmatprep.subr.bf16.mxu0 0
      %1804 = vmatpush1.bf16.xpose.msra.mxu0 0
      %1805 = vmatprep.mubr.bf16.mxu0 0
      %1806 = vmatmul.mubr.bf16.gmra.mrb[0].mxu0 %v1730
      %v1807 = vpop.f32.mrb[0].mxu0
      %v1808 = vadd.f32 0.0, %v1807
      %v1809 = vpop.f32.mrb[0].mxu0
      %v1810 = vpop.f32.mrb[0].mxu0
      %v1811 = vpop.f32.mrb[0].mxu0
      %1812 = vdwg.mxu0
      %1814 = vrot.lane.b32.xlu0 %v1081, 64
      %v1815 = vpop.permute.xlu0 %1814
      %v1817 = vsel %vm923, %v1815, 0
      %1819 = vmatprep.subr.bf16.mxu0 0
      %1820 = vmatpush1.bf16.xpose.msra.mxu0 %v928
      %1821 = vmatprep.subr.bf16.mxu0 0
      %1822 = vmatpush1.bf16.xpose.msra.mxu0 %v931
      %1823 = vmatprep.subr.bf16.mxu0 0
      %1824 = vmatpush1.bf16.xpose.msra.mxu0 %v934
      %1825 = vmatprep.subr.bf16.mxu0 0
      %1826 = vmatpush1.bf16.xpose.msra.mxu0 %v937
      %1827 = vmatprep.subr.bf16.mxu0 0
      %1828 = vmatpush1.bf16.xpose.msra.mxu0 %v940
      %1829 = vmatprep.subr.bf16.mxu0 0
      %1830 = vmatpush1.bf16.xpose.msra.mxu0 %v943
      %1831 = vmatprep.subr.bf16.mxu0 0
      %1832 = vmatpush1.bf16.xpose.msra.mxu0 %v946
      %1833 = vmatprep.subr.bf16.mxu0 0
      %1834 = vmatpush1.bf16.xpose.msra.mxu0 %v949
      %1835 = vmatprep.subr.bf16.mxu0 0
      %1836 = vmatpush1.bf16.xpose.msra.mxu0 %v952
      %1837 = vmatprep.subr.bf16.mxu0 0
      %1838 = vmatpush1.bf16.xpose.msra.mxu0 %v955
      %1839 = vmatprep.subr.bf16.mxu0 0
      %1840 = vmatpush1.bf16.xpose.msra.mxu0 %v958
      %1841 = vmatprep.subr.bf16.mxu0 0
      %1842 = vmatpush1.bf16.xpose.msra.mxu0 %v961
      %1843 = vmatprep.subr.bf16.mxu0 0
      %1844 = vmatpush1.bf16.xpose.msra.mxu0 %v964
      %1845 = vmatprep.subr.bf16.mxu0 0
      %1846 = vmatpush1.bf16.xpose.msra.mxu0 %v967
      %1847 = vmatprep.subr.bf16.mxu0 0
      %1848 = vmatpush1.bf16.xpose.msra.mxu0 %v970
      %1849 = vmatprep.subr.bf16.mxu0 0
      %1850 = vmatpush1.bf16.xpose.msra.mxu0 %v973
      %1851 = vmatprep.mubr.bf16.mxu0 0
      %1852 = vmatmul.mubr.bf16.gmra.mrb[0].mxu0 %v1817
      %v1853 = vpop.f32.mrb[0].mxu0
      %v1854 = vadd.f32 0.0, %v1853
      %v1855 = vpop.f32.mrb[0].mxu0
      %v1856 = vadd.f32 0.0, %v1855
      %v1857 = vpop.f32.mrb[0].mxu0
      %v1858 = vpop.f32.mrb[0].mxu0
      %1859 = vdwg.mxu0
      %1860 = vmatprep.subr.bf16.mxu0 0
      %1861 = vmatpush1.bf16.xpose.msra.mxu0 %v976
      %1862 = vmatprep.subr.bf16.mxu0 0
      %1863 = vmatpush1.bf16.xpose.msra.mxu0 %v979
      %1864 = vmatprep.subr.bf16.mxu0 0
      %1865 = vmatpush1.bf16.xpose.msra.mxu0 %v982
      %1866 = vmatprep.subr.bf16.mxu0 0
      %1867 = vmatpush1.bf16.xpose.msra.mxu0 %v985
      %1868 = vmatprep.subr.bf16.mxu0 0
      %1869 = vmatpush1.bf16.xpose.msra.mxu0 %v988
      %1870 = vmatprep.subr.bf16.mxu0 0
      %1871 = vmatpush1.bf16.xpose.msra.mxu0 %v991
      %1872 = vmatprep.subr.bf16.mxu0 0
      %1873 = vmatpush1.bf16.xpose.msra.mxu0 %v994
      %1874 = vmatprep.subr.bf16.mxu0 0
      %1875 = vmatpush1.bf16.xpose.msra.mxu0 %v997
      %1876 = vmatprep.subr.bf16.mxu0 0
      %1877 = vmatpush1.bf16.xpose.msra.mxu0 0
      %1878 = vmatprep.subr.bf16.mxu0 0
      %1879 = vmatpush1.bf16.xpose.msra.mxu0 0
      %1880 = vmatprep.subr.bf16.mxu0 0
      %1881 = vmatpush1.bf16.xpose.msra.mxu0 0
      %1882 = vmatprep.subr.bf16.mxu0 0
      %1883 = vmatpush1.bf16.xpose.msra.mxu0 0
      %1884 = vmatprep.subr.bf16.mxu0 0
      %1885 = vmatpush1.bf16.xpose.msra.mxu0 0
      %1886 = vmatprep.subr.bf16.mxu0 0
      %1887 = vmatpush1.bf16.xpose.msra.mxu0 0
      %1888 = vmatprep.subr.bf16.mxu0 0
      %1889 = vmatpush1.bf16.xpose.msra.mxu0 0
      %1890 = vmatprep.subr.bf16.mxu0 0
      %1891 = vmatpush1.bf16.xpose.msra.mxu0 0
      %1892 = vmatprep.mubr.bf16.mxu0 0
      %1893 = vmatmul.mubr.bf16.gmra.mrb[0].mxu0 %v1817
      %v1894 = vpop.f32.mrb[0].mxu0
      %v1895 = vadd.f32 0.0, %v1894
      %v1896 = vpop.f32.mrb[0].mxu0
      %v1897 = vpop.f32.mrb[0].mxu0
      %v1898 = vpop.f32.mrb[0].mxu0
      %1899 = vdwg.mxu0
      %1901 = vrot.lane.b32.xlu0 %v1166, 64
      %v1902 = vpop.permute.xlu0 %1901
      %v1904 = vsel %vm923, %v1902, 0.0
      %1905 = vadd.xlane.f32.xlu0 %v1904
      %v1906 = vpop.xlane.xlu0 %1905
      %v1907 = vmul.f32 %v1906, 0.0625
      %1909 = vrot.lane.b32.xlu0 %v1171, 64
      %v1910 = vpop.permute.xlu0 %1909
      %v1912 = vsel %vm923, %v1910, 0.0
      %1913 = vadd.xlane.f32.xlu0 %v1912
      %v1914 = vpop.xlane.xlu0 %1913
      %v1915 = vmul.f32 %v1914, 0.0625
      %v1916 = vsel %vm1179, %v1767, -inf
      %v1917 = vsel %vm1180, %v1769, -inf
      %v1918 = vsel %vm1181, %v1808, -inf
      %v1919 = vmax.f32 %v1916, %v1917
      %v1920 = vmax.f32 %v1919, %v1918
      %1921 = vmax.xlane.f32.xlu0 %v1920
      %v1922 = vpop.xlane.xlu0 %1921
      %v1923 = vsub.f32 %v1767, %v1907
      %v1924 = vsub.f32 %v1769, %v1907
      %v1925 = vsub.f32 %v1808, %v1907
      %v1926 = vsub.f32 %v1923, %v1922
      %v1927 = vsub.f32 %v1924, %v1922
      %v1928 = vsub.f32 %v1925, %v1922
      %v1929 = vmul.f32 %v1926, 1.442695
      %v1930 = vpow.pop %v1929
      %v1931 = vmul.f32 %v1927, 1.442695
      %v1932 = vpow.pop %v1931
      %v1933 = vmul.f32 %v1928, 1.442695
      %v1934 = vpow.pop %v1933
      %v1935 = vadd.f32 %v1930, 0.0001
      %v1936 = vadd.f32 %v1932, 0.0001
      %v1937 = vadd.f32 %v1934, 0.0001
      %v1938 = vmul.f32 %v1935, 0.061313935
      %v1939 = vmul.f32 %v1936, 0.061313935
      %v1940 = vmul.f32 %v1937, 0.061313935
      %v1941 = vsel %vm1179, %v1938, 0.0
      %v1942 = vsel %vm1180, %v1939, 0.0
      %v1943 = vsel %vm1181, %v1940, 0.0
      %v1944 = vsub.f32 %v1854, %v1915
      %v1945 = vsub.f32 %v1856, %v1915
      %v1946 = vsub.f32 %v1895, %v1915
      %v1947 = vadd.f32 %v1944, 0.0001
      %v1948 = vadd.f32 %v1945, 0.0001
      %v1949 = vadd.f32 %v1946, 0.0001
      %v1950 = vmul.f32 %v1947, 1.442695
      %v1951 = vpow.pop %v1950
      %v1952 = vmul.f32 %v1948, 1.442695
      %v1953 = vpow.pop %v1952
      %v1954 = vmul.f32 %v1949, 1.442695
      %v1955 = vpow.pop %v1954
      %v1956 = vmul.f32 %v1951, 0.061313935
      %v1957 = vmul.f32 %v1953, 0.061313935
      %v1958 = vmul.f32 %v1955, 0.061313935
      %v1959 = vsel %vm1179, %v1956, 0.0
      %v1960 = vsel %vm1180, %v1957, 0.0
      %v1961 = vsel %vm1181, %v1958, 0.0
      %v1962 = vpack.c.bf16 %v1959, %v1959
      %v1963 = vpack.c.bf16 %v1960, %v1960
      %v1964 = vpack.c.bf16 %v1961, %v1961
      %1965 = vxpose.xlu0.c.b16.start [1/8] %v1962, 128
      %1966 = vxpose.xlu0.c.b16.cont [2/8] 0, 128
      %1967 = vxpose.xlu0.c.b16.cont [3/8] 0, 128
      %1968 = vxpose.xlu0.c.b16.cont [4/8] 0, 128
      %1969 = vxpose.xlu0.c.b16.cont [5/8] 0, 128
      %1970 = vxpose.xlu0.c.b16.cont [6/8] 0, 128
      %1971 = vxpose.xlu0.c.b16.cont [7/8] 0, 128
      %1972 = vxpose.xlu0.c.b16.end [8/8] 0, 128
      %v1973 = vpop.trf.xlu0
      %v1974 = vpop.trf.xlu0
      %v1975 = vpop.trf.xlu0
      %v1976 = vpop.trf.xlu0
      %v1977 = vpop.trf.xlu0
      %v1978 = vpop.trf.xlu0
      %v1979 = vpop.trf.xlu0
      %v1980 = vpop.trf.xlu0
      %1981 = vxpose.xlu0.c.b16.start [1/8] %v1963, 128
      %1982 = vxpose.xlu0.c.b16.cont [2/8] 0, 128
      %1983 = vxpose.xlu0.c.b16.cont [3/8] 0, 128
      %1984 = vxpose.xlu0.c.b16.cont [4/8] 0, 128
      %1985 = vxpose.xlu0.c.b16.cont [5/8] 0, 128
      %1986 = vxpose.xlu0.c.b16.cont [6/8] 0, 128
      %1987 = vxpose.xlu0.c.b16.cont [7/8] 0, 128
      %1988 = vxpose.xlu0.c.b16.end [8/8] 0, 128
      %v1989 = vpop.trf.xlu0
      %v1990 = vpop.trf.xlu0
      %v1991 = vpop.trf.xlu0
      %v1992 = vpop.trf.xlu0
      %v1993 = vpop.trf.xlu0
      %v1994 = vpop.trf.xlu0
      %v1995 = vpop.trf.xlu0
      %v1996 = vpop.trf.xlu0
      %1997 = vxpose.xlu0.c.b16.start [1/8] %v1964, 128
      %1998 = vxpose.xlu0.c.b16.cont [2/8] 0, 128
      %1999 = vxpose.xlu0.c.b16.cont [3/8] 0, 128
      %2000 = vxpose.xlu0.c.b16.cont [4/8] 0, 128
      %2001 = vxpose.xlu0.c.b16.cont [5/8] 0, 128
      %2002 = vxpose.xlu0.c.b16.cont [6/8] 0, 128
      %2003 = vxpose.xlu0.c.b16.cont [7/8] 0, 128
      %2004 = vxpose.xlu0.c.b16.end [8/8] 0, 128
      %v2005 = vpop.trf.xlu0
      %v2006 = vpop.trf.xlu0
      %v2007 = vpop.trf.xlu0
      %v2008 = vpop.trf.xlu0
      %v2009 = vpop.trf.xlu0
      %v2010 = vpop.trf.xlu0
      %v2011 = vpop.trf.xlu0
      %v2012 = vpop.trf.xlu0
      %2014 = vrot.lane.b32.xlu0 %v1231, 64
      %v2015 = vpop.permute.xlu0 %2014
      %v2017 = vsel %vm1280, %v1973, 0
      %v2020 = vsel %vm1280, %v1974, 0
      %v2023 = vsel %vm1280, %v1975, 0
      %v2026 = vsel %vm1280, %v1976, 0
      %v2029 = vsel %vm1280, %v1977, 0
      %v2032 = vsel %vm1280, %v1978, 0
      %v2035 = vsel %vm1280, %v1979, 0
      %v2038 = vsel %vm1280, %v1980, 0
      %v2041 = vsel %vm1280, %v1989, 0
      %v2044 = vsel %vm1280, %v1990, 0
      %v2047 = vsel %vm1280, %v1991, 0
      %v2050 = vsel %vm1280, %v1992, 0
      %v2053 = vsel %vm1280, %v1993, 0
      %v2056 = vsel %vm1280, %v1994, 0
      %v2059 = vsel %vm1280, %v1995, 0
      %v2062 = vsel %vm1280, %v1996, 0
      %v2065 = vsel %vm1280, %v2005, 0
      %v2068 = vsel %vm1280, %v2006, 0
      %v2071 = vsel %vm1280, %v2007, 0
      %v2074 = vsel %vm1280, %v2008, 0
      %v2077 = vsel %vm1280, %v2009, 0
      %v2080 = vsel %vm1280, %v2010, 0
      %v2083 = vsel %vm1280, %v2011, 0
      %v2086 = vsel %vm1280, %v2012, 0
      %v2089 = vsel %vm1353, %v2015, 0
      %2091 = vmatprep.subr.bf16.mxu0 0
      %2092 = vmatpush1.bf16.msra.mxu0 %v2089
      %2093 = vmatprep.subr.bf16.mxu0 0
      %2094 = vmatpush1.bf16.msra.mxu0 0
      %2095 = vmatprep.subr.bf16.mxu0 0
      %2096 = vmatpush1.bf16.msra.mxu0 0
      %2097 = vmatprep.subr.bf16.mxu0 0
      %2098 = vmatpush1.bf16.msra.mxu0 0
      %2099 = vmatprep.subr.bf16.mxu0 0
      %2100 = vmatpush1.bf16.msra.mxu0 0
      %2101 = vmatprep.subr.bf16.mxu0 0
      %2102 = vmatpush1.bf16.msra.mxu0 0
      %2103 = vmatprep.subr.bf16.mxu0 0
      %2104 = vmatpush1.bf16.msra.mxu0 0
      %2105 = vmatprep.subr.bf16.mxu0 0
      %2106 = vmatpush1.bf16.msra.mxu0 0
      %2107 = vmatprep.subr.bf16.mxu0 0
      %2108 = vmatpush1.bf16.msra.mxu0 0
      %2109 = vmatprep.subr.bf16.mxu0 0
      %2110 = vmatpush1.bf16.msra.mxu0 0
      %2111 = vmatprep.subr.bf16.mxu0 0
      %2112 = vmatpush1.bf16.msra.mxu0 0
      %2113 = vmatprep.subr.bf16.mxu0 0
      %2114 = vmatpush1.bf16.msra.mxu0 0
      %2115 = vmatprep.subr.bf16.mxu0 0
      %2116 = vmatpush1.bf16.msra.mxu0 0
      %2117 = vmatprep.subr.bf16.mxu0 0
      %2118 = vmatpush1.bf16.msra.mxu0 0
      %2119 = vmatprep.subr.bf16.mxu0 0
      %2120 = vmatpush1.bf16.msra.mxu0 0
      %2121 = vmatprep.subr.bf16.mxu0 0
      %2122 = vmatpush1.bf16.msra.mxu0 0
      %2123 = vmatprep.mubr.bf16.mxu0 0
      %2124 = vmatmul.mubr.bf16.gmra.mrb[0].mxu0 %v2017
      %v2125 = vpop.f32.mrb[0].mxu0
      %v2126 = vadd.f32 0.0, %v2125
      %v2127 = vpop.f32.mrb[0].mxu0
      %v2128 = vpop.f32.mrb[0].mxu0
      %v2129 = vadd.f32 0.0, %v2128
      %v2130 = vpop.f32.mrb[0].mxu0
      %2131 = vmatprep.mubr.bf16.mxu0 0
      %2132 = vmatmul.mubr.bf16.gmra.mrb[0].mxu0 %v2020
      %v2133 = vpop.f32.mrb[0].mxu0
      %v2134 = vadd.f32 0.0, %v2133
      %v2135 = vpop.f32.mrb[0].mxu0
      %v2136 = vpop.f32.mrb[0].mxu0
      %v2137 = vadd.f32 0.0, %v2136
      %v2138 = vpop.f32.mrb[0].mxu0
      %2139 = vmatprep.mubr.bf16.mxu0 0
      %2140 = vmatmul.mubr.bf16.gmra.mrb[0].mxu0 %v2023
      %v2141 = vpop.f32.mrb[0].mxu0
      %v2142 = vadd.f32 0.0, %v2141
      %v2143 = vpop.f32.mrb[0].mxu0
      %v2144 = vpop.f32.mrb[0].mxu0
      %v2145 = vadd.f32 0.0, %v2144
      %v2146 = vpop.f32.mrb[0].mxu0
      %2147 = vmatprep.mubr.bf16.mxu0 0
      %2148 = vmatmul.mubr.bf16.gmra.mrb[0].mxu0 %v2026
      %v2149 = vpop.f32.mrb[0].mxu0
      %v2150 = vadd.f32 0.0, %v2149
      %v2151 = vpop.f32.mrb[0].mxu0
      %v2152 = vpop.f32.mrb[0].mxu0
      %v2153 = vadd.f32 0.0, %v2152
      %v2154 = vpop.f32.mrb[0].mxu0
      %2155 = vmatprep.mubr.bf16.mxu0 0
      %2156 = vmatmul.mubr.bf16.gmra.mrb[0].mxu0 %v2029
      %v2157 = vpop.f32.mrb[0].mxu0
      %v2158 = vadd.f32 0.0, %v2157
      %v2159 = vpop.f32.mrb[0].mxu0
      %v2160 = vpop.f32.mrb[0].mxu0
      %v2161 = vadd.f32 0.0, %v2160
      %v2162 = vpop.f32.mrb[0].mxu0
      %2163 = vmatprep.mubr.bf16.mxu0 0
      %2164 = vmatmul.mubr.bf16.gmra.mrb[0].mxu0 %v2032
      %v2165 = vpop.f32.mrb[0].mxu0
      %v2166 = vadd.f32 0.0, %v2165
      %v2167 = vpop.f32.mrb[0].mxu0
      %v2168 = vpop.f32.mrb[0].mxu0
      %v2169 = vadd.f32 0.0, %v2168
      %v2170 = vpop.f32.mrb[0].mxu0
      %2171 = vmatprep.mubr.bf16.mxu0 0
      %2172 = vmatmul.mubr.bf16.gmra.mrb[0].mxu0 %v2035
      %v2173 = vpop.f32.mrb[0].mxu0
      %v2174 = vadd.f32 0.0, %v2173
      %v2175 = vpop.f32.mrb[0].mxu0
      %v2176 = vpop.f32.mrb[0].mxu0
      %v2177 = vadd.f32 0.0, %v2176
      %v2178 = vpop.f32.mrb[0].mxu0
      %2179 = vmatprep.mubr.bf16.mxu0 0
      %2180 = vmatmul.mubr.bf16.gmra.mrb[0].mxu0 %v2038
      %v2181 = vpop.f32.mrb[0].mxu0
      %v2182 = vadd.f32 0.0, %v2181
      %v2183 = vpop.f32.mrb[0].mxu0
      %v2184 = vpop.f32.mrb[0].mxu0
      %v2185 = vadd.f32 0.0, %v2184
      %v2186 = vpop.f32.mrb[0].mxu0
      %2187 = vmatprep.mubr.bf16.mxu0 0
      %2188 = vmatmul.mubr.bf16.gmra.mrb[0].mxu0 %v2041
      %v2189 = vpop.f32.mrb[0].mxu0
      %v2190 = vadd.f32 0.0, %v2189
      %v2191 = vpop.f32.mrb[0].mxu0
      %v2192 = vpop.f32.mrb[0].mxu0
      %v2193 = vadd.f32 0.0, %v2192
      %v2194 = vpop.f32.mrb[0].mxu0
      %2195 = vmatprep.mubr.bf16.mxu0 0
      %2196 = vmatmul.mubr.bf16.gmra.mrb[0].mxu0 %v2044
      %v2197 = vpop.f32.mrb[0].mxu0
      %v2198 = vadd.f32 0.0, %v2197
      %v2199 = vpop.f32.mrb[0].mxu0
      %v2200 = vpop.f32.mrb[0].mxu0
      %v2201 = vadd.f32 0.0, %v2200
      %v2202 = vpop.f32.mrb[0].mxu0
      %2203 = vmatprep.mubr.bf16.mxu0 0
      %2204 = vmatmul.mubr.bf16.gmra.mrb[0].mxu0 %v2047
      %v2205 = vpop.f32.mrb[0].mxu0
      %v2206 = vadd.f32 0.0, %v2205
      %v2207 = vpop.f32.mrb[0].mxu0
      %v2208 = vpop.f32.mrb[0].mxu0
      %v2209 = vadd.f32 0.0, %v2208
      %v2210 = vpop.f32.mrb[0].mxu0
      %2211 = vmatprep.mubr.bf16.mxu0 0
      %2212 = vmatmul.mubr.bf16.gmra.mrb[0].mxu0 %v2050
      %v2213 = vpop.f32.mrb[0].mxu0
      %v2214 = vadd.f32 0.0, %v2213
      %v2215 = vpop.f32.mrb[0].mxu0
      %v2216 = vpop.f32.mrb[0].mxu0
      %v2217 = vadd.f32 0.0, %v2216
      %v2218 = vpop.f32.mrb[0].mxu0
      %2219 = vmatprep.mubr.bf16.mxu0 0
      %2220 = vmatmul.mubr.bf16.gmra.mrb[0].mxu0 %v2053
      %v2221 = vpop.f32.mrb[0].mxu0
      %v2222 = vadd.f32 0.0, %v2221
      %v2223 = vpop.f32.mrb[0].mxu0
      %v2224 = vpop.f32.mrb[0].mxu0
      %v2225 = vadd.f32 0.0, %v2224
      %v2226 = vpop.f32.mrb[0].mxu0
      %2227 = vmatprep.mubr.bf16.mxu0 0
      %2228 = vmatmul.mubr.bf16.gmra.mrb[0].mxu0 %v2056
      %v2229 = vpop.f32.mrb[0].mxu0
      %v2230 = vadd.f32 0.0, %v2229
      %v2231 = vpop.f32.mrb[0].mxu0
      %v2232 = vpop.f32.mrb[0].mxu0
      %v2233 = vadd.f32 0.0, %v2232
      %v2234 = vpop.f32.mrb[0].mxu0
      %2235 = vmatprep.mubr.bf16.mxu0 0
      %2236 = vmatmul.mubr.bf16.gmra.mrb[0].mxu0 %v2059
      %v2237 = vpop.f32.mrb[0].mxu0
      %v2238 = vadd.f32 0.0, %v2237
      %v2239 = vpop.f32.mrb[0].mxu0
      %v2240 = vpop.f32.mrb[0].mxu0
      %v2241 = vadd.f32 0.0, %v2240
      %v2242 = vpop.f32.mrb[0].mxu0
      %2243 = vmatprep.mubr.bf16.mxu0 0
      %2244 = vmatmul.mubr.bf16.gmra.mrb[0].mxu0 %v2062
      %v2245 = vpop.f32.mrb[0].mxu0
      %v2246 = vadd.f32 0.0, %v2245
      %v2247 = vpop.f32.mrb[0].mxu0
      %v2248 = vpop.f32.mrb[0].mxu0
      %v2249 = vadd.f32 0.0, %v2248
      %v2250 = vpop.f32.mrb[0].mxu0
      %2251 = vmatprep.mubr.bf16.mxu0 0
      %2252 = vmatmul.mubr.bf16.gmra.mrb[0].mxu0 %v2065
      %v2253 = vpop.f32.mrb[0].mxu0
      %v2254 = vadd.f32 0.0, %v2253
      %v2255 = vpop.f32.mrb[0].mxu0
      %v2256 = vpop.f32.mrb[0].mxu0
      %v2257 = vadd.f32 0.0, %v2256
      %v2258 = vpop.f32.mrb[0].mxu0
      %2259 = vmatprep.mubr.bf16.mxu0 0
      %2260 = vmatmul.mubr.bf16.gmra.mrb[0].mxu0 %v2068
      %v2261 = vpop.f32.mrb[0].mxu0
      %v2262 = vadd.f32 0.0, %v2261
      %v2263 = vpop.f32.mrb[0].mxu0
      %v2264 = vpop.f32.mrb[0].mxu0
      %v2265 = vadd.f32 0.0, %v2264
      %v2266 = vpop.f32.mrb[0].mxu0
      %2267 = vmatprep.mubr.bf16.mxu0 0
      %2268 = vmatmul.mubr.bf16.gmra.mrb[0].mxu0 %v2071
      %v2269 = vpop.f32.mrb[0].mxu0
      %v2270 = vadd.f32 0.0, %v2269
      %v2271 = vpop.f32.mrb[0].mxu0
      %v2272 = vpop.f32.mrb[0].mxu0
      %v2273 = vadd.f32 0.0, %v2272
      %v2274 = vpop.f32.mrb[0].mxu0
      %2275 = vmatprep.mubr.bf16.mxu0 0
      %2276 = vmatmul.mubr.bf16.gmra.mrb[0].mxu0 %v2074
      %v2277 = vpop.f32.mrb[0].mxu0
      %v2278 = vadd.f32 0.0, %v2277
      %v2279 = vpop.f32.mrb[0].mxu0
      %v2280 = vpop.f32.mrb[0].mxu0
      %v2281 = vadd.f32 0.0, %v2280
      %v2282 = vpop.f32.mrb[0].mxu0
      %2283 = vmatprep.mubr.bf16.mxu0 0
      %2284 = vmatmul.mubr.bf16.gmra.mrb[0].mxu0 %v2077
      %v2285 = vpop.f32.mrb[0].mxu0
      %v2286 = vadd.f32 0.0, %v2285
      %v2287 = vpop.f32.mrb[0].mxu0
      %v2288 = vpop.f32.mrb[0].mxu0
      %v2289 = vadd.f32 0.0, %v2288
      %v2290 = vpop.f32.mrb[0].mxu0
      %2291 = vmatprep.mubr.bf16.mxu0 0
      %2292 = vmatmul.mubr.bf16.gmra.mrb[0].mxu0 %v2080
      %v2293 = vpop.f32.mrb[0].mxu0
      %v2294 = vadd.f32 0.0, %v2293
      %v2295 = vpop.f32.mrb[0].mxu0
      %v2296 = vpop.f32.mrb[0].mxu0
      %v2297 = vadd.f32 0.0, %v2296
      %v2298 = vpop.f32.mrb[0].mxu0
      %2299 = vmatprep.mubr.bf16.mxu0 0
      %2300 = vmatmul.mubr.bf16.gmra.mrb[0].mxu0 %v2083
      %v2301 = vpop.f32.mrb[0].mxu0
      %v2302 = vadd.f32 0.0, %v2301
      %v2303 = vpop.f32.mrb[0].mxu0
      %v2304 = vpop.f32.mrb[0].mxu0
      %v2305 = vadd.f32 0.0, %v2304
      %v2306 = vpop.f32.mrb[0].mxu0
      %2307 = vmatprep.mubr.bf16.mxu0 0
      %2308 = vmatmul.mubr.bf16.gmra.mrb[0].mxu0 %v2086
      %v2309 = vpop.f32.mrb[0].mxu0
      %v2310 = vadd.f32 0.0, %v2309
      %v2311 = vpop.f32.mrb[0].mxu0
      %v2312 = vpop.f32.mrb[0].mxu0
      %v2313 = vadd.f32 0.0, %v2312
      %v2314 = vpop.f32.mrb[0].mxu0
      %2315 = vdwg.mxu0
      %v2316 = vrot.slane %v1959, 4
      %v2317 = vadd.f32 %v1959, %v2316
      %v2318 = vrot.slane %v2317, 2
      %v2319 = vadd.f32 %v2317, %v2318
      %v2320 = vrot.slane %v2319, 1
      %v2321 = vadd.f32 %v2319, %v2320
      %v2322 = vrot.slane %v1960, 4
      %v2323 = vadd.f32 %v1960, %v2322
      %v2324 = vrot.slane %v2323, 2
      %v2325 = vadd.f32 %v2323, %v2324
      %v2326 = vrot.slane %v2325, 1
      %v2327 = vadd.f32 %v2325, %v2326
      %v2328 = vrot.slane %v1961, 4
      %v2329 = vadd.f32 %v1961, %v2328
      %v2330 = vrot.slane %v2329, 2
      %v2331 = vadd.f32 %v2329, %v2330
      %v2332 = vrot.slane %v2331, 1
      %v2333 = vadd.f32 %v2331, %v2332
      %v2334 = vmul.f32 %v1941, %v2321
      %v2335 = vmul.f32 %v1942, %v2327
      %v2336 = vmul.f32 %v1943, %v2333
      %v2337 = vadd.f32 %v2334, %v2335
      %v2338 = vadd.f32 %v2337, %v2336
      %2339 = vadd.xlane.f32.xlu0 %v2338
      %v2340 = vpop.xlane.xlu0 %2339
      %v2341 = vadd.f32 %v2340, 1e-08
      %v2342 = vrcp.pop %v2341
      %v2343 = vpack.c.bf16 %v1941, %v1941
      %v2344 = vpack.c.bf16 %v1942, %v1942
      %v2345 = vpack.c.bf16 %v1943, %v1943
      %v2346 = vpack.c.bf16 %v2129, %v2126
      %v2347 = vpack.c.bf16 %v2137, %v2134
      %v2348 = vpack.c.bf16 %v2145, %v2142
      %v2349 = vpack.c.bf16 %v2153, %v2150
      %v2350 = vpack.c.bf16 %v2161, %v2158
      %v2351 = vpack.c.bf16 %v2169, %v2166
      %v2352 = vpack.c.bf16 %v2177, %v2174
      %v2353 = vpack.c.bf16 %v2185, %v2182
      %v2354 = vpack.c.bf16 %v2193, %v2190
      %v2355 = vpack.c.bf16 %v2201, %v2198
      %v2356 = vpack.c.bf16 %v2209, %v2206
      %v2357 = vpack.c.bf16 %v2217, %v2214
      %v2358 = vpack.c.bf16 %v2225, %v2222
      %v2359 = vpack.c.bf16 %v2233, %v2230
      %v2360 = vpack.c.bf16 %v2241, %v2238
      %v2361 = vpack.c.bf16 %v2249, %v2246
      %v2362 = vpack.c.bf16 %v2257, %v2254
      %v2363 = vpack.c.bf16 %v2265, %v2262
      %v2364 = vpack.c.bf16 %v2273, %v2270
      %v2365 = vpack.c.bf16 %v2281, %v2278
      %v2366 = vpack.c.bf16 %v2289, %v2286
      %v2367 = vpack.c.bf16 %v2297, %v2294
      %v2368 = vpack.c.bf16 %v2305, %v2302
      %v2369 = vpack.c.bf16 %v2313, %v2310
      %2370 = vmatprep.subr.bf16.mxu0 0
      %2371 = vmatpush1.bf16.msra.mxu0 %v2346
      %2372 = vmatprep.subr.bf16.mxu0 0
      %2373 = vmatpush1.bf16.msra.mxu0 %v2347
      %2374 = vmatprep.subr.bf16.mxu0 0
      %2375 = vmatpush1.bf16.msra.mxu0 %v2348
      %2376 = vmatprep.subr.bf16.mxu0 0
      %2377 = vmatpush1.bf16.msra.mxu0 %v2349
      %2378 = vmatprep.subr.bf16.mxu0 0
      %2379 = vmatpush1.bf16.msra.mxu0 %v2350
      %2380 = vmatprep.subr.bf16.mxu0 0
      %2381 = vmatpush1.bf16.msra.mxu0 %v2351
      %2382 = vmatprep.subr.bf16.mxu0 0
      %2383 = vmatpush1.bf16.msra.mxu0 %v2352
      %2384 = vmatprep.subr.bf16.mxu0 0
      %2385 = vmatpush1.bf16.msra.mxu0 %v2353
      %2386 = vmatprep.subr.bf16.mxu0 0
      %2387 = vmatpush1.bf16.msra.mxu0 %v2354
      %2388 = vmatprep.subr.bf16.mxu0 0
      %2389 = vmatpush1.bf16.msra.mxu0 %v2355
      %2390 = vmatprep.subr.bf16.mxu0 0
      %2391 = vmatpush1.bf16.msra.mxu0 %v2356
      %2392 = vmatprep.subr.bf16.mxu0 0
      %2393 = vmatpush1.bf16.msra.mxu0 %v2357
      %2394 = vmatprep.subr.bf16.mxu0 0
      %2395 = vmatpush1.bf16.msra.mxu0 %v2358
      %2396 = vmatprep.subr.bf16.mxu0 0
      %2397 = vmatpush1.bf16.msra.mxu0 %v2359
      %2398 = vmatprep.subr.bf16.mxu0 0
      %2399 = vmatpush1.bf16.msra.mxu0 %v2360
      %2400 = vmatprep.subr.bf16.mxu0 0
      %2401 = vmatpush1.bf16.msra.mxu0 %v2361
      %2402 = vmatprep.mubr.bf16.mxu0 %v2344
      %2403 = vmatmul.mubr.bf16.gmra.mrb[0].mxu0 %v2343
      %v2404 = vpop.f32.mrb[0].mxu0
      %v2405 = vadd.f32 0.0, %v2404
      %v2406 = vpop.f32.mrb[0].mxu0
      %v2407 = vpop.f32.mrb[0].mxu0
      %v2408 = vpop.f32.mrb[0].mxu0
      %2409 = vdwg.mxu0
      %2410 = vmatprep.subr.bf16.mxu0 0
      %2411 = vmatpush1.bf16.msra.mxu0 %v2362
      %2412 = vmatprep.subr.bf16.mxu0 0
      %2413 = vmatpush1.bf16.msra.mxu0 %v2363
      %2414 = vmatprep.subr.bf16.mxu0 0
      %2415 = vmatpush1.bf16.msra.mxu0 %v2364
      %2416 = vmatprep.subr.bf16.mxu0 0
      %2417 = vmatpush1.bf16.msra.mxu0 %v2365
      %2418 = vmatprep.subr.bf16.mxu0 0
      %2419 = vmatpush1.bf16.msra.mxu0 %v2366
      %2420 = vmatprep.subr.bf16.mxu0 0
      %2421 = vmatpush1.bf16.msra.mxu0 %v2367
      %2422 = vmatprep.subr.bf16.mxu0 0
      %2423 = vmatpush1.bf16.msra.mxu0 %v2368
      %2424 = vmatprep.subr.bf16.mxu0 0
      %2425 = vmatpush1.bf16.msra.mxu0 %v2369
      %2426 = vmatprep.subr.bf16.mxu0 0
      %2427 = vmatpush1.bf16.msra.mxu0 0
      %2428 = vmatprep.subr.bf16.mxu0 0
      %2429 = vmatpush1.bf16.msra.mxu0 0
      %2430 = vmatprep.subr.bf16.mxu0 0
      %2431 = vmatpush1.bf16.msra.mxu0 0
      %2432 = vmatprep.subr.bf16.mxu0 0
      %2433 = vmatpush1.bf16.msra.mxu0 0
      %2434 = vmatprep.subr.bf16.mxu0 0
      %2435 = vmatpush1.bf16.msra.mxu0 0
      %2436 = vmatprep.subr.bf16.mxu0 0
      %2437 = vmatpush1.bf16.msra.mxu0 0
      %2438 = vmatprep.subr.bf16.mxu0 0
      %2439 = vmatpush1.bf16.msra.mxu0 0
      %2440 = vmatprep.subr.bf16.mxu0 0
      %2441 = vmatpush1.bf16.msra.mxu0 0
      %2442 = vmatprep.mubr.bf16.mxu0 0
      %2443 = vmatmul.mubr.bf16.gmra.mrb[0].mxu0 %v2345
      %v2444 = vpop.f32.mrb[0].mxu0
      %v2445 = vadd.f32 %v2405, %v2444
      %v2446 = vpop.f32.mrb[0].mxu0
      %v2447 = vpop.f32.mrb[0].mxu0
      %v2448 = vpop.f32.mrb[0].mxu0
      %2449 = vdwg.mxu0
      %v2450 = vmul.f32 %v2445, %v2342
      %v2451 = vpack.c.bf16 %v2450, %v2450
      %v2452 = vld [vmem:[%s6 + $0x20] sm:$0xf]
      %v2453 = vld [vmem:[%s6 + $0x24] sm:$0xf]
      %v2454 = vld [vmem:[%s6 + $0x28] sm:$0xf]
      %v2455 = vld [vmem:[%s6 + $0x2c] sm:$0xf]
      %v2456 = vld [vmem:[%s6 + $0x30] sm:$0xf]
      %v2457 = vld [vmem:[%s6 + $0x34] sm:$0xf]
      %v2458 = vld [vmem:[%s6 + $0x38] sm:$0xf]
      %v2459 = vld [vmem:[%s6 + $0x3c] sm:$0xf]
      %v2468 = vunpack.c.l.b16 %v2452
      %v2469 = vunpack.c.l.b16 %v2453
      %v2470 = vunpack.c.l.b16 %v2454
      %v2471 = vunpack.c.l.b16 %v2455
      %v2472 = vunpack.c.l.b16 %v2456
      %v2473 = vunpack.c.l.b16 %v2457
      %v2474 = vunpack.c.l.b16 %v2458
      %v2475 = vunpack.c.l.b16 %v2459
      %v2476 = vpack.c.b16 %v2469, %v2468
      %v2477 = vpack.c.b16 %v2471, %v2470
      %v2478 = vpack.c.b16 %v2473, %v2472
      %v2479 = vpack.c.b16 %v2475, %v2474
      %v2485 = vsel %vm923, %v2451, 0
      %2487 = vmatprep.subr.bf16.mxu0 0
      %2488 = vmatpush1.bf16.msra.mxu0 %v2476
      %2489 = vmatprep.subr.bf16.mxu0 0
      %2490 = vmatpush1.bf16.msra.mxu0 %v2477
      %2491 = vmatprep.subr.bf16.mxu0 0
      %2492 = vmatpush1.bf16.msra.mxu0 %v2478
      %2493 = vmatprep.subr.bf16.mxu0 0
      %2494 = vmatpush1.bf16.msra.mxu0 %v2479
      %2495 = vmatprep.subr.bf16.mxu0 0
      %2496 = vmatpush1.bf16.msra.mxu0 0
      %2497 = vmatprep.subr.bf16.mxu0 0
      %2498 = vmatpush1.bf16.msra.mxu0 0
      %2499 = vmatprep.subr.bf16.mxu0 0
      %2500 = vmatpush1.bf16.msra.mxu0 0
      %2501 = vmatprep.subr.bf16.mxu0 0
      %2502 = vmatpush1.bf16.msra.mxu0 0
      %2503 = vmatprep.subr.bf16.mxu0 0
      %2504 = vmatpush1.bf16.msra.mxu0 0
      %2505 = vmatprep.subr.bf16.mxu0 0
      %2506 = vmatpush1.bf16.msra.mxu0 0
      %2507 = vmatprep.subr.bf16.mxu0 0
      %2508 = vmatpush1.bf16.msra.mxu0 0
      %2509 = vmatprep.subr.bf16.mxu0 0
      %2510 = vmatpush1.bf16.msra.mxu0 0
      %2511 = vmatprep.subr.bf16.mxu0 0
      %2512 = vmatpush1.bf16.msra.mxu0 0
      %2513 = vmatprep.subr.bf16.mxu0 0
      %2514 = vmatpush1.bf16.msra.mxu0 0
      %2515 = vmatprep.subr.bf16.mxu0 0
      %2516 = vmatpush1.bf16.msra.mxu0 0
      %2517 = vmatprep.subr.bf16.mxu0 0
      %2518 = vmatpush1.bf16.msra.mxu0 0
      %2519 = vmatprep.mubr.bf16.mxu0 0
      %2520 = vmatmul.mubr.bf16.gmra.mrb[0].mxu0 %v2485
      %v2521 = vpop.f32.mrb[0].mxu0
      %v2522 = vadd.f32 0.0, %v2521
      %v2523 = vpop.f32.mrb[0].mxu0
      %v2524 = vpop.f32.mrb[0].mxu0
      %v2525 = vpop.f32.mrb[0].mxu0
      %2526 = vdwg.mxu0
      %v2535 = vunpack.c.l.b16 %v1718
      %v2536 = vunpack.c.l.b16 %v1719
      %v2537 = vunpack.c.l.b16 %v1720
      %v2538 = vunpack.c.l.b16 %v1721
      %v2539 = vunpack.c.l.b16 %v1722
      %v2540 = vunpack.c.l.b16 %v1723
      %v2541 = vunpack.c.l.b16 %v1724
      %v2542 = vunpack.c.l.b16 %v1725
      %v2543 = vpack.c.b16 %v2536, %v2535
      %v2544 = vpack.c.b16 %v2538, %v2537
      %v2545 = vpack.c.b16 %v2540, %v2539
      %v2546 = vpack.c.b16 %v2542, %v2541
      %v2552 = vsel %vm923, %v1717, 0
      %2554 = vmatprep.subr.bf16.mxu0 0
      %2555 = vmatpush1.bf16.msra.mxu0 %v2543
      %2556 = vmatprep.subr.bf16.mxu0 0
      %2557 = vmatpush1.bf16.msra.mxu0 %v2544
      %2558 = vmatprep.subr.bf16.mxu0 0
      %2559 = vmatpush1.bf16.msra.mxu0 %v2545
      %2560 = vmatprep.subr.bf16.mxu0 0
      %2561 = vmatpush1.bf16.msra.mxu0 %v2546
      %2562 = vmatprep.subr.bf16.mxu0 0
      %2563 = vmatpush1.bf16.msra.mxu0 0
      %2564 = vmatprep.subr.bf16.mxu0 0
      %2565 = vmatpush1.bf16.msra.mxu0 0
      %2566 = vmatprep.subr.bf16.mxu0 0
      %2567 = vmatpush1.bf16.msra.mxu0 0
      %2568 = vmatprep.subr.bf16.mxu0 0
      %2569 = vmatpush1.bf16.msra.mxu0 0
      %2570 = vmatprep.subr.bf16.mxu0 0
      %2571 = vmatpush1.bf16.msra.mxu0 0
      %2572 = vmatprep.subr.bf16.mxu0 0
      %2573 = vmatpush1.bf16.msra.mxu0 0
      %2574 = vmatprep.subr.bf16.mxu0 0
      %2575 = vmatpush1.bf16.msra.mxu0 0
      %2576 = vmatprep.subr.bf16.mxu0 0
      %2577 = vmatpush1.bf16.msra.mxu0 0
      %2578 = vmatprep.subr.bf16.mxu0 0
      %2579 = vmatpush1.bf16.msra.mxu0 0
      %2580 = vmatprep.subr.bf16.mxu0 0
      %2581 = vmatpush1.bf16.msra.mxu0 0
      %2582 = vmatprep.subr.bf16.mxu0 0
      %2583 = vmatpush1.bf16.msra.mxu0 0
      %2584 = vmatprep.subr.bf16.mxu0 0
      %2585 = vmatpush1.bf16.msra.mxu0 0
      %2586 = vmatprep.mubr.bf16.mxu0 0
      %2587 = vmatmul.mubr.bf16.gmra.mrb[0].mxu0 %v2552
      %v2588 = vpop.f32.mrb[0].mxu0
      %v2589 = vadd.f32 %v2522, %v2588
      %v2590 = vpop.f32.mrb[0].mxu0
      %v2591 = vpop.f32.mrb[0].mxu0
      %v2592 = vpop.f32.mrb[0].mxu0
      %2593 = vdwg.mxu0
      %v2594 = vadd.f32 %v572, %v2589
      %v2595 = vld [vmem:[%s7] sm:$0x1]
      %v2597 = vlaneseq
      %v2598 = vshrl.u32 %v2597, 7
      %v2599 = vsub.s32 0, %v2598
      %v2600 = vrot.slane %v2595, %v2599
      %v2602 = vadd.f32 %v2594, %v2600
      %v2603 = vsel %vm573, %v2602, 0.0
      %2604 = vadd.xlane.f32.xlu0 %v2603
      %v2605 = vpop.xlane.xlu0 %2604
      %v2606 = vmul.f32 %v2605, %v577
      %v2607 = vsub.f32 %v2602, %v2606
      %v2608 = vmul.f32 %v2607, %v2607
      %v2609 = vsel %vm573, %v2608, 0.0
      %2610 = vadd.xlane.f32.xlu0 %v2609
      %v2611 = vpop.xlane.xlu0 %2610
      %v2612 = vmul.f32 %v2611, %v577
      %v2613 = vadd.f32 %v2612, 1e-05
      %v2614 = vrsqrt.pop %v2613
      %v2615 = vmul.f32 %v2607, %v2614
      %v2616 = vld [vmem:[%s8] sm:$0x1]
      %v2618 = vlaneseq
      %v2619 = vshrl.u32 %v2618, 7
      %v2620 = vsub.s32 0, %v2619
      %v2621 = vrot.slane %v2616, %v2620
      %v2623 = vmul.f32 %v2615, %v2621
      %v2624 = vld [vmem:[%s9] sm:$0x1]
      %v2626 = vlaneseq
      %v2627 = vshrl.u32 %v2626, 7
      %v2628 = vsub.s32 0, %v2627
      %v2629 = vrot.slane %v2624, %v2628
      %v2631 = vadd.f32 %v2623, %v2629
      %v2632 = vpack.c.bf16 %v2631, %v2631
      %v2633 = vld [vmem:[%s10] sm:$0xf]
      %v2634 = vld [vmem:[%s10 + $0x4] sm:$0xf]
      %v2635 = vld [vmem:[%s10 + $0x8] sm:$0xf]
      %v2636 = vld [vmem:[%s10 + $0xc] sm:$0xf]
      %v2637 = vld [vmem:[%s11] sm:$0x1]
      %v2639 = vlaneseq
      %v2640 = vshrl.u32 %v2639, 7
      %v2641 = vsub.s32 0, %v2640
      %v2642 = vrot.slane %v2637, %v2641
      %v2648 = vunpack.c.l.b16 %v2633
      %v2649 = vunpack.c.l.b16 %v2634
      %v2650 = vunpack.c.l.b16 %v2635
      %v2651 = vunpack.c.l.b16 %v2636
      %v2652 = vpack.c.b16 %v2649, %v2648
      %v2653 = vpack.c.b16 %v2651, %v2650
      %v2657 = vsel %vm573, %v2632, 0
      %2659 = vmatprep.subr.bf16.mxu0 0
      %2660 = vmatpush1.bf16.msra.mxu0 %v2652
      %2661 = vmatprep.subr.bf16.mxu0 0
      %2662 = vmatpush1.bf16.msra.mxu0 %v2653
      %2663 = vmatprep.subr.bf16.mxu0 0
      %2664 = vmatpush1.bf16.msra.mxu0 0
      %2665 = vmatprep.subr.bf16.mxu0 0
      %2666 = vmatpush1.bf16.msra.mxu0 0
      %2667 = vmatprep.subr.bf16.mxu0 0
      %2668 = vmatpush1.bf16.msra.mxu0 0
      %2669 = vmatprep.subr.bf16.mxu0 0
      %2670 = vmatpush1.bf16.msra.mxu0 0
      %2671 = vmatprep.subr.bf16.mxu0 0
      %2672 = vmatpush1.bf16.msra.mxu0 0
      %2673 = vmatprep.subr.bf16.mxu0 0
      %2674 = vmatpush1.bf16.msra.mxu0 0
      %2675 = vmatprep.subr.bf16.mxu0 0
      %2676 = vmatpush1.bf16.msra.mxu0 0
      %2677 = vmatprep.subr.bf16.mxu0 0
      %2678 = vmatpush1.bf16.msra.mxu0 0
      %2679 = vmatprep.subr.bf16.mxu0 0
      %2680 = vmatpush1.bf16.msra.mxu0 0
      %2681 = vmatprep.subr.bf16.mxu0 0
      %2682 = vmatpush1.bf16.msra.mxu0 0
      %2683 = vmatprep.subr.bf16.mxu0 0
      %2684 = vmatpush1.bf16.msra.mxu0 0
      %2685 = vmatprep.subr.bf16.mxu0 0
      %2686 = vmatpush1.bf16.msra.mxu0 0
      %2687 = vmatprep.subr.bf16.mxu0 0
      %2688 = vmatpush1.bf16.msra.mxu0 0
      %2689 = vmatprep.subr.bf16.mxu0 0
      %2690 = vmatpush1.bf16.msra.mxu0 0
      %2691 = vmatprep.mubr.bf16.mxu0 0
      %2692 = vmatmul.mubr.bf16.gmra.mrb[0].mxu0 %v2657
      %v2693 = vpop.f32.mrb[0].mxu0
      %v2694 = vadd.f32 %v2642, %v2693
      %v2695 = vpop.f32.mrb[0].mxu0
      %v2696 = vpop.f32.mrb[0].mxu0
      %v2697 = vpop.f32.mrb[0].mxu0
      %2698 = vdwg.mxu0
      %v2699 = vld [vmem:[%s12] sm:$0xf]
      %v2700 = vld [vmem:[%s12 + $0x4] sm:$0xf]
      %v2701 = vld [vmem:[%s12 + $0x8] sm:$0xf]
      %v2702 = vld [vmem:[%s12 + $0xc] sm:$0xf]
      %v2703 = vld [vmem:[%s13] sm:$0x1]
      %v2705 = vlaneseq
      %v2706 = vshrl.u32 %v2705, 7
      %v2707 = vsub.s32 0, %v2706
      %v2708 = vrot.slane %v2703, %v2707
      %v2714 = vunpack.c.l.b16 %v2699
      %v2715 = vunpack.c.l.b16 %v2700
      %v2716 = vunpack.c.l.b16 %v2701
      %v2717 = vunpack.c.l.b16 %v2702
      %v2718 = vpack.c.b16 %v2715, %v2714
      %v2719 = vpack.c.b16 %v2717, %v2716
      %2722 = vmatprep.subr.bf16.mxu0 0
      %2723 = vmatpush1.bf16.msra.mxu0 %v2718
      %2724 = vmatprep.subr.bf16.mxu0 0
      %2725 = vmatpush1.bf16.msra.mxu0 %v2719
      %2726 = vmatprep.subr.bf16.mxu0 0
      %2727 = vmatpush1.bf16.msra.mxu0 0
      %2728 = vmatprep.subr.bf16.mxu0 0
      %2729 = vmatpush1.bf16.msra.mxu0 0
      %2730 = vmatprep.subr.bf16.mxu0 0
      %2731 = vmatpush1.bf16.msra.mxu0 0
      %2732 = vmatprep.subr.bf16.mxu0 0
      %2733 = vmatpush1.bf16.msra.mxu0 0
      %2734 = vmatprep.subr.bf16.mxu0 0
      %2735 = vmatpush1.bf16.msra.mxu0 0
      %2736 = vmatprep.subr.bf16.mxu0 0
      %2737 = vmatpush1.bf16.msra.mxu0 0
      %2738 = vmatprep.subr.bf16.mxu0 0
      %2739 = vmatpush1.bf16.msra.mxu0 0
      %2740 = vmatprep.subr.bf16.mxu0 0
      %2741 = vmatpush1.bf16.msra.mxu0 0
      %2742 = vmatprep.subr.bf16.mxu0 0
      %2743 = vmatpush1.bf16.msra.mxu0 0
      %2744 = vmatprep.subr.bf16.mxu0 0
      %2745 = vmatpush1.bf16.msra.mxu0 0
      %2746 = vmatprep.subr.bf16.mxu0 0
      %2747 = vmatpush1.bf16.msra.mxu0 0
      %2748 = vmatprep.subr.bf16.mxu0 0
      %2749 = vmatpush1.bf16.msra.mxu0 0
      %2750 = vmatprep.subr.bf16.mxu0 0
      %2751 = vmatpush1.bf16.msra.mxu0 0
      %2752 = vmatprep.subr.bf16.mxu0 0
      %2753 = vmatpush1.bf16.msra.mxu0 0
      %2754 = vmatprep.mubr.bf16.mxu0 0
      %2755 = vmatmul.mubr.bf16.gmra.mrb[0].mxu0 %v2657
      %v2756 = vpop.f32.mrb[0].mxu0
      %v2757 = vadd.f32 %v2708, %v2756
      %v2758 = vpop.f32.mrb[0].mxu0
      %v2759 = vpop.f32.mrb[0].mxu0
      %v2760 = vpop.f32.mrb[0].mxu0
      %2761 = vdwg.mxu0
      %v2762 = vxor.u32 %v2757, 2147483648
      %v2763 = vmul.f32 %v2762, 1.442695
      %v2764 = vpow.pop %v2763
      %v2765 = vadd.f32 %v2764, 1.0
      %v2766 = vrcp.pop %v2765
      %v2767 = vmul.f32 1.0, %v2766
      %v2768 = vmul.f32 %v2694, %v2767
      %v2769 = vld [vmem:[%s14 + $0x8] sm:$0xff]
      %v2770 = vld [vmem:[%s14 + $0x10] sm:$0xff]
      %v2771 = vlaneseq
      %v2772 = vshrl.u32 %v2771, 7
      %v2773 = vrot.slane %v2768, 1
      %v2774 = vadd.s32 %v2772, 4294967289
      %vm2775 = vcmp.ge.s32.totalorder %v2774, 0
      %vm2776 = vcmp.lt.s32.totalorder %v2774, 8
      %vm2777 = vmand %vm2775, %vm2776
      %v2778 = vsel %vm2777, 1, 0
      %vm2779 = vcmp.eq.s32.totalorder %v2778, 1
      %v2780 = vsel %vm2779, %v2773, 0.0
      %v2781 = vlaneseq
      %v2782 = vshrl.u32 %v2781, 7
      %v2783 = vsub.s32 0, %v2782
      %v2784 = vrot.slane %v2769, %v2783
      %v2785 = vmul.f32 %v2780, %v2784
      %v2786 = vadd.f32 %v2785, 0.0
      %v2787 = vrot.slane %v2768, 2
      %v2788 = vadd.s32 %v2772, 4294967290
      %vm2789 = vcmp.ge.s32.totalorder %v2788, 0
      %vm2790 = vcmp.lt.s32.totalorder %v2788, 8
      %vm2791 = vmand %vm2789, %vm2790
      %v2792 = vsel %vm2791, 1, 0
      %vm2793 = vcmp.eq.s32.totalorder %v2792, 1
      %v2794 = vsel %vm2793, %v2787, 0.0
      %v2795 = vlaneseq
      %v2796 = vshrl.u32 %v2795, 7
      %v2797 = vsub.s32 1, %v2796
      %v2798 = vrot.slane %v2769, %v2797
      %v2799 = vmul.f32 %v2794, %v2798
      %v2800 = vadd.f32 %v2786, %v2799
      %v2801 = vrot.slane %v2768, 3
      %v2802 = vadd.s32 %v2772, 4294967291
      %vm2803 = vcmp.ge.s32.totalorder %v2802, 0
      %vm2804 = vcmp.lt.s32.totalorder %v2802, 8
      %vm2805 = vmand %vm2803, %vm2804
      %v2806 = vsel %vm2805, 1, 0
      %vm2807 = vcmp.eq.s32.totalorder %v2806, 1
      %v2808 = vsel %vm2807, %v2801, 0.0
      %v2809 = vlaneseq
      %v2810 = vshrl.u32 %v2809, 7
      %v2811 = vsub.s32 2, %v2810
      %v2812 = vrot.slane %v2769, %v2811
      %v2813 = vmul.f32 %v2808, %v2812
      %v2814 = vadd.f32 %v2800, %v2813
      %v2815 = vrot.slane %v2768, 4
      %v2816 = vadd.s32 %v2772, 4294967292
      %vm2817 = vcmp.ge.s32.totalorder %v2816, 0
      %vm2818 = vcmp.lt.s32.totalorder %v2816, 8
      %vm2819 = vmand %vm2817, %vm2818
      %v2820 = vsel %vm2819, 1, 0
      %vm2821 = vcmp.eq.s32.totalorder %v2820, 1
      %v2822 = vsel %vm2821, %v2815, 0.0
      %v2823 = vlaneseq
      %v2824 = vshrl.u32 %v2823, 7
      %v2825 = vsub.s32 3, %v2824
      %v2826 = vrot.slane %v2769, %v2825
      %v2827 = vmul.f32 %v2822, %v2826
      %v2828 = vadd.f32 %v2814, %v2827
      %v2829 = vrot.slane %v2768, 5
      %v2830 = vadd.s32 %v2772, 4294967293
      %vm2831 = vcmp.ge.s32.totalorder %v2830, 0
      %vm2832 = vcmp.lt.s32.totalorder %v2830, 8
      %vm2833 = vmand %vm2831, %vm2832
      %v2834 = vsel %vm2833, 1, 0
      %vm2835 = vcmp.eq.s32.totalorder %v2834, 1
      %v2836 = vsel %vm2835, %v2829, 0.0
      %v2837 = vlaneseq
      %v2838 = vshrl.u32 %v2837, 7
      %v2839 = vsub.s32 4, %v2838
      %v2840 = vrot.slane %v2769, %v2839
      %v2841 = vmul.f32 %v2836, %v2840
      %v2842 = vadd.f32 %v2828, %v2841
      %v2843 = vrot.slane %v2768, 6
      %v2844 = vadd.s32 %v2772, 4294967294
      %vm2845 = vcmp.ge.s32.totalorder %v2844, 0
      %vm2846 = vcmp.lt.s32.totalorder %v2844, 8
      %vm2847 = vmand %vm2845, %vm2846
      %v2848 = vsel %vm2847, 1, 0
      %vm2849 = vcmp.eq.s32.totalorder %v2848, 1
      %v2850 = vsel %vm2849, %v2843, 0.0
      %v2851 = vlaneseq
      %v2852 = vshrl.u32 %v2851, 7
      %v2853 = vsub.s32 5, %v2852
      %v2854 = vrot.slane %v2769, %v2853
      %v2855 = vmul.f32 %v2850, %v2854
      %v2856 = vadd.f32 %v2842, %v2855
      %v2857 = vrot.slane %v2768, 7
      %v2858 = vadd.s32 %v2772, 4294967295
      %vm2859 = vcmp.ge.s32.totalorder %v2858, 0
      %vm2860 = vcmp.lt.s32.totalorder %v2858, 8
      %vm2861 = vmand %vm2859, %vm2860
      %v2862 = vsel %vm2861, 1, 0
      %vm2863 = vcmp.eq.s32.totalorder %v2862, 1
      %v2864 = vsel %vm2863, %v2857, 0.0
      %v2865 = vlaneseq
      %v2866 = vshrl.u32 %v2865, 7
      %v2867 = vsub.s32 6, %v2866
      %v2868 = vrot.slane %v2769, %v2867
      %v2869 = vmul.f32 %v2864, %v2868
      %v2870 = vadd.f32 %v2856, %v2869
      %vm2871 = vcmp.ge.s32.totalorder %v2772, 0
      %vm2872 = vcmp.lt.s32.totalorder %v2772, 8
      %vm2873 = vmand %vm2871, %vm2872
      %v2874 = vsel %vm2873, 1, 0
      %vm2875 = vcmp.eq.s32.totalorder %v2874, 1
      %v2876 = vsel %vm2875, %v2768, 0.0
      %v2877 = vlaneseq
      %v2878 = vshrl.u32 %v2877, 7
      %v2879 = vsub.s32 7, %v2878
      %v2880 = vrot.slane %v2769, %v2879
      %v2881 = vmul.f32 %v2876, %v2880
      %v2882 = vadd.f32 %v2870, %v2881
      %v2883 = vadd.s32 %v2772, 1
      %vm2884 = vcmp.ge.s32.totalorder %v2883, 0
      %vm2885 = vcmp.lt.s32.totalorder %v2883, 8
      %vm2886 = vmand %vm2884, %vm2885
      %v2887 = vsel %vm2886, 1, 0
      %vm2888 = vcmp.eq.s32.totalorder %v2887, 1
      %v2889 = vsel %vm2888, %v2773, 0.0
      %v2890 = vlaneseq
      %v2891 = vshrl.u32 %v2890, 7
      %v2892 = vsub.s32 0, %v2891
      %v2893 = vrot.slane %v2770, %v2892
      %v2894 = vmul.f32 %v2889, %v2893
      %v2895 = vadd.f32 %v2882, %v2894
      %v2896 = vadd.s32 %v2772, 2
      %vm2897 = vcmp.ge.s32.totalorder %v2896, 0
      %vm2898 = vcmp.lt.s32.totalorder %v2896, 8
      %vm2899 = vmand %vm2897, %vm2898
      %v2900 = vsel %vm2899, 1, 0
      %vm2901 = vcmp.eq.s32.totalorder %v2900, 1
      %v2902 = vsel %vm2901, %v2787, 0.0
      %v2903 = vlaneseq
      %v2904 = vshrl.u32 %v2903, 7
      %v2905 = vsub.s32 1, %v2904
      %v2906 = vrot.slane %v2770, %v2905
      %v2907 = vmul.f32 %v2902, %v2906
      %v2908 = vadd.f32 %v2895, %v2907
      %v2909 = vadd.s32 %v2772, 3
      %vm2910 = vcmp.ge.s32.totalorder %v2909, 0
      %vm2911 = vcmp.lt.s32.totalorder %v2909, 8
      %vm2912 = vmand %vm2910, %vm2911
      %v2913 = vsel %vm2912, 1, 0
      %vm2914 = vcmp.eq.s32.totalorder %v2913, 1
      %v2915 = vsel %vm2914, %v2801, 0.0
      %v2916 = vlaneseq
      %v2917 = vshrl.u32 %v2916, 7
      %v2918 = vsub.s32 2, %v2917
      %v2919 = vrot.slane %v2770, %v2918
      %v2920 = vmul.f32 %v2915, %v2919
      %v2921 = vadd.f32 %v2908, %v2920
      %v2922 = vadd.s32 %v2772, 4
      %vm2923 = vcmp.ge.s32.totalorder %v2922, 0
      %vm2924 = vcmp.lt.s32.totalorder %v2922, 8
      %vm2925 = vmand %vm2923, %vm2924
      %v2926 = vsel %vm2925, 1, 0
      %vm2927 = vcmp.eq.s32.totalorder %v2926, 1
      %v2928 = vsel %vm2927, %v2815, 0.0
      %v2929 = vlaneseq
      %v2930 = vshrl.u32 %v2929, 7
      %v2931 = vsub.s32 3, %v2930
      %v2932 = vrot.slane %v2770, %v2931
      %v2933 = vmul.f32 %v2928, %v2932
      %v2934 = vadd.f32 %v2921, %v2933
      %v2935 = vadd.s32 %v2772, 5
      %vm2936 = vcmp.ge.s32.totalorder %v2935, 0
      %vm2937 = vcmp.lt.s32.totalorder %v2935, 8
      %vm2938 = vmand %vm2936, %vm2937
      %v2939 = vsel %vm2938, 1, 0
      %vm2940 = vcmp.eq.s32.totalorder %v2939, 1
      %v2941 = vsel %vm2940, %v2829, 0.0
      %v2942 = vlaneseq
      %v2943 = vshrl.u32 %v2942, 7
      %v2944 = vsub.s32 4, %v2943
      %v2945 = vrot.slane %v2770, %v2944
      %v2946 = vmul.f32 %v2941, %v2945
      %v2947 = vadd.f32 %v2934, %v2946
      %v2948 = vadd.s32 %v2772, 6
      %vm2949 = vcmp.ge.s32.totalorder %v2948, 0
      %vm2950 = vcmp.lt.s32.totalorder %v2948, 8
      %vm2951 = vmand %vm2949, %vm2950
      %v2952 = vsel %vm2951, 1, 0
      %vm2953 = vcmp.eq.s32.totalorder %v2952, 1
      %v2954 = vsel %vm2953, %v2843, 0.0
      %v2955 = vlaneseq
      %v2956 = vshrl.u32 %v2955, 7
      %v2957 = vsub.s32 5, %v2956
      %v2958 = vrot.slane %v2770, %v2957
      %v2959 = vmul.f32 %v2954, %v2958
      %v2960 = vadd.f32 %v2947, %v2959
      %v2961 = vadd.s32 %v2772, 7
      %vm2962 = vcmp.ge.s32.totalorder %v2961, 0
      %vm2963 = vcmp.lt.s32.totalorder %v2961, 8
      %vm2964 = vmand %vm2962, %vm2963
      %v2965 = vsel %vm2964, 1, 0
      %vm2966 = vcmp.eq.s32.totalorder %v2965, 1
      %v2967 = vsel %vm2966, %v2857, 0.0
      %v2968 = vlaneseq
      %v2969 = vshrl.u32 %v2968, 7
      %v2970 = vsub.s32 6, %v2969
      %v2971 = vrot.slane %v2770, %v2970
      %v2972 = vmul.f32 %v2967, %v2971
      %v2973 = vadd.f32 %v2960, %v2972
      %v2974 = vld [vmem:[%s15] sm:$0x1]
      %v2976 = vlaneseq
      %v2977 = vshrl.u32 %v2976, 7
      %v2978 = vsub.s32 0, %v2977
      %v2979 = vrot.slane %v2974, %v2978
      %v2981 = vadd.f32 %v2973, %v2979
      %v2982 = vxor.u32 %v2981, 2147483648
      %v2983 = vmul.f32 %v2982, 1.442695
      %v2984 = vpow.pop %v2983
      %v2985 = vadd.f32 %v2984, 1.0
      %v2986 = vrcp.pop %v2985
      %v2987 = vmul.f32 1.0, %v2986
      %v2988 = vmul.f32 %v2981, %v2987
      %v2989 = vpack.c.bf16 %v2988, %v2988
      %v2990 = vld [vmem:[%s16] sm:$0xf]
      %v2991 = vld [vmem:[%s16 + $0x4] sm:$0xf]
      %v2992 = vld [vmem:[%s16 + $0x8] sm:$0xf]
      %v2993 = vld [vmem:[%s16 + $0xc] sm:$0xf]
      %v2994 = vld [vmem:[%s16 + $0x10] sm:$0xf]
      %v2995 = vld [vmem:[%s16 + $0x14] sm:$0xf]
      %v2996 = vld [vmem:[%s16 + $0x18] sm:$0xf]
      %v2997 = vld [vmem:[%s16 + $0x1c] sm:$0xf]
      %v2998 = vld [vmem:[%s17] sm:$0x1]
      %v3000 = vlaneseq
      %v3001 = vshrl.u32 %v3000, 7
      %v3002 = vsub.s32 0, %v3001
      %v3003 = vrot.slane %v2998, %v3002
      %v3013 = vunpack.c.l.b16 %v2990
      %v3014 = vunpack.c.l.b16 %v2991
      %v3015 = vunpack.c.l.b16 %v2992
      %v3016 = vunpack.c.l.b16 %v2993
      %v3017 = vunpack.c.l.b16 %v2994
      %v3018 = vunpack.c.l.b16 %v2995
      %v3019 = vunpack.c.l.b16 %v2996
      %v3020 = vunpack.c.l.b16 %v2997
      %v3021 = vpack.c.b16 %v3014, %v3013
      %v3022 = vpack.c.b16 %v3016, %v3015
      %v3023 = vpack.c.b16 %v3018, %v3017
      %v3024 = vpack.c.b16 %v3020, %v3019
      %v3030 = vsel %vm923, %v2989, 0
      %3032 = vmatprep.subr.bf16.mxu0 0
      %3033 = vmatpush1.bf16.msra.mxu0 %v3021
      %3034 = vmatprep.subr.bf16.mxu0 0
      %3035 = vmatpush1.bf16.msra.mxu0 %v3022
      %3036 = vmatprep.subr.bf16.mxu0 0
      %3037 = vmatpush1.bf16.msra.mxu0 %v3023
      %3038 = vmatprep.subr.bf16.mxu0 0
      %3039 = vmatpush1.bf16.msra.mxu0 %v3024
      %3040 = vmatprep.subr.bf16.mxu0 0
      %3041 = vmatpush1.bf16.msra.mxu0 0
      %3042 = vmatprep.subr.bf16.mxu0 0
      %3043 = vmatpush1.bf16.msra.mxu0 0
      %3044 = vmatprep.subr.bf16.mxu0 0
      %3045 = vmatpush1.bf16.msra.mxu0 0
      %3046 = vmatprep.subr.bf16.mxu0 0
      %3047 = vmatpush1.bf16.msra.mxu0 0
      %3048 = vmatprep.subr.bf16.mxu0 0
      %3049 = vmatpush1.bf16.msra.mxu0 0
      %3050 = vmatprep.subr.bf16.mxu0 0
      %3051 = vmatpush1.bf16.msra.mxu0 0
      %3052 = vmatprep.subr.bf16.mxu0 0
      %3053 = vmatpush1.bf16.msra.mxu0 0
      %3054 = vmatprep.subr.bf16.mxu0 0
      %3055 = vmatpush1.bf16.msra.mxu0 0
      %3056 = vmatprep.subr.bf16.mxu0 0
      %3057 = vmatpush1.bf16.msra.mxu0 0
      %3058 = vmatprep.subr.bf16.mxu0 0
      %3059 = vmatpush1.bf16.msra.mxu0 0
      %3060 = vmatprep.subr.bf16.mxu0 0
      %3061 = vmatpush1.bf16.msra.mxu0 0
      %3062 = vmatprep.subr.bf16.mxu0 0
      %3063 = vmatpush1.bf16.msra.mxu0 0
      %3064 = vmatprep.mubr.bf16.mxu0 0
      %3065 = vmatmul.mubr.bf16.gmra.mrb[0].mxu0 %v3030
      %v3066 = vpop.f32.mrb[0].mxu0
      %v3067 = vadd.f32 %v3003, %v3066
      %v3068 = vpop.f32.mrb[0].mxu0
      %v3069 = vpop.f32.mrb[0].mxu0
      %v3070 = vpop.f32.mrb[0].mxu0
      %3071 = vdwg.mxu0
      %v3072 = vadd.f32 %v2602, %v3067
      %3073 = vst.msk [vmem:[%s570] sm:$0xff] %vm573, %v3072
      %p3074 = scmp.lt.s32.totalorder %s29, 1
      %s3075 = scalar_select %p3074, %s29, 1
      %s3076 = smul.addr %s3075, 8
      %s3077 = scalar_lea.vmem %s18, %s3076
      // Predicated region
      $region93: #{_lambda_.2} parent=91 // pred_check
        %p3078 = pneg %p430
      $region94: #{_lambda_.2} parent=91 // pred_check_branch
        %3080 = sbr.rel (%p3078) target = $region96
      $region95: #{_lambda_.2} parent=91 // pred_region
        _
      $region96: #{_lambda_.2} parent=91 // pred_fallthru
        _
    $region92: #{_lambda_.2} parent=5 // pred_fallthru
      _
    %p3081 = scmp.le.s32.totalorder 2, %s24
    // Predicated region
    $region97: #{_lambda_.2} parent=5 // pred_check
      %p3082 = pneg %p3081
    $region98: #{_lambda_.2} parent=5 // pred_check_branch
      %3084 = sbr.rel (%p3082) target = $region100
    $region99: #{_lambda_.2} parent=5 // pred_region
      %s3085 = ssub.s32 %s24, 2
      // Predicated region
      $region101: #{_lambda_.2} parent=99 // pred_check
        %p3086 = pneg %p436
      $region102: #{_lambda_.2} parent=99 // pred_check_branch
        %3088 = sbr.rel (%p3086) target = $region104
      $region103: #{_lambda_.2} parent=99 // pred_region
        %p3089 = scmp.lt.s32.totalorder %s30, 1
        %s3090 = scalar_select %p3089, %s30, 1
        %s3091 = smul.addr %s3090, 8
        %s3092 = scalar_lea.vmem %s18, %s3091
      $region104: #{_lambda_.2} parent=99 // pred_fallthru
        _
    $region100: #{_lambda_.2} parent=5 // pred_fallthru
      _
  $region6: #{_lambda_.2} parent=0 // loop_footer
    %s28 = sadd.s32 1, %s24
  $region7: #{_lambda_.2} parent=0 // loop_footer_branch
    %23 = sbr.rel target = $region3
  $region8: #{_lambda_.2} parent=0 // loop_exit
    _

// kernel: _lambda_.3
$region0: #{_lambda_.3}
  #allocation0 [shape = 'u32[]', space=smem, size = 0x4, offset = 0x4, fixed_abs, tag = 'smem constant byte address 0x4 - core index']
  #allocation1 [shape = 'u32[144,128]{1,0:T(1,128)}', space=vmem, size = 0x12000, scoped, tag = 'internal scratch']
  %s0 = inlined_call_operand.vmem [shape: f32[2,8,32], index: 0, kind: input, shape index: {}]
  %s1 = inlined_call_operand.vmem [shape: f32[1,32], index: 1, kind: input, shape index: {}]
  %s2 = inlined_call_operand.vmem [shape: f32[1,32], index: 2, kind: input, shape index: {}]
  %s3 = inlined_call_operand.vmem [shape: bf16[32,384], index: 3, kind: input, shape index: {}]
  %s4 = inlined_call_operand.vmem [shape: f32[1,384], index: 4, kind: input, shape index: {}]
  %s5 = inlined_call_operand.vmem [shape: bf16[384,64], index: 5, kind: input, shape index: {}]
  %s6 = inlined_call_operand.vmem [shape: bf16[128,32], index: 6, kind: input, shape index: {}]
  %s7 = inlined_call_operand.vmem [shape: f32[1,32], index: 7, kind: input, shape index: {}]
  %s8 = inlined_call_operand.vmem [shape: f32[1,32], index: 8, kind: input, shape index: {}]
  %s9 = inlined_call_operand.vmem [shape: f32[1,32], index: 9, kind: input, shape index: {}]
  %s10 = inlined_call_operand.vmem [shape: bf16[32,64], index: 10, kind: input, shape index: {}]
  %s11 = inlined_call_operand.vmem [shape: f32[1,64], index: 11, kind: input, shape index: {}]
  %s12 = inlined_call_operand.vmem [shape: bf16[32,64], index: 12, kind: input, shape index: {}]
  %s13 = inlined_call_operand.vmem [shape: f32[1,64], index: 13, kind: input, shape index: {}]
  %s14 = inlined_call_operand.vmem [shape: f32[31,64], index: 14, kind: input, shape index: {}]
  %s15 = inlined_call_operand.vmem [shape: f32[1,64], index: 15, kind: input, shape index: {}]
  %s16 = inlined_call_operand.vmem [shape: bf16[64,32], index: 16, kind: input, shape index: {}]
  %s17 = inlined_call_operand.vmem [shape: f32[1,32], index: 17, kind: input, shape index: {}]
  %s18 = inlined_call_operand.hbm [shape: f32[2,8,32], index: 18, kind: output, shape index: {}]
  %s19 = sld [smem:[#allocation0]]
  $region105: #{_lambda_.3} parent=0
    _
  %s21 = ssub.s32 1, %s19
  %s22 = scalar_select 0, %s21, %s19
  $region1: #{_lambda_.3} parent=0
    #allocation2 [shape = 'u8[8192]{0}', space=vmem, size = 0x2000, scoped, tag = 'output window, operand 0']
    #allocation3 [shape = 's32[2]{0}', space=sflag, size = 0x8, scoped, tag = 'scoped memory for _lambda_.3']
    %23 = vsyncpa [#allocation3], 0
    %s24 = scalar_lea.sflag [#allocation3], 1
    %25 = vsyncpa %s24, 0
    loop: start=0, step=1, limit=4
    $region2: #{_lambda_.3} parent=1 // loop_pre_header
      _
    $region3: #{_lambda_.3} parent=1 // loop_header
      %s27 = sphi 0, %s31
      %p28 = scmp.ge.s32.totalorder %s27, 4
      %s37 = sphi 0, %s39
      %s40 = sphi 0, %s37
      %s41 = sphi 0, %s40
      %s57 = sphi 0, %s41
      %s61 = sphi 0, %s61
      %s63 = sphi 0, %s61
      %s64 = sphi 0, %s63
      %s78 = sphi 0, %s64
      %s82 = sphi 0, %s82
      %s84 = sphi 0, %s82
      %s85 = sphi 0, %s84
      %s99 = sphi 0, %s85
      %s103 = sphi 0, %s103
      %s105 = sphi 0, %s103
      %s106 = sphi 0, %s105
      %s120 = sphi 0, %s106
      %s124 = sphi 0, %s124
      %s126 = sphi 0, %s124
      %s127 = sphi 0, %s126
      %s141 = sphi 0, %s127
      %s145 = sphi 0, %s145
      %s147 = sphi 0, %s145
      %s148 = sphi 0, %s147
      %s162 = sphi 0, %s148
      %s166 = sphi 0, %s166
      %s168 = sphi 0, %s166
      %s169 = sphi 0, %s168
      %s183 = sphi 0, %s169
      %s187 = sphi 0, %s187
      %s189 = sphi 0, %s187
      %s190 = sphi 0, %s189
      %s204 = sphi 0, %s190
      %s208 = sphi 0, %s208
      %s210 = sphi 0, %s208
      %s211 = sphi 0, %s210
      %s225 = sphi 0, %s211
      %s229 = sphi 0, %s229
      %s231 = sphi 0, %s229
      %s232 = sphi 0, %s231
      %s246 = sphi 0, %s232
      %s250 = sphi 0, %s250
      %s252 = sphi 0, %s250
      %s253 = sphi 0, %s252
      %s267 = sphi 0, %s253
      %s271 = sphi 0, %s271
      %s273 = sphi 0, %s271
      %s274 = sphi 0, %s273
      %s288 = sphi 0, %s274
      %s292 = sphi 0, %s292
      %s294 = sphi 0, %s292
      %s295 = sphi 0, %s294
      %s309 = sphi 0, %s295
      %s313 = sphi 0, %s313
      %s315 = sphi 0, %s313
      %s316 = sphi 0, %s315
      %s330 = sphi 0, %s316
      %s334 = sphi 0, %s334
      %s336 = sphi 0, %s334
      %s337 = sphi 0, %s336
      %s351 = sphi 0, %s337
      %s355 = sphi 0, %s355
      %s357 = sphi 0, %s355
      %s358 = sphi 0, %s357
      %s372 = sphi 0, %s358
      %s376 = sphi 0, %s376
      %s378 = sphi 0, %s376
      %s379 = sphi 0, %s378
      %s393 = sphi 0, %s379
      %s397 = sphi 0, %s397
      %s399 = sphi 0, %s397
      %s400 = sphi 0, %s399
      %s414 = sphi 0, %s400
      %s420 = sphi 0, %s422
      %s423 = sphi 0, %s420
      %s424 = sphi 0, %s423
      %s440 = sphi 0, %s424
    $region4: #{_lambda_.3} parent=1 // loop_header_branch
      %30 = sbr.rel (%p28) target = $region8
    $region5: #{_lambda_.3} parent=1 // loop_body
      %s32 = ssub.s32 %s27, 1
      %s33 = ssub.s32 %s27, 2
      %s34 = sadd.s32 %s27, 1
      %s35 = ssub.s32 %s27, %s34
      %p36 = scmp.eq.s32.totalorder %s35, 0
      %s38 = sadd.s32 %s37, 1
      %s39 = scalar_select %p36, %s37, %s38
      %p42 = pneg %p36
      %p43 = scmp.eq.s32.totalorder %s27, 1
      %p44 = por %p42, %p43
      %p45 = scmp.ne.s32.totalorder %s37, %s40
      %p46 = scmp.eq.s32.totalorder %s27, 0
      %p47 = por %p45, %p46
      %p48 = scmp.ne.s32.totalorder %s37, %s40
      %p49 = scmp.eq.s32.totalorder %s32, 1
      %p50 = por %p48, %p49
      %p51 = scmp.ne.s32.totalorder %s40, %s41
      %p52 = scmp.eq.s32.totalorder %s32, 0
      %p53 = por %p51, %p52
      %p54 = scmp.ne.s32.totalorder %s40, %s41
      %p55 = scmp.eq.s32.totalorder %s33, 1
      %p56 = por %p54, %p55
      %p58 = scmp.ne.s32.totalorder %s41, %s57
      %p59 = scmp.eq.s32.totalorder %s33, 0
      %p60 = por %p58, %p59
      %s62 = sadd.s32 %s61, 1
      %p65 = scmp.eq.s32.totalorder %s27, 1
      %p66 = scmp.ne.s32.totalorder %s61, %s63
      %p67 = scmp.eq.s32.totalorder %s27, 0
      %p68 = por %p66, %p67
      %p69 = scmp.ne.s32.totalorder %s61, %s63
      %p70 = scmp.eq.s32.totalorder %s32, 1
      %p71 = por %p69, %p70
      %p72 = scmp.ne.s32.totalorder %s63, %s64
      %p73 = scmp.eq.s32.totalorder %s32, 0
      %p74 = por %p72, %p73
      %p75 = scmp.ne.s32.totalorder %s63, %s64
      %p76 = scmp.eq.s32.totalorder %s33, 1
      %p77 = por %p75, %p76
      %p79 = scmp.ne.s32.totalorder %s64, %s78
      %p80 = scmp.eq.s32.totalorder %s33, 0
      %p81 = por %p79, %p80
      %s83 = sadd.s32 %s82, 1
      %p86 = scmp.eq.s32.totalorder %s27, 1
      %p87 = scmp.ne.s32.totalorder %s82, %s84
      %p88 = scmp.eq.s32.totalorder %s27, 0
      %p89 = por %p87, %p88
      %p90 = scmp.ne.s32.totalorder %s82, %s84
      %p91 = scmp.eq.s32.totalorder %s32, 1
      %p92 = por %p90, %p91
      %p93 = scmp.ne.s32.totalorder %s84, %s85
      %p94 = scmp.eq.s32.totalorder %s32, 0
      %p95 = por %p93, %p94
      %p96 = scmp.ne.s32.totalorder %s84, %s85
      %p97 = scmp.eq.s32.totalorder %s33, 1
      %p98 = por %p96, %p97
      %p100 = scmp.ne.s32.totalorder %s85, %s99
      %p101 = scmp.eq.s32.totalorder %s33, 0
      %p102 = por %p100, %p101
      %s104 = sadd.s32 %s103, 1
      %p107 = scmp.eq.s32.totalorder %s27, 1
      %p108 = scmp.ne.s32.totalorder %s103, %s105
      %p109 = scmp.eq.s32.totalorder %s27, 0
      %p110 = por %p108, %p109
      %p111 = scmp.ne.s32.totalorder %s103, %s105
      %p112 = scmp.eq.s32.totalorder %s32, 1
      %p113 = por %p111, %p112
      %p114 = scmp.ne.s32.totalorder %s105, %s106
      %p115 = scmp.eq.s32.totalorder %s32, 0
      %p116 = por %p114, %p115
      %p117 = scmp.ne.s32.totalorder %s105, %s106
      %p118 = scmp.eq.s32.totalorder %s33, 1
      %p119 = por %p117, %p118
      %p121 = scmp.ne.s32.totalorder %s106, %s120
      %p122 = scmp.eq.s32.totalorder %s33, 0
      %p123 = por %p121, %p122
      %s125 = sadd.s32 %s124, 1
      %p128 = scmp.eq.s32.totalorder %s27, 1
      %p129 = scmp.ne.s32.totalorder %s124, %s126
      %p130 = scmp.eq.s32.totalorder %s27, 0
      %p131 = por %p129, %p130
      %p132 = scmp.ne.s32.totalorder %s124, %s126
      %p133 = scmp.eq.s32.totalorder %s32, 1
      %p134 = por %p132, %p133
      %p135 = scmp.ne.s32.totalorder %s126, %s127
      %p136 = scmp.eq.s32.totalorder %s32, 0
      %p137 = por %p135, %p136
      %p138 = scmp.ne.s32.totalorder %s126, %s127
      %p139 = scmp.eq.s32.totalorder %s33, 1
      %p140 = por %p138, %p139
      %p142 = scmp.ne.s32.totalorder %s127, %s141
      %p143 = scmp.eq.s32.totalorder %s33, 0
      %p144 = por %p142, %p143
      %s146 = sadd.s32 %s145, 1
      %p149 = scmp.eq.s32.totalorder %s27, 1
      %p150 = scmp.ne.s32.totalorder %s145, %s147
      %p151 = scmp.eq.s32.totalorder %s27, 0
      %p152 = por %p150, %p151
      %p153 = scmp.ne.s32.totalorder %s145, %s147
      %p154 = scmp.eq.s32.totalorder %s32, 1
      %p155 = por %p153, %p154
      %p156 = scmp.ne.s32.totalorder %s147, %s148
      %p157 = scmp.eq.s32.totalorder %s32, 0
      %p158 = por %p156, %p157
      %p159 = scmp.ne.s32.totalorder %s147, %s148
      %p160 = scmp.eq.s32.totalorder %s33, 1
      %p161 = por %p159, %p160
      %p163 = scmp.ne.s32.totalorder %s148, %s162
      %p164 = scmp.eq.s32.totalorder %s33, 0
      %p165 = por %p163, %p164
      %s167 = sadd.s32 %s166, 1
      %p170 = scmp.eq.s32.totalorder %s27, 1
      %p171 = scmp.ne.s32.totalorder %s166, %s168
      %p172 = scmp.eq.s32.totalorder %s27, 0
      %p173 = por %p171, %p172
      %p174 = scmp.ne.s32.totalorder %s166, %s168
      %p175 = scmp.eq.s32.totalorder %s32, 1
      %p176 = por %p174, %p175
      %p177 = scmp.ne.s32.totalorder %s168, %s169
      %p178 = scmp.eq.s32.totalorder %s32, 0
      %p179 = por %p177, %p178
      %p180 = scmp.ne.s32.totalorder %s168, %s169
      %p181 = scmp.eq.s32.totalorder %s33, 1
      %p182 = por %p180, %p181
      %p184 = scmp.ne.s32.totalorder %s169, %s183
      %p185 = scmp.eq.s32.totalorder %s33, 0
      %p186 = por %p184, %p185
      %s188 = sadd.s32 %s187, 1
      %p191 = scmp.eq.s32.totalorder %s27, 1
      %p192 = scmp.ne.s32.totalorder %s187, %s189
      %p193 = scmp.eq.s32.totalorder %s27, 0
      %p194 = por %p192, %p193
      %p195 = scmp.ne.s32.totalorder %s187, %s189
      %p196 = scmp.eq.s32.totalorder %s32, 1
      %p197 = por %p195, %p196
      %p198 = scmp.ne.s32.totalorder %s189, %s190
      %p199 = scmp.eq.s32.totalorder %s32, 0
      %p200 = por %p198, %p199
      %p201 = scmp.ne.s32.totalorder %s189, %s190
      %p202 = scmp.eq.s32.totalorder %s33, 1
      %p203 = por %p201, %p202
      %p205 = scmp.ne.s32.totalorder %s190, %s204
      %p206 = scmp.eq.s32.totalorder %s33, 0
      %p207 = por %p205, %p206
      %s209 = sadd.s32 %s208, 1
      %p212 = scmp.eq.s32.totalorder %s27, 1
      %p213 = scmp.ne.s32.totalorder %s208, %s210
      %p214 = scmp.eq.s32.totalorder %s27, 0
      %p215 = por %p213, %p214
      %p216 = scmp.ne.s32.totalorder %s208, %s210
      %p217 = scmp.eq.s32.totalorder %s32, 1
      %p218 = por %p216, %p217
      %p219 = scmp.ne.s32.totalorder %s210, %s211
      %p220 = scmp.eq.s32.totalorder %s32, 0
      %p221 = por %p219, %p220
      %p222 = scmp.ne.s32.totalorder %s210, %s211
      %p223 = scmp.eq.s32.totalorder %s33, 1
      %p224 = por %p222, %p223
      %p226 = scmp.ne.s32.totalorder %s211, %s225
      %p227 = scmp.eq.s32.totalorder %s33, 0
      %p228 = por %p226, %p227
      %s230 = sadd.s32 %s229, 1
      %p233 = scmp.eq.s32.totalorder %s27, 1
      %p234 = scmp.ne.s32.totalorder %s229, %s231
      %p235 = scmp.eq.s32.totalorder %s27, 0
      %p236 = por %p234, %p235
      %p237 = scmp.ne.s32.totalorder %s229, %s231
      %p238 = scmp.eq.s32.totalorder %s32, 1
      %p239 = por %p237, %p238
      %p240 = scmp.ne.s32.totalorder %s231, %s232
      %p241 = scmp.eq.s32.totalorder %s32, 0
      %p242 = por %p240, %p241
      %p243 = scmp.ne.s32.totalorder %s231, %s232
      %p244 = scmp.eq.s32.totalorder %s33, 1
      %p245 = por %p243, %p244
      %p247 = scmp.ne.s32.totalorder %s232, %s246
      %p248 = scmp.eq.s32.totalorder %s33, 0
      %p249 = por %p247, %p248
      %s251 = sadd.s32 %s250, 1
      %p254 = scmp.eq.s32.totalorder %s27, 1
      %p255 = scmp.ne.s32.totalorder %s250, %s252
      %p256 = scmp.eq.s32.totalorder %s27, 0
      %p257 = por %p255, %p256
      %p258 = scmp.ne.s32.totalorder %s250, %s252
      %p259 = scmp.eq.s32.totalorder %s32, 1
      %p260 = por %p258, %p259
      %p261 = scmp.ne.s32.totalorder %s252, %s253
      %p262 = scmp.eq.s32.totalorder %s32, 0
      %p263 = por %p261, %p262
      %p264 = scmp.ne.s32.totalorder %s252, %s253
      %p265 = scmp.eq.s32.totalorder %s33, 1
      %p266 = por %p264, %p265
      %p268 = scmp.ne.s32.totalorder %s253, %s267
      %p269 = scmp.eq.s32.totalorder %s33, 0
      %p270 = por %p268, %p269
      %s272 = sadd.s32 %s271, 1
      %p275 = scmp.eq.s32.totalorder %s27, 1
      %p276 = scmp.ne.s32.totalorder %s271, %s273
      %p277 = scmp.eq.s32.totalorder %s27, 0
      %p278 = por %p276, %p277
      %p279 = scmp.ne.s32.totalorder %s271, %s273
      %p280 = scmp.eq.s32.totalorder %s32, 1
      %p281 = por %p279, %p280
      %p282 = scmp.ne.s32.totalorder %s273, %s274
      %p283 = scmp.eq.s32.totalorder %s32, 0
      %p284 = por %p282, %p283
      %p285 = scmp.ne.s32.totalorder %s273, %s274
      %p286 = scmp.eq.s32.totalorder %s33, 1
      %p287 = por %p285, %p286
      %p289 = scmp.ne.s32.totalorder %s274, %s288
      %p290 = scmp.eq.s32.totalorder %s33, 0
      %p291 = por %p289, %p290
      %s293 = sadd.s32 %s292, 1
      %p296 = scmp.eq.s32.totalorder %s27, 1
      %p297 = scmp.ne.s32.totalorder %s292, %s294
      %p298 = scmp.eq.s32.totalorder %s27, 0
      %p299 = por %p297, %p298
      %p300 = scmp.ne.s32.totalorder %s292, %s294
      %p301 = scmp.eq.s32.totalorder %s32, 1
      %p302 = por %p300, %p301
      %p303 = scmp.ne.s32.totalorder %s294, %s295
      %p304 = scmp.eq.s32.totalorder %s32, 0
      %p305 = por %p303, %p304
      %p306 = scmp.ne.s32.totalorder %s294, %s295
      %p307 = scmp.eq.s32.totalorder %s33, 1
      %p308 = por %p306, %p307
      %p310 = scmp.ne.s32.totalorder %s295, %s309
      %p311 = scmp.eq.s32.totalorder %s33, 0
      %p312 = por %p310, %p311
      %s314 = sadd.s32 %s313, 1
      %p317 = scmp.eq.s32.totalorder %s27, 1
      %p318 = scmp.ne.s32.totalorder %s313, %s315
      %p319 = scmp.eq.s32.totalorder %s27, 0
      %p320 = por %p318, %p319
      %p321 = scmp.ne.s32.totalorder %s313, %s315
      %p322 = scmp.eq.s32.totalorder %s32, 1
      %p323 = por %p321, %p322
      %p324 = scmp.ne.s32.totalorder %s315, %s316
      %p325 = scmp.eq.s32.totalorder %s32, 0
      %p326 = por %p324, %p325
      %p327 = scmp.ne.s32.totalorder %s315, %s316
      %p328 = scmp.eq.s32.totalorder %s33, 1
      %p329 = por %p327, %p328
      %p331 = scmp.ne.s32.totalorder %s316, %s330
      %p332 = scmp.eq.s32.totalorder %s33, 0
      %p333 = por %p331, %p332
      %s335 = sadd.s32 %s334, 1
      %p338 = scmp.eq.s32.totalorder %s27, 1
      %p339 = scmp.ne.s32.totalorder %s334, %s336
      %p340 = scmp.eq.s32.totalorder %s27, 0
      %p341 = por %p339, %p340
      %p342 = scmp.ne.s32.totalorder %s334, %s336
      %p343 = scmp.eq.s32.totalorder %s32, 1
      %p344 = por %p342, %p343
      %p345 = scmp.ne.s32.totalorder %s336, %s337
      %p346 = scmp.eq.s32.totalorder %s32, 0
      %p347 = por %p345, %p346
      %p348 = scmp.ne.s32.totalorder %s336, %s337
      %p349 = scmp.eq.s32.totalorder %s33, 1
      %p350 = por %p348, %p349
      %p352 = scmp.ne.s32.totalorder %s337, %s351
      %p353 = scmp.eq.s32.totalorder %s33, 0
      %p354 = por %p352, %p353
      %s356 = sadd.s32 %s355, 1
      %p359 = scmp.eq.s32.totalorder %s27, 1
      %p360 = scmp.ne.s32.totalorder %s355, %s357
      %p361 = scmp.eq.s32.totalorder %s27, 0
      %p362 = por %p360, %p361
      %p363 = scmp.ne.s32.totalorder %s355, %s357
      %p364 = scmp.eq.s32.totalorder %s32, 1
      %p365 = por %p363, %p364
      %p366 = scmp.ne.s32.totalorder %s357, %s358
      %p367 = scmp.eq.s32.totalorder %s32, 0
      %p368 = por %p366, %p367
      %p369 = scmp.ne.s32.totalorder %s357, %s358
      %p370 = scmp.eq.s32.totalorder %s33, 1
      %p371 = por %p369, %p370
      %p373 = scmp.ne.s32.totalorder %s358, %s372
      %p374 = scmp.eq.s32.totalorder %s33, 0
      %p375 = por %p373, %p374
      %s377 = sadd.s32 %s376, 1
      %p380 = scmp.eq.s32.totalorder %s27, 1
      %p381 = scmp.ne.s32.totalorder %s376, %s378
      %p382 = scmp.eq.s32.totalorder %s27, 0
      %p383 = por %p381, %p382
      %p384 = scmp.ne.s32.totalorder %s376, %s378
      %p385 = scmp.eq.s32.totalorder %s32, 1
      %p386 = por %p384, %p385
      %p387 = scmp.ne.s32.totalorder %s378, %s379
      %p388 = scmp.eq.s32.totalorder %s32, 0
      %p389 = por %p387, %p388
      %p390 = scmp.ne.s32.totalorder %s378, %s379
      %p391 = scmp.eq.s32.totalorder %s33, 1
      %p392 = por %p390, %p391
      %p394 = scmp.ne.s32.totalorder %s379, %s393
      %p395 = scmp.eq.s32.totalorder %s33, 0
      %p396 = por %p394, %p395
      %s398 = sadd.s32 %s397, 1
      %p401 = scmp.eq.s32.totalorder %s27, 1
      %p402 = scmp.ne.s32.totalorder %s397, %s399
      %p403 = scmp.eq.s32.totalorder %s27, 0
      %p404 = por %p402, %p403
      %p405 = scmp.ne.s32.totalorder %s397, %s399
      %p406 = scmp.eq.s32.totalorder %s32, 1
      %p407 = por %p405, %p406
      %p408 = scmp.ne.s32.totalorder %s399, %s400
      %p409 = scmp.eq.s32.totalorder %s32, 0
      %p410 = por %p408, %p409
      %p411 = scmp.ne.s32.totalorder %s399, %s400
      %p412 = scmp.eq.s32.totalorder %s33, 1
      %p413 = por %p411, %p412
      %p415 = scmp.ne.s32.totalorder %s400, %s414
      %p416 = scmp.eq.s32.totalorder %s33, 0
      %p417 = por %p415, %p416
      %s418 = ssub.s32 %s27, %s34
      %p419 = scmp.eq.s32.totalorder %s418, 0
      %s421 = sadd.s32 %s420, 1
      %s422 = scalar_select %p419, %s420, %s421
      %p425 = pneg %p419
      %p426 = scmp.eq.s32.totalorder %s27, 1
      %p427 = por %p425, %p426
      %p428 = scmp.ne.s32.totalorder %s420, %s423
      %p429 = scmp.eq.s32.totalorder %s27, 0
      %p430 = por %p428, %p429
      %p431 = scmp.ne.s32.totalorder %s420, %s423
      %p432 = scmp.eq.s32.totalorder %s32, 1
      %p433 = por %p431, %p432
      %p434 = scmp.ne.s32.totalorder %s423, %s424
      %p435 = scmp.eq.s32.totalorder %s32, 0
      %p436 = por %p434, %p435
      %p437 = scmp.ne.s32.totalorder %s423, %s424
      %p438 = scmp.eq.s32.totalorder %s33, 1
      %p439 = por %p437, %p438
      %p441 = scmp.ne.s32.totalorder %s424, %s440
      %p442 = scmp.eq.s32.totalorder %s33, 0
      %p443 = por %p441, %p442
      %p444 = scmp.le.s32.totalorder 1, %s27
      %p445 = scmp.lt.s32.totalorder %s27, 3
      %p446 = pnand %p444, %p445
      %p447 = pneg %p446
      // Predicated region
      $region9: #{_lambda_.3} parent=5 // pred_check
        _
      $region10: #{_lambda_.3} parent=5 // pred_check_branch
        %449 = sbr.rel (%p446) target = $region12
      $region11: #{_lambda_.3} parent=5 // pred_region
        %s450 = ssub.s32 %s27, 1
        // Predicated region
        $region13: #{_lambda_.3} parent=11 // pred_check
          %p451 = pneg %p74
        $region14: #{_lambda_.3} parent=11 // pred_check_branch
          %453 = sbr.rel (%p451) target = $region16
        $region15: #{_lambda_.3} parent=11 // pred_region
          _
        $region16: #{_lambda_.3} parent=11 // pred_fallthru
          _
        // Predicated region
        $region17: #{_lambda_.3} parent=11 // pred_check
          %p454 = pneg %p95
        $region18: #{_lambda_.3} parent=11 // pred_check_branch
          %456 = sbr.rel (%p454) target = $region20
        $region19: #{_lambda_.3} parent=11 // pred_region
          _
        $region20: #{_lambda_.3} parent=11 // pred_fallthru
          _
        // Predicated region
        $region21: #{_lambda_.3} parent=11 // pred_check
          %p457 = pneg %p116
        $region22: #{_lambda_.3} parent=11 // pred_check_branch
          %459 = sbr.rel (%p457) target = $region24
        $region23: #{_lambda_.3} parent=11 // pred_region
          _
        $region24: #{_lambda_.3} parent=11 // pred_fallthru
          _
        // Predicated region
        $region25: #{_lambda_.3} parent=11 // pred_check
          %p460 = pneg %p137
        $region26: #{_lambda_.3} parent=11 // pred_check_branch
          %462 = sbr.rel (%p460) target = $region28
        $region27: #{_lambda_.3} parent=11 // pred_region
          _
        $region28: #{_lambda_.3} parent=11 // pred_fallthru
          _
        // Predicated region
        $region29: #{_lambda_.3} parent=11 // pred_check
          %p463 = pneg %p158
        $region30: #{_lambda_.3} parent=11 // pred_check_branch
          %465 = sbr.rel (%p463) target = $region32
        $region31: #{_lambda_.3} parent=11 // pred_region
          _
        $region32: #{_lambda_.3} parent=11 // pred_fallthru
          _
        // Predicated region
        $region33: #{_lambda_.3} parent=11 // pred_check
          %p466 = pneg %p179
        $region34: #{_lambda_.3} parent=11 // pred_check_branch
          %468 = sbr.rel (%p466) target = $region36
        $region35: #{_lambda_.3} parent=11 // pred_region
          _
        $region36: #{_lambda_.3} parent=11 // pred_fallthru
          _
        // Predicated region
        $region37: #{_lambda_.3} parent=11 // pred_check
          %p469 = pneg %p200
        $region38: #{_lambda_.3} parent=11 // pred_check_branch
          %471 = sbr.rel (%p469) target = $region40
        $region39: #{_lambda_.3} parent=11 // pred_region
          _
        $region40: #{_lambda_.3} parent=11 // pred_fallthru
          _
        // Predicated region
        $region41: #{_lambda_.3} parent=11 // pred_check
          %p472 = pneg %p221
        $region42: #{_lambda_.3} parent=11 // pred_check_branch
          %474 = sbr.rel (%p472) target = $region44
        $region43: #{_lambda_.3} parent=11 // pred_region
          _
        $region44: #{_lambda_.3} parent=11 // pred_fallthru
          _
        // Predicated region
        $region45: #{_lambda_.3} parent=11 // pred_check
          %p475 = pneg %p242
        $region46: #{_lambda_.3} parent=11 // pred_check_branch
          %477 = sbr.rel (%p475) target = $region48
        $region47: #{_lambda_.3} parent=11 // pred_region
          _
        $region48: #{_lambda_.3} parent=11 // pred_fallthru
          _
        // Predicated region
        $region49: #{_lambda_.3} parent=11 // pred_check
          %p478 = pneg %p263
        $region50: #{_lambda_.3} parent=11 // pred_check_branch
          %480 = sbr.rel (%p478) target = $region52
        $region51: #{_lambda_.3} parent=11 // pred_region
          _
        $region52: #{_lambda_.3} parent=11 // pred_fallthru
          _
        // Predicated region
        $region53: #{_lambda_.3} parent=11 // pred_check
          %p481 = pneg %p284
        $region54: #{_lambda_.3} parent=11 // pred_check_branch
          %483 = sbr.rel (%p481) target = $region56
        $region55: #{_lambda_.3} parent=11 // pred_region
          _
        $region56: #{_lambda_.3} parent=11 // pred_fallthru
          _
        // Predicated region
        $region57: #{_lambda_.3} parent=11 // pred_check
          %p484 = pneg %p305
        $region58: #{_lambda_.3} parent=11 // pred_check_branch
          %486 = sbr.rel (%p484) target = $region60
        $region59: #{_lambda_.3} parent=11 // pred_region
          _
        $region60: #{_lambda_.3} parent=11 // pred_fallthru
          _
        // Predicated region
        $region61: #{_lambda_.3} parent=11 // pred_check
          %p487 = pneg %p326
        $region62: #{_lambda_.3} parent=11 // pred_check_branch
          %489 = sbr.rel (%p487) target = $region64
        $region63: #{_lambda_.3} parent=11 // pred_region
          _
        $region64: #{_lambda_.3} parent=11 // pred_fallthru
          _
        // Predicated region
        $region65: #{_lambda_.3} parent=11 // pred_check
          %p490 = pneg %p347
        $region66: #{_lambda_.3} parent=11 // pred_check_branch
          %492 = sbr.rel (%p490) target = $region68
        $region67: #{_lambda_.3} parent=11 // pred_region
          _
        $region68: #{_lambda_.3} parent=11 // pred_fallthru
          _
        // Predicated region
        $region69: #{_lambda_.3} parent=11 // pred_check
          %p493 = pneg %p368
        $region70: #{_lambda_.3} parent=11 // pred_check_branch
          %495 = sbr.rel (%p493) target = $region72
        $region71: #{_lambda_.3} parent=11 // pred_region
          _
        $region72: #{_lambda_.3} parent=11 // pred_fallthru
          _
        // Predicated region
        $region73: #{_lambda_.3} parent=11 // pred_check
          %p496 = pneg %p389
        $region74: #{_lambda_.3} parent=11 // pred_check_branch
          %498 = sbr.rel (%p496) target = $region76
        $region75: #{_lambda_.3} parent=11 // pred_region
          _
        $region76: #{_lambda_.3} parent=11 // pred_fallthru
          _
        // Predicated region
        $region77: #{_lambda_.3} parent=11 // pred_check
          %p499 = pneg %p410
        $region78: #{_lambda_.3} parent=11 // pred_check_branch
          %501 = sbr.rel (%p499) target = $region80
        $region79: #{_lambda_.3} parent=11 // pred_region
          _
        $region80: #{_lambda_.3} parent=11 // pred_fallthru
          _
      $region12: #{_lambda_.3} parent=5 // pred_fallthru
        _
      %p502 = scmp.lt.s32.totalorder %s27, 2
      // Predicated region
      $region81: #{_lambda_.3} parent=5 // pred_check
        %p503 = pneg %p502
      $region82: #{_lambda_.3} parent=5 // pred_check_branch
        %505 = sbr.rel (%p503) target = $region84
      $region83: #{_lambda_.3} parent=5 // pred_region
        // Predicated region
        $region85: #{_lambda_.3} parent=83 // pred_check
          %p506 = pneg %p47
        $region86: #{_lambda_.3} parent=83 // pred_check_branch
          %508 = sbr.rel (%p506) target = $region88
        $region87: #{_lambda_.3} parent=83 // pred_region
          %p509 = scmp.lt.s32.totalorder %s27, 1
          %s510 = scalar_select %p509, %s27, 1
          %s511 = smul.addr %s510, 8
          %s512 = scalar_lea.vmem %s0, %s511
        $region88: #{_lambda_.3} parent=83 // pred_fallthru
          _
      $region84: #{_lambda_.3} parent=5 // pred_fallthru
        _
      %p513 = scmp.le.s32.totalorder 1, %s27
      %p514 = scmp.lt.s32.totalorder %s27, 3
      %p515 = pnand %p513, %p514
      %p516 = pneg %p515
      // Predicated region
      $region89: #{_lambda_.3} parent=5 // pred_check
        _
      $region90: #{_lambda_.3} parent=5 // pred_check_branch
        %518 = sbr.rel (%p515) target = $region92
      $region91: #{_lambda_.3} parent=5 // pred_region
        %s519 = ssub.s32 %s27, 1
        %p520 = scmp.lt.s32.totalorder %s32, 1
        %s521 = scalar_select %p520, %s32, 1
        %s522 = smul.addr %s521, 8
        %s523 = scalar_lea.vmem %s0, %s522
        %p524 = pneg %p53
        %p525 = pneg %p50
        %p526 = pneg %p74
        %p527 = pneg %p71
        %p528 = pneg %p95
        %p529 = pneg %p92
        %p530 = pneg %p116
        %p531 = pneg %p113
        %p532 = pneg %p137
        %p533 = pneg %p134
        %p534 = pneg %p158
        %p535 = pneg %p155
        %p536 = pneg %p179
        %p537 = pneg %p176
        %p538 = pneg %p200
        %p539 = pneg %p197
        %p540 = pneg %p221
        %p541 = pneg %p218
        %p542 = pneg %p242
        %p543 = pneg %p239
        %p544 = pneg %p263
        %p545 = pneg %p260
        %p546 = pneg %p284
        %p547 = pneg %p281
        %p548 = pneg %p305
        %p549 = pneg %p302
        %p550 = pneg %p326
        %p551 = pneg %p323
        %p552 = pneg %p347
        %p553 = pneg %p344
        %p554 = pneg %p368
        %p555 = pneg %p365
        %p556 = pneg %p389
        %p557 = pneg %p386
        %p558 = pneg %p410
        %p559 = pneg %p407
        %p560 = pneg %p436
        %p561 = pneg %p433
        %s562 = sand.u32 %s423, 1
        %s563 = scalar_lea.sflag [#allocation3], %s562
        %s564 = sand.u32 %s423, 1
        %s565 = smul.addr %s564, 8
        %s566 = scalar_lea.vmem [#allocation2], %s565
        %p567 = scmp.lt.s32.totalorder %s32, 1
        %s568 = scalar_select %p567, %s32, 1
        %s569 = smul.addr %s568, 8
        %s570 = scalar_lea.vmem %s0, %s569
        %v572 = vld [vmem:[%s570] sm:$0xff]
        %vm573 = vcmask 261120
        %v574 = vsel %vm573, %v572, 0.0
        %575 = vadd.xlane.f32.xlu0 %v574
        %v576 = vpop.xlane.xlu0 %575
        %v577 = vrcp.pop 32.0
        %v578 = vmul.f32 %v576, %v577
        %v579 = vsub.f32 %v572, %v578
        %v580 = vmul.f32 %v579, %v579
        %v581 = vsel %vm573, %v580, 0.0
        %582 = vadd.xlane.f32.xlu0 %v581
        %v583 = vpop.xlane.xlu0 %582
        %v584 = vmul.f32 %v583, %v577
        %v585 = vadd.f32 %v584, 1e-05
        %v586 = vrsqrt.pop %v585
        %v587 = vmul.f32 %v579, %v586
        %v588 = vld [vmem:[%s1] sm:$0x1]
        %v590 = vlaneseq
        %v591 = vshrl.u32 %v590, 7
        %v592 = vsub.s32 0, %v591
        %v593 = vrot.slane %v588, %v592
        %v595 = vmul.f32 %v587, %v593
        %v596 = vld [vmem:[%s2] sm:$0x1]
        %v598 = vlaneseq
        %v599 = vshrl.u32 %v598, 7
        %v600 = vsub.s32 0, %v599
        %v601 = vrot.slane %v596, %v600
        %v603 = vadd.f32 %v595, %v601
        %v604 = vpack.c.bf16 %v603, %v603
        %v605 = vld [vmem:[%s3] sm:$0xff]
        %v606 = vld [vmem:[%s3 + $0x8] sm:$0xf]
        %v607 = vld [vmem:[%s3 + $0xc] sm:$0xff]
        %v608 = vld [vmem:[%s3 + $0x14] sm:$0xf]
        %v609 = vld [vmem:[%s3 + $0x18] sm:$0xff]
        %v610 = vld [vmem:[%s3 + $0x20] sm:$0xf]
        %v611 = vld [vmem:[%s3 + $0x24] sm:$0xff]
        %v612 = vld [vmem:[%s3 + $0x2c] sm:$0xf]
        %v613 = vld [vmem:[%s4] sm:$0x7]
        %v615 = vlaneseq
        %v616 = vshrl.u32 %v615, 7
        %v617 = vsub.s32 0, %v616
        %v618 = vrot.slane %v613, %v617
        %v619 = vlaneseq
        %v620 = vshrl.u32 %v619, 7
        %v621 = vsub.s32 1, %v620
        %v622 = vrot.slane %v613, %v621
        %v623 = vlaneseq
        %v624 = vshrl.u32 %v623, 7
        %v625 = vsub.s32 2, %v624
        %v626 = vrot.slane %v613, %v625
        %v638 = vunpack.c.l.b16 %v605
        %v639 = vunpack.c.h.b16 %v605
        %v640 = vunpack.c.l.b16 %v606
        %v641 = vunpack.c.l.b16 %v607
        %v642 = vunpack.c.h.b16 %v607
        %v643 = vunpack.c.l.b16 %v608
        %v644 = vunpack.c.l.b16 %v609
        %v645 = vunpack.c.h.b16 %v609
        %v646 = vunpack.c.l.b16 %v610
        %v647 = vunpack.c.l.b16 %v611
        %v648 = vunpack.c.h.b16 %v611
        %v649 = vunpack.c.l.b16 %v612
        %v650 = vpack.c.b16 %v641, %v638
        %v651 = vpack.c.b16 %v642, %v639
        %v652 = vpack.c.b16 %v643, %v640
        %v653 = vpack.c.b16 %v647, %v644
        %v654 = vpack.c.b16 %v648, %v645
        %v655 = vpack.c.b16 %v649, %v646
        %v663 = vsel %vm573, %v604, 0
        %665 = vmatprep.subr.bf16.mxu0 %v651
        %666 = vmatpush1.bf16.msra.mxu0 %v650
        %667 = vmatprep.subr.bf16.mxu0 %v654
        %668 = vmatpush1.bf16.msra.mxu0 %v653
        %669 = vmatprep.subr.bf16.mxu0 0
        %670 = vmatpush1.bf16.msra.mxu0 0
        %671 = vmatprep.subr.bf16.mxu0 0
        %672 = vmatpush1.bf16.msra.mxu0 0
        %673 = vmatprep.subr.bf16.mxu0 0
        %674 = vmatpush1.bf16.msra.mxu0 0
        %675 = vmatprep.subr.bf16.mxu0 0
        %676 = vmatpush1.bf16.msra.mxu0 0
        %677 = vmatprep.subr.bf16.mxu0 0
        %678 = vmatpush1.bf16.msra.mxu0 0
        %679 = vmatprep.subr.bf16.mxu0 0
        %680 = vmatpush1.bf16.msra.mxu0 0
        %681 = vmatprep.subr.bf16.mxu0 0
        %682 = vmatpush1.bf16.msra.mxu0 0
        %683 = vmatprep.subr.bf16.mxu0 0
        %684 = vmatpush1.bf16.msra.mxu0 0
        %685 = vmatprep.subr.bf16.mxu0 0
        %686 = vmatpush1.bf16.msra.mxu0 0
        %687 = vmatprep.subr.bf16.mxu0 0
        %688 = vmatpush1.bf16.msra.mxu0 0
        %689 = vmatprep.subr.bf16.mxu0 0
        %690 = vmatpush1.bf16.msra.mxu0 0
        %691 = vmatprep.subr.bf16.mxu0 0
        %692 = vmatpush1.bf16.msra.mxu0 0
        %693 = vmatprep.subr.bf16.mxu0 0
        %694 = vmatpush1.bf16.msra.mxu0 0
        %695 = vmatprep.subr.bf16.mxu0 0
        %696 = vmatpush1.bf16.msra.mxu0 0
        %697 = vmatprep.mubr.bf16.mxu0 0
        %698 = vmatmul.mubr.bf16.gmra.mrb[0].mxu0 %v663
        %v699 = vpop.f32.mrb[0].mxu0
        %v700 = vadd.f32 %v618, %v699
        %v701 = vpop.f32.mrb[0].mxu0
        %v702 = vadd.f32 %v622, %v701
        %v703 = vpop.f32.mrb[0].mxu0
        %v704 = vpop.f32.mrb[0].mxu0
        %705 = vdwg.mxu0
        %706 = vmatprep.subr.bf16.mxu0 0
        %707 = vmatpush1.bf16.msra.mxu0 %v652
        %708 = vmatprep.subr.bf16.mxu0 0
        %709 = vmatpush1.bf16.msra.mxu0 %v655
        %710 = vmatprep.subr.bf16.mxu0 0
        %711 = vmatpush1.bf16.msra.mxu0 0
        %712 = vmatprep.subr.bf16.mxu0 0
        %713 = vmatpush1.bf16.msra.mxu0 0
        %714 = vmatprep.subr.bf16.mxu0 0
        %715 = vmatpush1.bf16.msra.mxu0 0
        %716 = vmatprep.subr.bf16.mxu0 0
        %717 = vmatpush1.bf16.msra.mxu0 0
        %718 = vmatprep.subr.bf16.mxu0 0
        %719 = vmatpush1.bf16.msra.mxu0 0
        %720 = vmatprep.subr.bf16.mxu0 0
        %721 = vmatpush1.bf16.msra.mxu0 0
        %722 = vmatprep.subr.bf16.mxu0 0
        %723 = vmatpush1.bf16.msra.mxu0 0
        %724 = vmatprep.subr.bf16.mxu0 0
        %725 = vmatpush1.bf16.msra.mxu0 0
        %726 = vmatprep.subr.bf16.mxu0 0
        %727 = vmatpush1.bf16.msra.mxu0 0
        %728 = vmatprep.subr.bf16.mxu0 0
        %729 = vmatpush1.bf16.msra.mxu0 0
        %730 = vmatprep.subr.bf16.mxu0 0
        %731 = vmatpush1.bf16.msra.mxu0 0
        %732 = vmatprep.subr.bf16.mxu0 0
        %733 = vmatpush1.bf16.msra.mxu0 0
        %734 = vmatprep.subr.bf16.mxu0 0
        %735 = vmatpush1.bf16.msra.mxu0 0
        %736 = vmatprep.subr.bf16.mxu0 0
        %737 = vmatpush1.bf16.msra.mxu0 0
        %738 = vmatprep.mubr.bf16.mxu0 0
        %739 = vmatmul.mubr.bf16.gmra.mrb[0].mxu0 %v663
        %v740 = vpop.f32.mrb[0].mxu0
        %v741 = vadd.f32 %v626, %v740
        %v742 = vpop.f32.mrb[0].mxu0
        %v743 = vpop.f32.mrb[0].mxu0
        %v744 = vpop.f32.mrb[0].mxu0
        %745 = vdwg.mxu0
        %v746 = vld [vmem:[%s5] sm:$0xf]
        %v747 = vld [vmem:[%s5 + $0x4] sm:$0xf]
        %v748 = vld [vmem:[%s5 + $0x8] sm:$0xf]
        %v749 = vld [vmem:[%s5 + $0xc] sm:$0xf]
        %v750 = vld [vmem:[%s5 + $0x10] sm:$0xf]
        %v751 = vld [vmem:[%s5 + $0x14] sm:$0xf]
        %v752 = vld [vmem:[%s5 + $0x18] sm:$0xf]
        %v753 = vld [vmem:[%s5 + $0x1c] sm:$0xf]
        %v754 = vld [vmem:[%s5 + $0x20] sm:$0xf]
        %v755 = vld [vmem:[%s5 + $0x24] sm:$0xf]
        %v756 = vld [vmem:[%s5 + $0x28] sm:$0xf]
        %v757 = vld [vmem:[%s5 + $0x2c] sm:$0xf]
        %v758 = vld [vmem:[%s5 + $0x30] sm:$0xf]
        %v759 = vld [vmem:[%s5 + $0x34] sm:$0xf]
        %v760 = vld [vmem:[%s5 + $0x38] sm:$0xf]
        %v761 = vld [vmem:[%s5 + $0x3c] sm:$0xf]
        %v762 = vld [vmem:[%s5 + $0x40] sm:$0xf]
        %v763 = vld [vmem:[%s5 + $0x44] sm:$0xf]
        %v764 = vld [vmem:[%s5 + $0x48] sm:$0xf]
        %v765 = vld [vmem:[%s5 + $0x4c] sm:$0xf]
        %v766 = vld [vmem:[%s5 + $0x50] sm:$0xf]
        %v767 = vld [vmem:[%s5 + $0x54] sm:$0xf]
        %v768 = vld [vmem:[%s5 + $0x58] sm:$0xf]
        %v769 = vld [vmem:[%s5 + $0x5c] sm:$0xf]
        %v770 = vld [vmem:[%s5 + $0x60] sm:$0xf]
        %v771 = vld [vmem:[%s5 + $0x64] sm:$0xf]
        %v772 = vld [vmem:[%s5 + $0x68] sm:$0xf]
        %v773 = vld [vmem:[%s5 + $0x6c] sm:$0xf]
        %v774 = vld [vmem:[%s5 + $0x70] sm:$0xf]
        %v775 = vld [vmem:[%s5 + $0x74] sm:$0xf]
        %v776 = vld [vmem:[%s5 + $0x78] sm:$0xf]
        %v777 = vld [vmem:[%s5 + $0x7c] sm:$0xf]
        %v778 = vld [vmem:[%s5 + $0x80] sm:$0xf]
        %v779 = vld [vmem:[%s5 + $0x84] sm:$0xf]
        %v780 = vld [vmem:[%s5 + $0x88] sm:$0xf]
        %v781 = vld [vmem:[%s5 + $0x8c] sm:$0xf]
        %v782 = vld [vmem:[%s5 + $0x90] sm:$0xf]
        %v783 = vld [vmem:[%s5 + $0x94] sm:$0xf]
        %v784 = vld [vmem:[%s5 + $0x98] sm:$0xf]
        %v785 = vld [vmem:[%s5 + $0x9c] sm:$0xf]
        %v786 = vld [vmem:[%s5 + $0xa0] sm:$0xf]
        %v787 = vld [vmem:[%s5 + $0xa4] sm:$0xf]
        %v788 = vld [vmem:[%s5 + $0xa8] sm:$0xf]
        %v789 = vld [vmem:[%s5 + $0xac] sm:$0xf]
        %v790 = vld [vmem:[%s5 + $0xb0] sm:$0xf]
        %v791 = vld [vmem:[%s5 + $0xb4] sm:$0xf]
        %v792 = vld [vmem:[%s5 + $0xb8] sm:$0xf]
        %v793 = vld [vmem:[%s5 + $0xbc] sm:$0xf]
        %v794 = vlaneseq
        %v795 = vand.u32 %v794, 127
        %v796 = vadd.s32 %v795, 128
        %v797 = vadd.s32 %v795, 256
        %vm798 = vcmp.lt.s32.totalorder %v795, 266
        %vm799 = vcmp.lt.s32.totalorder %v796, 266
        %vm800 = vcmp.lt.s32.totalorder %v797, 266
        %v801 = vmul.f32 %v700, 0.35355338
        %v802 = vpack.c.bf16 %v801, %v801
        %v851 = vunpack.c.l.b16 %v746
        %v852 = vunpack.c.l.b16 %v747
        %v853 = vunpack.c.l.b16 %v748
        %v854 = vunpack.c.l.b16 %v749
        %v855 = vunpack.c.l.b16 %v750
        %v856 = vunpack.c.l.b16 %v751
        %v857 = vunpack.c.l.b16 %v752
        %v858 = vunpack.c.l.b16 %v753
        %v859 = vunpack.c.l.b16 %v754
        %v860 = vunpack.c.l.b16 %v755
        %v861 = vunpack.c.l.b16 %v756
        %v862 = vunpack.c.l.b16 %v757
        %v863 = vunpack.c.l.b16 %v758
        %v864 = vunpack.c.l.b16 %v759
        %v865 = vunpack.c.l.b16 %v760
        %v866 = vunpack.c.l.b16 %v761
        %v867 = vunpack.c.l.b16 %v762
        %v868 = vunpack.c.l.b16 %v763
        %v869 = vunpack.c.l.b16 %v764
        %v870 = vunpack.c.l.b16 %v765
        %v871 = vunpack.c.l.b16 %v766
        %v872 = vunpack.c.l.b16 %v767
        %v873 = vunpack.c.l.b16 %v768
        %v874 = vunpack.c.l.b16 %v769
        %v875 = vunpack.c.l.b16 %v770
        %v876 = vunpack.c.l.b16 %v771
        %v877 = vunpack.c.l.b16 %v772
        %v878 = vunpack.c.l.b16 %v773
        %v879 = vunpack.c.l.b16 %v774
        %v880 = vunpack.c.l.b16 %v775
        %v881 = vunpack.c.l.b16 %v776
        %v882 = vunpack.c.l.b16 %v777
        %v883 = vunpack.c.l.b16 %v778
        %v884 = vunpack.c.l.b16 %v779
        %v885 = vunpack.c.l.b16 %v780
        %v886 = vunpack.c.l.b16 %v781
        %v887 = vunpack.c.l.b16 %v782
        %v888 = vunpack.c.l.b16 %v783
        %v889 = vunpack.c.l.b16 %v784
        %v890 = vunpack.c.l.b16 %v785
        %v891 = vunpack.c.l.b16 %v786
        %v892 = vunpack.c.l.b16 %v787
        %v893 = vunpack.c.l.b16 %v788
        %v894 = vunpack.c.l.b16 %v789
        %v895 = vunpack.c.l.b16 %v790
        %v896 = vunpack.c.l.b16 %v791
        %v897 = vunpack.c.l.b16 %v792
        %v898 = vunpack.c.l.b16 %v793
        %v899 = vpack.c.b16 %v852, %v851
        %v900 = vpack.c.b16 %v854, %v853
        %v901 = vpack.c.b16 %v856, %v855
        %v902 = vpack.c.b16 %v858, %v857
        %v903 = vpack.c.b16 %v860, %v859
        %v904 = vpack.c.b16 %v862, %v861
        %v905 = vpack.c.b16 %v864, %v863
        %v906 = vpack.c.b16 %v866, %v865
        %v907 = vpack.c.b16 %v868, %v867
        %v908 = vpack.c.b16 %v870, %v869
        %v909 = vpack.c.b16 %v872, %v871
        %v910 = vpack.c.b16 %v874, %v873
        %v911 = vpack.c.b16 %v876, %v875
        %v912 = vpack.c.b16 %v878, %v877
        %v913 = vpack.c.b16 %v880, %v879
        %v914 = vpack.c.b16 %v882, %v881
        %v915 = vpack.c.b16 %v884, %v883
        %v916 = vpack.c.b16 %v886, %v885
        %v917 = vpack.c.b16 %v888, %v887
        %v918 = vpack.c.b16 %v890, %v889
        %v919 = vpack.c.b16 %v892, %v891
        %v920 = vpack.c.b16 %v894, %v893
        %v921 = vpack.c.b16 %v896, %v895
        %v922 = vpack.c.b16 %v898, %v897
        %vm923 = vcmask 523264
        %v925 = vsel %vm923, %v802, 0
        %v928 = vsel %vm923, %v899, 0
        %v931 = vsel %vm923, %v900, 0
        %v934 = vsel %vm923, %v901, 0
        %v937 = vsel %vm923, %v902, 0
        %v940 = vsel %vm923, %v903, 0
        %v943 = vsel %vm923, %v904, 0
        %v946 = vsel %vm923, %v905, 0
        %v949 = vsel %vm923, %v906, 0
        %v952 = vsel %vm923, %v907, 0
        %v955 = vsel %vm923, %v908, 0
        %v958 = vsel %vm923, %v909, 0
        %v961 = vsel %vm923, %v910, 0
        %v964 = vsel %vm923, %v911, 0
        %v967 = vsel %vm923, %v912, 0
        %v970 = vsel %vm923, %v913, 0
        %v973 = vsel %vm923, %v914, 0
        %v976 = vsel %vm923, %v915, 0
        %v979 = vsel %vm923, %v916, 0
        %v982 = vsel %vm923, %v917, 0
        %v985 = vsel %vm923, %v918, 0
        %v988 = vsel %vm923, %v919, 0
        %v991 = vsel %vm923, %v920, 0
        %v994 = vsel %vm923, %v921, 0
        %v997 = vsel %vm923, %v922, 0
        %999 = vmatprep.subr.bf16.mxu0 0
        %1000 = vmatpush1.bf16.xpose.msra.mxu0 %v928
        %1001 = vmatprep.subr.bf16.mxu0 0
        %1002 = vmatpush1.bf16.xpose.msra.mxu0 %v931
        %1003 = vmatprep.subr.bf16.mxu0 0
        %1004 = vmatpush1.bf16.xpose.msra.mxu0 %v934
        %1005 = vmatprep.subr.bf16.mxu0 0
        %1006 = vmatpush1.bf16.xpose.msra.mxu0 %v937
        %1007 = vmatprep.subr.bf16.mxu0 0
        %1008 = vmatpush1.bf16.xpose.msra.mxu0 %v940
        %1009 = vmatprep.subr.bf16.mxu0 0
        %1010 = vmatpush1.bf16.xpose.msra.mxu0 %v943
        %1011 = vmatprep.subr.bf16.mxu0 0
        %1012 = vmatpush1.bf16.xpose.msra.mxu0 %v946
        %1013 = vmatprep.subr.bf16.mxu0 0
        %1014 = vmatpush1.bf16.xpose.msra.mxu0 %v949
        %1015 = vmatprep.subr.bf16.mxu0 0
        %1016 = vmatpush1.bf16.xpose.msra.mxu0 %v952
        %1017 = vmatprep.subr.bf16.mxu0 0
        %1018 = vmatpush1.bf16.xpose.msra.mxu0 %v955
        %1019 = vmatprep.subr.bf16.mxu0 0
        %1020 = vmatpush1.bf16.xpose.msra.mxu0 %v958
        %1021 = vmatprep.subr.bf16.mxu0 0
        %1022 = vmatpush1.bf16.xpose.msra.mxu0 %v961
        %1023 = vmatprep.subr.bf16.mxu0 0
        %1024 = vmatpush1.bf16.xpose.msra.mxu0 %v964
        %1025 = vmatprep.subr.bf16.mxu0 0
        %1026 = vmatpush1.bf16.xpose.msra.mxu0 %v967
        %1027 = vmatprep.subr.bf16.mxu0 0
        %1028 = vmatpush1.bf16.xpose.msra.mxu0 %v970
        %1029 = vmatprep.subr.bf16.mxu0 0
        %1030 = vmatpush1.bf16.xpose.msra.mxu0 %v973
        %1031 = vmatprep.mubr.bf16.mxu0 0
        %1032 = vmatmul.mubr.bf16.gmra.mrb[0].mxu0 %v925
        %v1033 = vpop.f32.mrb[0].mxu0
        %v1034 = vadd.f32 0.0, %v1033
        %v1035 = vpop.f32.mrb[0].mxu0
        %v1036 = vadd.f32 0.0, %v1035
        %v1037 = vpop.f32.mrb[0].mxu0
        %v1038 = vpop.f32.mrb[0].mxu0
        %1039 = vdwg.mxu0
        %1040 = vmatprep.subr.bf16.mxu0 0
        %1041 = vmatpush1.bf16.xpose.msra.mxu0 %v976
        %1042 = vmatprep.subr.bf16.mxu0 0
        %1043 = vmatpush1.bf16.xpose.msra.mxu0 %v979
        %1044 = vmatprep.subr.bf16.mxu0 0
        %1045 = vmatpush1.bf16.xpose.msra.mxu0 %v982
        %1046 = vmatprep.subr.bf16.mxu0 0
        %1047 = vmatpush1.bf16.xpose.msra.mxu0 %v985
        %1048 = vmatprep.subr.bf16.mxu0 0
        %1049 = vmatpush1.bf16.xpose.msra.mxu0 %v988
        %1050 = vmatprep.subr.bf16.mxu0 0
        %1051 = vmatpush1.bf16.xpose.msra.mxu0 %v991
        %1052 = vmatprep.subr.bf16.mxu0 0
        %1053 = vmatpush1.bf16.xpose.msra.mxu0 %v994
        %1054 = vmatprep.subr.bf16.mxu0 0
        %1055 = vmatpush1.bf16.xpose.msra.mxu0 %v997
        %1056 = vmatprep.subr.bf16.mxu0 0
        %1057 = vmatpush1.bf16.xpose.msra.mxu0 0
        %1058 = vmatprep.subr.bf16.mxu0 0
        %1059 = vmatpush1.bf16.xpose.msra.mxu0 0
        %1060 = vmatprep.subr.bf16.mxu0 0
        %1061 = vmatpush1.bf16.xpose.msra.mxu0 0
        %1062 = vmatprep.subr.bf16.mxu0 0
        %1063 = vmatpush1.bf16.xpose.msra.mxu0 0
        %1064 = vmatprep.subr.bf16.mxu0 0
        %1065 = vmatpush1.bf16.xpose.msra.mxu0 0
        %1066 = vmatprep.subr.bf16.mxu0 0
        %1067 = vmatpush1.bf16.xpose.msra.mxu0 0
        %1068 = vmatprep.subr.bf16.mxu0 0
        %1069 = vmatpush1.bf16.xpose.msra.mxu0 0
        %1070 = vmatprep.subr.bf16.mxu0 0
        %1071 = vmatpush1.bf16.xpose.msra.mxu0 0
        %1072 = vmatprep.mubr.bf16.mxu0 0
        %1073 = vmatmul.mubr.bf16.gmra.mrb[0].mxu0 %v925
        %v1074 = vpop.f32.mrb[0].mxu0
        %v1075 = vadd.f32 0.0, %v1074
        %v1076 = vpop.f32.mrb[0].mxu0
        %v1077 = vpop.f32.mrb[0].mxu0
        %v1078 = vpop.f32.mrb[0].mxu0
        %1079 = vdwg.mxu0
        %v1080 = vmul.f32 %v702, 0.35355338
        %v1081 = vpack.c.bf16 %v1080, %v1080
        %v1083 = vsel %vm923, %v1081, 0
        %1085 = vmatprep.subr.bf16.mxu0 0
        %1086 = vmatpush1.bf16.xpose.msra.mxu0 %v928
        %1087 = vmatprep.subr.bf16.mxu0 0
        %1088 = vmatpush1.bf16.xpose.msra.mxu0 %v931
        %1089 = vmatprep.subr.bf16.mxu0 0
        %1090 = vmatpush1.bf16.xpose.msra.mxu0 %v934
        %1091 = vmatprep.subr.bf16.mxu0 0
        %1092 = vmatpush1.bf16.xpose.msra.mxu0 %v937
        %1093 = vmatprep.subr.bf16.mxu0 0
        %1094 = vmatpush1.bf16.xpose.msra.mxu0 %v940
        %1095 = vmatprep.subr.bf16.mxu0 0
        %1096 = vmatpush1.bf16.xpose.msra.mxu0 %v943
        %1097 = vmatprep.subr.bf16.mxu0 0
        %1098 = vmatpush1.bf16.xpose.msra.mxu0 %v946
        %1099 = vmatprep.subr.bf16.mxu0 0
        %1100 = vmatpush1.bf16.xpose.msra.mxu0 %v949
        %1101 = vmatprep.subr.bf16.mxu0 0
        %1102 = vmatpush1.bf16.xpose.msra.mxu0 %v952
        %1103 = vmatprep.subr.bf16.mxu0 0
        %1104 = vmatpush1.bf16.xpose.msra.mxu0 %v955
        %1105 = vmatprep.subr.bf16.mxu0 0
        %1106 = vmatpush1.bf16.xpose.msra.mxu0 %v958
        %1107 = vmatprep.subr.bf16.mxu0 0
        %1108 = vmatpush1.bf16.xpose.msra.mxu0 %v961
        %1109 = vmatprep.subr.bf16.mxu0 0
        %1110 = vmatpush1.bf16.xpose.msra.mxu0 %v964
        %1111 = vmatprep.subr.bf16.mxu0 0
        %1112 = vmatpush1.bf16.xpose.msra.mxu0 %v967
        %1113 = vmatprep.subr.bf16.mxu0 0
        %1114 = vmatpush1.bf16.xpose.msra.mxu0 %v970
        %1115 = vmatprep.subr.bf16.mxu0 0
        %1116 = vmatpush1.bf16.xpose.msra.mxu0 %v973
        %1117 = vmatprep.mubr.bf16.mxu0 0
        %1118 = vmatmul.mubr.bf16.gmra.mrb[0].mxu0 %v1083
        %v1119 = vpop.f32.mrb[0].mxu0
        %v1120 = vadd.f32 0.0, %v1119
        %v1121 = vpop.f32.mrb[0].mxu0
        %v1122 = vadd.f32 0.0, %v1121
        %v1123 = vpop.f32.mrb[0].mxu0
        %v1124 = vpop.f32.mrb[0].mxu0
        %1125 = vdwg.mxu0
        %1126 = vmatprep.subr.bf16.mxu0 0
        %1127 = vmatpush1.bf16.xpose.msra.mxu0 %v976
        %1128 = vmatprep.subr.bf16.mxu0 0
        %1129 = vmatpush1.bf16.xpose.msra.mxu0 %v979
        %1130 = vmatprep.subr.bf16.mxu0 0
        %1131 = vmatpush1.bf16.xpose.msra.mxu0 %v982
        %1132 = vmatprep.subr.bf16.mxu0 0
        %1133 = vmatpush1.bf16.xpose.msra.mxu0 %v985
        %1134 = vmatprep.subr.bf16.mxu0 0
        %1135 = vmatpush1.bf16.xpose.msra.mxu0 %v988
        %1136 = vmatprep.subr.bf16.mxu0 0
        %1137 = vmatpush1.bf16.xpose.msra.mxu0 %v991
        %1138 = vmatprep.subr.bf16.mxu0 0
        %1139 = vmatpush1.bf16.xpose.msra.mxu0 %v994
        %1140 = vmatprep.subr.bf16.mxu0 0
        %1141 = vmatpush1.bf16.xpose.msra.mxu0 %v997
        %1142 = vmatprep.subr.bf16.mxu0 0
        %1143 = vmatpush1.bf16.xpose.msra.mxu0 0
        %1144 = vmatprep.subr.bf16.mxu0 0
        %1145 = vmatpush1.bf16.xpose.msra.mxu0 0
        %1146 = vmatprep.subr.bf16.mxu0 0
        %1147 = vmatpush1.bf16.xpose.msra.mxu0 0
        %1148 = vmatprep.subr.bf16.mxu0 0
        %1149 = vmatpush1.bf16.xpose.msra.mxu0 0
        %1150 = vmatprep.subr.bf16.mxu0 0
        %1151 = vmatpush1.bf16.xpose.msra.mxu0 0
        %1152 = vmatprep.subr.bf16.mxu0 0
        %1153 = vmatpush1.bf16.xpose.msra.mxu0 0
        %1154 = vmatprep.subr.bf16.mxu0 0
        %1155 = vmatpush1.bf16.xpose.msra.mxu0 0
        %1156 = vmatprep.subr.bf16.mxu0 0
        %1157 = vmatpush1.bf16.xpose.msra.mxu0 0
        %1158 = vmatprep.mubr.bf16.mxu0 0
        %1159 = vmatmul.mubr.bf16.gmra.mrb[0].mxu0 %v1083
        %v1160 = vpop.f32.mrb[0].mxu0
        %v1161 = vadd.f32 0.0, %v1160
        %v1162 = vpop.f32.mrb[0].mxu0
        %v1163 = vpop.f32.mrb[0].mxu0
        %v1164 = vpop.f32.mrb[0].mxu0
        %1165 = vdwg.mxu0
        %v1166 = vmul.f32 %v700, %v700
        %v1167 = vsel %vm923, %v1166, 0.0
        %1168 = vadd.xlane.f32.xlu0 %v1167
        %v1169 = vpop.xlane.xlu0 %1168
        %v1170 = vmul.f32 %v1169, 0.0625
        %v1171 = vmul.f32 %v702, %v702
        %v1172 = vsel %vm923, %v1171, 0.0
        %1173 = vadd.xlane.f32.xlu0 %v1172
        %v1174 = vpop.xlane.xlu0 %1173
        %v1175 = vmul.f32 %v1174, 0.0625
        %v1176 = vsel %vm798, 1, 0
        %v1177 = vsel %vm799, 1, 0
        %v1178 = vsel %vm800, 1, 0
        %vm1179 = vcmp.eq.s32.totalorder %v1176, 1
        %vm1180 = vcmp.eq.s32.totalorder %v1177, 1
        %vm1181 = vcmp.eq.s32.totalorder %v1178, 1
        %v1182 = vsel %vm1179, %v1034, -inf
        %v1183 = vsel %vm1180, %v1036, -inf
        %v1184 = vsel %vm1181, %v1075, -inf
        %v1185 = vmax.f32 %v1182, %v1183
        %v1186 = vmax.f32 %v1185, %v1184
        %1187 = vmax.xlane.f32.xlu0 %v1186
        %v1188 = vpop.xlane.xlu0 %1187
        %v1189 = vsub.f32 %v1034, %v1170
        %v1190 = vsub.f32 %v1036, %v1170
        %v1191 = vsub.f32 %v1075, %v1170
        %v1192 = vsub.f32 %v1189, %v1188
        %v1193 = vsub.f32 %v1190, %v1188
        %v1194 = vsub.f32 %v1191, %v1188
        %v1195 = vmul.f32 %v1192, 1.442695
        %v1196 = vpow.pop %v1195
        %v1197 = vmul.f32 %v1193, 1.442695
        %v1198 = vpow.pop %v1197
        %v1199 = vmul.f32 %v1194, 1.442695
        %v1200 = vpow.pop %v1199
        %v1201 = vadd.f32 %v1196, 0.0001
        %v1202 = vadd.f32 %v1198, 0.0001
        %v1203 = vadd.f32 %v1200, 0.0001
        %v1204 = vmul.f32 %v1201, 0.061313935
        %v1205 = vmul.f32 %v1202, 0.061313935
        %v1206 = vmul.f32 %v1203, 0.061313935
        %v1207 = vsel %vm1179, %v1204, 0.0
        %v1208 = vsel %vm1180, %v1205, 0.0
        %v1209 = vsel %vm1181, %v1206, 0.0
        %v1210 = vsub.f32 %v1120, %v1175
        %v1211 = vsub.f32 %v1122, %v1175
        %v1212 = vsub.f32 %v1161, %v1175
        %v1213 = vadd.f32 %v1210, 0.0001
        %v1214 = vadd.f32 %v1211, 0.0001
        %v1215 = vadd.f32 %v1212, 0.0001
        %v1216 = vmul.f32 %v1213, 1.442695
        %v1217 = vpow.pop %v1216
        %v1218 = vmul.f32 %v1214, 1.442695
        %v1219 = vpow.pop %v1218
        %v1220 = vmul.f32 %v1215, 1.442695
        %v1221 = vpow.pop %v1220
        %v1222 = vmul.f32 %v1217, 0.061313935
        %v1223 = vmul.f32 %v1219, 0.061313935
        %v1224 = vmul.f32 %v1221, 0.061313935
        %v1225 = vsel %vm1179, %v1222, 0.0
        %v1226 = vsel %vm1180, %v1223, 0.0
        %v1227 = vsel %vm1181, %v1224, 0.0
        %v1228 = vpack.c.bf16 %v1225, %v1225
        %v1229 = vpack.c.bf16 %v1226, %v1226
        %v1230 = vpack.c.bf16 %v1227, %v1227
        %v1231 = vpack.c.bf16 %v741, %v741
        %1232 = vxpose.xlu0.c.b16.start [1/8] %v1228, 128
        %1233 = vxpose.xlu0.c.b16.cont [2/8] 0, 128
        %1234 = vxpose.xlu0.c.b16.cont [3/8] 0, 128
        %1235 = vxpose.xlu0.c.b16.cont [4/8] 0, 128
        %1236 = vxpose.xlu0.c.b16.cont [5/8] 0, 128
        %1237 = vxpose.xlu0.c.b16.cont [6/8] 0, 128
        %1238 = vxpose.xlu0.c.b16.cont [7/8] 0, 128
        %1239 = vxpose.xlu0.c.b16.end [8/8] 0, 128
        %v1240 = vpop.trf.xlu0
        %v1241 = vpop.trf.xlu0
        %v1242 = vpop.trf.xlu0
        %v1243 = vpop.trf.xlu0
        %v1244 = vpop.trf.xlu0
        %v1245 = vpop.trf.xlu0
        %v1246 = vpop.trf.xlu0
        %v1247 = vpop.trf.xlu0
        %1248 = vxpose.xlu0.c.b16.start [1/8] %v1229, 128
        %1249 = vxpose.xlu0.c.b16.cont [2/8] 0, 128
        %1250 = vxpose.xlu0.c.b16.cont [3/8] 0, 128
        %1251 = vxpose.xlu0.c.b16.cont [4/8] 0, 128
        %1252 = vxpose.xlu0.c.b16.cont [5/8] 0, 128
        %1253 = vxpose.xlu0.c.b16.cont [6/8] 0, 128
        %1254 = vxpose.xlu0.c.b16.cont [7/8] 0, 128
        %1255 = vxpose.xlu0.c.b16.end [8/8] 0, 128
        %v1256 = vpop.trf.xlu0
        %v1257 = vpop.trf.xlu0
        %v1258 = vpop.trf.xlu0
        %v1259 = vpop.trf.xlu0
        %v1260 = vpop.trf.xlu0
        %v1261 = vpop.trf.xlu0
        %v1262 = vpop.trf.xlu0
        %v1263 = vpop.trf.xlu0
        %1264 = vxpose.xlu0.c.b16.start [1/8] %v1230, 128
        %1265 = vxpose.xlu0.c.b16.cont [2/8] 0, 128
        %1266 = vxpose.xlu0.c.b16.cont [3/8] 0, 128
        %1267 = vxpose.xlu0.c.b16.cont [4/8] 0, 128
        %1268 = vxpose.xlu0.c.b16.cont [5/8] 0, 128
        %1269 = vxpose.xlu0.c.b16.cont [6/8] 0, 128
        %1270 = vxpose.xlu0.c.b16.cont [7/8] 0, 128
        %1271 = vxpose.xlu0.c.b16.end [8/8] 0, 128
        %v1272 = vpop.trf.xlu0
        %v1273 = vpop.trf.xlu0
        %v1274 = vpop.trf.xlu0
        %v1275 = vpop.trf.xlu0
        %v1276 = vpop.trf.xlu0
        %v1277 = vpop.trf.xlu0
        %v1278 = vpop.trf.xlu0
        %v1279 = vpop.trf.xlu0
        %vm1280 = vcmask 64512
        %v1282 = vsel %vm1280, %v1240, 0
        %v1285 = vsel %vm1280, %v1241, 0
        %v1288 = vsel %vm1280, %v1242, 0
        %v1291 = vsel %vm1280, %v1243, 0
        %v1294 = vsel %vm1280, %v1244, 0
        %v1297 = vsel %vm1280, %v1245, 0
        %v1300 = vsel %vm1280, %v1246, 0
        %v1303 = vsel %vm1280, %v1247, 0
        %v1306 = vsel %vm1280, %v1256, 0
        %v1309 = vsel %vm1280, %v1257, 0
        %v1312 = vsel %vm1280, %v1258, 0
        %v1315 = vsel %vm1280, %v1259, 0
        %v1318 = vsel %vm1280, %v1260, 0
        %v1321 = vsel %vm1280, %v1261, 0
        %v1324 = vsel %vm1280, %v1262, 0
        %v1327 = vsel %vm1280, %v1263, 0
        %v1330 = vsel %vm1280, %v1272, 0
        %v1333 = vsel %vm1280, %v1273, 0
        %v1336 = vsel %vm1280, %v1274, 0
        %v1339 = vsel %vm1280, %v1275, 0
        %v1342 = vsel %vm1280, %v1276, 0
        %v1345 = vsel %vm1280, %v1277, 0
        %v1348 = vsel %vm1280, %v1278, 0
        %v1351 = vsel %vm1280, %v1279, 0
        %vm1353 = vcmask 1043456
        %v1355 = vsel %vm1353, %v1231, 0
        %1357 = vmatprep.subr.bf16.mxu0 0
        %1358 = vmatpush1.bf16.msra.mxu0 %v1355
        %1359 = vmatprep.subr.bf16.mxu0 0
        %1360 = vmatpush1.bf16.msra.mxu0 0
        %1361 = vmatprep.subr.bf16.mxu0 0
        %1362 = vmatpush1.bf16.msra.mxu0 0
        %1363 = vmatprep.subr.bf16.mxu0 0
        %1364 = vmatpush1.bf16.msra.mxu0 0
        %1365 = vmatprep.subr.bf16.mxu0 0
        %1366 = vmatpush1.bf16.msra.mxu0 0
        %1367 = vmatprep.subr.bf16.mxu0 0
        %1368 = vmatpush1.bf16.msra.mxu0 0
        %1369 = vmatprep.subr.bf16.mxu0 0
        %1370 = vmatpush1.bf16.msra.mxu0 0
        %1371 = vmatprep.subr.bf16.mxu0 0
        %1372 = vmatpush1.bf16.msra.mxu0 0
        %1373 = vmatprep.subr.bf16.mxu0 0
        %1374 = vmatpush1.bf16.msra.mxu0 0
        %1375 = vmatprep.subr.bf16.mxu0 0
        %1376 = vmatpush1.bf16.msra.mxu0 0
        %1377 = vmatprep.subr.bf16.mxu0 0
        %1378 = vmatpush1.bf16.msra.mxu0 0
        %1379 = vmatprep.subr.bf16.mxu0 0
        %1380 = vmatpush1.bf16.msra.mxu0 0
        %1381 = vmatprep.subr.bf16.mxu0 0
        %1382 = vmatpush1.bf16.msra.mxu0 0
        %1383 = vmatprep.subr.bf16.mxu0 0
        %1384 = vmatpush1.bf16.msra.mxu0 0
        %1385 = vmatprep.subr.bf16.mxu0 0
        %1386 = vmatpush1.bf16.msra.mxu0 0
        %1387 = vmatprep.subr.bf16.mxu0 0
        %1388 = vmatpush1.bf16.msra.mxu0 0
        %1389 = vmatprep.mubr.bf16.mxu0 0
        %1390 = vmatmul.mubr.bf16.gmra.mrb[0].mxu0 %v1282
        %v1391 = vpop.f32.mrb[0].mxu0
        %v1392 = vadd.f32 0.0, %v1391
        %v1393 = vpop.f32.mrb[0].mxu0
        %v1394 = vpop.f32.mrb[0].mxu0
        %v1395 = vadd.f32 0.0, %v1394
        %v1396 = vpop.f32.mrb[0].mxu0
        %1397 = vmatprep.mubr.bf16.mxu0 0
        %1398 = vmatmul.mubr.bf16.gmra.mrb[0].mxu0 %v1285
        %v1399 = vpop.f32.mrb[0].mxu0
        %v1400 = vadd.f32 0.0, %v1399
        %v1401 = vpop.f32.mrb[0].mxu0
        %v1402 = vpop.f32.mrb[0].mxu0
        %v1403 = vadd.f32 0.0, %v1402
        %v1404 = vpop.f32.mrb[0].mxu0
        %1405 = vmatprep.mubr.bf16.mxu0 0
        %1406 = vmatmul.mubr.bf16.gmra.mrb[0].mxu0 %v1288
        %v1407 = vpop.f32.mrb[0].mxu0
        %v1408 = vadd.f32 0.0, %v1407
        %v1409 = vpop.f32.mrb[0].mxu0
        %v1410 = vpop.f32.mrb[0].mxu0
        %v1411 = vadd.f32 0.0, %v1410
        %v1412 = vpop.f32.mrb[0].mxu0
        %1413 = vmatprep.mubr.bf16.mxu0 0
        %1414 = vmatmul.mubr.bf16.gmra.mrb[0].mxu0 %v1291
        %v1415 = vpop.f32.mrb[0].mxu0
        %v1416 = vadd.f32 0.0, %v1415
        %v1417 = vpop.f32.mrb[0].mxu0
        %v1418 = vpop.f32.mrb[0].mxu0
        %v1419 = vadd.f32 0.0, %v1418
        %v1420 = vpop.f32.mrb[0].mxu0
        %1421 = vmatprep.mubr.bf16.mxu0 0
        %1422 = vmatmul.mubr.bf16.gmra.mrb[0].mxu0 %v1294
        %v1423 = vpop.f32.mrb[0].mxu0
        %v1424 = vadd.f32 0.0, %v1423
        %v1425 = vpop.f32.mrb[0].mxu0
        %v1426 = vpop.f32.mrb[0].mxu0
        %v1427 = vadd.f32 0.0, %v1426
        %v1428 = vpop.f32.mrb[0].mxu0
        %1429 = vmatprep.mubr.bf16.mxu0 0
        %1430 = vmatmul.mubr.bf16.gmra.mrb[0].mxu0 %v1297
        %v1431 = vpop.f32.mrb[0].mxu0
        %v1432 = vadd.f32 0.0, %v1431
        %v1433 = vpop.f32.mrb[0].mxu0
        %v1434 = vpop.f32.mrb[0].mxu0
        %v1435 = vadd.f32 0.0, %v1434
        %v1436 = vpop.f32.mrb[0].mxu0
        %1437 = vmatprep.mubr.bf16.mxu0 0
        %1438 = vmatmul.mubr.bf16.gmra.mrb[0].mxu0 %v1300
        %v1439 = vpop.f32.mrb[0].mxu0
        %v1440 = vadd.f32 0.0, %v1439
        %v1441 = vpop.f32.mrb[0].mxu0
        %v1442 = vpop.f32.mrb[0].mxu0
        %v1443 = vadd.f32 0.0, %v1442
        %v1444 = vpop.f32.mrb[0].mxu0
        %1445 = vmatprep.mubr.bf16.mxu0 0
        %1446 = vmatmul.mubr.bf16.gmra.mrb[0].mxu0 %v1303
        %v1447 = vpop.f32.mrb[0].mxu0
        %v1448 = vadd.f32 0.0, %v1447
        %v1449 = vpop.f32.mrb[0].mxu0
        %v1450 = vpop.f32.mrb[0].mxu0
        %v1451 = vadd.f32 0.0, %v1450
        %v1452 = vpop.f32.mrb[0].mxu0
        %1453 = vmatprep.mubr.bf16.mxu0 0
        %1454 = vmatmul.mubr.bf16.gmra.mrb[0].mxu0 %v1306
        %v1455 = vpop.f32.mrb[0].mxu0
        %v1456 = vadd.f32 0.0, %v1455
        %v1457 = vpop.f32.mrb[0].mxu0
        %v1458 = vpop.f32.mrb[0].mxu0
        %v1459 = vadd.f32 0.0, %v1458
        %v1460 = vpop.f32.mrb[0].mxu0
        %1461 = vmatprep.mubr.bf16.mxu0 0
        %1462 = vmatmul.mubr.bf16.gmra.mrb[0].mxu0 %v1309
        %v1463 = vpop.f32.mrb[0].mxu0
        %v1464 = vadd.f32 0.0, %v1463
        %v1465 = vpop.f32.mrb[0].mxu0
        %v1466 = vpop.f32.mrb[0].mxu0
        %v1467 = vadd.f32 0.0, %v1466
        %v1468 = vpop.f32.mrb[0].mxu0
        %1469 = vmatprep.mubr.bf16.mxu0 0
        %1470 = vmatmul.mubr.bf16.gmra.mrb[0].mxu0 %v1312
        %v1471 = vpop.f32.mrb[0].mxu0
        %v1472 = vadd.f32 0.0, %v1471
        %v1473 = vpop.f32.mrb[0].mxu0
        %v1474 = vpop.f32.mrb[0].mxu0
        %v1475 = vadd.f32 0.0, %v1474
        %v1476 = vpop.f32.mrb[0].mxu0
        %1477 = vmatprep.mubr.bf16.mxu0 0
        %1478 = vmatmul.mubr.bf16.gmra.mrb[0].mxu0 %v1315
        %v1479 = vpop.f32.mrb[0].mxu0
        %v1480 = vadd.f32 0.0, %v1479
        %v1481 = vpop.f32.mrb[0].mxu0
        %v1482 = vpop.f32.mrb[0].mxu0
        %v1483 = vadd.f32 0.0, %v1482
        %v1484 = vpop.f32.mrb[0].mxu0
        %1485 = vmatprep.mubr.bf16.mxu0 0
        %1486 = vmatmul.mubr.bf16.gmra.mrb[0].mxu0 %v1318
        %v1487 = vpop.f32.mrb[0].mxu0
        %v1488 = vadd.f32 0.0, %v1487
        %v1489 = vpop.f32.mrb[0].mxu0
        %v1490 = vpop.f32.mrb[0].mxu0
        %v1491 = vadd.f32 0.0, %v1490
        %v1492 = vpop.f32.mrb[0].mxu0
        %1493 = vmatprep.mubr.bf16.mxu0 0
        %1494 = vmatmul.mubr.bf16.gmra.mrb[0].mxu0 %v1321
        %v1495 = vpop.f32.mrb[0].mxu0
        %v1496 = vadd.f32 0.0, %v1495
        %v1497 = vpop.f32.mrb[0].mxu0
        %v1498 = vpop.f32.mrb[0].mxu0
        %v1499 = vadd.f32 0.0, %v1498
        %v1500 = vpop.f32.mrb[0].mxu0
        %1501 = vmatprep.mubr.bf16.mxu0 0
        %1502 = vmatmul.mubr.bf16.gmra.mrb[0].mxu0 %v1324
        %v1503 = vpop.f32.mrb[0].mxu0
        %v1504 = vadd.f32 0.0, %v1503
        %v1505 = vpop.f32.mrb[0].mxu0
        %v1506 = vpop.f32.mrb[0].mxu0
        %v1507 = vadd.f32 0.0, %v1506
        %v1508 = vpop.f32.mrb[0].mxu0
        %1509 = vmatprep.mubr.bf16.mxu0 0
        %1510 = vmatmul.mubr.bf16.gmra.mrb[0].mxu0 %v1327
        %v1511 = vpop.f32.mrb[0].mxu0
        %v1512 = vadd.f32 0.0, %v1511
        %v1513 = vpop.f32.mrb[0].mxu0
        %v1514 = vpop.f32.mrb[0].mxu0
        %v1515 = vadd.f32 0.0, %v1514
        %v1516 = vpop.f32.mrb[0].mxu0
        %1517 = vmatprep.mubr.bf16.mxu0 0
        %1518 = vmatmul.mubr.bf16.gmra.mrb[0].mxu0 %v1330
        %v1519 = vpop.f32.mrb[0].mxu0
        %v1520 = vadd.f32 0.0, %v1519
        %v1521 = vpop.f32.mrb[0].mxu0
        %v1522 = vpop.f32.mrb[0].mxu0
        %v1523 = vadd.f32 0.0, %v1522
        %v1524 = vpop.f32.mrb[0].mxu0
        %1525 = vmatprep.mubr.bf16.mxu0 0
        %1526 = vmatmul.mubr.bf16.gmra.mrb[0].mxu0 %v1333
        %v1527 = vpop.f32.mrb[0].mxu0
        %v1528 = vadd.f32 0.0, %v1527
        %v1529 = vpop.f32.mrb[0].mxu0
        %v1530 = vpop.f32.mrb[0].mxu0
        %v1531 = vadd.f32 0.0, %v1530
        %v1532 = vpop.f32.mrb[0].mxu0
        %1533 = vmatprep.mubr.bf16.mxu0 0
        %1534 = vmatmul.mubr.bf16.gmra.mrb[0].mxu0 %v1336
        %v1535 = vpop.f32.mrb[0].mxu0
        %v1536 = vadd.f32 0.0, %v1535
        %v1537 = vpop.f32.mrb[0].mxu0
        %v1538 = vpop.f32.mrb[0].mxu0
        %v1539 = vadd.f32 0.0, %v1538
        %v1540 = vpop.f32.mrb[0].mxu0
        %1541 = vmatprep.mubr.bf16.mxu0 0
        %1542 = vmatmul.mubr.bf16.gmra.mrb[0].mxu0 %v1339
        %v1543 = vpop.f32.mrb[0].mxu0
        %v1544 = vadd.f32 0.0, %v1543
        %v1545 = vpop.f32.mrb[0].mxu0
        %v1546 = vpop.f32.mrb[0].mxu0
        %v1547 = vadd.f32 0.0, %v1546
        %v1548 = vpop.f32.mrb[0].mxu0
        %1549 = vmatprep.mubr.bf16.mxu0 0
        %1550 = vmatmul.mubr.bf16.gmra.mrb[0].mxu0 %v1342
        %v1551 = vpop.f32.mrb[0].mxu0
        %v1552 = vadd.f32 0.0, %v1551
        %v1553 = vpop.f32.mrb[0].mxu0
        %v1554 = vpop.f32.mrb[0].mxu0
        %v1555 = vadd.f32 0.0, %v1554
        %v1556 = vpop.f32.mrb[0].mxu0
        %1557 = vmatprep.mubr.bf16.mxu0 0
        %1558 = vmatmul.mubr.bf16.gmra.mrb[0].mxu0 %v1345
        %v1559 = vpop.f32.mrb[0].mxu0
        %v1560 = vadd.f32 0.0, %v1559
        %v1561 = vpop.f32.mrb[0].mxu0
        %v1562 = vpop.f32.mrb[0].mxu0
        %v1563 = vadd.f32 0.0, %v1562
        %v1564 = vpop.f32.mrb[0].mxu0
        %1565 = vmatprep.mubr.bf16.mxu0 0
        %1566 = vmatmul.mubr.bf16.gmra.mrb[0].mxu0 %v1348
        %v1567 = vpop.f32.mrb[0].mxu0
        %v1568 = vadd.f32 0.0, %v1567
        %v1569 = vpop.f32.mrb[0].mxu0
        %v1570 = vpop.f32.mrb[0].mxu0
        %v1571 = vadd.f32 0.0, %v1570
        %v1572 = vpop.f32.mrb[0].mxu0
        %1573 = vmatprep.mubr.bf16.mxu0 0
        %1574 = vmatmul.mubr.bf16.gmra.mrb[0].mxu0 %v1351
        %v1575 = vpop.f32.mrb[0].mxu0
        %v1576 = vadd.f32 0.0, %v1575
        %v1577 = vpop.f32.mrb[0].mxu0
        %v1578 = vpop.f32.mrb[0].mxu0
        %v1579 = vadd.f32 0.0, %v1578
        %v1580 = vpop.f32.mrb[0].mxu0
        %1581 = vdwg.mxu0
        %v1582 = vrot.slane %v1225, 4
        %v1583 = vadd.f32 %v1225, %v1582
        %v1584 = vrot.slane %v1583, 2
        %v1585 = vadd.f32 %v1583, %v1584
        %v1586 = vrot.slane %v1585, 1
        %v1587 = vadd.f32 %v1585, %v1586
        %v1588 = vrot.slane %v1226, 4
        %v1589 = vadd.f32 %v1226, %v1588
        %v1590 = vrot.slane %v1589, 2
        %v1591 = vadd.f32 %v1589, %v1590
        %v1592 = vrot.slane %v1591, 1
        %v1593 = vadd.f32 %v1591, %v1592
        %v1594 = vrot.slane %v1227, 4
        %v1595 = vadd.f32 %v1227, %v1594
        %v1596 = vrot.slane %v1595, 2
        %v1597 = vadd.f32 %v1595, %v1596
        %v1598 = vrot.slane %v1597, 1
        %v1599 = vadd.f32 %v1597, %v1598
        %v1600 = vmul.f32 %v1207, %v1587
        %v1601 = vmul.f32 %v1208, %v1593
        %v1602 = vmul.f32 %v1209, %v1599
        %v1603 = vadd.f32 %v1600, %v1601
        %v1604 = vadd.f32 %v1603, %v1602
        %1605 = vadd.xlane.f32.xlu0 %v1604
        %v1606 = vpop.xlane.xlu0 %1605
        %v1607 = vadd.f32 %v1606, 1e-08
        %v1608 = vrcp.pop %v1607
        %v1609 = vpack.c.bf16 %v1207, %v1207
        %v1610 = vpack.c.bf16 %v1208, %v1208
        %v1611 = vpack.c.bf16 %v1209, %v1209
        %v1612 = vpack.c.bf16 %v1395, %v1392
        %v1613 = vpack.c.bf16 %v1403, %v1400
        %v1614 = vpack.c.bf16 %v1411, %v1408
        %v1615 = vpack.c.bf16 %v1419, %v1416
        %v1616 = vpack.c.bf16 %v1427, %v1424
        %v1617 = vpack.c.bf16 %v1435, %v1432
        %v1618 = vpack.c.bf16 %v1443, %v1440
        %v1619 = vpack.c.bf16 %v1451, %v1448
        %v1620 = vpack.c.bf16 %v1459, %v1456
        %v1621 = vpack.c.bf16 %v1467, %v1464
        %v1622 = vpack.c.bf16 %v1475, %v1472
        %v1623 = vpack.c.bf16 %v1483, %v1480
        %v1624 = vpack.c.bf16 %v1491, %v1488
        %v1625 = vpack.c.bf16 %v1499, %v1496
        %v1626 = vpack.c.bf16 %v1507, %v1504
        %v1627 = vpack.c.bf16 %v1515, %v1512
        %v1628 = vpack.c.bf16 %v1523, %v1520
        %v1629 = vpack.c.bf16 %v1531, %v1528
        %v1630 = vpack.c.bf16 %v1539, %v1536
        %v1631 = vpack.c.bf16 %v1547, %v1544
        %v1632 = vpack.c.bf16 %v1555, %v1552
        %v1633 = vpack.c.bf16 %v1563, %v1560
        %v1634 = vpack.c.bf16 %v1571, %v1568
        %v1635 = vpack.c.bf16 %v1579, %v1576
        %1636 = vmatprep.subr.bf16.mxu0 0
        %1637 = vmatpush1.bf16.msra.mxu0 %v1612
        %1638 = vmatprep.subr.bf16.mxu0 0
        %1639 = vmatpush1.bf16.msra.mxu0 %v1613
        %1640 = vmatprep.subr.bf16.mxu0 0
        %1641 = vmatpush1.bf16.msra.mxu0 %v1614
        %1642 = vmatprep.subr.bf16.mxu0 0
        %1643 = vmatpush1.bf16.msra.mxu0 %v1615
        %1644 = vmatprep.subr.bf16.mxu0 0
        %1645 = vmatpush1.bf16.msra.mxu0 %v1616
        %1646 = vmatprep.subr.bf16.mxu0 0
        %1647 = vmatpush1.bf16.msra.mxu0 %v1617
        %1648 = vmatprep.subr.bf16.mxu0 0
        %1649 = vmatpush1.bf16.msra.mxu0 %v1618
        %1650 = vmatprep.subr.bf16.mxu0 0
        %1651 = vmatpush1.bf16.msra.mxu0 %v1619
        %1652 = vmatprep.subr.bf16.mxu0 0
        %1653 = vmatpush1.bf16.msra.mxu0 %v1620
        %1654 = vmatprep.subr.bf16.mxu0 0
        %1655 = vmatpush1.bf16.msra.mxu0 %v1621
        %1656 = vmatprep.subr.bf16.mxu0 0
        %1657 = vmatpush1.bf16.msra.mxu0 %v1622
        %1658 = vmatprep.subr.bf16.mxu0 0
        %1659 = vmatpush1.bf16.msra.mxu0 %v1623
        %1660 = vmatprep.subr.bf16.mxu0 0
        %1661 = vmatpush1.bf16.msra.mxu0 %v1624
        %1662 = vmatprep.subr.bf16.mxu0 0
        %1663 = vmatpush1.bf16.msra.mxu0 %v1625
        %1664 = vmatprep.subr.bf16.mxu0 0
        %1665 = vmatpush1.bf16.msra.mxu0 %v1626
        %1666 = vmatprep.subr.bf16.mxu0 0
        %1667 = vmatpush1.bf16.msra.mxu0 %v1627
        %1668 = vmatprep.mubr.bf16.mxu0 %v1610
        %1669 = vmatmul.mubr.bf16.gmra.mrb[0].mxu0 %v1609
        %v1670 = vpop.f32.mrb[0].mxu0
        %v1671 = vadd.f32 0.0, %v1670
        %v1672 = vpop.f32.mrb[0].mxu0
        %v1673 = vpop.f32.mrb[0].mxu0
        %v1674 = vpop.f32.mrb[0].mxu0
        %1675 = vdwg.mxu0
        %1676 = vmatprep.subr.bf16.mxu0 0
        %1677 = vmatpush1.bf16.msra.mxu0 %v1628
        %1678 = vmatprep.subr.bf16.mxu0 0
        %1679 = vmatpush1.bf16.msra.mxu0 %v1629
        %1680 = vmatprep.subr.bf16.mxu0 0
        %1681 = vmatpush1.bf16.msra.mxu0 %v1630
        %1682 = vmatprep.subr.bf16.mxu0 0
        %1683 = vmatpush1.bf16.msra.mxu0 %v1631
        %1684 = vmatprep.subr.bf16.mxu0 0
        %1685 = vmatpush1.bf16.msra.mxu0 %v1632
        %1686 = vmatprep.subr.bf16.mxu0 0
        %1687 = vmatpush1.bf16.msra.mxu0 %v1633
        %1688 = vmatprep.subr.bf16.mxu0 0
        %1689 = vmatpush1.bf16.msra.mxu0 %v1634
        %1690 = vmatprep.subr.bf16.mxu0 0
        %1691 = vmatpush1.bf16.msra.mxu0 %v1635
        %1692 = vmatprep.subr.bf16.mxu0 0
        %1693 = vmatpush1.bf16.msra.mxu0 0
        %1694 = vmatprep.subr.bf16.mxu0 0
        %1695 = vmatpush1.bf16.msra.mxu0 0
        %1696 = vmatprep.subr.bf16.mxu0 0
        %1697 = vmatpush1.bf16.msra.mxu0 0
        %1698 = vmatprep.subr.bf16.mxu0 0
        %1699 = vmatpush1.bf16.msra.mxu0 0
        %1700 = vmatprep.subr.bf16.mxu0 0
        %1701 = vmatpush1.bf16.msra.mxu0 0
        %1702 = vmatprep.subr.bf16.mxu0 0
        %1703 = vmatpush1.bf16.msra.mxu0 0
        %1704 = vmatprep.subr.bf16.mxu0 0
        %1705 = vmatpush1.bf16.msra.mxu0 0
        %1706 = vmatprep.subr.bf16.mxu0 0
        %1707 = vmatpush1.bf16.msra.mxu0 0
        %1708 = vmatprep.mubr.bf16.mxu0 0
        %1709 = vmatmul.mubr.bf16.gmra.mrb[0].mxu0 %v1611
        %v1710 = vpop.f32.mrb[0].mxu0
        %v1711 = vadd.f32 %v1671, %v1710
        %v1712 = vpop.f32.mrb[0].mxu0
        %v1713 = vpop.f32.mrb[0].mxu0
        %v1714 = vpop.f32.mrb[0].mxu0
        %1715 = vdwg.mxu0
        %v1716 = vmul.f32 %v1711, %v1608
        %v1717 = vpack.c.bf16 %v1716, %v1716
        %v1718 = vld [vmem:[%s6] sm:$0xf]
        %v1719 = vld [vmem:[%s6 + $0x4] sm:$0xf]
        %v1720 = vld [vmem:[%s6 + $0x8] sm:$0xf]
        %v1721 = vld [vmem:[%s6 + $0xc] sm:$0xf]
        %v1722 = vld [vmem:[%s6 + $0x10] sm:$0xf]
        %v1723 = vld [vmem:[%s6 + $0x14] sm:$0xf]
        %v1724 = vld [vmem:[%s6 + $0x18] sm:$0xf]
        %v1725 = vld [vmem:[%s6 + $0x1c] sm:$0xf]
        %1727 = vrot.lane.b32.xlu0 %v802, 64
        %v1728 = vpop.permute.xlu0 %1727
        %v1730 = vsel %vm923, %v1728, 0
        %1732 = vmatprep.subr.bf16.mxu0 0
        %1733 = vmatpush1.bf16.xpose.msra.mxu0 %v928
        %1734 = vmatprep.subr.bf16.mxu0 0
        %1735 = vmatpush1.bf16.xpose.msra.mxu0 %v931
        %1736 = vmatprep.subr.bf16.mxu0 0
        %1737 = vmatpush1.bf16.xpose.msra.mxu0 %v934
        %1738 = vmatprep.subr.bf16.mxu0 0
        %1739 = vmatpush1.bf16.xpose.msra.mxu0 %v937
        %1740 = vmatprep.subr.bf16.mxu0 0
        %1741 = vmatpush1.bf16.xpose.msra.mxu0 %v940
        %1742 = vmatprep.subr.bf16.mxu0 0
        %1743 = vmatpush1.bf16.xpose.msra.mxu0 %v943
        %1744 = vmatprep.subr.bf16.mxu0 0
        %1745 = vmatpush1.bf16.xpose.msra.mxu0 %v946
        %1746 = vmatprep.subr.bf16.mxu0 0
        %1747 = vmatpush1.bf16.xpose.msra.mxu0 %v949
        %1748 = vmatprep.subr.bf16.mxu0 0
        %1749 = vmatpush1.bf16.xpose.msra.mxu0 %v952
        %1750 = vmatprep.subr.bf16.mxu0 0
        %1751 = vmatpush1.bf16.xpose.msra.mxu0 %v955
        %1752 = vmatprep.subr.bf16.mxu0 0
        %1753 = vmatpush1.bf16.xpose.msra.mxu0 %v958
        %1754 = vmatprep.subr.bf16.mxu0 0
        %1755 = vmatpush1.bf16.xpose.msra.mxu0 %v961
        %1756 = vmatprep.subr.bf16.mxu0 0
        %1757 = vmatpush1.bf16.xpose.msra.mxu0 %v964
        %1758 = vmatprep.subr.bf16.mxu0 0
        %1759 = vmatpush1.bf16.xpose.msra.mxu0 %v967
        %1760 = vmatprep.subr.bf16.mxu0 0
        %1761 = vmatpush1.bf16.xpose.msra.mxu0 %v970
        %1762 = vmatprep.subr.bf16.mxu0 0
        %1763 = vmatpush1.bf16.xpose.msra.mxu0 %v973
        %1764 = vmatprep.mubr.bf16.mxu0 0
        %1765 = vmatmul.mubr.bf16.gmra.mrb[0].mxu0 %v1730
        %v1766 = vpop.f32.mrb[0].mxu0
        %v1767 = vadd.f32 0.0, %v1766
        %v1768 = vpop.f32.mrb[0].mxu0
        %v1769 = vadd.f32 0.0, %v1768
        %v1770 = vpop.f32.mrb[0].mxu0
        %v1771 = vpop.f32.mrb[0].mxu0
        %1772 = vdwg.mxu0
        %1773 = vmatprep.subr.bf16.mxu0 0
        %1774 = vmatpush1.bf16.xpose.msra.mxu0 %v976
        %1775 = vmatprep.subr.bf16.mxu0 0
        %1776 = vmatpush1.bf16.xpose.msra.mxu0 %v979
        %1777 = vmatprep.subr.bf16.mxu0 0
        %1778 = vmatpush1.bf16.xpose.msra.mxu0 %v982
        %1779 = vmatprep.subr.bf16.mxu0 0
        %1780 = vmatpush1.bf16.xpose.msra.mxu0 %v985
        %1781 = vmatprep.subr.bf16.mxu0 0
        %1782 = vmatpush1.bf16.xpose.msra.mxu0 %v988
        %1783 = vmatprep.subr.bf16.mxu0 0
        %1784 = vmatpush1.bf16.xpose.msra.mxu0 %v991
        %1785 = vmatprep.subr.bf16.mxu0 0
        %1786 = vmatpush1.bf16.xpose.msra.mxu0 %v994
        %1787 = vmatprep.subr.bf16.mxu0 0
        %1788 = vmatpush1.bf16.xpose.msra.mxu0 %v997
        %1789 = vmatprep.subr.bf16.mxu0 0
        %1790 = vmatpush1.bf16.xpose.msra.mxu0 0
        %1791 = vmatprep.subr.bf16.mxu0 0
        %1792 = vmatpush1.bf16.xpose.msra.mxu0 0
        %1793 = vmatprep.subr.bf16.mxu0 0
        %1794 = vmatpush1.bf16.xpose.msra.mxu0 0
        %1795 = vmatprep.subr.bf16.mxu0 0
        %1796 = vmatpush1.bf16.xpose.msra.mxu0 0
        %1797 = vmatprep.subr.bf16.mxu0 0
        %1798 = vmatpush1.bf16.xpose.msra.mxu0 0
        %1799 = vmatprep.subr.bf16.mxu0 0
        %1800 = vmatpush1.bf16.xpose.msra.mxu0 0
        %1801 = vmatprep.subr.bf16.mxu0 0
        %1802 = vmatpush1.bf16.xpose.msra.mxu0 0
        %1803 = vmatprep.subr.bf16.mxu0 0
        %1804 = vmatpush1.bf16.xpose.msra.mxu0 0
        %1805 = vmatprep.mubr.bf16.mxu0 0
        %1806 = vmatmul.mubr.bf16.gmra.mrb[0].mxu0 %v1730
        %v1807 = vpop.f32.mrb[0].mxu0
        %v1808 = vadd.f32 0.0, %v1807
        %v1809 = vpop.f32.mrb[0].mxu0
        %v1810 = vpop.f32.mrb[0].mxu0
        %v1811 = vpop.f32.mrb[0].mxu0
        %1812 = vdwg.mxu0
        %1814 = vrot.lane.b32.xlu0 %v1081, 64
        %v1815 = vpop.permute.xlu0 %1814
        %v1817 = vsel %vm923, %v1815, 0
        %1819 = vmatprep.subr.bf16.mxu0 0
        %1820 = vmatpush1.bf16.xpose.msra.mxu0 %v928
        %1821 = vmatprep.subr.bf16.mxu0 0
        %1822 = vmatpush1.bf16.xpose.msra.mxu0 %v931
        %1823 = vmatprep.subr.bf16.mxu0 0
        %1824 = vmatpush1.bf16.xpose.msra.mxu0 %v934
        %1825 = vmatprep.subr.bf16.mxu0 0
        %1826 = vmatpush1.bf16.xpose.msra.mxu0 %v937
        %1827 = vmatprep.subr.bf16.mxu0 0
        %1828 = vmatpush1.bf16.xpose.msra.mxu0 %v940
        %1829 = vmatprep.subr.bf16.mxu0 0
        %1830 = vmatpush1.bf16.xpose.msra.mxu0 %v943
        %1831 = vmatprep.subr.bf16.mxu0 0
        %1832 = vmatpush1.bf16.xpose.msra.mxu0 %v946
        %1833 = vmatprep.subr.bf16.mxu0 0
        %1834 = vmatpush1.bf16.xpose.msra.mxu0 %v949
        %1835 = vmatprep.subr.bf16.mxu0 0
        %1836 = vmatpush1.bf16.xpose.msra.mxu0 %v952
        %1837 = vmatprep.subr.bf16.mxu0 0
        %1838 = vmatpush1.bf16.xpose.msra.mxu0 %v955
        %1839 = vmatprep.subr.bf16.mxu0 0
        %1840 = vmatpush1.bf16.xpose.msra.mxu0 %v958
        %1841 = vmatprep.subr.bf16.mxu0 0
        %1842 = vmatpush1.bf16.xpose.msra.mxu0 %v961
        %1843 = vmatprep.subr.bf16.mxu0 0
        %1844 = vmatpush1.bf16.xpose.msra.mxu0 %v964
        %1845 = vmatprep.subr.bf16.mxu0 0
        %1846 = vmatpush1.bf16.xpose.msra.mxu0 %v967
        %1847 = vmatprep.subr.bf16.mxu0 0
        %1848 = vmatpush1.bf16.xpose.msra.mxu0 %v970
        %1849 = vmatprep.subr.bf16.mxu0 0
        %1850 = vmatpush1.bf16.xpose.msra.mxu0 %v973
        %1851 = vmatprep.mubr.bf16.mxu0 0
        %1852 = vmatmul.mubr.bf16.gmra.mrb[0].mxu0 %v1817
        %v1853 = vpop.f32.mrb[0].mxu0
        %v1854 = vadd.f32 0.0, %v1853
        %v1855 = vpop.f32.mrb[0].mxu0
        %v1856 = vadd.f32 0.0, %v1855
        %v1857 = vpop.f32.mrb[0].mxu0
        %v1858 = vpop.f32.mrb[0].mxu0
        %1859 = vdwg.mxu0
        %1860 = vmatprep.subr.bf16.mxu0 0
        %1861 = vmatpush1.bf16.xpose.msra.mxu0 %v976
        %1862 = vmatprep.subr.bf16.mxu0 0
        %1863 = vmatpush1.bf16.xpose.msra.mxu0 %v979
        %1864 = vmatprep.subr.bf16.mxu0 0
        %1865 = vmatpush1.bf16.xpose.msra.mxu0 %v982
        %1866 = vmatprep.subr.bf16.mxu0 0
        %1867 = vmatpush1.bf16.xpose.msra.mxu0 %v985
        %1868 = vmatprep.subr.bf16.mxu0 0
        %1869 = vmatpush1.bf16.xpose.msra.mxu0 %v988
        %1870 = vmatprep.subr.bf16.mxu0 0
        %1871 = vmatpush1.bf16.xpose.msra.mxu0 %v991
        %1872 = vmatprep.subr.bf16.mxu0 0
        %1873 = vmatpush1.bf16.xpose.msra.mxu0 %v994
        %1874 = vmatprep.subr.bf16.mxu0 0
        %1875 = vmatpush1.bf16.xpose.msra.mxu0 %v997
        %1876 = vmatprep.subr.bf16.mxu0 0
        %1877 = vmatpush1.bf16.xpose.msra.mxu0 0
        %1878 = vmatprep.subr.bf16.mxu0 0
        %1879 = vmatpush1.bf16.xpose.msra.mxu0 0
        %1880 = vmatprep.subr.bf16.mxu0 0
        %1881 = vmatpush1.bf16.xpose.msra.mxu0 0
        %1882 = vmatprep.subr.bf16.mxu0 0
        %1883 = vmatpush1.bf16.xpose.msra.mxu0 0
        %1884 = vmatprep.subr.bf16.mxu0 0
        %1885 = vmatpush1.bf16.xpose.msra.mxu0 0
        %1886 = vmatprep.subr.bf16.mxu0 0
        %1887 = vmatpush1.bf16.xpose.msra.mxu0 0
        %1888 = vmatprep.subr.bf16.mxu0 0
        %1889 = vmatpush1.bf16.xpose.msra.mxu0 0
        %1890 = vmatprep.subr.bf16.mxu0 0
        %1891 = vmatpush1.bf16.xpose.msra.mxu0 0
        %1892 = vmatprep.mubr.bf16.mxu0 0
        %1893 = vmatmul.mubr.bf16.gmra.mrb[0].mxu0 %v1817
        %v1894 = vpop.f32.mrb[0].mxu0
        %v1895 = vadd.f32 0.0, %v1894
        %v1896 = vpop.f32.mrb[0].mxu0
        %v1897 = vpop.f32.mrb[0].mxu0
        %v1898 = vpop.f32.mrb[0].mxu0
        %1899 = vdwg.mxu0
        %1901 = vrot.lane.b32.xlu0 %v1166, 64
        %v1902 = vpop.permute.xlu0 %1901
        %v1904 = vsel %vm923, %v1902, 0.0
        %1905 = vadd.xlane.f32.xlu0 %v1904
        %v1906 = vpop.xlane.xlu0 %1905
        %v1907 = vmul.f32 %v1906, 0.0625
        %1909 = vrot.lane.b32.xlu0 %v1171, 64
        %v1910 = vpop.permute.xlu0 %1909
        %v1912 = vsel %vm923, %v1910, 0.0
        %1913 = vadd.xlane.f32.xlu0 %v1912
        %v1914 = vpop.xlane.xlu0 %1913
        %v1915 = vmul.f32 %v1914, 0.0625
        %v1916 = vsel %vm1179, %v1767, -inf
        %v1917 = vsel %vm1180, %v1769, -inf
        %v1918 = vsel %vm1181, %v1808, -inf
        %v1919 = vmax.f32 %v1916, %v1917
        %v1920 = vmax.f32 %v1919, %v1918
        %1921 = vmax.xlane.f32.xlu0 %v1920
        %v1922 = vpop.xlane.xlu0 %1921
        %v1923 = vsub.f32 %v1767, %v1907
        %v1924 = vsub.f32 %v1769, %v1907
        %v1925 = vsub.f32 %v1808, %v1907
        %v1926 = vsub.f32 %v1923, %v1922
        %v1927 = vsub.f32 %v1924, %v1922
        %v1928 = vsub.f32 %v1925, %v1922
        %v1929 = vmul.f32 %v1926, 1.442695
        %v1930 = vpow.pop %v1929
        %v1931 = vmul.f32 %v1927, 1.442695
        %v1932 = vpow.pop %v1931
        %v1933 = vmul.f32 %v1928, 1.442695
        %v1934 = vpow.pop %v1933
        %v1935 = vadd.f32 %v1930, 0.0001
        %v1936 = vadd.f32 %v1932, 0.0001
        %v1937 = vadd.f32 %v1934, 0.0001
        %v1938 = vmul.f32 %v1935, 0.061313935
        %v1939 = vmul.f32 %v1936, 0.061313935
        %v1940 = vmul.f32 %v1937, 0.061313935
        %v1941 = vsel %vm1179, %v1938, 0.0
        %v1942 = vsel %vm1180, %v1939, 0.0
        %v1943 = vsel %vm1181, %v1940, 0.0
        %v1944 = vsub.f32 %v1854, %v1915
        %v1945 = vsub.f32 %v1856, %v1915
        %v1946 = vsub.f32 %v1895, %v1915
        %v1947 = vadd.f32 %v1944, 0.0001
        %v1948 = vadd.f32 %v1945, 0.0001
        %v1949 = vadd.f32 %v1946, 0.0001
        %v1950 = vmul.f32 %v1947, 1.442695
        %v1951 = vpow.pop %v1950
        %v1952 = vmul.f32 %v1948, 1.442695
        %v1953 = vpow.pop %v1952
        %v1954 = vmul.f32 %v1949, 1.442695
        %v1955 = vpow.pop %v1954
        %v1956 = vmul.f32 %v1951, 0.061313935
        %v1957 = vmul.f32 %v1953, 0.061313935
        %v1958 = vmul.f32 %v1955, 0.061313935
        %v1959 = vsel %vm1179, %v1956, 0.0
        %v1960 = vsel %vm1180, %v1957, 0.0
        %v1961 = vsel %vm1181, %v1958, 0.0
        %v1962 = vpack.c.bf16 %v1959, %v1959
        %v1963 = vpack.c.bf16 %v1960, %v1960
        %v1964 = vpack.c.bf16 %v1961, %v1961
        %1965 = vxpose.xlu0.c.b16.start [1/8] %v1962, 128
        %1966 = vxpose.xlu0.c.b16.cont [2/8] 0, 128
        %1967 = vxpose.xlu0.c.b16.cont [3/8] 0, 128
        %1968 = vxpose.xlu0.c.b16.cont [4/8] 0, 128
        %1969 = vxpose.xlu0.c.b16.cont [5/8] 0, 128
        %1970 = vxpose.xlu0.c.b16.cont [6/8] 0, 128
        %1971 = vxpose.xlu0.c.b16.cont [7/8] 0, 128
        %1972 = vxpose.xlu0.c.b16.end [8/8] 0, 128
        %v1973 = vpop.trf.xlu0
        %v1974 = vpop.trf.xlu0
        %v1975 = vpop.trf.xlu0
        %v1976 = vpop.trf.xlu0
        %v1977 = vpop.trf.xlu0
        %v1978 = vpop.trf.xlu0
        %v1979 = vpop.trf.xlu0
        %v1980 = vpop.trf.xlu0
        %1981 = vxpose.xlu0.c.b16.start [1/8] %v1963, 128
        %1982 = vxpose.xlu0.c.b16.cont [2/8] 0, 128
        %1983 = vxpose.xlu0.c.b16.cont [3/8] 0, 128
        %1984 = vxpose.xlu0.c.b16.cont [4/8] 0, 128
        %1985 = vxpose.xlu0.c.b16.cont [5/8] 0, 128
        %1986 = vxpose.xlu0.c.b16.cont [6/8] 0, 128
        %1987 = vxpose.xlu0.c.b16.cont [7/8] 0, 128
        %1988 = vxpose.xlu0.c.b16.end [8/8] 0, 128
        %v1989 = vpop.trf.xlu0
        %v1990 = vpop.trf.xlu0
        %v1991 = vpop.trf.xlu0
        %v1992 = vpop.trf.xlu0
        %v1993 = vpop.trf.xlu0
        %v1994 = vpop.trf.xlu0
        %v1995 = vpop.trf.xlu0
        %v1996 = vpop.trf.xlu0
        %1997 = vxpose.xlu0.c.b16.start [1/8] %v1964, 128
        %1998 = vxpose.xlu0.c.b16.cont [2/8] 0, 128
        %1999 = vxpose.xlu0.c.b16.cont [3/8] 0, 128
        %2000 = vxpose.xlu0.c.b16.cont [4/8] 0, 128
        %2001 = vxpose.xlu0.c.b16.cont [5/8] 0, 128
        %2002 = vxpose.xlu0.c.b16.cont [6/8] 0, 128
        %2003 = vxpose.xlu0.c.b16.cont [7/8] 0, 128
        %2004 = vxpose.xlu0.c.b16.end [8/8] 0, 128
        %v2005 = vpop.trf.xlu0
        %v2006 = vpop.trf.xlu0
        %v2007 = vpop.trf.xlu0
        %v2008 = vpop.trf.xlu0
        %v2009 = vpop.trf.xlu0
        %v2010 = vpop.trf.xlu0
        %v2011 = vpop.trf.xlu0
        %v2012 = vpop.trf.xlu0
        %2014 = vrot.lane.b32.xlu0 %v1231, 64
        %v2015 = vpop.permute.xlu0 %2014
        %v2017 = vsel %vm1280, %v1973, 0
        %v2020 = vsel %vm1280, %v1974, 0
        %v2023 = vsel %vm1280, %v1975, 0
        %v2026 = vsel %vm1280, %v1976, 0
        %v2029 = vsel %vm1280, %v1977, 0
        %v2032 = vsel %vm1280, %v1978, 0
        %v2035 = vsel %vm1280, %v1979, 0
        %v2038 = vsel %vm1280, %v1980, 0
        %v2041 = vsel %vm1280, %v1989, 0
        %v2044 = vsel %vm1280, %v1990, 0
        %v2047 = vsel %vm1280, %v1991, 0
        %v2050 = vsel %vm1280, %v1992, 0
        %v2053 = vsel %vm1280, %v1993, 0
        %v2056 = vsel %vm1280, %v1994, 0
        %v2059 = vsel %vm1280, %v1995, 0
        %v2062 = vsel %vm1280, %v1996, 0
        %v2065 = vsel %vm1280, %v2005, 0
        %v2068 = vsel %vm1280, %v2006, 0
        %v2071 = vsel %vm1280, %v2007, 0
        %v2074 = vsel %vm1280, %v2008, 0
        %v2077 = vsel %vm1280, %v2009, 0
        %v2080 = vsel %vm1280, %v2010, 0
        %v2083 = vsel %vm1280, %v2011, 0
        %v2086 = vsel %vm1280, %v2012, 0
        %v2089 = vsel %vm1353, %v2015, 0
        %2091 = vmatprep.subr.bf16.mxu0 0
        %2092 = vmatpush1.bf16.msra.mxu0 %v2089
        %2093 = vmatprep.subr.bf16.mxu0 0
        %2094 = vmatpush1.bf16.msra.mxu0 0
        %2095 = vmatprep.subr.bf16.mxu0 0
        %2096 = vmatpush1.bf16.msra.mxu0 0
        %2097 = vmatprep.subr.bf16.mxu0 0
        %2098 = vmatpush1.bf16.msra.mxu0 0
        %2099 = vmatprep.subr.bf16.mxu0 0
        %2100 = vmatpush1.bf16.msra.mxu0 0
        %2101 = vmatprep.subr.bf16.mxu0 0
        %2102 = vmatpush1.bf16.msra.mxu0 0
        %2103 = vmatprep.subr.bf16.mxu0 0
        %2104 = vmatpush1.bf16.msra.mxu0 0
        %2105 = vmatprep.subr.bf16.mxu0 0
        %2106 = vmatpush1.bf16.msra.mxu0 0
        %2107 = vmatprep.subr.bf16.mxu0 0
        %2108 = vmatpush1.bf16.msra.mxu0 0
        %2109 = vmatprep.subr.bf16.mxu0 0
        %2110 = vmatpush1.bf16.msra.mxu0 0
        %2111 = vmatprep.subr.bf16.mxu0 0
        %2112 = vmatpush1.bf16.msra.mxu0 0
        %2113 = vmatprep.subr.bf16.mxu0 0
        %2114 = vmatpush1.bf16.msra.mxu0 0
        %2115 = vmatprep.subr.bf16.mxu0 0
        %2116 = vmatpush1.bf16.msra.mxu0 0
        %2117 = vmatprep.subr.bf16.mxu0 0
        %2118 = vmatpush1.bf16.msra.mxu0 0
        %2119 = vmatprep.subr.bf16.mxu0 0
        %2120 = vmatpush1.bf16.msra.mxu0 0
        %2121 = vmatprep.subr.bf16.mxu0 0
        %2122 = vmatpush1.bf16.msra.mxu0 0
        %2123 = vmatprep.mubr.bf16.mxu0 0
        %2124 = vmatmul.mubr.bf16.gmra.mrb[0].mxu0 %v2017
        %v2125 = vpop.f32.mrb[0].mxu0
        %v2126 = vadd.f32 0.0, %v2125
        %v2127 = vpop.f32.mrb[0].mxu0
        %v2128 = vpop.f32.mrb[0].mxu0
        %v2129 = vadd.f32 0.0, %v2128
        %v2130 = vpop.f32.mrb[0].mxu0
        %2131 = vmatprep.mubr.bf16.mxu0 0
        %2132 = vmatmul.mubr.bf16.gmra.mrb[0].mxu0 %v2020
        %v2133 = vpop.f32.mrb[0].mxu0
        %v2134 = vadd.f32 0.0, %v2133
        %v2135 = vpop.f32.mrb[0].mxu0
        %v2136 = vpop.f32.mrb[0].mxu0
        %v2137 = vadd.f32 0.0, %v2136
        %v2138 = vpop.f32.mrb[0].mxu0
        %2139 = vmatprep.mubr.bf16.mxu0 0
        %2140 = vmatmul.mubr.bf16.gmra.mrb[0].mxu0 %v2023
        %v2141 = vpop.f32.mrb[0].mxu0
        %v2142 = vadd.f32 0.0, %v2141
        %v2143 = vpop.f32.mrb[0].mxu0
        %v2144 = vpop.f32.mrb[0].mxu0
        %v2145 = vadd.f32 0.0, %v2144
        %v2146 = vpop.f32.mrb[0].mxu0
        %2147 = vmatprep.mubr.bf16.mxu0 0
        %2148 = vmatmul.mubr.bf16.gmra.mrb[0].mxu0 %v2026
        %v2149 = vpop.f32.mrb[0].mxu0
        %v2150 = vadd.f32 0.0, %v2149
        %v2151 = vpop.f32.mrb[0].mxu0
        %v2152 = vpop.f32.mrb[0].mxu0
        %v2153 = vadd.f32 0.0, %v2152
        %v2154 = vpop.f32.mrb[0].mxu0
        %2155 = vmatprep.mubr.bf16.mxu0 0
        %2156 = vmatmul.mubr.bf16.gmra.mrb[0].mxu0 %v2029
        %v2157 = vpop.f32.mrb[0].mxu0
        %v2158 = vadd.f32 0.0, %v2157
        %v2159 = vpop.f32.mrb[0].mxu0
        %v2160 = vpop.f32.mrb[0].mxu0
        %v2161 = vadd.f32 0.0, %v2160
        %v2162 = vpop.f32.mrb[0].mxu0
        %2163 = vmatprep.mubr.bf16.mxu0 0
        %2164 = vmatmul.mubr.bf16.gmra.mrb[0].mxu0 %v2032
        %v2165 = vpop.f32.mrb[0].mxu0
        %v2166 = vadd.f32 0.0, %v2165
        %v2167 = vpop.f32.mrb[0].mxu0
        %v2168 = vpop.f32.mrb[0].mxu0
        %v2169 = vadd.f32 0.0, %v2168
        %v2170 = vpop.f32.mrb[0].mxu0
        %2171 = vmatprep.mubr.bf16.mxu0 0
        %2172 = vmatmul.mubr.bf16.gmra.mrb[0].mxu0 %v2035
        %v2173 = vpop.f32.mrb[0].mxu0
        %v2174 = vadd.f32 0.0, %v2173
        %v2175 = vpop.f32.mrb[0].mxu0
        %v2176 = vpop.f32.mrb[0].mxu0
        %v2177 = vadd.f32 0.0, %v2176
        %v2178 = vpop.f32.mrb[0].mxu0
        %2179 = vmatprep.mubr.bf16.mxu0 0
        %2180 = vmatmul.mubr.bf16.gmra.mrb[0].mxu0 %v2038
        %v2181 = vpop.f32.mrb[0].mxu0
        %v2182 = vadd.f32 0.0, %v2181
        %v2183 = vpop.f32.mrb[0].mxu0
        %v2184 = vpop.f32.mrb[0].mxu0
        %v2185 = vadd.f32 0.0, %v2184
        %v2186 = vpop.f32.mrb[0].mxu0
        %2187 = vmatprep.mubr.bf16.mxu0 0
        %2188 = vmatmul.mubr.bf16.gmra.mrb[0].mxu0 %v2041
        %v2189 = vpop.f32.mrb[0].mxu0
        %v2190 = vadd.f32 0.0, %v2189
        %v2191 = vpop.f32.mrb[0].mxu0
        %v2192 = vpop.f32.mrb[0].mxu0
        %v2193 = vadd.f32 0.0, %v2192
        %v2194 = vpop.f32.mrb[0].mxu0
        %2195 = vmatprep.mubr.bf16.mxu0 0
        %2196 = vmatmul.mubr.bf16.gmra.mrb[0].mxu0 %v2044
        %v2197 = vpop.f32.mrb[0].mxu0
        %v2198 = vadd.f32 0.0, %v2197
        %v2199 = vpop.f32.mrb[0].mxu0
        %v2200 = vpop.f32.mrb[0].mxu0
        %v2201 = vadd.f32 0.0, %v2200
        %v2202 = vpop.f32.mrb[0].mxu0
        %2203 = vmatprep.mubr.bf16.mxu0 0
        %2204 = vmatmul.mubr.bf16.gmra.mrb[0].mxu0 %v2047
        %v2205 = vpop.f32.mrb[0].mxu0
        %v2206 = vadd.f32 0.0, %v2205
        %v2207 = vpop.f32.mrb[0].mxu0
        %v2208 = vpop.f32.mrb[0].mxu0
        %v2209 = vadd.f32 0.0, %v2208
        %v2210 = vpop.f32.mrb[0].mxu0
        %2211 = vmatprep.mubr.bf16.mxu0 0
        %2212 = vmatmul.mubr.bf16.gmra.mrb[0].mxu0 %v2050
        %v2213 = vpop.f32.mrb[0].mxu0
        %v2214 = vadd.f32 0.0, %v2213
        %v2215 = vpop.f32.mrb[0].mxu0
        %v2216 = vpop.f32.mrb[0].mxu0
        %v2217 = vadd.f32 0.0, %v2216
        %v2218 = vpop.f32.mrb[0].mxu0
        %2219 = vmatprep.mubr.bf16.mxu0 0
        %2220 = vmatmul.mubr.bf16.gmra.mrb[0].mxu0 %v2053
        %v2221 = vpop.f32.mrb[0].mxu0
        %v2222 = vadd.f32 0.0, %v2221
        %v2223 = vpop.f32.mrb[0].mxu0
        %v2224 = vpop.f32.mrb[0].mxu0
        %v2225 = vadd.f32 0.0, %v2224
        %v2226 = vpop.f32.mrb[0].mxu0
        %2227 = vmatprep.mubr.bf16.mxu0 0
        %2228 = vmatmul.mubr.bf16.gmra.mrb[0].mxu0 %v2056
        %v2229 = vpop.f32.mrb[0].mxu0
        %v2230 = vadd.f32 0.0, %v2229
        %v2231 = vpop.f32.mrb[0].mxu0
        %v2232 = vpop.f32.mrb[0].mxu0
        %v2233 = vadd.f32 0.0, %v2232
        %v2234 = vpop.f32.mrb[0].mxu0
        %2235 = vmatprep.mubr.bf16.mxu0 0
        %2236 = vmatmul.mubr.bf16.gmra.mrb[0].mxu0 %v2059
        %v2237 = vpop.f32.mrb[0].mxu0
        %v2238 = vadd.f32 0.0, %v2237
        %v2239 = vpop.f32.mrb[0].mxu0
        %v2240 = vpop.f32.mrb[0].mxu0
        %v2241 = vadd.f32 0.0, %v2240
        %v2242 = vpop.f32.mrb[0].mxu0
        %2243 = vmatprep.mubr.bf16.mxu0 0
        %2244 = vmatmul.mubr.bf16.gmra.mrb[0].mxu0 %v2062
        %v2245 = vpop.f32.mrb[0].mxu0
        %v2246 = vadd.f32 0.0, %v2245
        %v2247 = vpop.f32.mrb[0].mxu0
        %v2248 = vpop.f32.mrb[0].mxu0
        %v2249 = vadd.f32 0.0, %v2248
        %v2250 = vpop.f32.mrb[0].mxu0
        %2251 = vmatprep.mubr.bf16.mxu0 0
        %2252 = vmatmul.mubr.bf16.gmra.mrb[0].mxu0 %v2065
        %v2253 = vpop.f32.mrb[0].mxu0
        %v2254 = vadd.f32 0.0, %v2253
        %v2255 = vpop.f32.mrb[0].mxu0
        %v2256 = vpop.f32.mrb[0].mxu0
        %v2257 = vadd.f32 0.0, %v2256
        %v2258 = vpop.f32.mrb[0].mxu0
        %2259 = vmatprep.mubr.bf16.mxu0 0
        %2260 = vmatmul.mubr.bf16.gmra.mrb[0].mxu0 %v2068
        %v2261 = vpop.f32.mrb[0].mxu0
        %v2262 = vadd.f32 0.0, %v2261
        %v2263 = vpop.f32.mrb[0].mxu0
        %v2264 = vpop.f32.mrb[0].mxu0
        %v2265 = vadd.f32 0.0, %v2264
        %v2266 = vpop.f32.mrb[0].mxu0
        %2267 = vmatprep.mubr.bf16.mxu0 0
        %2268 = vmatmul.mubr.bf16.gmra.mrb[0].mxu0 %v2071
        %v2269 = vpop.f32.mrb[0].mxu0
        %v2270 = vadd.f32 0.0, %v2269
        %v2271 = vpop.f32.mrb[0].mxu0
        %v2272 = vpop.f32.mrb[0].mxu0
        %v2273 = vadd.f32 0.0, %v2272
        %v2274 = vpop.f32.mrb[0].mxu0
        %2275 = vmatprep.mubr.bf16.mxu0 0
        %2276 = vmatmul.mubr.bf16.gmra.mrb[0].mxu0 %v2074
        %v2277 = vpop.f32.mrb[0].mxu0
        %v2278 = vadd.f32 0.0, %v2277
        %v2279 = vpop.f32.mrb[0].mxu0
        %v2280 = vpop.f32.mrb[0].mxu0
        %v2281 = vadd.f32 0.0, %v2280
        %v2282 = vpop.f32.mrb[0].mxu0
        %2283 = vmatprep.mubr.bf16.mxu0 0
        %2284 = vmatmul.mubr.bf16.gmra.mrb[0].mxu0 %v2077
        %v2285 = vpop.f32.mrb[0].mxu0
        %v2286 = vadd.f32 0.0, %v2285
        %v2287 = vpop.f32.mrb[0].mxu0
        %v2288 = vpop.f32.mrb[0].mxu0
        %v2289 = vadd.f32 0.0, %v2288
        %v2290 = vpop.f32.mrb[0].mxu0
        %2291 = vmatprep.mubr.bf16.mxu0 0
        %2292 = vmatmul.mubr.bf16.gmra.mrb[0].mxu0 %v2080
        %v2293 = vpop.f32.mrb[0].mxu0
        %v2294 = vadd.f32 0.0, %v2293
        %v2295 = vpop.f32.mrb[0].mxu0
        %v2296 = vpop.f32.mrb[0].mxu0
        %v2297 = vadd.f32 0.0, %v2296
        %v2298 = vpop.f32.mrb[0].mxu0
        %2299 = vmatprep.mubr.bf16.mxu0 0
        %2300 = vmatmul.mubr.bf16.gmra.mrb[0].mxu0 %v2083
        %v2301 = vpop.f32.mrb[0].mxu0
        %v2302 = vadd.f32 0.0, %v2301
        %v2303 = vpop.f32.mrb[0].mxu0
        %v2304 = vpop.f32.mrb[0].mxu0
        %v2305 = vadd.f32 0.0, %v2304
        %v2306 = vpop.f32.mrb[0].mxu0
        %2307 = vmatprep.mubr.bf16.mxu0 0
        %2308 = vmatmul.mubr.bf16.gmra.mrb[0].mxu0 %v2086
        %v2309 = vpop.f32.mrb[0].mxu0
        %v2310 = vadd.f32 0.0, %v2309
        %v2311 = vpop.f32.mrb[0].mxu0
        %v2312 = vpop.f32.mrb[0].mxu0
        %v2313 = vadd.f32 0.0, %v2312
        %v2314 = vpop.f32.mrb[0].mxu0
        %2315 = vdwg.mxu0
        %v2316 = vrot.slane %v1959, 4
        %v2317 = vadd.f32 %v1959, %v2316
        %v2318 = vrot.slane %v2317, 2
        %v2319 = vadd.f32 %v2317, %v2318
        %v2320 = vrot.slane %v2319, 1
        %v2321 = vadd.f32 %v2319, %v2320
        %v2322 = vrot.slane %v1960, 4
        %v2323 = vadd.f32 %v1960, %v2322
        %v2324 = vrot.slane %v2323, 2
        %v2325 = vadd.f32 %v2323, %v2324
        %v2326 = vrot.slane %v2325, 1
        %v2327 = vadd.f32 %v2325, %v2326
        %v2328 = vrot.slane %v1961, 4
        %v2329 = vadd.f32 %v1961, %v2328
        %v2330 = vrot.slane %v2329, 2
        %v2331 = vadd.f32 %v2329, %v2330
        %v2332 = vrot.slane %v2331, 1
        %v2333 = vadd.f32 %v2331, %v2332
        %v2334 = vmul.f32 %v1941, %v2321
        %v2335 = vmul.f32 %v1942, %v2327
        %v2336 = vmul.f32 %v1943, %v2333
        %v2337 = vadd.f32 %v2334, %v2335
        %v2338 = vadd.f32 %v2337, %v2336
        %2339 = vadd.xlane.f32.xlu0 %v2338
        %v2340 = vpop.xlane.xlu0 %2339
        %v2341 = vadd.f32 %v2340, 1e-08
        %v2342 = vrcp.pop %v2341
        %v2343 = vpack.c.bf16 %v1941, %v1941
        %v2344 = vpack.c.bf16 %v1942, %v1942
        %v2345 = vpack.c.bf16 %v1943, %v1943
        %v2346 = vpack.c.bf16 %v2129, %v2126
        %v2347 = vpack.c.bf16 %v2137, %v2134
        %v2348 = vpack.c.bf16 %v2145, %v2142
        %v2349 = vpack.c.bf16 %v2153, %v2150
        %v2350 = vpack.c.bf16 %v2161, %v2158
        %v2351 = vpack.c.bf16 %v2169, %v2166
        %v2352 = vpack.c.bf16 %v2177, %v2174
        %v2353 = vpack.c.bf16 %v2185, %v2182
        %v2354 = vpack.c.bf16 %v2193, %v2190
        %v2355 = vpack.c.bf16 %v2201, %v2198
        %v2356 = vpack.c.bf16 %v2209, %v2206
        %v2357 = vpack.c.bf16 %v2217, %v2214
        %v2358 = vpack.c.bf16 %v2225, %v2222
        %v2359 = vpack.c.bf16 %v2233, %v2230
        %v2360 = vpack.c.bf16 %v2241, %v2238
        %v2361 = vpack.c.bf16 %v2249, %v2246
        %v2362 = vpack.c.bf16 %v2257, %v2254
        %v2363 = vpack.c.bf16 %v2265, %v2262
        %v2364 = vpack.c.bf16 %v2273, %v2270
        %v2365 = vpack.c.bf16 %v2281, %v2278
        %v2366 = vpack.c.bf16 %v2289, %v2286
        %v2367 = vpack.c.bf16 %v2297, %v2294
        %v2368 = vpack.c.bf16 %v2305, %v2302
        %v2369 = vpack.c.bf16 %v2313, %v2310
        %2370 = vmatprep.subr.bf16.mxu0 0
        %2371 = vmatpush1.bf16.msra.mxu0 %v2346
        %2372 = vmatprep.subr.bf16.mxu0 0
        %2373 = vmatpush1.bf16.msra.mxu0 %v2347
        %2374 = vmatprep.subr.bf16.mxu0 0
        %2375 = vmatpush1.bf16.msra.mxu0 %v2348
        %2376 = vmatprep.subr.bf16.mxu0 0
        %2377 = vmatpush1.bf16.msra.mxu0 %v2349
        %2378 = vmatprep.subr.bf16.mxu0 0
        %2379 = vmatpush1.bf16.msra.mxu0 %v2350
        %2380 = vmatprep.subr.bf16.mxu0 0
        %2381 = vmatpush1.bf16.msra.mxu0 %v2351
        %2382 = vmatprep.subr.bf16.mxu0 0
        %2383 = vmatpush1.bf16.msra.mxu0 %v2352
        %2384 = vmatprep.subr.bf16.mxu0 0
        %2385 = vmatpush1.bf16.msra.mxu0 %v2353
        %2386 = vmatprep.subr.bf16.mxu0 0
        %2387 = vmatpush1.bf16.msra.mxu0 %v2354
        %2388 = vmatprep.subr.bf16.mxu0 0
        %2389 = vmatpush1.bf16.msra.mxu0 %v2355
        %2390 = vmatprep.subr.bf16.mxu0 0
        %2391 = vmatpush1.bf16.msra.mxu0 %v2356
        %2392 = vmatprep.subr.bf16.mxu0 0
        %2393 = vmatpush1.bf16.msra.mxu0 %v2357
        %2394 = vmatprep.subr.bf16.mxu0 0
        %2395 = vmatpush1.bf16.msra.mxu0 %v2358
        %2396 = vmatprep.subr.bf16.mxu0 0
        %2397 = vmatpush1.bf16.msra.mxu0 %v2359
        %2398 = vmatprep.subr.bf16.mxu0 0
        %2399 = vmatpush1.bf16.msra.mxu0 %v2360
        %2400 = vmatprep.subr.bf16.mxu0 0
        %2401 = vmatpush1.bf16.msra.mxu0 %v2361
        %2402 = vmatprep.mubr.bf16.mxu0 %v2344
        %2403 = vmatmul.mubr.bf16.gmra.mrb[0].mxu0 %v2343
        %v2404 = vpop.f32.mrb[0].mxu0
        %v2405 = vadd.f32 0.0, %v2404
        %v2406 = vpop.f32.mrb[0].mxu0
        %v2407 = vpop.f32.mrb[0].mxu0
        %v2408 = vpop.f32.mrb[0].mxu0
        %2409 = vdwg.mxu0
        %2410 = vmatprep.subr.bf16.mxu0 0
        %2411 = vmatpush1.bf16.msra.mxu0 %v2362
        %2412 = vmatprep.subr.bf16.mxu0 0
        %2413 = vmatpush1.bf16.msra.mxu0 %v2363
        %2414 = vmatprep.subr.bf16.mxu0 0
        %2415 = vmatpush1.bf16.msra.mxu0 %v2364
        %2416 = vmatprep.subr.bf16.mxu0 0
        %2417 = vmatpush1.bf16.msra.mxu0 %v2365
        %2418 = vmatprep.subr.bf16.mxu0 0
        %2419 = vmatpush1.bf16.msra.mxu0 %v2366
        %2420 = vmatprep.subr.bf16.mxu0 0
        %2421 = vmatpush1.bf16.msra.mxu0 %v2367
        %2422 = vmatprep.subr.bf16.mxu0 0
        %2423 = vmatpush1.bf16.msra.mxu0 %v2368
        %2424 = vmatprep.subr.bf16.mxu0 0
        %2425 = vmatpush1.bf16.msra.mxu0 %v2369
        %2426 = vmatprep.subr.bf16.mxu0 0
        %2427 = vmatpush1.bf16.msra.mxu0 0
        %2428 = vmatprep.subr.bf16.mxu0 0
        %2429 = vmatpush1.bf16.msra.mxu0 0
        %2430 = vmatprep.subr.bf16.mxu0 0
        %2431 = vmatpush1.bf16.msra.mxu0 0
        %2432 = vmatprep.subr.bf16.mxu0 0
        %2433 = vmatpush1.bf16.msra.mxu0 0
        %2434 = vmatprep.subr.bf16.mxu0 0
        %2435 = vmatpush1.bf16.msra.mxu0 0
        %2436 = vmatprep.subr.bf16.mxu0 0
        %2437 = vmatpush1.bf16.msra.mxu0 0
        %2438 = vmatprep.subr.bf16.mxu0 0
        %2439 = vmatpush1.bf16.msra.mxu0 0
        %2440 = vmatprep.subr.bf16.mxu0 0
        %2441 = vmatpush1.bf16.msra.mxu0 0
        %2442 = vmatprep.mubr.bf16.mxu0 0
        %2443 = vmatmul.mubr.bf16.gmra.mrb[0].mxu0 %v2345
        %v2444 = vpop.f32.mrb[0].mxu0
        %v2445 = vadd.f32 %v2405, %v2444
        %v2446 = vpop.f32.mrb[0].mxu0
        %v2447 = vpop.f32.mrb[0].mxu0
        %v2448 = vpop.f32.mrb[0].mxu0
        %2449 = vdwg.mxu0
        %v2450 = vmul.f32 %v2445, %v2342
        %v2451 = vpack.c.bf16 %v2450, %v2450
        %v2452 = vld [vmem:[%s6 + $0x20] sm:$0xf]
        %v2453 = vld [vmem:[%s6 + $0x24] sm:$0xf]
        %v2454 = vld [vmem:[%s6 + $0x28] sm:$0xf]
        %v2455 = vld [vmem:[%s6 + $0x2c] sm:$0xf]
        %v2456 = vld [vmem:[%s6 + $0x30] sm:$0xf]
        %v2457 = vld [vmem:[%s6 + $0x34] sm:$0xf]
        %v2458 = vld [vmem:[%s6 + $0x38] sm:$0xf]
        %v2459 = vld [vmem:[%s6 + $0x3c] sm:$0xf]
        %v2468 = vunpack.c.l.b16 %v2452
        %v2469 = vunpack.c.l.b16 %v2453
        %v2470 = vunpack.c.l.b16 %v2454
        %v2471 = vunpack.c.l.b16 %v2455
        %v2472 = vunpack.c.l.b16 %v2456
        %v2473 = vunpack.c.l.b16 %v2457
        %v2474 = vunpack.c.l.b16 %v2458
        %v2475 = vunpack.c.l.b16 %v2459
        %v2476 = vpack.c.b16 %v2469, %v2468
        %v2477 = vpack.c.b16 %v2471, %v2470
        %v2478 = vpack.c.b16 %v2473, %v2472
        %v2479 = vpack.c.b16 %v2475, %v2474
        %v2485 = vsel %vm923, %v2451, 0
        %2487 = vmatprep.subr.bf16.mxu0 0
        %2488 = vmatpush1.bf16.msra.mxu0 %v2476
        %2489 = vmatprep.subr.bf16.mxu0 0
        %2490 = vmatpush1.bf16.msra.mxu0 %v2477
        %2491 = vmatprep.subr.bf16.mxu0 0
        %2492 = vmatpush1.bf16.msra.mxu0 %v2478
        %2493 = vmatprep.subr.bf16.mxu0 0
        %2494 = vmatpush1.bf16.msra.mxu0 %v2479
        %2495 = vmatprep.subr.bf16.mxu0 0
        %2496 = vmatpush1.bf16.msra.mxu0 0
        %2497 = vmatprep.subr.bf16.mxu0 0
        %2498 = vmatpush1.bf16.msra.mxu0 0
        %2499 = vmatprep.subr.bf16.mxu0 0
        %2500 = vmatpush1.bf16.msra.mxu0 0
        %2501 = vmatprep.subr.bf16.mxu0 0
        %2502 = vmatpush1.bf16.msra.mxu0 0
        %2503 = vmatprep.subr.bf16.mxu0 0
        %2504 = vmatpush1.bf16.msra.mxu0 0
        %2505 = vmatprep.subr.bf16.mxu0 0
        %2506 = vmatpush1.bf16.msra.mxu0 0
        %2507 = vmatprep.subr.bf16.mxu0 0
        %2508 = vmatpush1.bf16.msra.mxu0 0
        %2509 = vmatprep.subr.bf16.mxu0 0
        %2510 = vmatpush1.bf16.msra.mxu0 0
        %2511 = vmatprep.subr.bf16.mxu0 0
        %2512 = vmatpush1.bf16.msra.mxu0 0
        %2513 = vmatprep.subr.bf16.mxu0 0
        %2514 = vmatpush1.bf16.msra.mxu0 0
        %2515 = vmatprep.subr.bf16.mxu0 0
        %2516 = vmatpush1.bf16.msra.mxu0 0
        %2517 = vmatprep.subr.bf16.mxu0 0
        %2518 = vmatpush1.bf16.msra.mxu0 0
        %2519 = vmatprep.mubr.bf16.mxu0 0
        %2520 = vmatmul.mubr.bf16.gmra.mrb[0].mxu0 %v2485
        %v2521 = vpop.f32.mrb[0].mxu0
        %v2522 = vadd.f32 0.0, %v2521
        %v2523 = vpop.f32.mrb[0].mxu0
        %v2524 = vpop.f32.mrb[0].mxu0
        %v2525 = vpop.f32.mrb[0].mxu0
        %2526 = vdwg.mxu0
        %v2535 = vunpack.c.l.b16 %v1718
        %v2536 = vunpack.c.l.b16 %v1719
        %v2537 = vunpack.c.l.b16 %v1720
        %v2538 = vunpack.c.l.b16 %v1721
        %v2539 = vunpack.c.l.b16 %v1722
        %v2540 = vunpack.c.l.b16 %v1723
        %v2541 = vunpack.c.l.b16 %v1724
        %v2542 = vunpack.c.l.b16 %v1725
        %v2543 = vpack.c.b16 %v2536, %v2535
        %v2544 = vpack.c.b16 %v2538, %v2537
        %v2545 = vpack.c.b16 %v2540, %v2539
        %v2546 = vpack.c.b16 %v2542, %v2541
        %v2552 = vsel %vm923, %v1717, 0
        %2554 = vmatprep.subr.bf16.mxu0 0
        %2555 = vmatpush1.bf16.msra.mxu0 %v2543
        %2556 = vmatprep.subr.bf16.mxu0 0
        %2557 = vmatpush1.bf16.msra.mxu0 %v2544
        %2558 = vmatprep.subr.bf16.mxu0 0
        %2559 = vmatpush1.bf16.msra.mxu0 %v2545
        %2560 = vmatprep.subr.bf16.mxu0 0
        %2561 = vmatpush1.bf16.msra.mxu0 %v2546
        %2562 = vmatprep.subr.bf16.mxu0 0
        %2563 = vmatpush1.bf16.msra.mxu0 0
        %2564 = vmatprep.subr.bf16.mxu0 0
        %2565 = vmatpush1.bf16.msra.mxu0 0
        %2566 = vmatprep.subr.bf16.mxu0 0
        %2567 = vmatpush1.bf16.msra.mxu0 0
        %2568 = vmatprep.subr.bf16.mxu0 0
        %2569 = vmatpush1.bf16.msra.mxu0 0
        %2570 = vmatprep.subr.bf16.mxu0 0
        %2571 = vmatpush1.bf16.msra.mxu0 0
        %2572 = vmatprep.subr.bf16.mxu0 0
        %2573 = vmatpush1.bf16.msra.mxu0 0
        %2574 = vmatprep.subr.bf16.mxu0 0
        %2575 = vmatpush1.bf16.msra.mxu0 0
        %2576 = vmatprep.subr.bf16.mxu0 0
        %2577 = vmatpush1.bf16.msra.mxu0 0
        %2578 = vmatprep.subr.bf16.mxu0 0
        %2579 = vmatpush1.bf16.msra.mxu0 0
        %2580 = vmatprep.subr.bf16.mxu0 0
        %2581 = vmatpush1.bf16.msra.mxu0 0
        %2582 = vmatprep.subr.bf16.mxu0 0
        %2583 = vmatpush1.bf16.msra.mxu0 0
        %2584 = vmatprep.subr.bf16.mxu0 0
        %2585 = vmatpush1.bf16.msra.mxu0 0
        %2586 = vmatprep.mubr.bf16.mxu0 0
        %2587 = vmatmul.mubr.bf16.gmra.mrb[0].mxu0 %v2552
        %v2588 = vpop.f32.mrb[0].mxu0
        %v2589 = vadd.f32 %v2522, %v2588
        %v2590 = vpop.f32.mrb[0].mxu0
        %v2591 = vpop.f32.mrb[0].mxu0
        %v2592 = vpop.f32.mrb[0].mxu0
        %2593 = vdwg.mxu0
        %v2594 = vadd.f32 %v572, %v2589
        %v2595 = vld [vmem:[%s7] sm:$0x1]
        %v2597 = vlaneseq
        %v2598 = vshrl.u32 %v2597, 7
        %v2599 = vsub.s32 0, %v2598
        %v2600 = vrot.slane %v2595, %v2599
        %v2602 = vadd.f32 %v2594, %v2600
        %v2603 = vsel %vm573, %v2602, 0.0
        %2604 = vadd.xlane.f32.xlu0 %v2603
        %v2605 = vpop.xlane.xlu0 %2604
        %v2606 = vmul.f32 %v2605, %v577
        %v2607 = vsub.f32 %v2602, %v2606
        %v2608 = vmul.f32 %v2607, %v2607
        %v2609 = vsel %vm573, %v2608, 0.0
        %2610 = vadd.xlane.f32.xlu0 %v2609
        %v2611 = vpop.xlane.xlu0 %2610
        %v2612 = vmul.f32 %v2611, %v577
        %v2613 = vadd.f32 %v2612, 1e-05
        %v2614 = vrsqrt.pop %v2613
        %v2615 = vmul.f32 %v2607, %v2614
        %v2616 = vld [vmem:[%s8] sm:$0x1]
        %v2618 = vlaneseq
        %v2619 = vshrl.u32 %v2618, 7
        %v2620 = vsub.s32 0, %v2619
        %v2621 = vrot.slane %v2616, %v2620
        %v2623 = vmul.f32 %v2615, %v2621
        %v2624 = vld [vmem:[%s9] sm:$0x1]
        %v2626 = vlaneseq
        %v2627 = vshrl.u32 %v2626, 7
        %v2628 = vsub.s32 0, %v2627
        %v2629 = vrot.slane %v2624, %v2628
        %v2631 = vadd.f32 %v2623, %v2629
        %v2632 = vpack.c.bf16 %v2631, %v2631
        %v2633 = vld [vmem:[%s10] sm:$0xf]
        %v2634 = vld [vmem:[%s10 + $0x4] sm:$0xf]
        %v2635 = vld [vmem:[%s10 + $0x8] sm:$0xf]
        %v2636 = vld [vmem:[%s10 + $0xc] sm:$0xf]
        %v2637 = vld [vmem:[%s11] sm:$0x1]
        %v2639 = vlaneseq
        %v2640 = vshrl.u32 %v2639, 7
        %v2641 = vsub.s32 0, %v2640
        %v2642 = vrot.slane %v2637, %v2641
        %v2648 = vunpack.c.l.b16 %v2633
        %v2649 = vunpack.c.l.b16 %v2634
        %v2650 = vunpack.c.l.b16 %v2635
        %v2651 = vunpack.c.l.b16 %v2636
        %v2652 = vpack.c.b16 %v2649, %v2648
        %v2653 = vpack.c.b16 %v2651, %v2650
        %v2657 = vsel %vm573, %v2632, 0
        %2659 = vmatprep.subr.bf16.mxu0 0
        %2660 = vmatpush1.bf16.msra.mxu0 %v2652
        %2661 = vmatprep.subr.bf16.mxu0 0
        %2662 = vmatpush1.bf16.msra.mxu0 %v2653
        %2663 = vmatprep.subr.bf16.mxu0 0
        %2664 = vmatpush1.bf16.msra.mxu0 0
        %2665 = vmatprep.subr.bf16.mxu0 0
        %2666 = vmatpush1.bf16.msra.mxu0 0
        %2667 = vmatprep.subr.bf16.mxu0 0
        %2668 = vmatpush1.bf16.msra.mxu0 0
        %2669 = vmatprep.subr.bf16.mxu0 0
        %2670 = vmatpush1.bf16.msra.mxu0 0
        %2671 = vmatprep.subr.bf16.mxu0 0
        %2672 = vmatpush1.bf16.msra.mxu0 0
        %2673 = vmatprep.subr.bf16.mxu0 0
        %2674 = vmatpush1.bf16.msra.mxu0 0
        %2675 = vmatprep.subr.bf16.mxu0 0
        %2676 = vmatpush1.bf16.msra.mxu0 0
        %2677 = vmatprep.subr.bf16.mxu0 0
        %2678 = vmatpush1.bf16.msra.mxu0 0
        %2679 = vmatprep.subr.bf16.mxu0 0
        %2680 = vmatpush1.bf16.msra.mxu0 0
        %2681 = vmatprep.subr.bf16.mxu0 0
        %2682 = vmatpush1.bf16.msra.mxu0 0
        %2683 = vmatprep.subr.bf16.mxu0 0
        %2684 = vmatpush1.bf16.msra.mxu0 0
        %2685 = vmatprep.subr.bf16.mxu0 0
        %2686 = vmatpush1.bf16.msra.mxu0 0
        %2687 = vmatprep.subr.bf16.mxu0 0
        %2688 = vmatpush1.bf16.msra.mxu0 0
        %2689 = vmatprep.subr.bf16.mxu0 0
        %2690 = vmatpush1.bf16.msra.mxu0 0
        %2691 = vmatprep.mubr.bf16.mxu0 0
        %2692 = vmatmul.mubr.bf16.gmra.mrb[0].mxu0 %v2657
        %v2693 = vpop.f32.mrb[0].mxu0
        %v2694 = vadd.f32 %v2642, %v2693
        %v2695 = vpop.f32.mrb[0].mxu0
        %v2696 = vpop.f32.mrb[0].mxu0
        %v2697 = vpop.f32.mrb[0].mxu0
        %2698 = vdwg.mxu0
        %v2699 = vld [vmem:[%s12] sm:$0xf]
        %v2700 = vld [vmem:[%s12 + $0x4] sm:$0xf]
        %v2701 = vld [vmem:[%s12 + $0x8] sm:$0xf]
        %v2702 = vld [vmem:[%s12 + $0xc] sm:$0xf]
        %v2703 = vld [vmem:[%s13] sm:$0x1]
        %v2705 = vlaneseq
        %v2706 = vshrl.u32 %v2705, 7
        %v2707 = vsub.s32 0, %v2706
        %v2708 = vrot.slane %v2703, %v2707
        %v2714 = vunpack.c.l.b16 %v2699
        %v2715 = vunpack.c.l.b16 %v2700
        %v2716 = vunpack.c.l.b16 %v2701
        %v2717 = vunpack.c.l.b16 %v2702
        %v2718 = vpack.c.b16 %v2715, %v2714
        %v2719 = vpack.c.b16 %v2717, %v2716
        %2722 = vmatprep.subr.bf16.mxu0 0
        %2723 = vmatpush1.bf16.msra.mxu0 %v2718
        %2724 = vmatprep.subr.bf16.mxu0 0
        %2725 = vmatpush1.bf16.msra.mxu0 %v2719
        %2726 = vmatprep.subr.bf16.mxu0 0
        %2727 = vmatpush1.bf16.msra.mxu0 0
        %2728 = vmatprep.subr.bf16.mxu0 0
        %2729 = vmatpush1.bf16.msra.mxu0 0
        %2730 = vmatprep.subr.bf16.mxu0 0
        %2731 = vmatpush1.bf16.msra.mxu0 0
        %2732 = vmatprep.subr.bf16.mxu0 0
        %2733 = vmatpush1.bf16.msra.mxu0 0
        %2734 = vmatprep.subr.bf16.mxu0 0
        %2735 = vmatpush1.bf16.msra.mxu0 0
        %2736 = vmatprep.subr.bf16.mxu0 0
        %2737 = vmatpush1.bf16.msra.mxu0 0
        %2738 = vmatprep.subr.bf16.mxu0 0
        %2739 = vmatpush1.bf16.msra.mxu0 0
        %2740 = vmatprep.subr.bf16.mxu0 0
        %2741 = vmatpush1.bf16.msra.mxu0 0
        %2742 = vmatprep.subr.bf16.mxu0 0
        %2743 = vmatpush1.bf16.msra.mxu0 0
        %2744 = vmatprep.subr.bf16.mxu0 0
        %2745 = vmatpush1.bf16.msra.mxu0 0
        %2746 = vmatprep.subr.bf16.mxu0 0
        %2747 = vmatpush1.bf16.msra.mxu0 0
        %2748 = vmatprep.subr.bf16.mxu0 0
        %2749 = vmatpush1.bf16.msra.mxu0 0
        %2750 = vmatprep.subr.bf16.mxu0 0
        %2751 = vmatpush1.bf16.msra.mxu0 0
        %2752 = vmatprep.subr.bf16.mxu0 0
        %2753 = vmatpush1.bf16.msra.mxu0 0
        %2754 = vmatprep.mubr.bf16.mxu0 0
        %2755 = vmatmul.mubr.bf16.gmra.mrb[0].mxu0 %v2657
        %v2756 = vpop.f32.mrb[0].mxu0
        %v2757 = vadd.f32 %v2708, %v2756
        %v2758 = vpop.f32.mrb[0].mxu0
        %v2759 = vpop.f32.mrb[0].mxu0
        %v2760 = vpop.f32.mrb[0].mxu0
        %2761 = vdwg.mxu0
        %v2762 = vxor.u32 %v2757, 2147483648
        %v2763 = vmul.f32 %v2762, 1.442695
        %v2764 = vpow.pop %v2763
        %v2765 = vadd.f32 %v2764, 1.0
        %v2766 = vrcp.pop %v2765
        %v2767 = vmul.f32 1.0, %v2766
        %v2768 = vmul.f32 %v2694, %v2767
        %v2769 = vld [vmem:[%s14 + $0x8] sm:$0xff]
        %v2770 = vld [vmem:[%s14 + $0x10] sm:$0xff]
        %v2771 = vlaneseq
        %v2772 = vshrl.u32 %v2771, 7
        %v2773 = vrot.slane %v2768, 1
        %v2774 = vadd.s32 %v2772, 4294967289
        %vm2775 = vcmp.ge.s32.totalorder %v2774, 0
        %vm2776 = vcmp.lt.s32.totalorder %v2774, 8
        %vm2777 = vmand %vm2775, %vm2776
        %v2778 = vsel %vm2777, 1, 0
        %vm2779 = vcmp.eq.s32.totalorder %v2778, 1
        %v2780 = vsel %vm2779, %v2773, 0.0
        %v2781 = vlaneseq
        %v2782 = vshrl.u32 %v2781, 7
        %v2783 = vsub.s32 0, %v2782
        %v2784 = vrot.slane %v2769, %v2783
        %v2785 = vmul.f32 %v2780, %v2784
        %v2786 = vadd.f32 %v2785, 0.0
        %v2787 = vrot.slane %v2768, 2
        %v2788 = vadd.s32 %v2772, 4294967290
        %vm2789 = vcmp.ge.s32.totalorder %v2788, 0
        %vm2790 = vcmp.lt.s32.totalorder %v2788, 8
        %vm2791 = vmand %vm2789, %vm2790
        %v2792 = vsel %vm2791, 1, 0
        %vm2793 = vcmp.eq.s32.totalorder %v2792, 1
        %v2794 = vsel %vm2793, %v2787, 0.0
        %v2795 = vlaneseq
        %v2796 = vshrl.u32 %v2795, 7
        %v2797 = vsub.s32 1, %v2796
        %v2798 = vrot.slane %v2769, %v2797
        %v2799 = vmul.f32 %v2794, %v2798
        %v2800 = vadd.f32 %v2786, %v2799
        %v2801 = vrot.slane %v2768, 3
        %v2802 = vadd.s32 %v2772, 4294967291
        %vm2803 = vcmp.ge.s32.totalorder %v2802, 0
        %vm2804 = vcmp.lt.s32.totalorder %v2802, 8
        %vm2805 = vmand %vm2803, %vm2804
        %v2806 = vsel %vm2805, 1, 0
        %vm2807 = vcmp.eq.s32.totalorder %v2806, 1
        %v2808 = vsel %vm2807, %v2801, 0.0
        %v2809 = vlaneseq
        %v2810 = vshrl.u32 %v2809, 7
        %v2811 = vsub.s32 2, %v2810
        %v2812 = vrot.slane %v2769, %v2811
        %v2813 = vmul.f32 %v2808, %v2812
        %v2814 = vadd.f32 %v2800, %v2813
        %v2815 = vrot.slane %v2768, 4
        %v2816 = vadd.s32 %v2772, 4294967292
        %vm2817 = vcmp.ge.s32.totalorder %v2816, 0
        %vm2818 = vcmp.lt.s32.totalorder %v2816, 8
        %vm2819 = vmand %vm2817, %vm2818
        %v2820 = vsel %vm2819, 1, 0
        %vm2821 = vcmp.eq.s32.totalorder %v2820, 1
        %v2822 = vsel %vm2821, %v2815, 0.0
        %v2823 = vlaneseq
        %v2824 = vshrl.u32 %v2823, 7
        %v2825 = vsub.s32 3, %v2824
        %v2826 = vrot.slane %v2769, %v2825
        %v2827 = vmul.f32 %v2822, %v2826
        %v2828 = vadd.f32 %v2814, %v2827
        %v2829 = vrot.slane %v2768, 5
        %v2830 = vadd.s32 %v2772, 4294967293
        %vm2831 = vcmp.ge.s32.totalorder %v2830, 0
        %vm2832 = vcmp.lt.s32.totalorder %v2830, 8
        %vm2833 = vmand %vm2831, %vm2832
        %v2834 = vsel %vm2833, 1, 0
        %vm2835 = vcmp.eq.s32.totalorder %v2834, 1
        %v2836 = vsel %vm2835, %v2829, 0.0
        %v2837 = vlaneseq
        %v2838 = vshrl.u32 %v2837, 7
        %v2839 = vsub.s32 4, %v2838
        %v2840 = vrot.slane %v2769, %v2839
        %v2841 = vmul.f32 %v2836, %v2840
        %v2842 = vadd.f32 %v2828, %v2841
        %v2843 = vrot.slane %v2768, 6
        %v2844 = vadd.s32 %v2772, 4294967294
        %vm2845 = vcmp.ge.s32.totalorder %v2844, 0
        %vm2846 = vcmp.lt.s32.totalorder %v2844, 8
        %vm2847 = vmand %vm2845, %vm2846
        %v2848 = vsel %vm2847, 1, 0
        %vm2849 = vcmp.eq.s32.totalorder %v2848, 1
        %v2850 = vsel %vm2849, %v2843, 0.0
        %v2851 = vlaneseq
        %v2852 = vshrl.u32 %v2851, 7
        %v2853 = vsub.s32 5, %v2852
        %v2854 = vrot.slane %v2769, %v2853
        %v2855 = vmul.f32 %v2850, %v2854
        %v2856 = vadd.f32 %v2842, %v2855
        %v2857 = vrot.slane %v2768, 7
        %v2858 = vadd.s32 %v2772, 4294967295
        %vm2859 = vcmp.ge.s32.totalorder %v2858, 0
        %vm2860 = vcmp.lt.s32.totalorder %v2858, 8
        %vm2861 = vmand %vm2859, %vm2860
        %v2862 = vsel %vm2861, 1, 0
        %vm2863 = vcmp.eq.s32.totalorder %v2862, 1
        %v2864 = vsel %vm2863, %v2857, 0.0
        %v2865 = vlaneseq
        %v2866 = vshrl.u32 %v2865, 7
        %v2867 = vsub.s32 6, %v2866
        %v2868 = vrot.slane %v2769, %v2867
        %v2869 = vmul.f32 %v2864, %v2868
        %v2870 = vadd.f32 %v2856, %v2869
        %vm2871 = vcmp.ge.s32.totalorder %v2772, 0
        %vm2872 = vcmp.lt.s32.totalorder %v2772, 8
        %vm2873 = vmand %vm2871, %vm2872
        %v2874 = vsel %vm2873, 1, 0
        %vm2875 = vcmp.eq.s32.totalorder %v2874, 1
        %v2876 = vsel %vm2875, %v2768, 0.0
        %v2877 = vlaneseq
        %v2878 = vshrl.u32 %v2877, 7
        %v2879 = vsub.s32 7, %v2878
        %v2880 = vrot.slane %v2769, %v2879
        %v2881 = vmul.f32 %v2876, %v2880
        %v2882 = vadd.f32 %v2870, %v2881
        %v2883 = vadd.s32 %v2772, 1
        %vm2884 = vcmp.ge.s32.totalorder %v2883, 0
        %vm2885 = vcmp.lt.s32.totalorder %v2883, 8
        %vm2886 = vmand %vm2884, %vm2885
        %v2887 = vsel %vm2886, 1, 0
        %vm2888 = vcmp.eq.s32.totalorder %v2887, 1
        %v2889 = vsel %vm2888, %v2773, 0.0
        %v2890 = vlaneseq
        %v2891 = vshrl.u32 %v2890, 7
        %v2892 = vsub.s32 0, %v2891
        %v2893 = vrot.slane %v2770, %v2892
        %v2894 = vmul.f32 %v2889, %v2893
        %v2895 = vadd.f32 %v2882, %v2894
        %v2896 = vadd.s32 %v2772, 2
        %vm2897 = vcmp.ge.s32.totalorder %v2896, 0
        %vm2898 = vcmp.lt.s32.totalorder %v2896, 8
        %vm2899 = vmand %vm2897, %vm2898
        %v2900 = vsel %vm2899, 1, 0
        %vm2901 = vcmp.eq.s32.totalorder %v2900, 1
        %v2902 = vsel %vm2901, %v2787, 0.0
        %v2903 = vlaneseq
        %v2904 = vshrl.u32 %v2903, 7
        %v2905 = vsub.s32 1, %v2904
        %v2906 = vrot.slane %v2770, %v2905
        %v2907 = vmul.f32 %v2902, %v2906
        %v2908 = vadd.f32 %v2895, %v2907
        %v2909 = vadd.s32 %v2772, 3
        %vm2910 = vcmp.ge.s32.totalorder %v2909, 0
        %vm2911 = vcmp.lt.s32.totalorder %v2909, 8
        %vm2912 = vmand %vm2910, %vm2911
        %v2913 = vsel %vm2912, 1, 0
        %vm2914 = vcmp.eq.s32.totalorder %v2913, 1
        %v2915 = vsel %vm2914, %v2801, 0.0
        %v2916 = vlaneseq
        %v2917 = vshrl.u32 %v2916, 7
        %v2918 = vsub.s32 2, %v2917
        %v2919 = vrot.slane %v2770, %v2918
        %v2920 = vmul.f32 %v2915, %v2919
        %v2921 = vadd.f32 %v2908, %v2920
        %v2922 = vadd.s32 %v2772, 4
        %vm2923 = vcmp.ge.s32.totalorder %v2922, 0
        %vm2924 = vcmp.lt.s32.totalorder %v2922, 8
        %vm2925 = vmand %vm2923, %vm2924
        %v2926 = vsel %vm2925, 1, 0
        %vm2927 = vcmp.eq.s32.totalorder %v2926, 1
        %v2928 = vsel %vm2927, %v2815, 0.0
        %v2929 = vlaneseq
        %v2930 = vshrl.u32 %v2929, 7
        %v2931 = vsub.s32 3, %v2930
        %v2932 = vrot.slane %v2770, %v2931
        %v2933 = vmul.f32 %v2928, %v2932
        %v2934 = vadd.f32 %v2921, %v2933
        %v2935 = vadd.s32 %v2772, 5
        %vm2936 = vcmp.ge.s32.totalorder %v2935, 0
        %vm2937 = vcmp.lt.s32.totalorder %v2935, 8
        %vm2938 = vmand %vm2936, %vm2937
        %v2939 = vsel %vm2938, 1, 0
        %vm2940 = vcmp.eq.s32.totalorder %v2939, 1
        %v2941 = vsel %vm2940, %v2829, 0.0
        %v2942 = vlaneseq
        %v2943 = vshrl.u32 %v2942, 7
        %v2944 = vsub.s32 4, %v2943
        %v2945 = vrot.slane %v2770, %v2944
        %v2946 = vmul.f32 %v2941, %v2945
        %v2947 = vadd.f32 %v2934, %v2946
        %v2948 = vadd.s32 %v2772, 6
        %vm2949 = vcmp.ge.s32.totalorder %v2948, 0
        %vm2950 = vcmp.lt.s32.totalorder %v2948, 8
        %vm2951 = vmand %vm2949, %vm2950
        %v2952 = vsel %vm2951, 1, 0
        %vm2953 = vcmp.eq.s32.totalorder %v2952, 1
        %v2954 = vsel %vm2953, %v2843, 0.0
        %v2955 = vlaneseq
        %v2956 = vshrl.u32 %v2955, 7
        %v2957 = vsub.s32 5, %v2956
        %v2958 = vrot.slane %v2770, %v2957
        %v2959 = vmul.f32 %v2954, %v2958
        %v2960 = vadd.f32 %v2947, %v2959
        %v2961 = vadd.s32 %v2772, 7
        %vm2962 = vcmp.ge.s32.totalorder %v2961, 0
        %vm2963 = vcmp.lt.s32.totalorder %v2961, 8
        %vm2964 = vmand %vm2962, %vm2963
        %v2965 = vsel %vm2964, 1, 0
        %vm2966 = vcmp.eq.s32.totalorder %v2965, 1
        %v2967 = vsel %vm2966, %v2857, 0.0
        %v2968 = vlaneseq
        %v2969 = vshrl.u32 %v2968, 7
        %v2970 = vsub.s32 6, %v2969
        %v2971 = vrot.slane %v2770, %v2970
        %v2972 = vmul.f32 %v2967, %v2971
        %v2973 = vadd.f32 %v2960, %v2972
        %v2974 = vld [vmem:[%s15] sm:$0x1]
        %v2976 = vlaneseq
        %v2977 = vshrl.u32 %v2976, 7
        %v2978 = vsub.s32 0, %v2977
        %v2979 = vrot.slane %v2974, %v2978
        %v2981 = vadd.f32 %v2973, %v2979
        %v2982 = vxor.u32 %v2981, 2147483648
        %v2983 = vmul.f32 %v2982, 1.442695
        %v2984 = vpow.pop %v2983
        %v2985 = vadd.f32 %v2984, 1.0
        %v2986 = vrcp.pop %v2985
        %v2987 = vmul.f32 1.0, %v2986
        %v2988 = vmul.f32 %v2981, %v2987
        %v2989 = vpack.c.bf16 %v2988, %v2988
        %v2990 = vld [vmem:[%s16] sm:$0xf]
        %v2991 = vld [vmem:[%s16 + $0x4] sm:$0xf]
        %v2992 = vld [vmem:[%s16 + $0x8] sm:$0xf]
        %v2993 = vld [vmem:[%s16 + $0xc] sm:$0xf]
        %v2994 = vld [vmem:[%s16 + $0x10] sm:$0xf]
        %v2995 = vld [vmem:[%s16 + $0x14] sm:$0xf]
        %v2996 = vld [vmem:[%s16 + $0x18] sm:$0xf]
        %v2997 = vld [vmem:[%s16 + $0x1c] sm:$0xf]
        %v2998 = vld [vmem:[%s17] sm:$0x1]
        %v3000 = vlaneseq
        %v3001 = vshrl.u32 %v3000, 7
        %v3002 = vsub.s32 0, %v3001
        %v3003 = vrot.slane %v2998, %v3002
        %v3013 = vunpack.c.l.b16 %v2990
        %v3014 = vunpack.c.l.b16 %v2991
        %v3015 = vunpack.c.l.b16 %v2992
        %v3016 = vunpack.c.l.b16 %v2993
        %v3017 = vunpack.c.l.b16 %v2994
        %v3018 = vunpack.c.l.b16 %v2995
        %v3019 = vunpack.c.l.b16 %v2996
        %v3020 = vunpack.c.l.b16 %v2997
        %v3021 = vpack.c.b16 %v3014, %v3013
        %v3022 = vpack.c.b16 %v3016, %v3015
        %v3023 = vpack.c.b16 %v3018, %v3017
        %v3024 = vpack.c.b16 %v3020, %v3019
        %v3030 = vsel %vm923, %v2989, 0
        %3032 = vmatprep.subr.bf16.mxu0 0
        %3033 = vmatpush1.bf16.msra.mxu0 %v3021
        %3034 = vmatprep.subr.bf16.mxu0 0
        %3035 = vmatpush1.bf16.msra.mxu0 %v3022
        %3036 = vmatprep.subr.bf16.mxu0 0
        %3037 = vmatpush1.bf16.msra.mxu0 %v3023
        %3038 = vmatprep.subr.bf16.mxu0 0
        %3039 = vmatpush1.bf16.msra.mxu0 %v3024
        %3040 = vmatprep.subr.bf16.mxu0 0
        %3041 = vmatpush1.bf16.msra.mxu0 0
        %3042 = vmatprep.subr.bf16.mxu0 0
        %3043 = vmatpush1.bf16.msra.mxu0 0
        %3044 = vmatprep.subr.bf16.mxu0 0
        %3045 = vmatpush1.bf16.msra.mxu0 0
        %3046 = vmatprep.subr.bf16.mxu0 0
        %3047 = vmatpush1.bf16.msra.mxu0 0
        %3048 = vmatprep.subr.bf16.mxu0 0
        %3049 = vmatpush1.bf16.msra.mxu0 0
        %3050 = vmatprep.subr.bf16.mxu0 0
        %3051 = vmatpush1.bf16.msra.mxu0 0
        %3052 = vmatprep.subr.bf16.mxu0 0
        %3053 = vmatpush1.bf16.msra.mxu0 0
        %3054 = vmatprep.subr.bf16.mxu0 0
        %3055 = vmatpush1.bf16.msra.mxu0 0
        %3056 = vmatprep.subr.bf16.mxu0 0
        %3057 = vmatpush1.bf16.msra.mxu0 0
        %3058 = vmatprep.subr.bf16.mxu0 0
        %3059 = vmatpush1.bf16.msra.mxu0 0
        %3060 = vmatprep.subr.bf16.mxu0 0
        %3061 = vmatpush1.bf16.msra.mxu0 0
        %3062 = vmatprep.subr.bf16.mxu0 0
        %3063 = vmatpush1.bf16.msra.mxu0 0
        %3064 = vmatprep.mubr.bf16.mxu0 0
        %3065 = vmatmul.mubr.bf16.gmra.mrb[0].mxu0 %v3030
        %v3066 = vpop.f32.mrb[0].mxu0
        %v3067 = vadd.f32 %v3003, %v3066
        %v3068 = vpop.f32.mrb[0].mxu0
        %v3069 = vpop.f32.mrb[0].mxu0
        %v3070 = vpop.f32.mrb[0].mxu0
        %3071 = vdwg.mxu0
        %v3072 = vadd.f32 %v2602, %v3067
        %3073 = vst.msk [vmem:[%s566] sm:$0xff] %vm573, %v3072
        %s3074 = sand.u32 %s423, 1
        %s3075 = scalar_lea.sflag [#allocation3], %s3074
        %s3076 = sand.u32 %s423, 1
        %s3077 = smul.addr %s3076, 8
        %s3078 = scalar_lea.vmem [#allocation2], %s3077
        // Predicated region
        $region93: #{_lambda_.3} parent=91 // pred_check
          %p3079 = pneg %p433
        $region94: #{_lambda_.3} parent=91 // pred_check_branch
          %3081 = sbr.rel (%p3079) target = $region96
        $region95: #{_lambda_.3} parent=91 // pred_region
          %s3083 = ssub.s32 128, 128
          %3084 = vsyncadd %s3075, %s3083
          %s3085 = smul.addr %s32, 128
          %s3086 = scalar_lea.hbm %s18, %s3085
          %s3088 = sshll.u32 %s3078, 4
          %s3089 = int_to_ptr.vmem [resolvable:$true] %s3088
          %3091 = dma.vmem_to_hbm [thread:$0]  %s3089, 128, %s3086, %s3075
        $region96: #{_lambda_.3} parent=91 // pred_fallthru
          _
      $region92: #{_lambda_.3} parent=5 // pred_fallthru
        _
      %p3092 = scmp.le.s32.totalorder 2, %s27
      // Predicated region
      $region97: #{_lambda_.3} parent=5 // pred_check
        %p3093 = pneg %p3092
      $region98: #{_lambda_.3} parent=5 // pred_check_branch
        %3095 = sbr.rel (%p3093) target = $region100
      $region99: #{_lambda_.3} parent=5 // pred_region
        %s3096 = ssub.s32 %s27, 2
        // Predicated region
        $region101: #{_lambda_.3} parent=99 // pred_check
          %p3097 = pneg %p439
        $region102: #{_lambda_.3} parent=99 // pred_check_branch
          %3099 = sbr.rel (%p3097) target = $region104
        $region103: #{_lambda_.3} parent=99 // pred_region
          %s3100 = sand.u32 %s424, 1
          %s3101 = scalar_lea.sflag [#allocation3], %s3100
          %s3102 = sand.u32 %s424, 1
          %s3103 = smul.addr %s3102, 8
          %s3104 = scalar_lea.vmem [#allocation2], %s3103
          %3105 = dma.done %s3101, 128
        $region104: #{_lambda_.3} parent=99 // pred_fallthru
          _
      $region100: #{_lambda_.3} parent=5 // pred_fallthru
        _
    $region6: #{_lambda_.3} parent=1 // loop_footer
      %s31 = sadd.s32 1, %s27
    $region7: #{_lambda_.3} parent=1 // loop_footer_branch
      %26 = sbr.rel target = $region3
    $region8: #{_lambda_.3} parent=1 // loop_exit
      _
    %3106 = vsyncpa [#allocation3], 1
    %s3107 = scalar_lea.sflag [#allocation3], 1
    %3108 = vsyncpa %s3107, 1

</llo_original>
